<compile_context>
chip_gen: v7x
topology: tpu7x:2x2x1
jax: 0.10.0
libtpu: 0.0.40
codegen_flags: <defaults>
</compile_context>

<pallas_src>
import math

import jax
import jax.numpy as jnp
from jax import lax
from jax.experimental import pallas as pl
from jax.experimental.pallas import tpu as pltpu

# bf16 MXU operands with fp32 accumulation: native on v6e/v7x, supported on v5e;
# halves weight DMA / VMEM.  Biases and the neighbour scores stay fp32.
COMPUTE_DTYPE = jnp.bfloat16
WEIGHT_DTYPE = jnp.bfloat16


# ----------------------------- in-kernel helpers -----------------------------

def _mm(a, b):
    """MXU matmul: bf16 operands, fp32 accumulation."""
    return jnp.dot(a.astype(COMPUTE_DTYPE), b.astype(COMPUTE_DTYPE),
                   preferred_element_type=jnp.float32)


def _shift_rows(x, shift):
    """y[t] = x[t - shift], zero outside [0, T).  Static shift.

    Realized as a tiny (T, T) shift-matrix matmul built from iotas.
    pltpu.roll / slice+concat were considered (they would keep the shift off
    the MXU) but partial-tile sublane rotates / unaligned sublane concats at
    T = 16 are not reliably lowerable; at (16,16)x(16,C) each extra push is
    drain-latency only and tap-folding already removed most of them.
    """
    if shift == 0:
        return x
    T = x.shape[0]
    rows = lax.broadcasted_iota(jnp.int32, (T, T), 0)
    cols = lax.broadcasted_iota(jnp.int32, (T, T), 1)
    smat = (cols == rows - shift).astype(COMPUTE_DTYPE)
    return jnp.dot(smat, x.astype(COMPUTE_DTYPE),
                   preferred_element_type=jnp.float32)


def _conv_taps_folded(x, w_ref, b_ref):
    """'same' temporal conv with all taps folded into ONE MXU matmul.

    x: (T, Cin) channels-last.  w_ref: (ks*Cin, Cout) per-tap block-diagonal
    (grouped) matrices stacked along rows.  The shifted copies are concatenated
    along lanes (Cin = 128 => lane-aligned), raising K from Cin to ks*Cin and
    cutting ks MXU issues to 1.
    """
    cin = x.shape[1]
    ks = w_ref.shape[0] // cin
    half = ks // 2
    parts = [_shift_rows(x, half - j) for j in range(ks)]
    xcat = parts[0] if ks == 1 else jnp.concatenate(parts, axis=1)
    return _mm(xcat, w_ref[...]) + b_ref[...]


def _conv_taps_serial(x, w_ref, b_ref):
    """'same' temporal conv, one matmul per tap (w_ref: (ks, Cin, Cout)).

    Used only for the backbone where Cin (= feat_dim = 64) is not lane-aligned,
    so the folded variant's lane concatenation would need unaligned offsets.
    It runs once per forward; negligible.
    """
    ks = w_ref.shape[0]
    half = ks // 2
    y = b_ref[...].astype(jnp.float32)
    for j in range(ks):
        y = y + _mm(_shift_rows(x, half - j), w_ref[j])
    return y


# ------------------------------ Pallas kernels -------------------------------

def _backbone_kernel(snip_ref, topic_ref, w1_ref, b1_ref, wt_ref, bt_ref,
                     base_ref, topicf_ref):
    # backbone1: grouped k=3 conv (groups=4) + ReLU, channels-last.
    x = snip_ref[0]                                         # (T, feat_dim)
    base = _conv_taps_serial(x, w1_ref, b1_ref)             # (T, 256)
    base_ref[0] = jnp.maximum(base, 0.0).astype(base_ref.dtype)

    # backbone_topic: grouped 1x1 conv (groups=4) + ReLU on (1, topic_dim).
    tf = _mm(topic_ref[0], wt_ref[...]) + bt_ref[...]       # (1, 256)
    topicf_ref[0] = jnp.maximum(tf, 0.0).astype(topicf_ref.dtype)


def _ego_gcnext_kernel(seg_ref, x_ref, ego_ref,
                       t1w_ref, t1b_ref, t2w_ref, t2b_ref, t3w_ref, t3b_ref,
                       s1wa_ref, s1wba_ref, s1wc_ref, s1b_ref,
                       s2w_ref, s2b_ref, s3w_ref, s3b_ref,
                       o_ref):
    """One fully fused EgoGCNeXt block for one batch element (channels-last).

    Fuses neighbour scoring (neg-dist), iterative top-k, one-hot gather, both
    branches, residual and ReLU into a single pallas_call: no HBM bounce of the
    (T, T) score matrix and no XLA top_k between kernels.
    """
    b = pl.program_id(0)
    x = x_ref[0]                                            # (T, C) fp32
    T = x.shape[0]

    # ---- neighbour scores (replaces the neg_dist kernel + lax.top_k) --------
    # neg_dist[i,j] = 2<xi,xj> - |xi|^2 - |xj|^2; the -|xi|^2 term is constant
    # per row so it cannot change the per-row top-k -> rank by
    # score[i,j] = 2<xi,xj> - |xj|^2 (fp32 so selection stays stable).
    gram = lax.dot_general(x, x, (((1,), (1,)), ((), ())),
                           preferred_element_type=jnp.float32)      # (T, T)
    rows = lax.broadcasted_iota(jnp.int32, (T, T), 0)
    cols = lax.broadcasted_iota(jnp.int32, (T, T), 1)
    sq_j = jnp.sum(jnp.where(rows == cols, gram, 0.0), axis=0,
                   keepdims=True)                                    # (1, T)
    score = 2.0 * gram - sq_j
    score = jnp.where(cols < seg_ref[b], score, -jnp.inf)  # mask padded keys

    # ---- temporal branch: 1x1 -> grouped k=3 conv (taps folded) -> 1x1 ------
    t1 = jnp.maximum(_mm(x, t1w_ref[...]) + t1b_ref[...], 0.0)      # (T, W)
    t2 = jnp.maximum(_conv_taps_folded(t1, t2w_ref, t2b_ref), 0.0)  # (T, W)
    t3 = _mm(t2, t3w_ref[...]) + t3b_ref[...]                       # (T, C)

    # ---- semantic (ego-graph) branch, all on the MXU -------------------------
    # The dense 1x1 conv s1 over cat([neigh - center, center, ego]) distributes:
    #   s1_j = relu(onehot_j @ (x Wa) + x (Wb - Wa) + ego Wc + b_s1)
    A = _mm(x, s1wa_ref[...])                                        # (T, W)
    s1_base = (_mm(x, s1wba_ref[...]) + _mm(ego_ref[0], s1wc_ref[...])
               + s1b_ref[...])                                       # (T, W)

    k = s2w_ref.shape[0] // s2w_ref.shape[1]
    colsf = cols.astype(jnp.float32)
    sc = score
    parts = []
    for j in range(k):
        # arg-max with lowest-index tie-break (matches lax.top_k ordering).
        rowmax = jnp.max(sc, axis=1, keepdims=True)                  # (T, 1)
        is_max = sc == rowmax
        sel = jnp.min(jnp.where(is_max, colsf, float(T)), axis=1,
                      keepdims=True)                                 # (T, 1)
        onehot = colsf == sel                                        # (T, T)
        sc = jnp.where(onehot, -jnp.inf, sc)
        gathered = _mm(onehot.astype(jnp.float32), A)                # (T, W)
        parts.append(jnp.maximum(gathered + s1_base, 0.0))
    # grouped (1, k) conv over the neighbour axis: concat the k neighbour maps
    # along lanes (W = 128 -> aligned) and do ONE K = k*W matmul.
    s1_cat = parts[0] if k == 1 else jnp.concatenate(parts, axis=1)  # (T, k*W)
    s2 = jnp.maximum(_mm(s1_cat, s2w_ref[...]) + s2b_ref[...], 0.0)  # (T, W)
    s3 = _mm(s2, s3w_ref[...]) + s3b_ref[...]                        # (T, C)
    # TODO(synk): EgoGCNeXt source not provided; assumes the (1,k) grouped conv
    # (not a max) reduces the neighbour axis, as in the G-TAD GCNeXt layout.

    # ---- residual + ReLU fused into the epilogue -----------------------------
    o_ref[0] = jnp.maximum(t3 + x + s3, 0.0).astype(o_ref.dtype)


# ------------------------------- call wrappers --------------------------------

def _const_spec(arr, num_prefetch=0):
    """Whole-array block, constant across the grid (weights stay VMEM-resident)."""
    nd = arr.ndim
    zeros = (0,) * nd
    if num_prefetch:
        return pl.BlockSpec(arr.shape, lambda b, seg: zeros)
    return pl.BlockSpec(arr.shape, lambda b: zeros)


def backbone(snip, topic, params):
    """backbone1 + backbone_topic fused into one pallas_call, grid=(B,)."""
    B, T, F = snip.shape
    Td = topic.shape[2]
    C = params["bb1_w"].shape[2]
    return pl.pallas_call(
        _backbone_kernel,
        out_shape=(jax.ShapeDtypeStruct((B, T, C), jnp.float32),
                   jax.ShapeDtypeStruct((B, 1, C), jnp.float32)),
        grid=(B,),
        in_specs=[
            pl.BlockSpec((1, T, F), lambda b: (b, 0, 0)),
            pl.BlockSpec((1, 1, Td), lambda b: (b, 0, 0)),
            _const_spec(params["bb1_w"]), _const_spec(params["bb1_b"]),
            _const_spec(params["bbt_w"]), _const_spec(params["bbt_b"]),
        ],
        out_specs=(pl.BlockSpec((1, T, C), lambda b: (b, 0, 0)),
                   pl.BlockSpec((1, 1, C), lambda b: (b, 0, 0))),
        compiler_params=pltpu.CompilerParams(dimension_semantics=("parallel",)),
    )(snip, topic, params["bb1_w"], params["bb1_b"],
      params["bbt_w"], params["bbt_b"])


_GCN_WEIGHTS = ("t1_w", "t1_b", "t2_w", "t2_b", "t3_w", "t3_b",
                "s1_wa", "s1_wba", "s1_wc", "s1_b",
                "s2_w", "s2_b", "s3_w", "s3_b")


def ego_gcnext_block(x, ego, seg_lens, p):
    """One fused EgoGCNeXt block (scoring + top-k + both branches), grid=(B,)."""
    B, T, C = x.shape
    W = p["t1_w"].shape[1]
    k = p["s2_w"].shape[0] // W
    weights = [p[n] for n in _GCN_WEIGHTS]

    flops_per_b = 2 * T * (C * T                                  # gram
                           + C * W + 3 * W * W + W * C            # temporal
                           + 3 * C * W                            # A, s1_base
                           + k * T * W                            # gathers
                           + k * W * W + W * C)                   # s2, s3
    bytes_w = sum(int(w.size) * w.dtype.itemsize for w in weights)
    bytes_act = B * (2 * T * C + C) * 4
    cost = pl.CostEstimate(flops=int(B * flops_per_b), transcendentals=0,
                           bytes_accessed=int(bytes_w + bytes_act))

    return pl.pallas_call(
        _ego_gcnext_kernel,
        out_shape=jax.ShapeDtypeStruct((B, T, C), jnp.float32),
        grid_spec=pltpu.PrefetchScalarGridSpec(
            num_scalar_prefetch=1,
            grid=(B,),
            in_specs=[pl.BlockSpec((1, T, C), lambda b, seg: (b, 0, 0)),
                      pl.BlockSpec((1, 1, C), lambda b, seg: (b, 0, 0))]
                     + [_const_spec(w, num_prefetch=1) for w in weights],
            out_specs=pl.BlockSpec((1, T, C), lambda b, seg: (b, 0, 0)),
        ),
        compiler_params=pltpu.CompilerParams(dimension_semantics=("parallel",)),
        cost_estimate=cost,
    )(seg_lens, x, ego, *weights)


# ---------------------- parameters: init + kernel layout ---------------------

def _conv_init(key, shape):
    """PyTorch default conv init: U(-1/sqrt(fan_in), 1/sqrt(fan_in))."""
    kw, kb = jax.random.split(key)
    fan_in = 1
    for d in shape[1:]:
        fan_in *= d
    bound = 1.0 / math.sqrt(fan_in)
    w = jax.random.uniform(kw, shape, jnp.float32, -bound, bound)
    b = jax.random.uniform(kb, (shape[0],), jnp.float32, -bound, bound)
    return w, b


def _init_gcn_raw(key, channel, width, groups, ego_dim, k):
    ks = jax.random.split(key, 6)
    p = {}
    p["t1_w"], p["t1_b"] = _conv_init(ks[0], (width, channel, 1))
    p["t2_w"], p["t2_b"] = _conv_init(ks[1], (width, width // groups, 3))
    p["t3_w"], p["t3_b"] = _conv_init(ks[2], (channel, width, 1))
    p["s1_w"], p["s1_b"] = _conv_init(ks[3], (width, 2 * channel + ego_dim, 1))
    p["s2_w"], p["s2_b"] = _conv_init(ks[4], (width, width // groups, 1, k))
    p["s3_w"], p["s3_b"] = _conv_init(ks[5], (channel, width, 1))
    return p


def init_raw_params(key, feat_dim, topic_dim, h_dim=256, groups=32,
                    width_group=4, k=3):
    width = width_group * groups        # 128
    ks = jax.random.split(key, 4)
    raw = {}
    raw["bb1_w"], raw["bb1_b"] = _conv_init(ks[0], (h_dim, feat_dim // 4, 3))
    raw["bbt_w"], raw["bbt_b"] = _conv_init(ks[1], (h_dim, topic_dim // 4, 1))
    raw["gcn1"] = _init_gcn_raw(ks[2], h_dim, width, groups, h_dim, k)
    raw["gcn2"] = _init_gcn_raw(ks[3], h_dim, width, groups, h_dim, k)
    return raw


def _blockdiag_taps(w, groups):
    """(Cout, Cin_per_group, ks) grouped-conv weight -> (ks, Cin, Cout) per-tap
    block-diagonal matrices for channels-last matmuls."""
    cout, ci_g, ks = w.shape
    co_g = cout // groups
    wg = w.reshape(groups, co_g, ci_g, ks)
    wg = jnp.transpose(wg, (3, 0, 2, 1))                    # (ks, G, ci_g, co_g)
    eye = jnp.eye(groups, dtype=w.dtype)
    full = jnp.einsum("kgio,gh->kgiho", wg, eye)            # zero off-group blocks
    return full.reshape(ks, groups * ci_g, cout)


def _dense_1x1(w):
    """(Cout, Cin, 1) -> (Cin, Cout)."""
    return jnp.transpose(w[:, :, 0])


def prepare_params(raw, *, backbone_groups=4, gcn_groups=32,
                   weight_dtype=WEIGHT_DTYPE):
    """Convert PyTorch-layout weights into the kernel layout (done once).

    Matmul weights are stored in bf16 (halved DMA/VMEM); biases stay fp32.
    t2_w / s2_w are stacked tap-major into (ks*W, W) for the folded-tap convs.
    """
    wd = weight_dtype
    p = {
        "bb1_w": _blockdiag_taps(raw["bb1_w"], backbone_groups).astype(wd),
        "bb1_b": raw["bb1_b"][None, :],
        "bbt_w": _blockdiag_taps(raw["bbt_w"], backbone_groups)[0].astype(wd),
        "bbt_b": raw["bbt_b"][None, :],
    }
    for name in ("gcn1", "gcn2"):
        g = raw[name]
        C = g["t1_w"].shape[1]                              # channel (= 256)
        W = g["t1_w"].shape[0]                              # width   (= 128)
        ws1 = _dense_1x1(g["s1_w"])                         # (2C + ego, W)
        t2 = _blockdiag_taps(g["t2_w"], gcn_groups)                  # (3, W, W)
        s2 = _blockdiag_taps(g["s2_w"][:, :, 0, :], gcn_groups)      # (k, W, W)
        p[name] = {
            "t1_w": _dense_1x1(g["t1_w"]).astype(wd), "t1_b": g["t1_b"][None, :],
            "t2_w": t2.reshape(-1, W).astype(wd),     "t2_b": g["t2_b"][None, :],
            "t3_w": _dense_1x1(g["t3_w"]).astype(wd), "t3_b": g["t3_b"][None, :],
            "s1_wa": ws1[:C].astype(wd),
            "s1_wba": (ws1[C:2 * C] - ws1[:C]).astype(wd),
            "s1_wc": ws1[2 * C:].astype(wd),
            "s1_b": g["s1_b"][None, :],
            "s2_w": s2.reshape(-1, W).astype(wd),     "s2_b": g["s2_b"][None, :],
            "s3_w": _dense_1x1(g["s3_w"]).astype(wd), "s3_b": g["s3_b"][None, :],
        }
    return p


# --------------------------------- forward -----------------------------------

def snippet_topic_gcn(params, snip_feature, seg_lens, topic_embedding):
    """Forward pass.  Inputs/outputs in PyTorch layout: (B, C, T), (B, topic_dim)."""
    # TODO(synk): the (B, C, T) -> (B, T, C) transpose stays in XLA glue; consuming
    # channels-first directly would need a transposed-LHS matmul / in-kernel
    # transpose whose lowering is not guaranteed at these tiny tile sizes.
    snip = jnp.transpose(snip_feature, (0, 2, 1))            # channels-last (B, T, F)
    topic = topic_embedding[:, None, :]                      # (B, 1, topic_dim)
    seg_lens = seg_lens.astype(jnp.int32)

    base, topic_feature = backbone(snip, topic, params)      # (B,T,256), (B,1,256)
    base = ego_gcnext_block(base, topic_feature, seg_lens, params["gcn1"])
    base = ego_gcnext_block(base, topic_feature, seg_lens, params["gcn2"])
    return jnp.transpose(base, (0, 2, 1))                    # (B, 256, T)


# ----------------------------------- main -------------------------------------

if __name__ == "__main__":
    B, FEAT, T, TOPIC = 2, 64, 16, 16
    key = jax.random.PRNGKey(0)
    k_param, k_x, k_topic = jax.random.split(key, 3)

    raw = init_raw_params(k_param, FEAT, TOPIC)
    params = prepare_params(raw)

    snip_feature = jax.random.normal(k_x, (B, FEAT, T), jnp.float32)
    topic_embedding = jax.random.normal(k_topic, (B, TOPIC), jnp.float32)
    seg_lens = jnp.array([T, T - 4], jnp.int32)

    fwd = jax.jit(snippet_topic_gcn)
    out = fwd(params, snip_feature, seg_lens, topic_embedding)
    jax.block_until_ready(out)

    assert out.shape == (B, 256, T), out.shape
    assert bool(jnp.all(jnp.isfinite(out)))
    print("KERNEL_OK")
</pallas_src>

<mosaic_0001>
module attributes {stable_mosaic.version = 11 : i64} {
  func.func @_backbone_kernel(%arg0: i32, %arg1: memref<1x16x64xf32, #tpu.memory_space<vmem>>, %arg2: memref<1x1x16xf32, #tpu.memory_space<vmem>>, %arg3: memref<3x64x256xbf16, #tpu.memory_space<vmem>>, %arg4: memref<1x256xf32, #tpu.memory_space<vmem>>, %arg5: memref<16x256xbf16, #tpu.memory_space<vmem>>, %arg6: memref<1x256xf32, #tpu.memory_space<vmem>>, %arg7: memref<1x16x256xf32, #tpu.memory_space<vmem>>, %arg8: memref<1x1x256xf32, #tpu.memory_space<vmem>>) attributes {dimension_semantics = [#tpu.dimension_semantics<parallel>], iteration_bounds = array<i64: 2>, scalar_prefetch = 0 : i64, scratch_operands = 0 : i64, tpu.core_type = #tpu.core_type<tc>, window_params = [{transform_indices = @transform_0, window_bounds = array<i64: 1, 16, 64>}, {transform_indices = @transform_1, window_bounds = array<i64: 1, 1, 16>}, {pipeline_mode = #tpu.pipeline_mode<synchronous>, transform_indices = @transform_2, window_bounds = array<i64: 3, 64, 256>}, {pipeline_mode = #tpu.pipeline_mode<synchronous>, transform_indices = @transform_3, window_bounds = array<i64: 1, 256>}, {pipeline_mode = #tpu.pipeline_mode<synchronous>, transform_indices = @transform_4, window_bounds = array<i64: 16, 256>}, {pipeline_mode = #tpu.pipeline_mode<synchronous>, transform_indices = @transform_5, window_bounds = array<i64: 1, 256>}, {transform_indices = @transform_6, window_bounds = array<i64: 1, 16, 256>}, {transform_indices = @transform_7, window_bounds = array<i64: 1, 1, 256>}]} {
    %c0 = arith.constant 0 : index
    %c0_0 = arith.constant 0 : index
    %c0_1 = arith.constant 0 : index
    %0 = vector.load %arg1[%c0, %c0_0, %c0_1] : memref<1x16x64xf32, #tpu.memory_space<vmem>>, vector<1x16x64xf32>
    %1 = vector.shape_cast %0 : vector<1x16x64xf32> to vector<16x64xf32>
    %c0_2 = arith.constant 0 : index
    %c0_3 = arith.constant 0 : index
    %2 = vector.load %arg4[%c0_2, %c0_3] : memref<1x256xf32, #tpu.memory_space<vmem>>, vector<1x256xf32>
    %3 = tpu.iota {dimensions = array<i32: 0>} : vector<16x16xi32>
    %4 = tpu.iota {dimensions = array<i32: 1>} : vector<16x16xi32>
    %c1_i32 = arith.constant 1 : i32
    %5 = vector.broadcast %c1_i32 : i32 to vector<16x16xi32>
    %6 = arith.subi %3, %5 : vector<16x16xi32>
    %7 = arith.cmpi eq, %4, %6 : vector<16x16xi32>
    %8 = arith.extui %7 : vector<16x16xi1> to vector<16x16xi32>
    %9 = arith.sitofp %8 : vector<16x16xi32> to vector<16x16xf32>
    %10 = arith.truncf %9 : vector<16x16xf32> to vector<16x16xbf16>
    %11 = arith.truncf %1 : vector<16x64xf32> to vector<16x64xbf16>
    %cst = arith.constant dense<0.000000e+00> : vector<16x64xf32>
    %12 = tpu.matmul %10, %11, %cst {dimension_numbers = #tpu.dot_dimension_numbers<[1], [0], [0], [1], [0, 0, 1, 1], [], []>} : vector<16x16xbf16>, vector<16x64xbf16>, vector<16x64xf32> -> vector<16x64xf32>
    %c0_4 = arith.constant 0 : index
    %c0_5 = arith.constant 0 : index
    %c0_6 = arith.constant 0 : index
    %13 = vector.load %arg3[%c0_4, %c0_5, %c0_6] : memref<3x64x256xbf16, #tpu.memory_space<vmem>>, vector<1x64x256xbf16>
    %14 = vector.shape_cast %13 : vector<1x64x256xbf16> to vector<64x256xbf16>
    %15 = arith.truncf %12 : vector<16x64xf32> to vector<16x64xbf16>
    %cst_7 = arith.constant dense<0.000000e+00> : vector<16x256xf32>
    %16 = tpu.matmul %15, %14, %cst_7 {dimension_numbers = #tpu.dot_dimension_numbers<[1], [0], [0], [1], [0, 0, 1, 1], [], []>} : vector<16x64xbf16>, vector<64x256xbf16>, vector<16x256xf32> -> vector<16x256xf32>
    %17 = vector.broadcast %2 : vector<1x256xf32> to vector<16x256xf32>
    %18 = arith.addf %17, %16 : vector<16x256xf32>
    %c1 = arith.constant 1 : index
    %c0_8 = arith.constant 0 : index
    %c0_9 = arith.constant 0 : index
    %19 = vector.load %arg3[%c1, %c0_8, %c0_9] : memref<3x64x256xbf16, #tpu.memory_space<vmem>>, vector<1x64x256xbf16>
    %20 = vector.shape_cast %19 : vector<1x64x256xbf16> to vector<64x256xbf16>
    %21 = arith.truncf %1 : vector<16x64xf32> to vector<16x64xbf16>
    %cst_10 = arith.constant dense<0.000000e+00> : vector<16x256xf32>
    %22 = tpu.matmul %21, %20, %cst_10 {dimension_numbers = #tpu.dot_dimension_numbers<[1], [0], [0], [1], [0, 0, 1, 1], [], []>} : vector<16x64xbf16>, vector<64x256xbf16>, vector<16x256xf32> -> vector<16x256xf32>
    %23 = arith.addf %18, %22 : vector<16x256xf32>
    %24 = tpu.iota {dimensions = array<i32: 0>} : vector<16x16xi32>
    %25 = tpu.iota {dimensions = array<i32: 1>} : vector<16x16xi32>
    %c-1_i32 = arith.constant -1 : i32
    %26 = vector.broadcast %c-1_i32 : i32 to vector<16x16xi32>
    %27 = arith.subi %24, %26 : vector<16x16xi32>
    %28 = arith.cmpi eq, %25, %27 : vector<16x16xi32>
    %29 = arith.extui %28 : vector<16x16xi1> to vector<16x16xi32>
    %30 = arith.sitofp %29 : vector<16x16xi32> to vector<16x16xf32>
    %31 = arith.truncf %30 : vector<16x16xf32> to vector<16x16xbf16>
    %32 = arith.truncf %1 : vector<16x64xf32> to vector<16x64xbf16>
    %cst_11 = arith.constant dense<0.000000e+00> : vector<16x64xf32>
    %33 = tpu.matmul %31, %32, %cst_11 {dimension_numbers = #tpu.dot_dimension_numbers<[1], [0], [0], [1], [0, 0, 1, 1], [], []>} : vector<16x16xbf16>, vector<16x64xbf16>, vector<16x64xf32> -> vector<16x64xf32>
    %c2 = arith.constant 2 : index
    %c0_12 = arith.constant 0 : index
    %c0_13 = arith.constant 0 : index
    %34 = vector.load %arg3[%c2, %c0_12, %c0_13] : memref<3x64x256xbf16, #tpu.memory_space<vmem>>, vector<1x64x256xbf16>
    %35 = vector.shape_cast %34 : vector<1x64x256xbf16> to vector<64x256xbf16>
    %36 = arith.truncf %33 : vector<16x64xf32> to vector<16x64xbf16>
    %cst_14 = arith.constant dense<0.000000e+00> : vector<16x256xf32>
    %37 = tpu.matmul %36, %35, %cst_14 {dimension_numbers = #tpu.dot_dimension_numbers<[1], [0], [0], [1], [0, 0, 1, 1], [], []>} : vector<16x64xbf16>, vector<64x256xbf16>, vector<16x256xf32> -> vector<16x256xf32>
    %38 = arith.addf %23, %37 : vector<16x256xf32>
    %cst_15 = arith.constant 0.000000e+00 : f32
    %39 = vector.broadcast %cst_15 : f32 to vector<16x256xf32>
    %40 = arith.maximumf %38, %39 : vector<16x256xf32>
    %c0_16 = arith.constant 0 : index
    %c0_17 = arith.constant 0 : index
    %c0_18 = arith.constant 0 : index
    %41 = vector.load %arg7[%c0_16, %c0_17, %c0_18] : memref<1x16x256xf32, #tpu.memory_space<vmem>>, vector<1x16x256xf32>
    %42 = vector.shape_cast %41 : vector<1x16x256xf32> to vector<16x256xf32>
    %43 = vector.shape_cast %40 : vector<16x256xf32> to vector<1x16x256xf32>
    tpu.vector_store %arg7[%c0_16, %c0_17, %c0_18], %43 {strides = array<i32>} : memref<1x16x256xf32, #tpu.memory_space<vmem>>, vector<1x16x256xf32>,
    %c0_19 = arith.constant 0 : index
    %c0_20 = arith.constant 0 : index
    %c0_21 = arith.constant 0 : index
    %44 = vector.load %arg2[%c0_19, %c0_20, %c0_21] : memref<1x1x16xf32, #tpu.memory_space<vmem>>, vector<1x1x16xf32>
    %45 = vector.shape_cast %44 : vector<1x1x16xf32> to vector<1x16xf32>
    %c0_22 = arith.constant 0 : index
    %c0_23 = arith.constant 0 : index
    %46 = vector.load %arg5[%c0_22, %c0_23] : memref<16x256xbf16, #tpu.memory_space<vmem>>, vector<16x256xbf16>
    %47 = arith.truncf %45 : vector<1x16xf32> to vector<1x16xbf16>
    %cst_24 = arith.constant dense<0.000000e+00> : vector<1x256xf32>
    %48 = tpu.matmul %47, %46, %cst_24 {dimension_numbers = #tpu.dot_dimension_numbers<[1], [0], [0], [1], [0, 0, 1, 1], [], []>} : vector<1x16xbf16>, vector<16x256xbf16>, vector<1x256xf32> -> vector<1x256xf32>
    %c0_25 = arith.constant 0 : index
    %c0_26 = arith.constant 0 : index
    %49 = vector.load %arg6[%c0_25, %c0_26] : memref<1x256xf32, #tpu.memory_space<vmem>>, vector<1x256xf32>
    %50 = arith.addf %48, %49 : vector<1x256xf32>
    %cst_27 = arith.constant 0.000000e+00 : f32
    %51 = vector.broadcast %cst_27 : f32 to vector<1x256xf32>
    %52 = arith.maximumf %50, %51 : vector<1x256xf32>
    %c0_28 = arith.constant 0 : index
    %c0_29 = arith.constant 0 : index
    %c0_30 = arith.constant 0 : index
    %53 = vector.load %arg8[%c0_28, %c0_29, %c0_30] : memref<1x1x256xf32, #tpu.memory_space<vmem>>, vector<1x1x256xf32>
    %54 = vector.shape_cast %53 : vector<1x1x256xf32> to vector<1x256xf32>
    %55 = vector.shape_cast %52 : vector<1x256xf32> to vector<1x1x256xf32>
    tpu.vector_store %arg8[%c0_28, %c0_29, %c0_30], %55 {strides = array<i32>} : memref<1x1x256xf32, #tpu.memory_space<vmem>>, vector<1x1x256xf32>,
    return
  }
  func.func @transform_0(%arg0: i32) -> (i32, i32, i32) {
    %c0_i32 = arith.constant 0 : i32
    %c0_i32_0 = arith.constant 0 : i32
    %c0_i32_1 = arith.constant 0 : i32
    return %arg0, %c0_i32, %c0_i32_0 : i32, i32, i32
  }
  func.func @transform_1(%arg0: i32) -> (i32, i32, i32) {
    %c0_i32 = arith.constant 0 : i32
    %c0_i32_0 = arith.constant 0 : i32
    %c0_i32_1 = arith.constant 0 : i32
    return %arg0, %c0_i32, %c0_i32_0 : i32, i32, i32
  }
  func.func @transform_2(%arg0: i32) -> (i32, i32, i32) {
    %c0_i32 = arith.constant 0 : i32
    %c0_i32_0 = arith.constant 0 : i32
    %c0_i32_1 = arith.constant 0 : i32
    %c0_i32_2 = arith.constant 0 : i32
    return %c0_i32, %c0_i32_0, %c0_i32_1 : i32, i32, i32
  }
  func.func @transform_3(%arg0: i32) -> (i32, i32) {
    %c0_i32 = arith.constant 0 : i32
    %c0_i32_0 = arith.constant 0 : i32
    %c0_i32_1 = arith.constant 0 : i32
    return %c0_i32, %c0_i32_0 : i32, i32
  }
  func.func @transform_4(%arg0: i32) -> (i32, i32) {
    %c0_i32 = arith.constant 0 : i32
    %c0_i32_0 = arith.constant 0 : i32
    %c0_i32_1 = arith.constant 0 : i32
    return %c0_i32, %c0_i32_0 : i32, i32
  }
  func.func @transform_5(%arg0: i32) -> (i32, i32) {
    %c0_i32 = arith.constant 0 : i32
    %c0_i32_0 = arith.constant 0 : i32
    %c0_i32_1 = arith.constant 0 : i32
    return %c0_i32, %c0_i32_0 : i32, i32
  }
  func.func @transform_6(%arg0: i32) -> (i32, i32, i32) {
    %c0_i32 = arith.constant 0 : i32
    %c0_i32_0 = arith.constant 0 : i32
    %c0_i32_1 = arith.constant 0 : i32
    return %arg0, %c0_i32, %c0_i32_0 : i32, i32, i32
  }
  func.func @transform_7(%arg0: i32) -> (i32, i32, i32) {
    %c0_i32 = arith.constant 0 : i32
    %c0_i32_0 = arith.constant 0 : i32
    %c0_i32_1 = arith.constant 0 : i32
    return %arg0, %c0_i32, %c0_i32_0 : i32, i32, i32
  }
}

module attributes {stable_mosaic.version = 11 : i64} {
  func.func @_ego_gcnext_kernel(%arg0: i32, %arg1: memref<2xi32, #tpu.memory_space<smem>>, %arg2: memref<1x16x256xf32, #tpu.memory_space<vmem>>, %arg3: memref<1x1x256xf32, #tpu.memory_space<vmem>>, %arg4: memref<256x128xbf16, #tpu.memory_space<vmem>>, %arg5: memref<1x128xf32, #tpu.memory_space<vmem>>, %arg6: memref<384x128xbf16, #tpu.memory_space<vmem>>, %arg7: memref<1x128xf32, #tpu.memory_space<vmem>>, %arg8: memref<128x256xbf16, #tpu.memory_space<vmem>>, %arg9: memref<1x256xf32, #tpu.memory_space<vmem>>, %arg10: memref<256x128xbf16, #tpu.memory_space<vmem>>, %arg11: memref<256x128xbf16, #tpu.memory_space<vmem>>, %arg12: memref<256x128xbf16, #tpu.memory_space<vmem>>, %arg13: memref<1x128xf32, #tpu.memory_space<vmem>>, %arg14: memref<384x128xbf16, #tpu.memory_space<vmem>>, %arg15: memref<1x128xf32, #tpu.memory_space<vmem>>, %arg16: memref<128x256xbf16, #tpu.memory_space<vmem>>, %arg17: memref<1x256xf32, #tpu.memory_space<vmem>>, %arg18: memref<1x16x256xf32, #tpu.memory_space<vmem>>) attributes {dimension_semantics = [#tpu.dimension_semantics<parallel>], iteration_bounds = array<i64: 2>, scalar_prefetch = 1 : i64, scratch_operands = 0 : i64, tpu.core_type = #tpu.core_type<tc>, window_params = [{transform_indices = @transform_0, window_bounds = array<i64: 1, 16, 256>}, {transform_indices = @transform_1, window_bounds = array<i64: 1, 1, 256>}, {pipeline_mode = #tpu.pipeline_mode<synchronous>, transform_indices = @transform_2, window_bounds = array<i64: 256, 128>}, {pipeline_mode = #tpu.pipeline_mode<synchronous>, transform_indices = @transform_3, window_bounds = array<i64: 1, 128>}, {pipeline_mode = #tpu.pipeline_mode<synchronous>, transform_indices = @transform_4, window_bounds = array<i64: 384, 128>}, {pipeline_mode = #tpu.pipeline_mode<synchronous>, transform_indices = @transform_5, window_bounds = array<i64: 1, 128>}, {pipeline_mode = #tpu.pipeline_mode<synchronous>, transform_indices = @transform_6, window_bounds = array<i64: 128, 256>}, {pipeline_mode = #tpu.pipeline_mode<synchronous>, transform_indices = @transform_7, window_bounds = array<i64: 1, 256>}, {pipeline_mode = #tpu.pipeline_mode<synchronous>, transform_indices = @transform_8, window_bounds = array<i64: 256, 128>}, {pipeline_mode = #tpu.pipeline_mode<synchronous>, transform_indices = @transform_9, window_bounds = array<i64: 256, 128>}, {pipeline_mode = #tpu.pipeline_mode<synchronous>, transform_indices = @transform_10, window_bounds = array<i64: 256, 128>}, {pipeline_mode = #tpu.pipeline_mode<synchronous>, transform_indices = @transform_11, window_bounds = array<i64: 1, 128>}, {pipeline_mode = #tpu.pipeline_mode<synchronous>, transform_indices = @transform_12, window_bounds = array<i64: 384, 128>}, {pipeline_mode = #tpu.pipeline_mode<synchronous>, transform_indices = @transform_13, window_bounds = array<i64: 1, 128>}, {pipeline_mode = #tpu.pipeline_mode<synchronous>, transform_indices = @transform_14, window_bounds = array<i64: 128, 256>}, {pipeline_mode = #tpu.pipeline_mode<synchronous>, transform_indices = @transform_15, window_bounds = array<i64: 1, 256>}, {transform_indices = @transform_16, window_bounds = array<i64: 1, 16, 256>}]} {
    %c0 = arith.constant 0 : index
    %c0_0 = arith.constant 0 : index
    %c0_1 = arith.constant 0 : index
    %0 = vector.load %arg2[%c0, %c0_0, %c0_1] : memref<1x16x256xf32, #tpu.memory_space<vmem>>, vector<1x16x256xf32>
    %1 = vector.shape_cast %0 : vector<1x16x256xf32> to vector<16x256xf32>
    %cst = arith.constant dense<0.000000e+00> : vector<16x16xf32>
    %2 = tpu.matmul %1, %1, %cst {dimension_numbers = #tpu.dot_dimension_numbers<[1], [1], [0], [0], [0, 0, 1, 0], [], []>} : vector<16x256xf32>, vector<16x256xf32>, vector<16x16xf32> -> vector<16x16xf32>
    %3 = tpu.iota {dimensions = array<i32: 0>} : vector<16x16xi32>
    %4 = tpu.iota {dimensions = array<i32: 1>} : vector<16x16xi32>
    %5 = arith.cmpi eq, %3, %4 : vector<16x16xi32>
    %cst_2 = arith.constant 0.000000e+00 : f32
    %6 = vector.broadcast %cst_2 : f32 to vector<16x16xf32>
    %7 = arith.select %5, %2, %6 : vector<16x16xi1>, vector<16x16xf32>
    %cst_3 = arith.constant dense<0.000000e+00> : vector<16xf32>
    %8 = vector.multi_reduction <add>, %7, %cst_3 [0] : vector<16x16xf32> to vector<16xf32>
    %9 = vector.shape_cast %8 : vector<16xf32> to vector<1x16xf32>
    %cst_4 = arith.constant 2.000000e+00 : f32
    %10 = vector.broadcast %cst_4 : f32 to vector<16x16xf32>
    %11 = arith.mulf %10, %2 : vector<16x16xf32>
    %12 = vector.broadcast %9 : vector<1x16xf32> to vector<16x16xf32>
    %13 = arith.subf %11, %12 : vector<16x16xf32>
    %14 = arith.index_cast %arg0 : i32 to index
    %15 = memref.load %arg1[%14] : memref<2xi32, #tpu.memory_space<smem>>
    %16 = vector.broadcast %15 : i32 to vector<16x16xi32>
    %17 = arith.cmpi slt, %4, %16 : vector<16x16xi32>
    %cst_5 = arith.constant 0xFF800000 : f32
    %18 = vector.broadcast %cst_5 : f32 to vector<16x16xf32>
    %19 = arith.select %17, %13, %18 : vector<16x16xi1>, vector<16x16xf32>
    %c0_6 = arith.constant 0 : index
    %c0_7 = arith.constant 0 : index
    %20 = vector.load %arg4[%c0_6, %c0_7] : memref<256x128xbf16, #tpu.memory_space<vmem>>, vector<256x128xbf16>
    %21 = arith.truncf %1 : vector<16x256xf32> to vector<16x256xbf16>
    %cst_8 = arith.constant dense<0.000000e+00> : vector<16x128xf32>
    %22 = tpu.matmul %21, %20, %cst_8 {dimension_numbers = #tpu.dot_dimension_numbers<[1], [0], [0], [1], [0, 0, 1, 1], [], []>} : vector<16x256xbf16>, vector<256x128xbf16>, vector<16x128xf32> -> vector<16x128xf32>
    %c0_9 = arith.constant 0 : index
    %c0_10 = arith.constant 0 : index
    %23 = vector.load %arg5[%c0_9, %c0_10] : memref<1x128xf32, #tpu.memory_space<vmem>>, vector<1x128xf32>
    %24 = vector.broadcast %23 : vector<1x128xf32> to vector<16x128xf32>
    %25 = arith.addf %22, %24 : vector<16x128xf32>
    %cst_11 = arith.constant 0.000000e+00 : f32
    %26 = vector.broadcast %cst_11 : f32 to vector<16x128xf32>
    %27 = arith.maximumf %25, %26 : vector<16x128xf32>
    %28 = tpu.iota {dimensions = array<i32: 0>} : vector<16x16xi32>
    %29 = tpu.iota {dimensions = array<i32: 1>} : vector<16x16xi32>
    %c1_i32 = arith.constant 1 : i32
    %30 = vector.broadcast %c1_i32 : i32 to vector<16x16xi32>
    %31 = arith.subi %28, %30 : vector<16x16xi32>
    %32 = arith.cmpi eq, %29, %31 : vector<16x16xi32>
    %33 = arith.extui %32 : vector<16x16xi1> to vector<16x16xi32>
    %34 = arith.sitofp %33 : vector<16x16xi32> to vector<16x16xf32>
    %35 = arith.truncf %34 : vector<16x16xf32> to vector<16x16xbf16>
    %36 = arith.truncf %27 : vector<16x128xf32> to vector<16x128xbf16>
    %cst_12 = arith.constant dense<0.000000e+00> : vector<16x128xf32>
    %37 = tpu.matmul %35, %36, %cst_12 {dimension_numbers = #tpu.dot_dimension_numbers<[1], [0], [0], [1], [0, 0, 1, 1], [], []>} : vector<16x16xbf16>, vector<16x128xbf16>, vector<16x128xf32> -> vector<16x128xf32>
    %38 = tpu.iota {dimensions = array<i32: 0>} : vector<16x16xi32>
    %39 = tpu.iota {dimensions = array<i32: 1>} : vector<16x16xi32>
    %c-1_i32 = arith.constant -1 : i32
    %40 = vector.broadcast %c-1_i32 : i32 to vector<16x16xi32>
    %41 = arith.subi %38, %40 : vector<16x16xi32>
    %42 = arith.cmpi eq, %39, %41 : vector<16x16xi32>
    %43 = arith.extui %42 : vector<16x16xi1> to vector<16x16xi32>
    %44 = arith.sitofp %43 : vector<16x16xi32> to vector<16x16xf32>
    %45 = arith.truncf %44 : vector<16x16xf32> to vector<16x16xbf16>
    %46 = arith.truncf %27 : vector<16x128xf32> to vector<16x128xbf16>
    %cst_13 = arith.constant dense<0.000000e+00> : vector<16x128xf32>
    %47 = tpu.matmul %45, %46, %cst_13 {dimension_numbers = #tpu.dot_dimension_numbers<[1], [0], [0], [1], [0, 0, 1, 1], [], []>} : vector<16x16xbf16>, vector<16x128xbf16>, vector<16x128xf32> -> vector<16x128xf32>
    %48 = tpu.concatenate %37, %27, %47 in 1 : vector<16x128xf32>, vector<16x128xf32>, vector<16x128xf32> -> vector<16x384xf32>
    %c0_14 = arith.constant 0 : index
    %c0_15 = arith.constant 0 : index
    %49 = vector.load %arg6[%c0_14, %c0_15] : memref<384x128xbf16, #tpu.memory_space<vmem>>, vector<384x128xbf16>
    %50 = arith.truncf %48 : vector<16x384xf32> to vector<16x384xbf16>
    %cst_16 = arith.constant dense<0.000000e+00> : vector<16x128xf32>
    %51 = tpu.matmul %50, %49, %cst_16 {dimension_numbers = #tpu.dot_dimension_numbers<[1], [0], [0], [1], [0, 0, 1, 1], [], []>} : vector<16x384xbf16>, vector<384x128xbf16>, vector<16x128xf32> -> vector<16x128xf32>
    %c0_17 = arith.constant 0 : index
    %c0_18 = arith.constant 0 : index
    %52 = vector.load %arg7[%c0_17, %c0_18] : memref<1x128xf32, #tpu.memory_space<vmem>>, vector<1x128xf32>
    %53 = vector.broadcast %52 : vector<1x128xf32> to vector<16x128xf32>
    %54 = arith.addf %51, %53 : vector<16x128xf32>
    %cst_19 = arith.constant 0.000000e+00 : f32
    %55 = vector.broadcast %cst_19 : f32 to vector<16x128xf32>
    %56 = arith.maximumf %54, %55 : vector<16x128xf32>
    %c0_20 = arith.constant 0 : index
    %c0_21 = arith.constant 0 : index
    %57 = vector.load %arg8[%c0_20, %c0_21] : memref<128x256xbf16, #tpu.memory_space<vmem>>, vector<128x256xbf16>
    %58 = arith.truncf %56 : vector<16x128xf32> to vector<16x128xbf16>
    %cst_22 = arith.constant dense<0.000000e+00> : vector<16x256xf32>
    %59 = tpu.matmul %58, %57, %cst_22 {dimension_numbers = #tpu.dot_dimension_numbers<[1], [0], [0], [1], [0, 0, 1, 1], [], []>} : vector<16x128xbf16>, vector<128x256xbf16>, vector<16x256xf32> -> vector<16x256xf32>
    %c0_23 = arith.constant 0 : index
    %c0_24 = arith.constant 0 : index
    %60 = vector.load %arg9[%c0_23, %c0_24] : memref<1x256xf32, #tpu.memory_space<vmem>>, vector<1x256xf32>
    %61 = vector.broadcast %60 : vector<1x256xf32> to vector<16x256xf32>
    %62 = arith.addf %59, %61 : vector<16x256xf32>
    %c0_25 = arith.constant 0 : index
    %c0_26 = arith.constant 0 : index
    %63 = vector.load %arg10[%c0_25, %c0_26] : memref<256x128xbf16, #tpu.memory_space<vmem>>, vector<256x128xbf16>
    %64 = arith.truncf %1 : vector<16x256xf32> to vector<16x256xbf16>
    %cst_27 = arith.constant dense<0.000000e+00> : vector<16x128xf32>
    %65 = tpu.matmul %64, %63, %cst_27 {dimension_numbers = #tpu.dot_dimension_numbers<[1], [0], [0], [1], [0, 0, 1, 1], [], []>} : vector<16x256xbf16>, vector<256x128xbf16>, vector<16x128xf32> -> vector<16x128xf32>
    %c0_28 = arith.constant 0 : index
    %c0_29 = arith.constant 0 : index
    %66 = vector.load %arg11[%c0_28, %c0_29] : memref<256x128xbf16, #tpu.memory_space<vmem>>, vector<256x128xbf16>
    %67 = arith.truncf %1 : vector<16x256xf32> to vector<16x256xbf16>
    %cst_30 = arith.constant dense<0.000000e+00> : vector<16x128xf32>
    %68 = tpu.matmul %67, %66, %cst_30 {dimension_numbers = #tpu.dot_dimension_numbers<[1], [0], [0], [1], [0, 0, 1, 1], [], []>} : vector<16x256xbf16>, vector<256x128xbf16>, vector<16x128xf32> -> vector<16x128xf32>
    %c0_31 = arith.constant 0 : index
    %c0_32 = arith.constant 0 : index
    %c0_33 = arith.constant 0 : index
    %69 = vector.load %arg3[%c0_31, %c0_32, %c0_33] : memref<1x1x256xf32, #tpu.memory_space<vmem>>, vector<1x1x256xf32>
    %70 = vector.shape_cast %69 : vector<1x1x256xf32> to vector<1x256xf32>
    %c0_34 = arith.constant 0 : index
    %c0_35 = arith.constant 0 : index
    %71 = vector.load %arg12[%c0_34, %c0_35] : memref<256x128xbf16, #tpu.memory_space<vmem>>, vector<256x128xbf16>
    %72 = arith.truncf %70 : vector<1x256xf32> to vector<1x256xbf16>
    %cst_36 = arith.constant dense<0.000000e+00> : vector<1x128xf32>
    %73 = tpu.matmul %72, %71, %cst_36 {dimension_numbers = #tpu.dot_dimension_numbers<[1], [0], [0], [1], [0, 0, 1, 1], [], []>} : vector<1x256xbf16>, vector<256x128xbf16>, vector<1x128xf32> -> vector<1x128xf32>
    %74 = vector.broadcast %73 : vector<1x128xf32> to vector<16x128xf32>
    %75 = arith.addf %68, %74 : vector<16x128xf32>
    %c0_37 = arith.constant 0 : index
    %c0_38 = arith.constant 0 : index
    %76 = vector.load %arg13[%c0_37, %c0_38] : memref<1x128xf32, #tpu.memory_space<vmem>>, vector<1x128xf32>
    %77 = vector.broadcast %76 : vector<1x128xf32> to vector<16x128xf32>
    %78 = arith.addf %75, %77 : vector<16x128xf32>
    %79 = arith.sitofp %4 : vector<16x16xi32> to vector<16x16xf32>
    %cst_39 = arith.constant dense<0xFF800000> : vector<16xf32>
    %80 = vector.multi_reduction <maximumf>, %19, %cst_39 [1] : vector<16x16xf32> to vector<16xf32>
    %81 = vector.shape_cast %80 : vector<16xf32> to vector<16x1xf32>
    %82 = vector.broadcast %81 : vector<16x1xf32> to vector<16x16xf32>
    %83 = arith.cmpf oeq, %19, %82 : vector<16x16xf32>
    %cst_40 = arith.constant 1.600000e+01 : f32
    %84 = vector.broadcast %cst_40 : f32 to vector<16x16xf32>
    %85 = arith.select %83, %79, %84 : vector<16x16xi1>, vector<16x16xf32>
    %cst_41 = arith.constant dense<0x7F800000> : vector<16xf32>
    %86 = vector.multi_reduction <minimumf>, %85, %cst_41 [1] : vector<16x16xf32> to vector<16xf32>
    %87 = vector.shape_cast %86 : vector<16xf32> to vector<16x1xf32>
    %88 = vector.broadcast %87 : vector<16x1xf32> to vector<16x16xf32>
    %89 = arith.cmpf oeq, %79, %88 : vector<16x16xf32>
    %cst_42 = arith.constant 0xFF800000 : f32
    %90 = vector.broadcast %cst_42 : f32 to vector<16x16xf32>
    %91 = arith.select %89, %90, %19 : vector<16x16xi1>, vector<16x16xf32>
    %92 = arith.extui %89 : vector<16x16xi1> to vector<16x16xi32>
    %93 = arith.sitofp %92 : vector<16x16xi32> to vector<16x16xf32>
    %94 = arith.truncf %93 : vector<16x16xf32> to vector<16x16xbf16>
    %95 = arith.truncf %65 : vector<16x128xf32> to vector<16x128xbf16>
    %cst_43 = arith.constant dense<0.000000e+00> : vector<16x128xf32>
    %96 = tpu.matmul %94, %95, %cst_43 {dimension_numbers = #tpu.dot_dimension_numbers<[1], [0], [0], [1], [0, 0, 1, 1], [], []>} : vector<16x16xbf16>, vector<16x128xbf16>, vector<16x128xf32> -> vector<16x128xf32>
    %97 = arith.addf %96, %78 : vector<16x128xf32>
    %cst_44 = arith.constant 0.000000e+00 : f32
    %98 = vector.broadcast %cst_44 : f32 to vector<16x128xf32>
    %99 = arith.maximumf %97, %98 : vector<16x128xf32>
    %cst_45 = arith.constant dense<0xFF800000> : vector<16xf32>
    %100 = vector.multi_reduction <maximumf>, %91, %cst_45 [1] : vector<16x16xf32> to vector<16xf32>
    %101 = vector.shape_cast %100 : vector<16xf32> to vector<16x1xf32>
    %102 = vector.broadcast %101 : vector<16x1xf32> to vector<16x16xf32>
    %103 = arith.cmpf oeq, %91, %102 : vector<16x16xf32>
    %cst_46 = arith.constant 1.600000e+01 : f32
    %104 = vector.broadcast %cst_46 : f32 to vector<16x16xf32>
    %105 = arith.select %103, %79, %104 : vector<16x16xi1>, vector<16x16xf32>
    %cst_47 = arith.constant dense<0x7F800000> : vector<16xf32>
    %106 = vector.multi_reduction <minimumf>, %105, %cst_47 [1] : vector<16x16xf32> to vector<16xf32>
    %107 = vector.shape_cast %106 : vector<16xf32> to vector<16x1xf32>
    %108 = vector.broadcast %107 : vector<16x1xf32> to vector<16x16xf32>
    %109 = arith.cmpf oeq, %79, %108 : vector<16x16xf32>
    %cst_48 = arith.constant 0xFF800000 : f32
    %110 = vector.broadcast %cst_48 : f32 to vector<16x16xf32>
    %111 = arith.select %109, %110, %91 : vector<16x16xi1>, vector<16x16xf32>
    %112 = arith.extui %109 : vector<16x16xi1> to vector<16x16xi32>
    %113 = arith.sitofp %112 : vector<16x16xi32> to vector<16x16xf32>
    %114 = arith.truncf %113 : vector<16x16xf32> to vector<16x16xbf16>
    %115 = arith.truncf %65 : vector<16x128xf32> to vector<16x128xbf16>
    %cst_49 = arith.constant dense<0.000000e+00> : vector<16x128xf32>
    %116 = tpu.matmul %114, %115, %cst_49 {dimension_numbers = #tpu.dot_dimension_numbers<[1], [0], [0], [1], [0, 0, 1, 1], [], []>} : vector<16x16xbf16>, vector<16x128xbf16>, vector<16x128xf32> -> vector<16x128xf32>
    %117 = arith.addf %116, %78 : vector<16x128xf32>
    %cst_50 = arith.constant 0.000000e+00 : f32
    %118 = vector.broadcast %cst_50 : f32 to vector<16x128xf32>
    %119 = arith.maximumf %117, %118 : vector<16x128xf32>
    %cst_51 = arith.constant dense<0xFF800000> : vector<16xf32>
    %120 = vector.multi_reduction <maximumf>, %111, %cst_51 [1] : vector<16x16xf32> to vector<16xf32>
    %121 = vector.shape_cast %120 : vector<16xf32> to vector<16x1xf32>
    %122 = vector.broadcast %121 : vector<16x1xf32> to vector<16x16xf32>
    %123 = arith.cmpf oeq, %111, %122 : vector<16x16xf32>
    %cst_52 = arith.constant 1.600000e+01 : f32
    %124 = vector.broadcast %cst_52 : f32 to vector<16x16xf32>
    %125 = arith.select %123, %79, %124 : vector<16x16xi1>, vector<16x16xf32>
    %cst_53 = arith.constant dense<0x7F800000> : vector<16xf32>
    %126 = vector.multi_reduction <minimumf>, %125, %cst_53 [1] : vector<16x16xf32> to vector<16xf32>
    %127 = vector.shape_cast %126 : vector<16xf32> to vector<16x1xf32>
    %128 = vector.broadcast %127 : vector<16x1xf32> to vector<16x16xf32>
    %129 = arith.cmpf oeq, %79, %128 : vector<16x16xf32>
    %130 = arith.extui %129 : vector<16x16xi1> to vector<16x16xi32>
    %131 = arith.sitofp %130 : vector<16x16xi32> to vector<16x16xf32>
    %132 = arith.truncf %131 : vector<16x16xf32> to vector<16x16xbf16>
    %133 = arith.truncf %65 : vector<16x128xf32> to vector<16x128xbf16>
    %cst_54 = arith.constant dense<0.000000e+00> : vector<16x128xf32>
    %134 = tpu.matmul %132, %133, %cst_54 {dimension_numbers = #tpu.dot_dimension_numbers<[1], [0], [0], [1], [0, 0, 1, 1], [], []>} : vector<16x16xbf16>, vector<16x128xbf16>, vector<16x128xf32> -> vector<16x128xf32>
    %135 = arith.addf %134, %78 : vector<16x128xf32>
    %cst_55 = arith.constant 0.000000e+00 : f32
    %136 = vector.broadcast %cst_55 : f32 to vector<16x128xf32>
    %137 = arith.maximumf %135, %136 : vector<16x128xf32>
    %138 = tpu.concatenate %99, %119, %137 in 1 : vector<16x128xf32>, vector<16x128xf32>, vector<16x128xf32> -> vector<16x384xf32>
    %c0_56 = arith.constant 0 : index
    %c0_57 = arith.constant 0 : index
    %139 = vector.load %arg14[%c0_56, %c0_57] : memref<384x128xbf16, #tpu.memory_space<vmem>>, vector<384x128xbf16>
    %140 = arith.truncf %138 : vector<16x384xf32> to vector<16x384xbf16>
    %cst_58 = arith.constant dense<0.000000e+00> : vector<16x128xf32>
    %141 = tpu.matmul %140, %139, %cst_58 {dimension_numbers = #tpu.dot_dimension_numbers<[1], [0], [0], [1], [0, 0, 1, 1], [], []>} : vector<16x384xbf16>, vector<384x128xbf16>, vector<16x128xf32> -> vector<16x128xf32>
    %c0_59 = arith.constant 0 : index
    %c0_60 = arith.constant 0 : index
    %142 = vector.load %arg15[%c0_59, %c0_60] : memref<1x128xf32, #tpu.memory_space<vmem>>, vector<1x128xf32>
    %143 = vector.broadcast %142 : vector<1x128xf32> to vector<16x128xf32>
    %144 = arith.addf %141, %143 : vector<16x128xf32>
    %cst_61 = arith.constant 0.000000e+00 : f32
    %145 = vector.broadcast %cst_61 : f32 to vector<16x128xf32>
    %146 = arith.maximumf %144, %145 : vector<16x128xf32>
    %c0_62 = arith.constant 0 : index
    %c0_63 = arith.constant 0 : index
    %147 = vector.load %arg16[%c0_62, %c0_63] : memref<128x256xbf16, #tpu.memory_space<vmem>>, vector<128x256xbf16>
    %148 = arith.truncf %146 : vector<16x128xf32> to vector<16x128xbf16>
    %cst_64 = arith.constant dense<0.000000e+00> : vector<16x256xf32>
    %149 = tpu.matmul %148, %147, %cst_64 {dimension_numbers = #tpu.dot_dimension_numbers<[1], [0], [0], [1], [0, 0, 1, 1], [], []>} : vector<16x128xbf16>, vector<128x256xbf16>, vector<16x256xf32> -> vector<16x256xf32>
    %c0_65 = arith.constant 0 : index
    %c0_66 = arith.constant 0 : index
    %150 = vector.load %arg17[%c0_65, %c0_66] : memref<1x256xf32, #tpu.memory_space<vmem>>, vector<1x256xf32>
    %151 = vector.broadcast %150 : vector<1x256xf32> to vector<16x256xf32>
    %152 = arith.addf %149, %151 : vector<16x256xf32>
    %153 = arith.addf %62, %1 : vector<16x256xf32>
    %154 = arith.addf %153, %152 : vector<16x256xf32>
    %cst_67 = arith.constant 0.000000e+00 : f32
    %155 = vector.broadcast %cst_67 : f32 to vector<16x256xf32>
    %156 = arith.maximumf %154, %155 : vector<16x256xf32>
    %c0_68 = arith.constant 0 : index
    %c0_69 = arith.constant 0 : index
    %c0_70 = arith.constant 0 : index
    %157 = vector.load %arg18[%c0_68, %c0_69, %c0_70] : memref<1x16x256xf32, #tpu.memory_space<vmem>>, vector<1x16x256xf32>
    %158 = vector.shape_cast %157 : vector<1x16x256xf32> to vector<16x256xf32>
    %159 = vector.shape_cast %156 : vector<16x256xf32> to vector<1x16x256xf32>
    tpu.vector_store %arg18[%c0_68, %c0_69, %c0_70], %159 {strides = array<i32>} : memref<1x16x256xf32, #tpu.memory_space<vmem>>, vector<1x16x256xf32>,
    return
  }
  func.func @transform_0(%arg0: i32, %arg1: memref<2xi32, #tpu.memory_space<smem>>) -> (i32, i32, i32) {
    %c0_i32 = arith.constant 0 : i32
    %c0_i32_0 = arith.constant 0 : i32
    %c0_i32_1 = arith.constant 0 : i32
    return %arg0, %c0_i32, %c0_i32_0 : i32, i32, i32
  }
  func.func @transform_1(%arg0: i32, %arg1: memref<2xi32, #tpu.memory_space<smem>>) -> (i32, i32, i32) {
    %c0_i32 = arith.constant 0 : i32
    %c0_i32_0 = arith.constant 0 : i32
    %c0_i32_1 = arith.constant 0 : i32
    return %arg0, %c0_i32, %c0_i32_0 : i32, i32, i32
  }
  func.func @transform_2(%arg0: i32, %arg1: memref<2xi32, #tpu.memory_space<smem>>) -> (i32, i32) {
    %c0_i32 = arith.constant 0 : i32
    %c0_i32_0 = arith.constant 0 : i32
    %c0_i32_1 = arith.constant 0 : i32
    return %c0_i32, %c0_i32_0 : i32, i32
  }
  func.func @transform_3(%arg0: i32, %arg1: memref<2xi32, #tpu.memory_space<smem>>) -> (i32, i32) {
    %c0_i32 = arith.constant 0 : i32
    %c0_i32_0 = arith.constant 0 : i32
    %c0_i32_1 = arith.constant 0 : i32
    return %c0_i32, %c0_i32_0 : i32, i32
  }
  func.func @transform_4(%arg0: i32, %arg1: memref<2xi32, #tpu.memory_space<smem>>) -> (i32, i32) {
    %c0_i32 = arith.constant 0 : i32
    %c0_i32_0 = arith.constant 0 : i32
    %c0_i32_1 = arith.constant 0 : i32
    return %c0_i32, %c0_i32_0 : i32, i32
  }
  func.func @transform_5(%arg0: i32, %arg1: memref<2xi32, #tpu.memory_space<smem>>) -> (i32, i32) {
    %c0_i32 = arith.constant 0 : i32
    %c0_i32_0 = arith.constant 0 : i32
    %c0_i32_1 = arith.constant 0 : i32
    return %c0_i32, %c0_i32_0 : i32, i32
  }
  func.func @transform_6(%arg0: i32, %arg1: memref<2xi32, #tpu.memory_space<smem>>) -> (i32, i32) {
    %c0_i32 = arith.constant 0 : i32
    %c0_i32_0 = arith.constant 0 : i32
    %c0_i32_1 = arith.constant 0 : i32
    return %c0_i32, %c0_i32_0 : i32, i32
  }
  func.func @transform_7(%arg0: i32, %arg1: memref<2xi32, #tpu.memory_space<smem>>) -> (i32, i32) {
    %c0_i32 = arith.constant 0 : i32
    %c0_i32_0 = arith.constant 0 : i32
    %c0_i32_1 = arith.constant 0 : i32
    return %c0_i32, %c0_i32_0 : i32, i32
  }
  func.func @transform_8(%arg0: i32, %arg1: memref<2xi32, #tpu.memory_space<smem>>) -> (i32, i32) {
    %c0_i32 = arith.constant 0 : i32
    %c0_i32_0 = arith.constant 0 : i32
    %c0_i32_1 = arith.constant 0 : i32
    return %c0_i32, %c0_i32_0 : i32, i32
  }
  func.func @transform_9(%arg0: i32, %arg1: memref<2xi32, #tpu.memory_space<smem>>) -> (i32, i32) {
    %c0_i32 = arith.constant 0 : i32
    %c0_i32_0 = arith.constant 0 : i32
    %c0_i32_1 = arith.constant 0 : i32
    return %c0_i32, %c0_i32_0 : i32, i32
  }
  func.func @transform_10(%arg0: i32, %arg1: memref<2xi32, #tpu.memory_space<smem>>) -> (i32, i32) {
    %c0_i32 = arith.constant 0 : i32
    %c0_i32_0 = arith.constant 0 : i32
    %c0_i32_1 = arith.constant 0 : i32
    return %c0_i32, %c0_i32_0 : i32, i32
  }
  func.func @transform_11(%arg0: i32, %arg1: memref<2xi32, #tpu.memory_space<smem>>) -> (i32, i32) {
    %c0_i32 = arith.constant 0 : i32
    %c0_i32_0 = arith.constant 0 : i32
    %c0_i32_1 = arith.constant 0 : i32
    return %c0_i32, %c0_i32_0 : i32, i32
  }
  func.func @transform_12(%arg0: i32, %arg1: memref<2xi32, #tpu.memory_space<smem>>) -> (i32, i32) {
    %c0_i32 = arith.constant 0 : i32
    %c0_i32_0 = arith.constant 0 : i32
    %c0_i32_1 = arith.constant 0 : i32
    return %c0_i32, %c0_i32_0 : i32, i32
  }
  func.func @transform_13(%arg0: i32, %arg1: memref<2xi32, #tpu.memory_space<smem>>) -> (i32, i32) {
    %c0_i32 = arith.constant 0 : i32
    %c0_i32_0 = arith.constant 0 : i32
    %c0_i32_1 = arith.constant 0 : i32
    return %c0_i32, %c0_i32_0 : i32, i32
  }
  func.func @transform_14(%arg0: i32, %arg1: memref<2xi32, #tpu.memory_space<smem>>) -> (i32, i32) {
    %c0_i32 = arith.constant 0 : i32
    %c0_i32_0 = arith.constant 0 : i32
    %c0_i32_1 = arith.constant 0 : i32
    return %c0_i32, %c0_i32_0 : i32, i32
  }
  func.func @transform_15(%arg0: i32, %arg1: memref<2xi32, #tpu.memory_space<smem>>) -> (i32, i32) {
    %c0_i32 = arith.constant 0 : i32
    %c0_i32_0 = arith.constant 0 : i32
    %c0_i32_1 = arith.constant 0 : i32
    return %c0_i32, %c0_i32_0 : i32, i32
  }
  func.func @transform_16(%arg0: i32, %arg1: memref<2xi32, #tpu.memory_space<smem>>) -> (i32, i32, i32) {
    %c0_i32 = arith.constant 0 : i32
    %c0_i32_0 = arith.constant 0 : i32
    %c0_i32_1 = arith.constant 0 : i32
    return %arg0, %c0_i32, %c0_i32_0 : i32, i32, i32
  }
}

module attributes {stable_mosaic.version = 11 : i64} {
  func.func @_ego_gcnext_kernel(%arg0: i32, %arg1: memref<2xi32, #tpu.memory_space<smem>>, %arg2: memref<1x16x256xf32, #tpu.memory_space<vmem>>, %arg3: memref<1x1x256xf32, #tpu.memory_space<vmem>>, %arg4: memref<256x128xbf16, #tpu.memory_space<vmem>>, %arg5: memref<1x128xf32, #tpu.memory_space<vmem>>, %arg6: memref<384x128xbf16, #tpu.memory_space<vmem>>, %arg7: memref<1x128xf32, #tpu.memory_space<vmem>>, %arg8: memref<128x256xbf16, #tpu.memory_space<vmem>>, %arg9: memref<1x256xf32, #tpu.memory_space<vmem>>, %arg10: memref<256x128xbf16, #tpu.memory_space<vmem>>, %arg11: memref<256x128xbf16, #tpu.memory_space<vmem>>, %arg12: memref<256x128xbf16, #tpu.memory_space<vmem>>, %arg13: memref<1x128xf32, #tpu.memory_space<vmem>>, %arg14: memref<384x128xbf16, #tpu.memory_space<vmem>>, %arg15: memref<1x128xf32, #tpu.memory_space<vmem>>, %arg16: memref<128x256xbf16, #tpu.memory_space<vmem>>, %arg17: memref<1x256xf32, #tpu.memory_space<vmem>>, %arg18: memref<1x16x256xf32, #tpu.memory_space<vmem>>) attributes {dimension_semantics = [#tpu.dimension_semantics<parallel>], iteration_bounds = array<i64: 2>, scalar_prefetch = 1 : i64, scratch_operands = 0 : i64, tpu.core_type = #tpu.core_type<tc>, window_params = [{transform_indices = @transform_0, window_bounds = array<i64: 1, 16, 256>}, {transform_indices = @transform_1, window_bounds = array<i64: 1, 1, 256>}, {pipeline_mode = #tpu.pipeline_mode<synchronous>, transform_indices = @transform_2, window_bounds = array<i64: 256, 128>}, {pipeline_mode = #tpu.pipeline_mode<synchronous>, transform_indices = @transform_3, window_bounds = array<i64: 1, 128>}, {pipeline_mode = #tpu.pipeline_mode<synchronous>, transform_indices = @transform_4, window_bounds = array<i64: 384, 128>}, {pipeline_mode = #tpu.pipeline_mode<synchronous>, transform_indices = @transform_5, window_bounds = array<i64: 1, 128>}, {pipeline_mode = #tpu.pipeline_mode<synchronous>, transform_indices = @transform_6, window_bounds = array<i64: 128, 256>}, {pipeline_mode = #tpu.pipeline_mode<synchronous>, transform_indices = @transform_7, window_bounds = array<i64: 1, 256>}, {pipeline_mode = #tpu.pipeline_mode<synchronous>, transform_indices = @transform_8, window_bounds = array<i64: 256, 128>}, {pipeline_mode = #tpu.pipeline_mode<synchronous>, transform_indices = @transform_9, window_bounds = array<i64: 256, 128>}, {pipeline_mode = #tpu.pipeline_mode<synchronous>, transform_indices = @transform_10, window_bounds = array<i64: 256, 128>}, {pipeline_mode = #tpu.pipeline_mode<synchronous>, transform_indices = @transform_11, window_bounds = array<i64: 1, 128>}, {pipeline_mode = #tpu.pipeline_mode<synchronous>, transform_indices = @transform_12, window_bounds = array<i64: 384, 128>}, {pipeline_mode = #tpu.pipeline_mode<synchronous>, transform_indices = @transform_13, window_bounds = array<i64: 1, 128>}, {pipeline_mode = #tpu.pipeline_mode<synchronous>, transform_indices = @transform_14, window_bounds = array<i64: 128, 256>}, {pipeline_mode = #tpu.pipeline_mode<synchronous>, transform_indices = @transform_15, window_bounds = array<i64: 1, 256>}, {transform_indices = @transform_16, window_bounds = array<i64: 1, 16, 256>}]} {
    %c0 = arith.constant 0 : index
    %c0_0 = arith.constant 0 : index
    %c0_1 = arith.constant 0 : index
    %0 = vector.load %arg2[%c0, %c0_0, %c0_1] : memref<1x16x256xf32, #tpu.memory_space<vmem>>, vector<1x16x256xf32>
    %1 = vector.shape_cast %0 : vector<1x16x256xf32> to vector<16x256xf32>
    %cst = arith.constant dense<0.000000e+00> : vector<16x16xf32>
    %2 = tpu.matmul %1, %1, %cst {dimension_numbers = #tpu.dot_dimension_numbers<[1], [1], [0], [0], [0, 0, 1, 0], [], []>} : vector<16x256xf32>, vector<16x256xf32>, vector<16x16xf32> -> vector<16x16xf32>
    %3 = tpu.iota {dimensions = array<i32: 0>} : vector<16x16xi32>
    %4 = tpu.iota {dimensions = array<i32: 1>} : vector<16x16xi32>
    %5 = arith.cmpi eq, %3, %4 : vector<16x16xi32>
    %cst_2 = arith.constant 0.000000e+00 : f32
    %6 = vector.broadcast %cst_2 : f32 to vector<16x16xf32>
    %7 = arith.select %5, %2, %6 : vector<16x16xi1>, vector<16x16xf32>
    %cst_3 = arith.constant dense<0.000000e+00> : vector<16xf32>
    %8 = vector.multi_reduction <add>, %7, %cst_3 [0] : vector<16x16xf32> to vector<16xf32>
    %9 = vector.shape_cast %8 : vector<16xf32> to vector<1x16xf32>
    %cst_4 = arith.constant 2.000000e+00 : f32
    %10 = vector.broadcast %cst_4 : f32 to vector<16x16xf32>
    %11 = arith.mulf %10, %2 : vector<16x16xf32>
    %12 = vector.broadcast %9 : vector<1x16xf32> to vector<16x16xf32>
    %13 = arith.subf %11, %12 : vector<16x16xf32>
    %14 = arith.index_cast %arg0 : i32 to index
    %15 = memref.load %arg1[%14] : memref<2xi32, #tpu.memory_space<smem>>
    %16 = vector.broadcast %15 : i32 to vector<16x16xi32>
    %17 = arith.cmpi slt, %4, %16 : vector<16x16xi32>
    %cst_5 = arith.constant 0xFF800000 : f32
    %18 = vector.broadcast %cst_5 : f32 to vector<16x16xf32>
    %19 = arith.select %17, %13, %18 : vector<16x16xi1>, vector<16x16xf32>
    %c0_6 = arith.constant 0 : index
    %c0_7 = arith.constant 0 : index
    %20 = vector.load %arg4[%c0_6, %c0_7] : memref<256x128xbf16, #tpu.memory_space<vmem>>, vector<256x128xbf16>
    %21 = arith.truncf %1 : vector<16x256xf32> to vector<16x256xbf16>
    %cst_8 = arith.constant dense<0.000000e+00> : vector<16x128xf32>
    %22 = tpu.matmul %21, %20, %cst_8 {dimension_numbers = #tpu.dot_dimension_numbers<[1], [0], [0], [1], [0, 0, 1, 1], [], []>} : vector<16x256xbf16>, vector<256x128xbf16>, vector<16x128xf32> -> vector<16x128xf32>
    %c0_9 = arith.constant 0 : index
    %c0_10 = arith.constant 0 : index
    %23 = vector.load %arg5[%c0_9, %c0_10] : memref<1x128xf32, #tpu.memory_space<vmem>>, vector<1x128xf32>
    %24 = vector.broadcast %23 : vector<1x128xf32> to vector<16x128xf32>
    %25 = arith.addf %22, %24 : vector<16x128xf32>
    %cst_11 = arith.constant 0.000000e+00 : f32
    %26 = vector.broadcast %cst_11 : f32 to vector<16x128xf32>
    %27 = arith.maximumf %25, %26 : vector<16x128xf32>
    %28 = tpu.iota {dimensions = array<i32: 0>} : vector<16x16xi32>
    %29 = tpu.iota {dimensions = array<i32: 1>} : vector<16x16xi32>
    %c1_i32 = arith.constant 1 : i32
    %30 = vector.broadcast %c1_i32 : i32 to vector<16x16xi32>
    %31 = arith.subi %28, %30 : vector<16x16xi32>
    %32 = arith.cmpi eq, %29, %31 : vector<16x16xi32>
    %33 = arith.extui %32 : vector<16x16xi1> to vector<16x16xi32>
    %34 = arith.sitofp %33 : vector<16x16xi32> to vector<16x16xf32>
    %35 = arith.truncf %34 : vector<16x16xf32> to vector<16x16xbf16>
    %36 = arith.truncf %27 : vector<16x128xf32> to vector<16x128xbf16>
    %cst_12 = arith.constant dense<0.000000e+00> : vector<16x128xf32>
    %37 = tpu.matmul %35, %36, %cst_12 {dimension_numbers = #tpu.dot_dimension_numbers<[1], [0], [0], [1], [0, 0, 1, 1], [], []>} : vector<16x16xbf16>, vector<16x128xbf16>, vector<16x128xf32> -> vector<16x128xf32>
    %38 = tpu.iota {dimensions = array<i32: 0>} : vector<16x16xi32>
    %39 = tpu.iota {dimensions = array<i32: 1>} : vector<16x16xi32>
    %c-1_i32 = arith.constant -1 : i32
    %40 = vector.broadcast %c-1_i32 : i32 to vector<16x16xi32>
    %41 = arith.subi %38, %40 : vector<16x16xi32>
    %42 = arith.cmpi eq, %39, %41 : vector<16x16xi32>
    %43 = arith.extui %42 : vector<16x16xi1> to vector<16x16xi32>
    %44 = arith.sitofp %43 : vector<16x16xi32> to vector<16x16xf32>
    %45 = arith.truncf %44 : vector<16x16xf32> to vector<16x16xbf16>
    %46 = arith.truncf %27 : vector<16x128xf32> to vector<16x128xbf16>
    %cst_13 = arith.constant dense<0.000000e+00> : vector<16x128xf32>
    %47 = tpu.matmul %45, %46, %cst_13 {dimension_numbers = #tpu.dot_dimension_numbers<[1], [0], [0], [1], [0, 0, 1, 1], [], []>} : vector<16x16xbf16>, vector<16x128xbf16>, vector<16x128xf32> -> vector<16x128xf32>
    %48 = tpu.concatenate %37, %27, %47 in 1 : vector<16x128xf32>, vector<16x128xf32>, vector<16x128xf32> -> vector<16x384xf32>
    %c0_14 = arith.constant 0 : index
    %c0_15 = arith.constant 0 : index
    %49 = vector.load %arg6[%c0_14, %c0_15] : memref<384x128xbf16, #tpu.memory_space<vmem>>, vector<384x128xbf16>
    %50 = arith.truncf %48 : vector<16x384xf32> to vector<16x384xbf16>
    %cst_16 = arith.constant dense<0.000000e+00> : vector<16x128xf32>
    %51 = tpu.matmul %50, %49, %cst_16 {dimension_numbers = #tpu.dot_dimension_numbers<[1], [0], [0], [1], [0, 0, 1, 1], [], []>} : vector<16x384xbf16>, vector<384x128xbf16>, vector<16x128xf32> -> vector<16x128xf32>
    %c0_17 = arith.constant 0 : index
    %c0_18 = arith.constant 0 : index
    %52 = vector.load %arg7[%c0_17, %c0_18] : memref<1x128xf32, #tpu.memory_space<vmem>>, vector<1x128xf32>
    %53 = vector.broadcast %52 : vector<1x128xf32> to vector<16x128xf32>
    %54 = arith.addf %51, %53 : vector<16x128xf32>
    %cst_19 = arith.constant 0.000000e+00 : f32
    %55 = vector.broadcast %cst_19 : f32 to vector<16x128xf32>
    %56 = arith.maximumf %54, %55 : vector<16x128xf32>
    %c0_20 = arith.constant 0 : index
    %c0_21 = arith.constant 0 : index
    %57 = vector.load %arg8[%c0_20, %c0_21] : memref<128x256xbf16, #tpu.memory_space<vmem>>, vector<128x256xbf16>
    %58 = arith.truncf %56 : vector<16x128xf32> to vector<16x128xbf16>
    %cst_22 = arith.constant dense<0.000000e+00> : vector<16x256xf32>
    %59 = tpu.matmul %58, %57, %cst_22 {dimension_numbers = #tpu.dot_dimension_numbers<[1], [0], [0], [1], [0, 0, 1, 1], [], []>} : vector<16x128xbf16>, vector<128x256xbf16>, vector<16x256xf32> -> vector<16x256xf32>
    %c0_23 = arith.constant 0 : index
    %c0_24 = arith.constant 0 : index
    %60 = vector.load %arg9[%c0_23, %c0_24] : memref<1x256xf32, #tpu.memory_space<vmem>>, vector<1x256xf32>
    %61 = vector.broadcast %60 : vector<1x256xf32> to vector<16x256xf32>
    %62 = arith.addf %59, %61 : vector<16x256xf32>
    %c0_25 = arith.constant 0 : index
    %c0_26 = arith.constant 0 : index
    %63 = vector.load %arg10[%c0_25, %c0_26] : memref<256x128xbf16, #tpu.memory_space<vmem>>, vector<256x128xbf16>
    %64 = arith.truncf %1 : vector<16x256xf32> to vector<16x256xbf16>
    %cst_27 = arith.constant dense<0.000000e+00> : vector<16x128xf32>
    %65 = tpu.matmul %64, %63, %cst_27 {dimension_numbers = #tpu.dot_dimension_numbers<[1], [0], [0], [1], [0, 0, 1, 1], [], []>} : vector<16x256xbf16>, vector<256x128xbf16>, vector<16x128xf32> -> vector<16x128xf32>
    %c0_28 = arith.constant 0 : index
    %c0_29 = arith.constant 0 : index
    %66 = vector.load %arg11[%c0_28, %c0_29] : memref<256x128xbf16, #tpu.memory_space<vmem>>, vector<256x128xbf16>
    %67 = arith.truncf %1 : vector<16x256xf32> to vector<16x256xbf16>
    %cst_30 = arith.constant dense<0.000000e+00> : vector<16x128xf32>
    %68 = tpu.matmul %67, %66, %cst_30 {dimension_numbers = #tpu.dot_dimension_numbers<[1], [0], [0], [1], [0, 0, 1, 1], [], []>} : vector<16x256xbf16>, vector<256x128xbf16>, vector<16x128xf32> -> vector<16x128xf32>
    %c0_31 = arith.constant 0 : index
    %c0_32 = arith.constant 0 : index
    %c0_33 = arith.constant 0 : index
    %69 = vector.load %arg3[%c0_31, %c0_32, %c0_33] : memref<1x1x256xf32, #tpu.memory_space<vmem>>, vector<1x1x256xf32>
    %70 = vector.shape_cast %69 : vector<1x1x256xf32> to vector<1x256xf32>
    %c0_34 = arith.constant 0 : index
    %c0_35 = arith.constant 0 : index
    %71 = vector.load %arg12[%c0_34, %c0_35] : memref<256x128xbf16, #tpu.memory_space<vmem>>, vector<256x128xbf16>
    %72 = arith.truncf %70 : vector<1x256xf32> to vector<1x256xbf16>
    %cst_36 = arith.constant dense<0.000000e+00> : vector<1x128xf32>
    %73 = tpu.matmul %72, %71, %cst_36 {dimension_numbers = #tpu.dot_dimension_numbers<[1], [0], [0], [1], [0, 0, 1, 1], [], []>} : vector<1x256xbf16>, vector<256x128xbf16>, vector<1x128xf32> -> vector<1x128xf32>
    %74 = vector.broadcast %73 : vector<1x128xf32> to vector<16x128xf32>
    %75 = arith.addf %68, %74 : vector<16x128xf32>
    %c0_37 = arith.constant 0 : index
    %c0_38 = arith.constant 0 : index
    %76 = vector.load %arg13[%c0_37, %c0_38] : memref<1x128xf32, #tpu.memory_space<vmem>>, vector<1x128xf32>
    %77 = vector.broadcast %76 : vector<1x128xf32> to vector<16x128xf32>
    %78 = arith.addf %75, %77 : vector<16x128xf32>
    %79 = arith.sitofp %4 : vector<16x16xi32> to vector<16x16xf32>
    %cst_39 = arith.constant dense<0xFF800000> : vector<16xf32>
    %80 = vector.multi_reduction <maximumf>, %19, %cst_39 [1] : vector<16x16xf32> to vector<16xf32>
    %81 = vector.shape_cast %80 : vector<16xf32> to vector<16x1xf32>
    %82 = vector.broadcast %81 : vector<16x1xf32> to vector<16x16xf32>
    %83 = arith.cmpf oeq, %19, %82 : vector<16x16xf32>
    %cst_40 = arith.constant 1.600000e+01 : f32
    %84 = vector.broadcast %cst_40 : f32 to vector<16x16xf32>
    %85 = arith.select %83, %79, %84 : vector<16x16xi1>, vector<16x16xf32>
    %cst_41 = arith.constant dense<0x7F800000> : vector<16xf32>
    %86 = vector.multi_reduction <minimumf>, %85, %cst_41 [1] : vector<16x16xf32> to vector<16xf32>
    %87 = vector.shape_cast %86 : vector<16xf32> to vector<16x1xf32>
    %88 = vector.broadcast %87 : vector<16x1xf32> to vector<16x16xf32>
    %89 = arith.cmpf oeq, %79, %88 : vector<16x16xf32>
    %cst_42 = arith.constant 0xFF800000 : f32
    %90 = vector.broadcast %cst_42 : f32 to vector<16x16xf32>
    %91 = arith.select %89, %90, %19 : vector<16x16xi1>, vector<16x16xf32>
    %92 = arith.extui %89 : vector<16x16xi1> to vector<16x16xi32>
    %93 = arith.sitofp %92 : vector<16x16xi32> to vector<16x16xf32>
    %94 = arith.truncf %93 : vector<16x16xf32> to vector<16x16xbf16>
    %95 = arith.truncf %65 : vector<16x128xf32> to vector<16x128xbf16>
    %cst_43 = arith.constant dense<0.000000e+00> : vector<16x128xf32>
    %96 = tpu.matmul %94, %95, %cst_43 {dimension_numbers = #tpu.dot_dimension_numbers<[1], [0], [0], [1], [0, 0, 1, 1], [], []>} : vector<16x16xbf16>, vector<16x128xbf16>, vector<16x128xf32> -> vector<16x128xf32>
    %97 = arith.addf %96, %78 : vector<16x128xf32>
    %cst_44 = arith.constant 0.000000e+00 : f32
    %98 = vector.broadcast %cst_44 : f32 to vector<16x128xf32>
    %99 = arith.maximumf %97, %98 : vector<16x128xf32>
    %cst_45 = arith.constant dense<0xFF800000> : vector<16xf32>
    %100 = vector.multi_reduction <maximumf>, %91, %cst_45 [1] : vector<16x16xf32> to vector<16xf32>
    %101 = vector.shape_cast %100 : vector<16xf32> to vector<16x1xf32>
    %102 = vector.broadcast %101 : vector<16x1xf32> to vector<16x16xf32>
    %103 = arith.cmpf oeq, %91, %102 : vector<16x16xf32>
    %cst_46 = arith.constant 1.600000e+01 : f32
    %104 = vector.broadcast %cst_46 : f32 to vector<16x16xf32>
    %105 = arith.select %103, %79, %104 : vector<16x16xi1>, vector<16x16xf32>
    %cst_47 = arith.constant dense<0x7F800000> : vector<16xf32>
    %106 = vector.multi_reduction <minimumf>, %105, %cst_47 [1] : vector<16x16xf32> to vector<16xf32>
    %107 = vector.shape_cast %106 : vector<16xf32> to vector<16x1xf32>
    %108 = vector.broadcast %107 : vector<16x1xf32> to vector<16x16xf32>
    %109 = arith.cmpf oeq, %79, %108 : vector<16x16xf32>
    %cst_48 = arith.constant 0xFF800000 : f32
    %110 = vector.broadcast %cst_48 : f32 to vector<16x16xf32>
    %111 = arith.select %109, %110, %91 : vector<16x16xi1>, vector<16x16xf32>
    %112 = arith.extui %109 : vector<16x16xi1> to vector<16x16xi32>
    %113 = arith.sitofp %112 : vector<16x16xi32> to vector<16x16xf32>
    %114 = arith.truncf %113 : vector<16x16xf32> to vector<16x16xbf16>
    %115 = arith.truncf %65 : vector<16x128xf32> to vector<16x128xbf16>
    %cst_49 = arith.constant dense<0.000000e+00> : vector<16x128xf32>
    %116 = tpu.matmul %114, %115, %cst_49 {dimension_numbers = #tpu.dot_dimension_numbers<[1], [0], [0], [1], [0, 0, 1, 1], [], []>} : vector<16x16xbf16>, vector<16x128xbf16>, vector<16x128xf32> -> vector<16x128xf32>
    %117 = arith.addf %116, %78 : vector<16x128xf32>
    %cst_50 = arith.constant 0.000000e+00 : f32
    %118 = vector.broadcast %cst_50 : f32 to vector<16x128xf32>
    %119 = arith.maximumf %117, %118 : vector<16x128xf32>
    %cst_51 = arith.constant dense<0xFF800000> : vector<16xf32>
    %120 = vector.multi_reduction <maximumf>, %111, %cst_51 [1] : vector<16x16xf32> to vector<16xf32>
    %121 = vector.shape_cast %120 : vector<16xf32> to vector<16x1xf32>
    %122 = vector.broadcast %121 : vector<16x1xf32> to vector<16x16xf32>
    %123 = arith.cmpf oeq, %111, %122 : vector<16x16xf32>
    %cst_52 = arith.constant 1.600000e+01 : f32
    %124 = vector.broadcast %cst_52 : f32 to vector<16x16xf32>
    %125 = arith.select %123, %79, %124 : vector<16x16xi1>, vector<16x16xf32>
    %cst_53 = arith.constant dense<0x7F800000> : vector<16xf32>
    %126 = vector.multi_reduction <minimumf>, %125, %cst_53 [1] : vector<16x16xf32> to vector<16xf32>
    %127 = vector.shape_cast %126 : vector<16xf32> to vector<16x1xf32>
    %128 = vector.broadcast %127 : vector<16x1xf32> to vector<16x16xf32>
    %129 = arith.cmpf oeq, %79, %128 : vector<16x16xf32>
    %130 = arith.extui %129 : vector<16x16xi1> to vector<16x16xi32>
    %131 = arith.sitofp %130 : vector<16x16xi32> to vector<16x16xf32>
    %132 = arith.truncf %131 : vector<16x16xf32> to vector<16x16xbf16>
    %133 = arith.truncf %65 : vector<16x128xf32> to vector<16x128xbf16>
    %cst_54 = arith.constant dense<0.000000e+00> : vector<16x128xf32>
    %134 = tpu.matmul %132, %133, %cst_54 {dimension_numbers = #tpu.dot_dimension_numbers<[1], [0], [0], [1], [0, 0, 1, 1], [], []>} : vector<16x16xbf16>, vector<16x128xbf16>, vector<16x128xf32> -> vector<16x128xf32>
    %135 = arith.addf %134, %78 : vector<16x128xf32>
    %cst_55 = arith.constant 0.000000e+00 : f32
    %136 = vector.broadcast %cst_55 : f32 to vector<16x128xf32>
    %137 = arith.maximumf %135, %136 : vector<16x128xf32>
    %138 = tpu.concatenate %99, %119, %137 in 1 : vector<16x128xf32>, vector<16x128xf32>, vector<16x128xf32> -> vector<16x384xf32>
    %c0_56 = arith.constant 0 : index
    %c0_57 = arith.constant 0 : index
    %139 = vector.load %arg14[%c0_56, %c0_57] : memref<384x128xbf16, #tpu.memory_space<vmem>>, vector<384x128xbf16>
    %140 = arith.truncf %138 : vector<16x384xf32> to vector<16x384xbf16>
    %cst_58 = arith.constant dense<0.000000e+00> : vector<16x128xf32>
    %141 = tpu.matmul %140, %139, %cst_58 {dimension_numbers = #tpu.dot_dimension_numbers<[1], [0], [0], [1], [0, 0, 1, 1], [], []>} : vector<16x384xbf16>, vector<384x128xbf16>, vector<16x128xf32> -> vector<16x128xf32>
    %c0_59 = arith.constant 0 : index
    %c0_60 = arith.constant 0 : index
    %142 = vector.load %arg15[%c0_59, %c0_60] : memref<1x128xf32, #tpu.memory_space<vmem>>, vector<1x128xf32>
    %143 = vector.broadcast %142 : vector<1x128xf32> to vector<16x128xf32>
    %144 = arith.addf %141, %143 : vector<16x128xf32>
    %cst_61 = arith.constant 0.000000e+00 : f32
    %145 = vector.broadcast %cst_61 : f32 to vector<16x128xf32>
    %146 = arith.maximumf %144, %145 : vector<16x128xf32>
    %c0_62 = arith.constant 0 : index
    %c0_63 = arith.constant 0 : index
    %147 = vector.load %arg16[%c0_62, %c0_63] : memref<128x256xbf16, #tpu.memory_space<vmem>>, vector<128x256xbf16>
    %148 = arith.truncf %146 : vector<16x128xf32> to vector<16x128xbf16>
    %cst_64 = arith.constant dense<0.000000e+00> : vector<16x256xf32>
    %149 = tpu.matmul %148, %147, %cst_64 {dimension_numbers = #tpu.dot_dimension_numbers<[1], [0], [0], [1], [0, 0, 1, 1], [], []>} : vector<16x128xbf16>, vector<128x256xbf16>, vector<16x256xf32> -> vector<16x256xf32>
    %c0_65 = arith.constant 0 : index
    %c0_66 = arith.constant 0 : index
    %150 = vector.load %arg17[%c0_65, %c0_66] : memref<1x256xf32, #tpu.memory_space<vmem>>, vector<1x256xf32>
    %151 = vector.broadcast %150 : vector<1x256xf32> to vector<16x256xf32>
    %152 = arith.addf %149, %151 : vector<16x256xf32>
    %153 = arith.addf %62, %1 : vector<16x256xf32>
    %154 = arith.addf %153, %152 : vector<16x256xf32>
    %cst_67 = arith.constant 0.000000e+00 : f32
    %155 = vector.broadcast %cst_67 : f32 to vector<16x256xf32>
    %156 = arith.maximumf %154, %155 : vector<16x256xf32>
    %c0_68 = arith.constant 0 : index
    %c0_69 = arith.constant 0 : index
    %c0_70 = arith.constant 0 : index
    %157 = vector.load %arg18[%c0_68, %c0_69, %c0_70] : memref<1x16x256xf32, #tpu.memory_space<vmem>>, vector<1x16x256xf32>
    %158 = vector.shape_cast %157 : vector<1x16x256xf32> to vector<16x256xf32>
    %159 = vector.shape_cast %156 : vector<16x256xf32> to vector<1x16x256xf32>
    tpu.vector_store %arg18[%c0_68, %c0_69, %c0_70], %159 {strides = array<i32>} : memref<1x16x256xf32, #tpu.memory_space<vmem>>, vector<1x16x256xf32>,
    return
  }
  func.func @transform_0(%arg0: i32, %arg1: memref<2xi32, #tpu.memory_space<smem>>) -> (i32, i32, i32) {
    %c0_i32 = arith.constant 0 : i32
    %c0_i32_0 = arith.constant 0 : i32
    %c0_i32_1 = arith.constant 0 : i32
    return %arg0, %c0_i32, %c0_i32_0 : i32, i32, i32
  }
  func.func @transform_1(%arg0: i32, %arg1: memref<2xi32, #tpu.memory_space<smem>>) -> (i32, i32, i32) {
    %c0_i32 = arith.constant 0 : i32
    %c0_i32_0 = arith.constant 0 : i32
    %c0_i32_1 = arith.constant 0 : i32
    return %arg0, %c0_i32, %c0_i32_0 : i32, i32, i32
  }
  func.func @transform_2(%arg0: i32, %arg1: memref<2xi32, #tpu.memory_space<smem>>) -> (i32, i32) {
    %c0_i32 = arith.constant 0 : i32
    %c0_i32_0 = arith.constant 0 : i32
    %c0_i32_1 = arith.constant 0 : i32
    return %c0_i32, %c0_i32_0 : i32, i32
  }
  func.func @transform_3(%arg0: i32, %arg1: memref<2xi32, #tpu.memory_space<smem>>) -> (i32, i32) {
    %c0_i32 = arith.constant 0 : i32
    %c0_i32_0 = arith.constant 0 : i32
    %c0_i32_1 = arith.constant 0 : i32
    return %c0_i32, %c0_i32_0 : i32, i32
  }
  func.func @transform_4(%arg0: i32, %arg1: memref<2xi32, #tpu.memory_space<smem>>) -> (i32, i32) {
    %c0_i32 = arith.constant 0 : i32
    %c0_i32_0 = arith.constant 0 : i32
    %c0_i32_1 = arith.constant 0 : i32
    return %c0_i32, %c0_i32_0 : i32, i32
  }
  func.func @transform_5(%arg0: i32, %arg1: memref<2xi32, #tpu.memory_space<smem>>) -> (i32, i32) {
    %c0_i32 = arith.constant 0 : i32
    %c0_i32_0 = arith.constant 0 : i32
    %c0_i32_1 = arith.constant 0 : i32
    return %c0_i32, %c0_i32_0 : i32, i32
  }
  func.func @transform_6(%arg0: i32, %arg1: memref<2xi32, #tpu.memory_space<smem>>) -> (i32, i32) {
    %c0_i32 = arith.constant 0 : i32
    %c0_i32_0 = arith.constant 0 : i32
    %c0_i32_1 = arith.constant 0 : i32
    return %c0_i32, %c0_i32_0 : i32, i32
  }
  func.func @transform_7(%arg0: i32, %arg1: memref<2xi32, #tpu.memory_space<smem>>) -> (i32, i32) {
    %c0_i32 = arith.constant 0 : i32
    %c0_i32_0 = arith.constant 0 : i32
    %c0_i32_1 = arith.constant 0 : i32
    return %c0_i32, %c0_i32_0 : i32, i32
  }
  func.func @transform_8(%arg0: i32, %arg1: memref<2xi32, #tpu.memory_space<smem>>) -> (i32, i32) {
    %c0_i32 = arith.constant 0 : i32
    %c0_i32_0 = arith.constant 0 : i32
    %c0_i32_1 = arith.constant 0 : i32
    return %c0_i32, %c0_i32_0 : i32, i32
  }
  func.func @transform_9(%arg0: i32, %arg1: memref<2xi32, #tpu.memory_space<smem>>) -> (i32, i32) {
    %c0_i32 = arith.constant 0 : i32
    %c0_i32_0 = arith.constant 0 : i32
    %c0_i32_1 = arith.constant 0 : i32
    return %c0_i32, %c0_i32_0 : i32, i32
  }
  func.func @transform_10(%arg0: i32, %arg1: memref<2xi32, #tpu.memory_space<smem>>) -> (i32, i32) {
    %c0_i32 = arith.constant 0 : i32
    %c0_i32_0 = arith.constant 0 : i32
    %c0_i32_1 = arith.constant 0 : i32
    return %c0_i32, %c0_i32_0 : i32, i32
  }
  func.func @transform_11(%arg0: i32, %arg1: memref<2xi32, #tpu.memory_space<smem>>) -> (i32, i32) {
    %c0_i32 = arith.constant 0 : i32
    %c0_i32_0 = arith.constant 0 : i32
    %c0_i32_1 = arith.constant 0 : i32
    return %c0_i32, %c0_i32_0 : i32, i32
  }
  func.func @transform_12(%arg0: i32, %arg1: memref<2xi32, #tpu.memory_space<smem>>) -> (i32, i32) {
    %c0_i32 = arith.constant 0 : i32
    %c0_i32_0 = arith.constant 0 : i32
    %c0_i32_1 = arith.constant 0 : i32
    return %c0_i32, %c0_i32_0 : i32, i32
  }
  func.func @transform_13(%arg0: i32, %arg1: memref<2xi32, #tpu.memory_space<smem>>) -> (i32, i32) {
    %c0_i32 = arith.constant 0 : i32
    %c0_i32_0 = arith.constant 0 : i32
    %c0_i32_1 = arith.constant 0 : i32
    return %c0_i32, %c0_i32_0 : i32, i32
  }
  func.func @transform_14(%arg0: i32, %arg1: memref<2xi32, #tpu.memory_space<smem>>) -> (i32, i32) {
    %c0_i32 = arith.constant 0 : i32
    %c0_i32_0 = arith.constant 0 : i32
    %c0_i32_1 = arith.constant 0 : i32
    return %c0_i32, %c0_i32_0 : i32, i32
  }
  func.func @transform_15(%arg0: i32, %arg1: memref<2xi32, #tpu.memory_space<smem>>) -> (i32, i32) {
    %c0_i32 = arith.constant 0 : i32
    %c0_i32_0 = arith.constant 0 : i32
    %c0_i32_1 = arith.constant 0 : i32
    return %c0_i32, %c0_i32_0 : i32, i32
  }
  func.func @transform_16(%arg0: i32, %arg1: memref<2xi32, #tpu.memory_space<smem>>) -> (i32, i32, i32) {
    %c0_i32 = arith.constant 0 : i32
    %c0_i32_0 = arith.constant 0 : i32
    %c0_i32_1 = arith.constant 0 : i32
    return %arg0, %c0_i32, %c0_i32_0 : i32, i32, i32
  }
}

</mosaic_0001>

<llo_original>
// kernel: snippet_topic_gcn.3
$region0: #{snippet_topic_gcn.3}
  #allocation0 [shape = 'u32[]', space=smem, size = 0x4, offset = 0x4, fixed_abs, tag = 'smem constant byte address 0x4 - core index']
  #allocation1 [shape = 'u32[144,128]{1,0:T(1,128)}', space=vmem, size = 0x12000, scoped, tag = 'internal scratch']
  %s0 = inlined_call_operand.vmem [shape: f32[2,16,64], index: 0, kind: input, shape index: {}]
  %s1 = inlined_call_operand.vmem [shape: f32[2,1,16], index: 1, kind: input, shape index: {}]
  %s2 = inlined_call_operand.hbm [shape: bf16[3,64,256], index: 2, kind: input, shape index: {}]
  %s3 = inlined_call_operand.hbm [shape: f32[1,256], index: 3, kind: input, shape index: {}]
  %s4 = inlined_call_operand.hbm [shape: bf16[16,256], index: 4, kind: input, shape index: {}]
  %s5 = inlined_call_operand.hbm [shape: f32[1,256], index: 5, kind: input, shape index: {}]
  %s6 = inlined_call_operand.vmem [shape: f32[2,16,256], index: 6, kind: output, shape index: {0}]
  %s7 = inlined_call_operand.vmem [shape: f32[2,1,256], index: 7, kind: output, shape index: {1}]
  %8 = xla_tuple %s6, %s7
  %s9 = sld [smem:[#allocation0]]
  $region81: #{snippet_topic_gcn.3} parent=0
    _
  %s11 = ssub.s32 1, %s9
  %s12 = scalar_select 0, %s11, %s9
  $region1: #{snippet_topic_gcn.3} parent=0
    #allocation2 [shape = 'u8[98304]{0}', space=vmem, size = 0x18000, scoped, tag = 'input window, operand 2, single buffered']
    #allocation3 [shape = 's32[2]{0}', space=sflag, size = 0x8, scoped, tag = 'scoped memory for snippet_topic_gcn.3']
    #allocation4 [shape = 'u8[1024]{0}', space=vmem, size = 0x400, scoped, tag = 'input window, operand 3, single buffered']
    #allocation5 [shape = 's32[1]{0}', space=sflag, size = 0x4, scoped, tag = 'scoped memory for snippet_topic_gcn.3']
    #allocation6 [shape = 'u8[8192]{0}', space=vmem, size = 0x2000, scoped, tag = 'input window, operand 4, single buffered']
    #allocation7 [shape = 'u8[1024]{0}', space=vmem, size = 0x400, scoped, tag = 'input window, operand 5, single buffered']
    #allocation8 [shape = 's32[1]{0}', space=sflag, size = 0x4, scoped, tag = 'scoped memory for snippet_topic_gcn.3']
    %13 = vsyncpa [#allocation3], 0
    %14 = vsyncpa [#allocation5], 0
    %15 = vsyncpa [#allocation8], 0
    loop: start=0, step=1, limit=4
    $region2: #{snippet_topic_gcn.3} parent=1 // loop_pre_header
      _
    $region3: #{snippet_topic_gcn.3} parent=1 // loop_header
      %s17 = sphi 0, %s21
      %p18 = scmp.ge.s32.totalorder %s17, 4
      %s27 = sphi 0, %s29
      %s30 = sphi 0, %s27
      %s31 = sphi 0, %s30
      %s47 = sphi 0, %s31
      %s53 = sphi 0, %s55
      %s56 = sphi 0, %s53
      %s57 = sphi 0, %s56
      %s73 = sphi 0, %s57
      %s77 = sphi 0, %s77
      %s79 = sphi 0, %s77
      %s80 = sphi 0, %s79
      %s94 = sphi 0, %s80
      %s98 = sphi 0, %s98
      %s100 = sphi 0, %s98
      %s101 = sphi 0, %s100
      %s115 = sphi 0, %s101
      %s119 = sphi 0, %s119
      %s121 = sphi 0, %s119
      %s122 = sphi 0, %s121
      %s136 = sphi 0, %s122
      %s140 = sphi 0, %s140
      %s142 = sphi 0, %s140
      %s143 = sphi 0, %s142
      %s157 = sphi 0, %s143
      %s163 = sphi 0, %s165
      %s166 = sphi 0, %s163
      %s167 = sphi 0, %s166
      %s183 = sphi 0, %s167
      %s189 = sphi 0, %s191
      %s192 = sphi 0, %s189
      %s193 = sphi 0, %s192
      %s209 = sphi 0, %s193
    $region4: #{snippet_topic_gcn.3} parent=1 // loop_header_branch
      %20 = sbr.rel (%p18) target = $region8
    $region5: #{snippet_topic_gcn.3} parent=1 // loop_body
      %s22 = ssub.s32 %s17, 1
      %s23 = ssub.s32 %s17, 2
      %s24 = sadd.s32 %s17, 1
      %s25 = ssub.s32 %s17, %s24
      %p26 = scmp.eq.s32.totalorder %s25, 0
      %s28 = sadd.s32 %s27, 1
      %s29 = scalar_select %p26, %s27, %s28
      %p32 = pneg %p26
      %p33 = scmp.eq.s32.totalorder %s17, 1
      %p34 = por %p32, %p33
      %p35 = scmp.ne.s32.totalorder %s27, %s30
      %p36 = scmp.eq.s32.totalorder %s17, 0
      %p37 = por %p35, %p36
      %p38 = scmp.ne.s32.totalorder %s27, %s30
      %p39 = scmp.eq.s32.totalorder %s22, 1
      %p40 = por %p38, %p39
      %p41 = scmp.ne.s32.totalorder %s30, %s31
      %p42 = scmp.eq.s32.totalorder %s22, 0
      %p43 = por %p41, %p42
      %p44 = scmp.ne.s32.totalorder %s30, %s31
      %p45 = scmp.eq.s32.totalorder %s23, 1
      %p46 = por %p44, %p45
      %p48 = scmp.ne.s32.totalorder %s31, %s47
      %p49 = scmp.eq.s32.totalorder %s23, 0
      %p50 = por %p48, %p49
      %s51 = ssub.s32 %s17, %s24
      %p52 = scmp.eq.s32.totalorder %s51, 0
      %s54 = sadd.s32 %s53, 1
      %s55 = scalar_select %p52, %s53, %s54
      %p58 = pneg %p52
      %p59 = scmp.eq.s32.totalorder %s17, 1
      %p60 = por %p58, %p59
      %p61 = scmp.ne.s32.totalorder %s53, %s56
      %p62 = scmp.eq.s32.totalorder %s17, 0
      %p63 = por %p61, %p62
      %p64 = scmp.ne.s32.totalorder %s53, %s56
      %p65 = scmp.eq.s32.totalorder %s22, 1
      %p66 = por %p64, %p65
      %p67 = scmp.ne.s32.totalorder %s56, %s57
      %p68 = scmp.eq.s32.totalorder %s22, 0
      %p69 = por %p67, %p68
      %p70 = scmp.ne.s32.totalorder %s56, %s57
      %p71 = scmp.eq.s32.totalorder %s23, 1
      %p72 = por %p70, %p71
      %p74 = scmp.ne.s32.totalorder %s57, %s73
      %p75 = scmp.eq.s32.totalorder %s23, 0
      %p76 = por %p74, %p75
      %s78 = sadd.s32 %s77, 1
      %p81 = scmp.eq.s32.totalorder %s17, 1
      %p82 = scmp.ne.s32.totalorder %s77, %s79
      %p83 = scmp.eq.s32.totalorder %s17, 0
      %p84 = por %p82, %p83
      %p85 = scmp.ne.s32.totalorder %s77, %s79
      %p86 = scmp.eq.s32.totalorder %s22, 1
      %p87 = por %p85, %p86
      %p88 = scmp.ne.s32.totalorder %s79, %s80
      %p89 = scmp.eq.s32.totalorder %s22, 0
      %p90 = por %p88, %p89
      %p91 = scmp.ne.s32.totalorder %s79, %s80
      %p92 = scmp.eq.s32.totalorder %s23, 1
      %p93 = por %p91, %p92
      %p95 = scmp.ne.s32.totalorder %s80, %s94
      %p96 = scmp.eq.s32.totalorder %s23, 0
      %p97 = por %p95, %p96
      %s99 = sadd.s32 %s98, 1
      %p102 = scmp.eq.s32.totalorder %s17, 1
      %p103 = scmp.ne.s32.totalorder %s98, %s100
      %p104 = scmp.eq.s32.totalorder %s17, 0
      %p105 = por %p103, %p104
      %p106 = scmp.ne.s32.totalorder %s98, %s100
      %p107 = scmp.eq.s32.totalorder %s22, 1
      %p108 = por %p106, %p107
      %p109 = scmp.ne.s32.totalorder %s100, %s101
      %p110 = scmp.eq.s32.totalorder %s22, 0
      %p111 = por %p109, %p110
      %p112 = scmp.ne.s32.totalorder %s100, %s101
      %p113 = scmp.eq.s32.totalorder %s23, 1
      %p114 = por %p112, %p113
      %p116 = scmp.ne.s32.totalorder %s101, %s115
      %p117 = scmp.eq.s32.totalorder %s23, 0
      %p118 = por %p116, %p117
      %s120 = sadd.s32 %s119, 1
      %p123 = scmp.eq.s32.totalorder %s17, 1
      %p124 = scmp.ne.s32.totalorder %s119, %s121
      %p125 = scmp.eq.s32.totalorder %s17, 0
      %p126 = por %p124, %p125
      %p127 = scmp.ne.s32.totalorder %s119, %s121
      %p128 = scmp.eq.s32.totalorder %s22, 1
      %p129 = por %p127, %p128
      %p130 = scmp.ne.s32.totalorder %s121, %s122
      %p131 = scmp.eq.s32.totalorder %s22, 0
      %p132 = por %p130, %p131
      %p133 = scmp.ne.s32.totalorder %s121, %s122
      %p134 = scmp.eq.s32.totalorder %s23, 1
      %p135 = por %p133, %p134
      %p137 = scmp.ne.s32.totalorder %s122, %s136
      %p138 = scmp.eq.s32.totalorder %s23, 0
      %p139 = por %p137, %p138
      %s141 = sadd.s32 %s140, 1
      %p144 = scmp.eq.s32.totalorder %s17, 1
      %p145 = scmp.ne.s32.totalorder %s140, %s142
      %p146 = scmp.eq.s32.totalorder %s17, 0
      %p147 = por %p145, %p146
      %p148 = scmp.ne.s32.totalorder %s140, %s142
      %p149 = scmp.eq.s32.totalorder %s22, 1
      %p150 = por %p148, %p149
      %p151 = scmp.ne.s32.totalorder %s142, %s143
      %p152 = scmp.eq.s32.totalorder %s22, 0
      %p153 = por %p151, %p152
      %p154 = scmp.ne.s32.totalorder %s142, %s143
      %p155 = scmp.eq.s32.totalorder %s23, 1
      %p156 = por %p154, %p155
      %p158 = scmp.ne.s32.totalorder %s143, %s157
      %p159 = scmp.eq.s32.totalorder %s23, 0
      %p160 = por %p158, %p159
      %s161 = ssub.s32 %s17, %s24
      %p162 = scmp.eq.s32.totalorder %s161, 0
      %s164 = sadd.s32 %s163, 1
      %s165 = scalar_select %p162, %s163, %s164
      %p168 = pneg %p162
      %p169 = scmp.eq.s32.totalorder %s17, 1
      %p170 = por %p168, %p169
      %p171 = scmp.ne.s32.totalorder %s163, %s166
      %p172 = scmp.eq.s32.totalorder %s17, 0
      %p173 = por %p171, %p172
      %p174 = scmp.ne.s32.totalorder %s163, %s166
      %p175 = scmp.eq.s32.totalorder %s22, 1
      %p176 = por %p174, %p175
      %p177 = scmp.ne.s32.totalorder %s166, %s167
      %p178 = scmp.eq.s32.totalorder %s22, 0
      %p179 = por %p177, %p178
      %p180 = scmp.ne.s32.totalorder %s166, %s167
      %p181 = scmp.eq.s32.totalorder %s23, 1
      %p182 = por %p180, %p181
      %p184 = scmp.ne.s32.totalorder %s167, %s183
      %p185 = scmp.eq.s32.totalorder %s23, 0
      %p186 = por %p184, %p185
      %s187 = ssub.s32 %s17, %s24
      %p188 = scmp.eq.s32.totalorder %s187, 0
      %s190 = sadd.s32 %s189, 1
      %s191 = scalar_select %p188, %s189, %s190
      %p194 = pneg %p188
      %p195 = scmp.eq.s32.totalorder %s17, 1
      %p196 = por %p194, %p195
      %p197 = scmp.ne.s32.totalorder %s189, %s192
      %p198 = scmp.eq.s32.totalorder %s17, 0
      %p199 = por %p197, %p198
      %p200 = scmp.ne.s32.totalorder %s189, %s192
      %p201 = scmp.eq.s32.totalorder %s22, 1
      %p202 = por %p200, %p201
      %p203 = scmp.ne.s32.totalorder %s192, %s193
      %p204 = scmp.eq.s32.totalorder %s22, 0
      %p205 = por %p203, %p204
      %p206 = scmp.ne.s32.totalorder %s192, %s193
      %p207 = scmp.eq.s32.totalorder %s23, 1
      %p208 = por %p206, %p207
      %p210 = scmp.ne.s32.totalorder %s193, %s209
      %p211 = scmp.eq.s32.totalorder %s23, 0
      %p212 = por %p210, %p211
      %p213 = scmp.le.s32.totalorder 1, %s17
      %p214 = scmp.lt.s32.totalorder %s17, 3
      %p215 = pnand %p213, %p214
      %p216 = pneg %p215
      // Predicated region
      $region9: #{snippet_topic_gcn.3} parent=5 // pred_check
        _
      $region10: #{snippet_topic_gcn.3} parent=5 // pred_check_branch
        %218 = sbr.rel (%p215) target = $region12
      $region11: #{snippet_topic_gcn.3} parent=5 // pred_region
        %s219 = ssub.s32 %s17, 1
        // Predicated region
        $region13: #{snippet_topic_gcn.3} parent=11 // pred_check
          %p220 = pneg %p90
        $region14: #{snippet_topic_gcn.3} parent=11 // pred_check_branch
          %222 = sbr.rel (%p220) target = $region16
        $region15: #{snippet_topic_gcn.3} parent=11 // pred_region
          %s224 = ssub.s32 3072, 3072
          %225 = vsyncadd [#allocation3], %s224
          %s226 = sshll.u32 [#allocation2], 4
          %s227 = int_to_ptr.vmem [resolvable:$true] %s226
          %232 = dma.hbm_to_vmem [thread:$0]  %s2, 3072, %s227, [#allocation3], 128, 128, 8
        $region16: #{snippet_topic_gcn.3} parent=11 // pred_fallthru
          _
        // Predicated region
        $region17: #{snippet_topic_gcn.3} parent=11 // pred_check
          %p233 = pneg %p111
        $region18: #{snippet_topic_gcn.3} parent=11 // pred_check_branch
          %235 = sbr.rel (%p233) target = $region20
        $region19: #{snippet_topic_gcn.3} parent=11 // pred_region
          %s237 = ssub.s32 32, 32
          %238 = vsyncadd [#allocation5], %s237
          %s240 = sshll.u32 [#allocation4], 4
          %s241 = int_to_ptr.vmem [resolvable:$true] %s240
          %243 = dma.hbm_to_vmem [thread:$0]  %s3, 32, %s241, [#allocation5]
        $region20: #{snippet_topic_gcn.3} parent=11 // pred_fallthru
          _
        // Predicated region
        $region21: #{snippet_topic_gcn.3} parent=11 // pred_check
          %p244 = pneg %p132
        $region22: #{snippet_topic_gcn.3} parent=11 // pred_check_branch
          %246 = sbr.rel (%p244) target = $region24
        $region23: #{snippet_topic_gcn.3} parent=11 // pred_region
          %s248 = ssub.s32 256, 256
          %249 = vsyncadd [#allocation5], %s248
          %s250 = sshll.u32 [#allocation6], 4
          %s251 = int_to_ptr.vmem [resolvable:$true] %s250
          %256 = dma.hbm_to_vmem [thread:$0]  %s4, 256, %s251, [#allocation5], 128, 128, 8
        $region24: #{snippet_topic_gcn.3} parent=11 // pred_fallthru
          _
        // Predicated region
        $region25: #{snippet_topic_gcn.3} parent=11 // pred_check
          %p257 = pneg %p153
        $region26: #{snippet_topic_gcn.3} parent=11 // pred_check_branch
          %259 = sbr.rel (%p257) target = $region28
        $region27: #{snippet_topic_gcn.3} parent=11 // pred_region
          %s261 = ssub.s32 32, 32
          %262 = vsyncadd [#allocation8], %s261
          %s264 = sshll.u32 [#allocation7], 4
          %s265 = int_to_ptr.vmem [resolvable:$true] %s264
          %267 = dma.hbm_to_vmem [thread:$0]  %s5, 32, %s265, [#allocation8]
        $region28: #{snippet_topic_gcn.3} parent=11 // pred_fallthru
          _
      $region12: #{snippet_topic_gcn.3} parent=5 // pred_fallthru
        _
      %p268 = scmp.lt.s32.totalorder %s17, 2
      // Predicated region
      $region29: #{snippet_topic_gcn.3} parent=5 // pred_check
        %p269 = pneg %p268
      $region30: #{snippet_topic_gcn.3} parent=5 // pred_check_branch
        %271 = sbr.rel (%p269) target = $region32
      $region31: #{snippet_topic_gcn.3} parent=5 // pred_region
        // Predicated region
        $region33: #{snippet_topic_gcn.3} parent=31 // pred_check
          %p272 = pneg %p37
        $region34: #{snippet_topic_gcn.3} parent=31 // pred_check_branch
          %274 = sbr.rel (%p272) target = $region36
        $region35: #{snippet_topic_gcn.3} parent=31 // pred_region
          %p275 = scmp.lt.s32.totalorder %s17, 1
          %s276 = scalar_select %p275, %s17, 1
          %s277 = smul.addr %s276, 2
          %s278 = smul.addr %s277, 8
          %s279 = scalar_lea.vmem %s0, %s278
        $region36: #{snippet_topic_gcn.3} parent=31 // pred_fallthru
          _
        // Predicated region
        $region37: #{snippet_topic_gcn.3} parent=31 // pred_check
          %p280 = pneg %p63
        $region38: #{snippet_topic_gcn.3} parent=31 // pred_check_branch
          %282 = sbr.rel (%p280) target = $region40
        $region39: #{snippet_topic_gcn.3} parent=31 // pred_region
          %p283 = scmp.lt.s32.totalorder %s17, 1
          %s284 = scalar_select %p283, %s17, 1
          %s285 = scalar_lea.vmem %s1, %s284
        $region40: #{snippet_topic_gcn.3} parent=31 // pred_fallthru
          _
      $region32: #{snippet_topic_gcn.3} parent=5 // pred_fallthru
        _
      %p286 = scmp.le.s32.totalorder 1, %s17
      %p287 = scmp.lt.s32.totalorder %s17, 3
      %p288 = pnand %p286, %p287
      %p289 = pneg %p288
      // Predicated region
      $region41: #{snippet_topic_gcn.3} parent=5 // pred_check
        _
      $region42: #{snippet_topic_gcn.3} parent=5 // pred_check_branch
        %291 = sbr.rel (%p288) target = $region44
      $region43: #{snippet_topic_gcn.3} parent=5 // pred_region
        %s292 = ssub.s32 %s17, 1
        // Predicated region
        $region45: #{snippet_topic_gcn.3} parent=43 // pred_check
          %p293 = pneg %p90
        $region46: #{snippet_topic_gcn.3} parent=43 // pred_check_branch
          %295 = sbr.rel (%p293) target = $region48
        $region47: #{snippet_topic_gcn.3} parent=43 // pred_region
          %296 = dma.done [#allocation3], 3072
        $region48: #{snippet_topic_gcn.3} parent=43 // pred_fallthru
          _
        // Predicated region
        $region49: #{snippet_topic_gcn.3} parent=43 // pred_check
          %p297 = pneg %p111
        $region50: #{snippet_topic_gcn.3} parent=43 // pred_check_branch
          %299 = sbr.rel (%p297) target = $region52
        $region51: #{snippet_topic_gcn.3} parent=43 // pred_region
          %300 = dma.done [#allocation5], 32
        $region52: #{snippet_topic_gcn.3} parent=43 // pred_fallthru
          _
        // Predicated region
        $region53: #{snippet_topic_gcn.3} parent=43 // pred_check
          %p301 = pneg %p132
        $region54: #{snippet_topic_gcn.3} parent=43 // pred_check_branch
          %303 = sbr.rel (%p301) target = $region56
        $region55: #{snippet_topic_gcn.3} parent=43 // pred_region
          %304 = dma.done [#allocation5], 256
        $region56: #{snippet_topic_gcn.3} parent=43 // pred_fallthru
          _
        // Predicated region
        $region57: #{snippet_topic_gcn.3} parent=43 // pred_check
          %p305 = pneg %p153
        $region58: #{snippet_topic_gcn.3} parent=43 // pred_check_branch
          %307 = sbr.rel (%p305) target = $region60
        $region59: #{snippet_topic_gcn.3} parent=43 // pred_region
          %308 = dma.done [#allocation8], 32
        $region60: #{snippet_topic_gcn.3} parent=43 // pred_fallthru
          _
        %p309 = scmp.lt.s32.totalorder %s22, 1
        %s310 = scalar_select %p309, %s22, 1
        %s311 = smul.addr %s310, 2
        %s312 = smul.addr %s311, 8
        %s313 = scalar_lea.vmem %s0, %s312
        %p314 = pneg %p43
        %p315 = pneg %p40
        %p316 = scmp.lt.s32.totalorder %s22, 1
        %s317 = scalar_select %p316, %s22, 1
        %s318 = scalar_lea.vmem %s1, %s317
        %p319 = pneg %p69
        %p320 = pneg %p66
        %p321 = pneg %p90
        %p322 = pneg %p87
        %p323 = pneg %p111
        %p324 = pneg %p108
        %p325 = pneg %p132
        %p326 = pneg %p129
        %p327 = pneg %p153
        %p328 = pneg %p150
        %p329 = pneg %p179
        %p330 = pneg %p176
        %p331 = scmp.lt.s32.totalorder %s22, 1
        %s332 = scalar_select %p331, %s22, 1
        %s333 = smul.addr %s332, 4
        %s334 = smul.addr %s333, 8
        %s335 = scalar_lea.vmem %s6, %s334
        %p336 = pneg %p205
        %p337 = pneg %p202
        %p338 = scmp.lt.s32.totalorder %s22, 1
        %s339 = scalar_select %p338, %s22, 1
        %s340 = smul.addr %s339, 2
        %s341 = scalar_lea.vmem %s7, %s340
        %p342 = scmp.lt.s32.totalorder %s22, 1
        %s343 = scalar_select %p342, %s22, 1
        %s344 = smul.addr %s343, 2
        %s345 = smul.addr %s344, 8
        %s346 = scalar_lea.vmem %s0, %s345
        %p347 = scmp.lt.s32.totalorder %s22, 1
        %s348 = scalar_select %p347, %s22, 1
        %s349 = scalar_lea.vmem %s1, %s348
        %p350 = scmp.lt.s32.totalorder %s22, 1
        %s351 = scalar_select %p350, %s22, 1
        %s352 = smul.addr %s351, 4
        %s353 = smul.addr %s352, 8
        %s354 = scalar_lea.vmem %s6, %s353
        %p355 = scmp.lt.s32.totalorder %s22, 1
        %s356 = scalar_select %p355, %s22, 1
        %s357 = smul.addr %s356, 2
        %s358 = scalar_lea.vmem %s7, %s357
        %v360 = vld [vmem:[%s346] sm:$0xff]
        %v361 = vld [vmem:[%s346 + $0x8] sm:$0xff]
        %v362 = vld [vmem:[#allocation4] sm:$0x3]
        %v363 = vlaneseq
        %v364 = vshrl.u32 %v363, 7
        %v365 = vadd.s32 %v364, 8
        %v366 = vlaneseq
        %v367 = vand.u32 %v366, 127
        %v368 = vsub.s32 %v364, 1
        %v369 = vsub.s32 %v365, 1
        %vm370 = vcmp.eq.s32.totalorder %v367, %v368
        %vm371 = vcmp.eq.s32.totalorder %v367, %v369
        %v372 = vsel %vm370, 1, 0
        %v373 = vsel %vm371, 1, 0
        %v374 = vcvt.s32.f32 %v372
        %v375 = vcvt.s32.f32 %v373
        %v376 = vpack.c.bf16 %v375, %v374
        %v377 = vpack.c.bf16 %v361, %v360
        %vm378 = vcmask 130048
        %v380 = vsel %vm378, %v376, 0
        %382 = vmatprep.subr.bf16.mxu0 0
        %383 = vmatpush1.bf16.msra.mxu0 %v377
        %384 = vmatprep.subr.bf16.mxu0 0
        %385 = vmatpush1.bf16.msra.mxu0 0
        %386 = vmatprep.subr.bf16.mxu0 0
        %387 = vmatpush1.bf16.msra.mxu0 0
        %388 = vmatprep.subr.bf16.mxu0 0
        %389 = vmatpush1.bf16.msra.mxu0 0
        %390 = vmatprep.subr.bf16.mxu0 0
        %391 = vmatpush1.bf16.msra.mxu0 0
        %392 = vmatprep.subr.bf16.mxu0 0
        %393 = vmatpush1.bf16.msra.mxu0 0
        %394 = vmatprep.subr.bf16.mxu0 0
        %395 = vmatpush1.bf16.msra.mxu0 0
        %396 = vmatprep.subr.bf16.mxu0 0
        %397 = vmatpush1.bf16.msra.mxu0 0
        %398 = vmatprep.subr.bf16.mxu0 0
        %399 = vmatpush1.bf16.msra.mxu0 0
        %400 = vmatprep.subr.bf16.mxu0 0
        %401 = vmatpush1.bf16.msra.mxu0 0
        %402 = vmatprep.subr.bf16.mxu0 0
        %403 = vmatpush1.bf16.msra.mxu0 0
        %404 = vmatprep.subr.bf16.mxu0 0
        %405 = vmatpush1.bf16.msra.mxu0 0
        %406 = vmatprep.subr.bf16.mxu0 0
        %407 = vmatpush1.bf16.msra.mxu0 0
        %408 = vmatprep.subr.bf16.mxu0 0
        %409 = vmatpush1.bf16.msra.mxu0 0
        %410 = vmatprep.subr.bf16.mxu0 0
        %411 = vmatpush1.bf16.msra.mxu0 0
        %412 = vmatprep.subr.bf16.mxu0 0
        %413 = vmatpush1.bf16.msra.mxu0 0
        %414 = vmatprep.mubr.bf16.mxu0 0
        %415 = vmatmul.mubr.bf16.gmra.mrb[0].mxu0 %v380
        %v416 = vpop.f32.mrb[0].mxu0
        %v417 = vadd.f32 0.0, %v416
        %v418 = vpop.f32.mrb[0].mxu0
        %v419 = vpop.f32.mrb[0].mxu0
        %v420 = vadd.f32 0.0, %v419
        %v421 = vpop.f32.mrb[0].mxu0
        %422 = vdwg.mxu0
        %v423 = vld [vmem:[#allocation2] sm:$0xff]
        %v424 = vld [vmem:[#allocation2 + $0x8] sm:$0xff]
        %v425 = vld [vmem:[#allocation2 + $0x10] sm:$0xff]
        %v426 = vld [vmem:[#allocation2 + $0x18] sm:$0xff]
        %v427 = vld [vmem:[#allocation2 + $0x20] sm:$0xff]
        %v428 = vld [vmem:[#allocation2 + $0x28] sm:$0xff]
        %v429 = vld [vmem:[#allocation2 + $0x30] sm:$0xff]
        %v430 = vld [vmem:[#allocation2 + $0x38] sm:$0xff]
        %v431 = vpack.c.bf16 %v420, %v417
        %v440 = vunpack.c.l.b16 %v423
        %v441 = vunpack.c.h.b16 %v423
        %v442 = vunpack.c.l.b16 %v424
        %v443 = vunpack.c.h.b16 %v424
        %v444 = vunpack.c.l.b16 %v425
        %v445 = vunpack.c.h.b16 %v425
        %v446 = vunpack.c.l.b16 %v426
        %v447 = vunpack.c.h.b16 %v426
        %v448 = vunpack.c.l.b16 %v427
        %v449 = vunpack.c.h.b16 %v427
        %v450 = vunpack.c.l.b16 %v428
        %v451 = vunpack.c.h.b16 %v428
        %v452 = vunpack.c.l.b16 %v429
        %v453 = vunpack.c.h.b16 %v429
        %v454 = vunpack.c.l.b16 %v430
        %v455 = vunpack.c.h.b16 %v430
        %v456 = vpack.c.b16 %v442, %v440
        %v457 = vpack.c.b16 %v443, %v441
        %v458 = vpack.c.b16 %v446, %v444
        %v459 = vpack.c.b16 %v447, %v445
        %v460 = vpack.c.b16 %v450, %v448
        %v461 = vpack.c.b16 %v451, %v449
        %v462 = vpack.c.b16 %v454, %v452
        %v463 = vpack.c.b16 %v455, %v453
        %vm472 = vcmask 523264
        %v474 = vsel %vm472, %v431, 0
        %476 = vmatprep.subr.bf16.mxu0 %v457
        %477 = vmatpush1.bf16.msra.mxu0 %v456
        %478 = vmatprep.subr.bf16.mxu0 %v459
        %479 = vmatpush1.bf16.msra.mxu0 %v458
        %480 = vmatprep.subr.bf16.mxu0 %v461
        %481 = vmatpush1.bf16.msra.mxu0 %v460
        %482 = vmatprep.subr.bf16.mxu0 %v463
        %483 = vmatpush1.bf16.msra.mxu0 %v462
        %484 = vmatprep.subr.bf16.mxu0 0
        %485 = vmatpush1.bf16.msra.mxu0 0
        %486 = vmatprep.subr.bf16.mxu0 0
        %487 = vmatpush1.bf16.msra.mxu0 0
        %488 = vmatprep.subr.bf16.mxu0 0
        %489 = vmatpush1.bf16.msra.mxu0 0
        %490 = vmatprep.subr.bf16.mxu0 0
        %491 = vmatpush1.bf16.msra.mxu0 0
        %492 = vmatprep.subr.bf16.mxu0 0
        %493 = vmatpush1.bf16.msra.mxu0 0
        %494 = vmatprep.subr.bf16.mxu0 0
        %495 = vmatpush1.bf16.msra.mxu0 0
        %496 = vmatprep.subr.bf16.mxu0 0
        %497 = vmatpush1.bf16.msra.mxu0 0
        %498 = vmatprep.subr.bf16.mxu0 0
        %499 = vmatpush1.bf16.msra.mxu0 0
        %500 = vmatprep.subr.bf16.mxu0 0
        %501 = vmatpush1.bf16.msra.mxu0 0
        %502 = vmatprep.subr.bf16.mxu0 0
        %503 = vmatpush1.bf16.msra.mxu0 0
        %504 = vmatprep.subr.bf16.mxu0 0
        %505 = vmatpush1.bf16.msra.mxu0 0
        %506 = vmatprep.subr.bf16.mxu0 0
        %507 = vmatpush1.bf16.msra.mxu0 0
        %508 = vmatprep.mubr.bf16.mxu0 0
        %509 = vmatmul.mubr.bf16.gmra.mrb[0].mxu0 %v474
        %v510 = vpop.f32.mrb[0].mxu0
        %v511 = vadd.f32 0.0, %v510
        %v512 = vpop.f32.mrb[0].mxu0
        %v513 = vadd.f32 0.0, %v512
        %v514 = vpop.f32.mrb[0].mxu0
        %v515 = vadd.f32 0.0, %v514
        %v516 = vpop.f32.mrb[0].mxu0
        %v517 = vadd.f32 0.0, %v516
        %518 = vdwg.mxu0
        %v520 = vlaneseq
        %v521 = vshrl.u32 %v520, 7
        %v522 = vsub.s32 0, %v521
        %v523 = vrot.slane %v362, %v522
        %v524 = vlaneseq
        %v525 = vshrl.u32 %v524, 7
        %v526 = vsub.s32 1, %v525
        %v527 = vrot.slane %v362, %v526
        %v530 = vadd.f32 %v523, %v511
        %v531 = vadd.f32 %v527, %v513
        %v532 = vadd.f32 %v523, %v515
        %v533 = vadd.f32 %v527, %v517
        %s534 = scalar_lea.vmem [#allocation2], 64
        %v535 = vld [vmem:[%s534] sm:$0xff]
        %v536 = vld [vmem:[%s534 + $0x8] sm:$0xff]
        %v537 = vld [vmem:[%s534 + $0x10] sm:$0xff]
        %v538 = vld [vmem:[%s534 + $0x18] sm:$0xff]
        %v539 = vld [vmem:[%s534 + $0x20] sm:$0xff]
        %v540 = vld [vmem:[%s534 + $0x28] sm:$0xff]
        %v541 = vld [vmem:[%s534 + $0x30] sm:$0xff]
        %v542 = vld [vmem:[%s534 + $0x38] sm:$0xff]
        %v551 = vunpack.c.l.b16 %v535
        %v552 = vunpack.c.h.b16 %v535
        %v553 = vunpack.c.l.b16 %v536
        %v554 = vunpack.c.h.b16 %v536
        %v555 = vunpack.c.l.b16 %v537
        %v556 = vunpack.c.h.b16 %v537
        %v557 = vunpack.c.l.b16 %v538
        %v558 = vunpack.c.h.b16 %v538
        %v559 = vunpack.c.l.b16 %v539
        %v560 = vunpack.c.h.b16 %v539
        %v561 = vunpack.c.l.b16 %v540
        %v562 = vunpack.c.h.b16 %v540
        %v563 = vunpack.c.l.b16 %v541
        %v564 = vunpack.c.h.b16 %v541
        %v565 = vunpack.c.l.b16 %v542
        %v566 = vunpack.c.h.b16 %v542
        %v567 = vpack.c.b16 %v553, %v551
        %v568 = vpack.c.b16 %v554, %v552
        %v569 = vpack.c.b16 %v557, %v555
        %v570 = vpack.c.b16 %v558, %v556
        %v571 = vpack.c.b16 %v561, %v559
        %v572 = vpack.c.b16 %v562, %v560
        %v573 = vpack.c.b16 %v565, %v563
        %v574 = vpack.c.b16 %v566, %v564
        %v584 = vsel %vm472, %v377, 0
        %586 = vmatprep.subr.bf16.mxu0 %v568
        %587 = vmatpush1.bf16.msra.mxu0 %v567
        %588 = vmatprep.subr.bf16.mxu0 %v570
        %589 = vmatpush1.bf16.msra.mxu0 %v569
        %590 = vmatprep.subr.bf16.mxu0 %v572
        %591 = vmatpush1.bf16.msra.mxu0 %v571
        %592 = vmatprep.subr.bf16.mxu0 %v574
        %593 = vmatpush1.bf16.msra.mxu0 %v573
        %594 = vmatprep.subr.bf16.mxu0 0
        %595 = vmatpush1.bf16.msra.mxu0 0
        %596 = vmatprep.subr.bf16.mxu0 0
        %597 = vmatpush1.bf16.msra.mxu0 0
        %598 = vmatprep.subr.bf16.mxu0 0
        %599 = vmatpush1.bf16.msra.mxu0 0
        %600 = vmatprep.subr.bf16.mxu0 0
        %601 = vmatpush1.bf16.msra.mxu0 0
        %602 = vmatprep.subr.bf16.mxu0 0
        %603 = vmatpush1.bf16.msra.mxu0 0
        %604 = vmatprep.subr.bf16.mxu0 0
        %605 = vmatpush1.bf16.msra.mxu0 0
        %606 = vmatprep.subr.bf16.mxu0 0
        %607 = vmatpush1.bf16.msra.mxu0 0
        %608 = vmatprep.subr.bf16.mxu0 0
        %609 = vmatpush1.bf16.msra.mxu0 0
        %610 = vmatprep.subr.bf16.mxu0 0
        %611 = vmatpush1.bf16.msra.mxu0 0
        %612 = vmatprep.subr.bf16.mxu0 0
        %613 = vmatpush1.bf16.msra.mxu0 0
        %614 = vmatprep.subr.bf16.mxu0 0
        %615 = vmatpush1.bf16.msra.mxu0 0
        %616 = vmatprep.subr.bf16.mxu0 0
        %617 = vmatpush1.bf16.msra.mxu0 0
        %618 = vmatprep.mubr.bf16.mxu0 0
        %619 = vmatmul.mubr.bf16.gmra.mrb[0].mxu0 %v584
        %v620 = vpop.f32.mrb[0].mxu0
        %v621 = vadd.f32 0.0, %v620
        %v622 = vpop.f32.mrb[0].mxu0
        %v623 = vadd.f32 0.0, %v622
        %v624 = vpop.f32.mrb[0].mxu0
        %v625 = vadd.f32 0.0, %v624
        %v626 = vpop.f32.mrb[0].mxu0
        %v627 = vadd.f32 0.0, %v626
        %628 = vdwg.mxu0
        %v629 = vadd.f32 %v530, %v621
        %v630 = vadd.f32 %v531, %v623
        %v631 = vadd.f32 %v532, %v625
        %v632 = vadd.f32 %v533, %v627
        %v633 = vsub.s32 %v364, 4294967295
        %v634 = vsub.s32 %v365, 4294967295
        %vm635 = vcmp.eq.s32.totalorder %v367, %v633
        %vm636 = vcmp.eq.s32.totalorder %v367, %v634
        %v637 = vsel %vm635, 1, 0
        %v638 = vsel %vm636, 1, 0
        %v639 = vcvt.s32.f32 %v637
        %v640 = vcvt.s32.f32 %v638
        %v641 = vpack.c.bf16 %v640, %v639
        %v643 = vsel %vm378, %v641, 0
        %645 = vmatprep.subr.bf16.mxu0 0
        %646 = vmatpush1.bf16.msra.mxu0 %v377
        %647 = vmatprep.subr.bf16.mxu0 0
        %648 = vmatpush1.bf16.msra.mxu0 0
        %649 = vmatprep.subr.bf16.mxu0 0
        %650 = vmatpush1.bf16.msra.mxu0 0
        %651 = vmatprep.subr.bf16.mxu0 0
        %652 = vmatpush1.bf16.msra.mxu0 0
        %653 = vmatprep.subr.bf16.mxu0 0
        %654 = vmatpush1.bf16.msra.mxu0 0
        %655 = vmatprep.subr.bf16.mxu0 0
        %656 = vmatpush1.bf16.msra.mxu0 0
        %657 = vmatprep.subr.bf16.mxu0 0
        %658 = vmatpush1.bf16.msra.mxu0 0
        %659 = vmatprep.subr.bf16.mxu0 0
        %660 = vmatpush1.bf16.msra.mxu0 0
        %661 = vmatprep.subr.bf16.mxu0 0
        %662 = vmatpush1.bf16.msra.mxu0 0
        %663 = vmatprep.subr.bf16.mxu0 0
        %664 = vmatpush1.bf16.msra.mxu0 0
        %665 = vmatprep.subr.bf16.mxu0 0
        %666 = vmatpush1.bf16.msra.mxu0 0
        %667 = vmatprep.subr.bf16.mxu0 0
        %668 = vmatpush1.bf16.msra.mxu0 0
        %669 = vmatprep.subr.bf16.mxu0 0
        %670 = vmatpush1.bf16.msra.mxu0 0
        %671 = vmatprep.subr.bf16.mxu0 0
        %672 = vmatpush1.bf16.msra.mxu0 0
        %673 = vmatprep.subr.bf16.mxu0 0
        %674 = vmatpush1.bf16.msra.mxu0 0
        %675 = vmatprep.subr.bf16.mxu0 0
        %676 = vmatpush1.bf16.msra.mxu0 0
        %677 = vmatprep.mubr.bf16.mxu0 0
        %678 = vmatmul.mubr.bf16.gmra.mrb[0].mxu0 %v643
        %v679 = vpop.f32.mrb[0].mxu0
        %v680 = vadd.f32 0.0, %v679
        %v681 = vpop.f32.mrb[0].mxu0
        %v682 = vpop.f32.mrb[0].mxu0
        %v683 = vadd.f32 0.0, %v682
        %v684 = vpop.f32.mrb[0].mxu0
        %685 = vdwg.mxu0
        %s686 = scalar_lea.vmem [#allocation2], 128
        %v687 = vld [vmem:[%s686] sm:$0xff]
        %v688 = vld [vmem:[%s686 + $0x8] sm:$0xff]
        %v689 = vld [vmem:[%s686 + $0x10] sm:$0xff]
        %v690 = vld [vmem:[%s686 + $0x18] sm:$0xff]
        %v691 = vld [vmem:[%s686 + $0x20] sm:$0xff]
        %v692 = vld [vmem:[%s686 + $0x28] sm:$0xff]
        %v693 = vld [vmem:[%s686 + $0x30] sm:$0xff]
        %v694 = vld [vmem:[%s686 + $0x38] sm:$0xff]
        %v695 = vpack.c.bf16 %v683, %v680
        %v704 = vunpack.c.l.b16 %v687
        %v705 = vunpack.c.h.b16 %v687
        %v706 = vunpack.c.l.b16 %v688
        %v707 = vunpack.c.h.b16 %v688
        %v708 = vunpack.c.l.b16 %v689
        %v709 = vunpack.c.h.b16 %v689
        %v710 = vunpack.c.l.b16 %v690
        %v711 = vunpack.c.h.b16 %v690
        %v712 = vunpack.c.l.b16 %v691
        %v713 = vunpack.c.h.b16 %v691
        %v714 = vunpack.c.l.b16 %v692
        %v715 = vunpack.c.h.b16 %v692
        %v716 = vunpack.c.l.b16 %v693
        %v717 = vunpack.c.h.b16 %v693
        %v718 = vunpack.c.l.b16 %v694
        %v719 = vunpack.c.h.b16 %v694
        %v720 = vpack.c.b16 %v706, %v704
        %v721 = vpack.c.b16 %v707, %v705
        %v722 = vpack.c.b16 %v710, %v708
        %v723 = vpack.c.b16 %v711, %v709
        %v724 = vpack.c.b16 %v714, %v712
        %v725 = vpack.c.b16 %v715, %v713
        %v726 = vpack.c.b16 %v718, %v716
        %v727 = vpack.c.b16 %v719, %v717
        %v737 = vsel %vm472, %v695, 0
        %739 = vmatprep.subr.bf16.mxu0 %v721
        %740 = vmatpush1.bf16.msra.mxu0 %v720
        %741 = vmatprep.subr.bf16.mxu0 %v723
        %742 = vmatpush1.bf16.msra.mxu0 %v722
        %743 = vmatprep.subr.bf16.mxu0 %v725
        %744 = vmatpush1.bf16.msra.mxu0 %v724
        %745 = vmatprep.subr.bf16.mxu0 %v727
        %746 = vmatpush1.bf16.msra.mxu0 %v726
        %747 = vmatprep.subr.bf16.mxu0 0
        %748 = vmatpush1.bf16.msra.mxu0 0
        %749 = vmatprep.subr.bf16.mxu0 0
        %750 = vmatpush1.bf16.msra.mxu0 0
        %751 = vmatprep.subr.bf16.mxu0 0
        %752 = vmatpush1.bf16.msra.mxu0 0
        %753 = vmatprep.subr.bf16.mxu0 0
        %754 = vmatpush1.bf16.msra.mxu0 0
        %755 = vmatprep.subr.bf16.mxu0 0
        %756 = vmatpush1.bf16.msra.mxu0 0
        %757 = vmatprep.subr.bf16.mxu0 0
        %758 = vmatpush1.bf16.msra.mxu0 0
        %759 = vmatprep.subr.bf16.mxu0 0
        %760 = vmatpush1.bf16.msra.mxu0 0
        %761 = vmatprep.subr.bf16.mxu0 0
        %762 = vmatpush1.bf16.msra.mxu0 0
        %763 = vmatprep.subr.bf16.mxu0 0
        %764 = vmatpush1.bf16.msra.mxu0 0
        %765 = vmatprep.subr.bf16.mxu0 0
        %766 = vmatpush1.bf16.msra.mxu0 0
        %767 = vmatprep.subr.bf16.mxu0 0
        %768 = vmatpush1.bf16.msra.mxu0 0
        %769 = vmatprep.subr.bf16.mxu0 0
        %770 = vmatpush1.bf16.msra.mxu0 0
        %771 = vmatprep.mubr.bf16.mxu0 0
        %772 = vmatmul.mubr.bf16.gmra.mrb[0].mxu0 %v737
        %v773 = vpop.f32.mrb[0].mxu0
        %v774 = vadd.f32 0.0, %v773
        %v775 = vpop.f32.mrb[0].mxu0
        %v776 = vadd.f32 0.0, %v775
        %v777 = vpop.f32.mrb[0].mxu0
        %v778 = vadd.f32 0.0, %v777
        %v779 = vpop.f32.mrb[0].mxu0
        %v780 = vadd.f32 0.0, %v779
        %781 = vdwg.mxu0
        %v782 = vadd.f32 %v629, %v774
        %v783 = vadd.f32 %v630, %v776
        %v784 = vadd.f32 %v631, %v778
        %v785 = vadd.f32 %v632, %v780
        %v786 = vmax.f32 %v782, 0.0
        %v787 = vmax.f32 %v783, 0.0
        %v788 = vmax.f32 %v784, 0.0
        %v789 = vmax.f32 %v785, 0.0
        %790 = vst [vmem:[%s354] sm:$0xff] %v786
        %791 = vst [vmem:[%s354 + $0x8] sm:$0xff] %v787
        %792 = vst [vmem:[%s354 + $0x10] sm:$0xff] %v788
        %793 = vst [vmem:[%s354 + $0x18] sm:$0xff] %v789
        %v794 = vld [vmem:[%s349] sm:$0x1]
        %v795 = vld [vmem:[#allocation6] sm:$0xff]
        %v796 = vld [vmem:[#allocation6 + $0x8] sm:$0xff]
        %v797 = vpack.c.bf16 %v794, %v794
        %v798 = vld [vmem:[#allocation7] sm:$0x3]
        %v801 = vunpack.c.l.b16 %v795
        %v802 = vunpack.c.h.b16 %v795
        %v803 = vunpack.c.l.b16 %v796
        %v804 = vunpack.c.h.b16 %v796
        %v805 = vpack.c.b16 %v803, %v801
        %v806 = vpack.c.b16 %v804, %v802
        %v810 = vlaneseq
        %v811 = vshrl.u32 %v810, 7
        %v812 = vsub.s32 0, %v811
        %v813 = vrot.slane %v798, %v812
        %v814 = vlaneseq
        %v815 = vshrl.u32 %v814, 7
        %v816 = vsub.s32 1, %v815
        %v817 = vrot.slane %v798, %v816
        %v821 = vsel %vm378, %v797, 0
        %823 = vmatprep.subr.bf16.mxu0 %v806
        %824 = vmatpush1.bf16.msra.mxu0 %v805
        %825 = vmatprep.subr.bf16.mxu0 0
        %826 = vmatpush1.bf16.msra.mxu0 0
        %827 = vmatprep.subr.bf16.mxu0 0
        %828 = vmatpush1.bf16.msra.mxu0 0
        %829 = vmatprep.subr.bf16.mxu0 0
        %830 = vmatpush1.bf16.msra.mxu0 0
        %831 = vmatprep.subr.bf16.mxu0 0
        %832 = vmatpush1.bf16.msra.mxu0 0
        %833 = vmatprep.subr.bf16.mxu0 0
        %834 = vmatpush1.bf16.msra.mxu0 0
        %835 = vmatprep.subr.bf16.mxu0 0
        %836 = vmatpush1.bf16.msra.mxu0 0
        %837 = vmatprep.subr.bf16.mxu0 0
        %838 = vmatpush1.bf16.msra.mxu0 0
        %839 = vmatprep.subr.bf16.mxu0 0
        %840 = vmatpush1.bf16.msra.mxu0 0
        %841 = vmatprep.subr.bf16.mxu0 0
        %842 = vmatpush1.bf16.msra.mxu0 0
        %843 = vmatprep.subr.bf16.mxu0 0
        %844 = vmatpush1.bf16.msra.mxu0 0
        %845 = vmatprep.subr.bf16.mxu0 0
        %846 = vmatpush1.bf16.msra.mxu0 0
        %847 = vmatprep.subr.bf16.mxu0 0
        %848 = vmatpush1.bf16.msra.mxu0 0
        %849 = vmatprep.subr.bf16.mxu0 0
        %850 = vmatpush1.bf16.msra.mxu0 0
        %851 = vmatprep.subr.bf16.mxu0 0
        %852 = vmatpush1.bf16.msra.mxu0 0
        %853 = vmatprep.subr.bf16.mxu0 0
        %854 = vmatpush1.bf16.msra.mxu0 0
        %855 = vmatprep.mubr.bf16.mxu0 0
        %856 = vmatmul.mubr.bf16.gmra.mrb[0].mxu0 %v821
        %v857 = vpop.f32.mrb[0].mxu0
        %v858 = vadd.f32 %v813, %v857
        %v859 = vpop.f32.mrb[0].mxu0
        %v860 = vadd.f32 %v817, %v859
        %v861 = vpop.f32.mrb[0].mxu0
        %v862 = vpop.f32.mrb[0].mxu0
        %863 = vdwg.mxu0
        %v864 = vmax.f32 %v858, 0.0
        %v865 = vmax.f32 %v860, 0.0
        %v868 = vcombine.low %v864, %v865
        %v870 = vunpack.c.l.s4 1966171168
        %v871 = vunpack.c.0.s8 %v870
        %v872 = vlaneseq
        %v873 = vshrl.u32 %v872, 7
        %v874 = vsub.s32 %v871, %v873
        %v875 = vrot.slane %v868, %v874
        %v877 = vunpack.c.l.s4 1966171168
        %v878 = vunpack.c.0.s8 %v877
        %v879 = vlaneseq
        %v880 = vshrl.u32 %v879, 7
        %v881 = vsub.s32 %v878, %v880
        %v882 = vrot.slane %v875, %v881
        %v884 = vlaneseq
        %vm885 = vcmp.ge.s32.totalorder %v884, 0
        %vm886 = vcmp.lt.s32.totalorder %v884, 256
        %vm887 = vmand %vm885, %vm886
        %888 = vst.msk [vmem:[%s358] sm:$0x3] %vm887, %v882
        %p889 = scmp.lt.s32.totalorder %s22, 1
        %s890 = scalar_select %p889, %s22, 1
        %s891 = smul.addr %s890, 4
        %s892 = smul.addr %s891, 8
        %s893 = scalar_lea.vmem %s6, %s892
        %p894 = scmp.lt.s32.totalorder %s22, 1
        %s895 = scalar_select %p894, %s22, 1
        %s896 = smul.addr %s895, 2
        %s897 = scalar_lea.vmem %s7, %s896
        // Predicated region
        $region61: #{snippet_topic_gcn.3} parent=43 // pred_check
          %p898 = pneg %p176
        $region62: #{snippet_topic_gcn.3} parent=43 // pred_check_branch
          %900 = sbr.rel (%p898) target = $region64
        $region63: #{snippet_topic_gcn.3} parent=43 // pred_region
          _
        $region64: #{snippet_topic_gcn.3} parent=43 // pred_fallthru
          _
        // Predicated region
        $region65: #{snippet_topic_gcn.3} parent=43 // pred_check
          %p901 = pneg %p202
        $region66: #{snippet_topic_gcn.3} parent=43 // pred_check_branch
          %903 = sbr.rel (%p901) target = $region68
        $region67: #{snippet_topic_gcn.3} parent=43 // pred_region
          _
        $region68: #{snippet_topic_gcn.3} parent=43 // pred_fallthru
          _
      $region44: #{snippet_topic_gcn.3} parent=5 // pred_fallthru
        _
      %p904 = scmp.le.s32.totalorder 2, %s17
      // Predicated region
      $region69: #{snippet_topic_gcn.3} parent=5 // pred_check
        %p905 = pneg %p904
      $region70: #{snippet_topic_gcn.3} parent=5 // pred_check_branch
        %907 = sbr.rel (%p905) target = $region72
      $region71: #{snippet_topic_gcn.3} parent=5 // pred_region
        %s908 = ssub.s32 %s17, 2
        // Predicated region
        $region73: #{snippet_topic_gcn.3} parent=71 // pred_check
          %p909 = pneg %p182
        $region74: #{snippet_topic_gcn.3} parent=71 // pred_check_branch
          %911 = sbr.rel (%p909) target = $region76
        $region75: #{snippet_topic_gcn.3} parent=71 // pred_region
          %p912 = scmp.lt.s32.totalorder %s23, 1
          %s913 = scalar_select %p912, %s23, 1
          %s914 = smul.addr %s913, 4
          %s915 = smul.addr %s914, 8
          %s916 = scalar_lea.vmem %s6, %s915
        $region76: #{snippet_topic_gcn.3} parent=71 // pred_fallthru
          _
        // Predicated region
        $region77: #{snippet_topic_gcn.3} parent=71 // pred_check
          %p917 = pneg %p208
        $region78: #{snippet_topic_gcn.3} parent=71 // pred_check_branch
          %919 = sbr.rel (%p917) target = $region80
        $region79: #{snippet_topic_gcn.3} parent=71 // pred_region
          %p920 = scmp.lt.s32.totalorder %s23, 1
          %s921 = scalar_select %p920, %s23, 1
          %s922 = smul.addr %s921, 2
          %s923 = scalar_lea.vmem %s7, %s922
        $region80: #{snippet_topic_gcn.3} parent=71 // pred_fallthru
          _
      $region72: #{snippet_topic_gcn.3} parent=5 // pred_fallthru
        _
    $region6: #{snippet_topic_gcn.3} parent=1 // loop_footer
      %s21 = sadd.s32 1, %s17
    $region7: #{snippet_topic_gcn.3} parent=1 // loop_footer_branch
      %16 = sbr.rel target = $region3
    $region8: #{snippet_topic_gcn.3} parent=1 // loop_exit
      _
    %924 = vsyncpa [#allocation3], 1
    %s925 = scalar_lea.sflag [#allocation3], 1
    %926 = vsyncpa %s925, 1
    %927 = vsyncpa [#allocation5], 1
    %928 = vsyncpa [#allocation8], 1

// kernel: snippet_topic_gcn.5
$region0: #{snippet_topic_gcn.5}
  #allocation0 [shape = 'u32[]', space=smem, size = 0x4, offset = 0x4, fixed_abs, tag = 'smem constant byte address 0x4 - core index']
  #allocation1 [shape = 'u32[144,128]{1,0:T(1,128)}', space=vmem, size = 0x12000, scoped, tag = 'internal scratch']
  #allocation2 [shape = 's32[1]{0}', space=sflag, size = 0x4, scoped, tag = 'scoped memory for snippet_topic_gcn.5']
  #allocation3 [shape = 'u8[512]{0}', space=smem, size = 0x200, scoped, tag = 'prefetched SMEM operand 0']
  %s0 = inlined_call_operand.vmem [shape: s32[2], index: 0, kind: input, shape index: {}]
  %s1 = inlined_call_operand.vmem [shape: f32[2,16,256], index: 1, kind: input, shape index: {}]
  %s2 = inlined_call_operand.vmem [shape: f32[2,1,256], index: 2, kind: input, shape index: {}]
  %s3 = inlined_call_operand.vmem [shape: bf16[256,128], index: 3, kind: input, shape index: {}]
  %s4 = inlined_call_operand.vmem [shape: f32[1,128], index: 4, kind: input, shape index: {}]
  %s5 = inlined_call_operand.vmem [shape: bf16[384,128], index: 5, kind: input, shape index: {}]
  %s6 = inlined_call_operand.vmem [shape: f32[1,128], index: 6, kind: input, shape index: {}]
  %s7 = inlined_call_operand.vmem [shape: bf16[128,256], index: 7, kind: input, shape index: {}]
  %s8 = inlined_call_operand.vmem [shape: f32[1,256], index: 8, kind: input, shape index: {}]
  %s9 = inlined_call_operand.vmem [shape: bf16[256,128], index: 9, kind: input, shape index: {}]
  %s10 = inlined_call_operand.vmem [shape: bf16[256,128], index: 10, kind: input, shape index: {}]
  %s11 = inlined_call_operand.vmem [shape: bf16[256,128], index: 11, kind: input, shape index: {}]
  %s12 = inlined_call_operand.vmem [shape: f32[1,128], index: 12, kind: input, shape index: {}]
  %s13 = inlined_call_operand.vmem [shape: bf16[384,128], index: 13, kind: input, shape index: {}]
  %s14 = inlined_call_operand.vmem [shape: f32[1,128], index: 14, kind: input, shape index: {}]
  %s15 = inlined_call_operand.vmem [shape: bf16[128,256], index: 15, kind: input, shape index: {}]
  %s16 = inlined_call_operand.vmem [shape: f32[1,256], index: 16, kind: input, shape index: {}]
  %s17 = inlined_call_operand.hbm [shape: f32[2,16,256], index: 17, kind: output, shape index: {}]
  %s18 = sld [smem:[#allocation0]]
  $region97: #{snippet_topic_gcn.5} parent=0
    _
  %s20 = ssub.s32 1, %s18
  %s21 = scalar_select 0, %s20, %s18
  %s22 = sshll.u32 %s0, 4
  %s23 = int_to_ptr.vmem [resolvable:$true] %s22
  %25 = dma.vmem_to_smem %s23, 16, [#allocation3], [#allocation2]
  %26 = dma.done [#allocation2], 16
  %27 = sfence
  $region1: #{snippet_topic_gcn.5} parent=0
    #allocation4 [shape = 'u8[32768]{0}', space=vmem, size = 0x8000, scoped, tag = 'output window, operand 0']
    #allocation5 [shape = 's32[2]{0}', space=sflag, size = 0x8, scoped, tag = 'scoped memory for snippet_topic_gcn.5']
    %28 = vsyncpa [#allocation5], 0
    %s29 = scalar_lea.sflag [#allocation5], 1
    %30 = vsyncpa %s29, 0
    loop: start=0, step=1, limit=4
    $region2: #{snippet_topic_gcn.5} parent=1 // loop_pre_header
      _
    $region3: #{snippet_topic_gcn.5} parent=1 // loop_header
      %s32 = sphi 0, %s36
      %p33 = scmp.ge.s32.totalorder %s32, 4
      %s42 = sphi 0, %s44
      %s45 = sphi 0, %s42
      %s46 = sphi 0, %s45
      %s62 = sphi 0, %s46
      %s68 = sphi 0, %s70
      %s71 = sphi 0, %s68
      %s72 = sphi 0, %s71
      %s88 = sphi 0, %s72
      %s92 = sphi 0, %s92
      %s94 = sphi 0, %s92
      %s95 = sphi 0, %s94
      %s109 = sphi 0, %s95
      %s113 = sphi 0, %s113
      %s115 = sphi 0, %s113
      %s116 = sphi 0, %s115
      %s130 = sphi 0, %s116
      %s134 = sphi 0, %s134
      %s136 = sphi 0, %s134
      %s137 = sphi 0, %s136
      %s151 = sphi 0, %s137
      %s155 = sphi 0, %s155
      %s157 = sphi 0, %s155
      %s158 = sphi 0, %s157
      %s172 = sphi 0, %s158
      %s176 = sphi 0, %s176
      %s178 = sphi 0, %s176
      %s179 = sphi 0, %s178
      %s193 = sphi 0, %s179
      %s197 = sphi 0, %s197
      %s199 = sphi 0, %s197
      %s200 = sphi 0, %s199
      %s214 = sphi 0, %s200
      %s218 = sphi 0, %s218
      %s220 = sphi 0, %s218
      %s221 = sphi 0, %s220
      %s235 = sphi 0, %s221
      %s239 = sphi 0, %s239
      %s241 = sphi 0, %s239
      %s242 = sphi 0, %s241
      %s256 = sphi 0, %s242
      %s260 = sphi 0, %s260
      %s262 = sphi 0, %s260
      %s263 = sphi 0, %s262
      %s277 = sphi 0, %s263
      %s281 = sphi 0, %s281
      %s283 = sphi 0, %s281
      %s284 = sphi 0, %s283
      %s298 = sphi 0, %s284
      %s302 = sphi 0, %s302
      %s304 = sphi 0, %s302
      %s305 = sphi 0, %s304
      %s319 = sphi 0, %s305
      %s323 = sphi 0, %s323
      %s325 = sphi 0, %s323
      %s326 = sphi 0, %s325
      %s340 = sphi 0, %s326
      %s344 = sphi 0, %s344
      %s346 = sphi 0, %s344
      %s347 = sphi 0, %s346
      %s361 = sphi 0, %s347
      %s365 = sphi 0, %s365
      %s367 = sphi 0, %s365
      %s368 = sphi 0, %s367
      %s382 = sphi 0, %s368
      %s388 = sphi 0, %s390
      %s391 = sphi 0, %s388
      %s392 = sphi 0, %s391
      %s408 = sphi 0, %s392
    $region4: #{snippet_topic_gcn.5} parent=1 // loop_header_branch
      %35 = sbr.rel (%p33) target = $region8
    $region5: #{snippet_topic_gcn.5} parent=1 // loop_body
      %s37 = ssub.s32 %s32, 1
      %s38 = ssub.s32 %s32, 2
      %s39 = sadd.s32 %s32, 1
      %s40 = ssub.s32 %s32, %s39
      %p41 = scmp.eq.s32.totalorder %s40, 0
      %s43 = sadd.s32 %s42, 1
      %s44 = scalar_select %p41, %s42, %s43
      %p47 = pneg %p41
      %p48 = scmp.eq.s32.totalorder %s32, 1
      %p49 = por %p47, %p48
      %p50 = scmp.ne.s32.totalorder %s42, %s45
      %p51 = scmp.eq.s32.totalorder %s32, 0
      %p52 = por %p50, %p51
      %p53 = scmp.ne.s32.totalorder %s42, %s45
      %p54 = scmp.eq.s32.totalorder %s37, 1
      %p55 = por %p53, %p54
      %p56 = scmp.ne.s32.totalorder %s45, %s46
      %p57 = scmp.eq.s32.totalorder %s37, 0
      %p58 = por %p56, %p57
      %p59 = scmp.ne.s32.totalorder %s45, %s46
      %p60 = scmp.eq.s32.totalorder %s38, 1
      %p61 = por %p59, %p60
      %p63 = scmp.ne.s32.totalorder %s46, %s62
      %p64 = scmp.eq.s32.totalorder %s38, 0
      %p65 = por %p63, %p64
      %s66 = ssub.s32 %s32, %s39
      %p67 = scmp.eq.s32.totalorder %s66, 0
      %s69 = sadd.s32 %s68, 1
      %s70 = scalar_select %p67, %s68, %s69
      %p73 = pneg %p67
      %p74 = scmp.eq.s32.totalorder %s32, 1
      %p75 = por %p73, %p74
      %p76 = scmp.ne.s32.totalorder %s68, %s71
      %p77 = scmp.eq.s32.totalorder %s32, 0
      %p78 = por %p76, %p77
      %p79 = scmp.ne.s32.totalorder %s68, %s71
      %p80 = scmp.eq.s32.totalorder %s37, 1
      %p81 = por %p79, %p80
      %p82 = scmp.ne.s32.totalorder %s71, %s72
      %p83 = scmp.eq.s32.totalorder %s37, 0
      %p84 = por %p82, %p83
      %p85 = scmp.ne.s32.totalorder %s71, %s72
      %p86 = scmp.eq.s32.totalorder %s38, 1
      %p87 = por %p85, %p86
      %p89 = scmp.ne.s32.totalorder %s72, %s88
      %p90 = scmp.eq.s32.totalorder %s38, 0
      %p91 = por %p89, %p90
      %s93 = sadd.s32 %s92, 1
      %p96 = scmp.eq.s32.totalorder %s32, 1
      %p97 = scmp.ne.s32.totalorder %s92, %s94
      %p98 = scmp.eq.s32.totalorder %s32, 0
      %p99 = por %p97, %p98
      %p100 = scmp.ne.s32.totalorder %s92, %s94
      %p101 = scmp.eq.s32.totalorder %s37, 1
      %p102 = por %p100, %p101
      %p103 = scmp.ne.s32.totalorder %s94, %s95
      %p104 = scmp.eq.s32.totalorder %s37, 0
      %p105 = por %p103, %p104
      %p106 = scmp.ne.s32.totalorder %s94, %s95
      %p107 = scmp.eq.s32.totalorder %s38, 1
      %p108 = por %p106, %p107
      %p110 = scmp.ne.s32.totalorder %s95, %s109
      %p111 = scmp.eq.s32.totalorder %s38, 0
      %p112 = por %p110, %p111
      %s114 = sadd.s32 %s113, 1
      %p117 = scmp.eq.s32.totalorder %s32, 1
      %p118 = scmp.ne.s32.totalorder %s113, %s115
      %p119 = scmp.eq.s32.totalorder %s32, 0
      %p120 = por %p118, %p119
      %p121 = scmp.ne.s32.totalorder %s113, %s115
      %p122 = scmp.eq.s32.totalorder %s37, 1
      %p123 = por %p121, %p122
      %p124 = scmp.ne.s32.totalorder %s115, %s116
      %p125 = scmp.eq.s32.totalorder %s37, 0
      %p126 = por %p124, %p125
      %p127 = scmp.ne.s32.totalorder %s115, %s116
      %p128 = scmp.eq.s32.totalorder %s38, 1
      %p129 = por %p127, %p128
      %p131 = scmp.ne.s32.totalorder %s116, %s130
      %p132 = scmp.eq.s32.totalorder %s38, 0
      %p133 = por %p131, %p132
      %s135 = sadd.s32 %s134, 1
      %p138 = scmp.eq.s32.totalorder %s32, 1
      %p139 = scmp.ne.s32.totalorder %s134, %s136
      %p140 = scmp.eq.s32.totalorder %s32, 0
      %p141 = por %p139, %p140
      %p142 = scmp.ne.s32.totalorder %s134, %s136
      %p143 = scmp.eq.s32.totalorder %s37, 1
      %p144 = por %p142, %p143
      %p145 = scmp.ne.s32.totalorder %s136, %s137
      %p146 = scmp.eq.s32.totalorder %s37, 0
      %p147 = por %p145, %p146
      %p148 = scmp.ne.s32.totalorder %s136, %s137
      %p149 = scmp.eq.s32.totalorder %s38, 1
      %p150 = por %p148, %p149
      %p152 = scmp.ne.s32.totalorder %s137, %s151
      %p153 = scmp.eq.s32.totalorder %s38, 0
      %p154 = por %p152, %p153
      %s156 = sadd.s32 %s155, 1
      %p159 = scmp.eq.s32.totalorder %s32, 1
      %p160 = scmp.ne.s32.totalorder %s155, %s157
      %p161 = scmp.eq.s32.totalorder %s32, 0
      %p162 = por %p160, %p161
      %p163 = scmp.ne.s32.totalorder %s155, %s157
      %p164 = scmp.eq.s32.totalorder %s37, 1
      %p165 = por %p163, %p164
      %p166 = scmp.ne.s32.totalorder %s157, %s158
      %p167 = scmp.eq.s32.totalorder %s37, 0
      %p168 = por %p166, %p167
      %p169 = scmp.ne.s32.totalorder %s157, %s158
      %p170 = scmp.eq.s32.totalorder %s38, 1
      %p171 = por %p169, %p170
      %p173 = scmp.ne.s32.totalorder %s158, %s172
      %p174 = scmp.eq.s32.totalorder %s38, 0
      %p175 = por %p173, %p174
      %s177 = sadd.s32 %s176, 1
      %p180 = scmp.eq.s32.totalorder %s32, 1
      %p181 = scmp.ne.s32.totalorder %s176, %s178
      %p182 = scmp.eq.s32.totalorder %s32, 0
      %p183 = por %p181, %p182
      %p184 = scmp.ne.s32.totalorder %s176, %s178
      %p185 = scmp.eq.s32.totalorder %s37, 1
      %p186 = por %p184, %p185
      %p187 = scmp.ne.s32.totalorder %s178, %s179
      %p188 = scmp.eq.s32.totalorder %s37, 0
      %p189 = por %p187, %p188
      %p190 = scmp.ne.s32.totalorder %s178, %s179
      %p191 = scmp.eq.s32.totalorder %s38, 1
      %p192 = por %p190, %p191
      %p194 = scmp.ne.s32.totalorder %s179, %s193
      %p195 = scmp.eq.s32.totalorder %s38, 0
      %p196 = por %p194, %p195
      %s198 = sadd.s32 %s197, 1
      %p201 = scmp.eq.s32.totalorder %s32, 1
      %p202 = scmp.ne.s32.totalorder %s197, %s199
      %p203 = scmp.eq.s32.totalorder %s32, 0
      %p204 = por %p202, %p203
      %p205 = scmp.ne.s32.totalorder %s197, %s199
      %p206 = scmp.eq.s32.totalorder %s37, 1
      %p207 = por %p205, %p206
      %p208 = scmp.ne.s32.totalorder %s199, %s200
      %p209 = scmp.eq.s32.totalorder %s37, 0
      %p210 = por %p208, %p209
      %p211 = scmp.ne.s32.totalorder %s199, %s200
      %p212 = scmp.eq.s32.totalorder %s38, 1
      %p213 = por %p211, %p212
      %p215 = scmp.ne.s32.totalorder %s200, %s214
      %p216 = scmp.eq.s32.totalorder %s38, 0
      %p217 = por %p215, %p216
      %s219 = sadd.s32 %s218, 1
      %p222 = scmp.eq.s32.totalorder %s32, 1
      %p223 = scmp.ne.s32.totalorder %s218, %s220
      %p224 = scmp.eq.s32.totalorder %s32, 0
      %p225 = por %p223, %p224
      %p226 = scmp.ne.s32.totalorder %s218, %s220
      %p227 = scmp.eq.s32.totalorder %s37, 1
      %p228 = por %p226, %p227
      %p229 = scmp.ne.s32.totalorder %s220, %s221
      %p230 = scmp.eq.s32.totalorder %s37, 0
      %p231 = por %p229, %p230
      %p232 = scmp.ne.s32.totalorder %s220, %s221
      %p233 = scmp.eq.s32.totalorder %s38, 1
      %p234 = por %p232, %p233
      %p236 = scmp.ne.s32.totalorder %s221, %s235
      %p237 = scmp.eq.s32.totalorder %s38, 0
      %p238 = por %p236, %p237
      %s240 = sadd.s32 %s239, 1
      %p243 = scmp.eq.s32.totalorder %s32, 1
      %p244 = scmp.ne.s32.totalorder %s239, %s241
      %p245 = scmp.eq.s32.totalorder %s32, 0
      %p246 = por %p244, %p245
      %p247 = scmp.ne.s32.totalorder %s239, %s241
      %p248 = scmp.eq.s32.totalorder %s37, 1
      %p249 = por %p247, %p248
      %p250 = scmp.ne.s32.totalorder %s241, %s242
      %p251 = scmp.eq.s32.totalorder %s37, 0
      %p252 = por %p250, %p251
      %p253 = scmp.ne.s32.totalorder %s241, %s242
      %p254 = scmp.eq.s32.totalorder %s38, 1
      %p255 = por %p253, %p254
      %p257 = scmp.ne.s32.totalorder %s242, %s256
      %p258 = scmp.eq.s32.totalorder %s38, 0
      %p259 = por %p257, %p258
      %s261 = sadd.s32 %s260, 1
      %p264 = scmp.eq.s32.totalorder %s32, 1
      %p265 = scmp.ne.s32.totalorder %s260, %s262
      %p266 = scmp.eq.s32.totalorder %s32, 0
      %p267 = por %p265, %p266
      %p268 = scmp.ne.s32.totalorder %s260, %s262
      %p269 = scmp.eq.s32.totalorder %s37, 1
      %p270 = por %p268, %p269
      %p271 = scmp.ne.s32.totalorder %s262, %s263
      %p272 = scmp.eq.s32.totalorder %s37, 0
      %p273 = por %p271, %p272
      %p274 = scmp.ne.s32.totalorder %s262, %s263
      %p275 = scmp.eq.s32.totalorder %s38, 1
      %p276 = por %p274, %p275
      %p278 = scmp.ne.s32.totalorder %s263, %s277
      %p279 = scmp.eq.s32.totalorder %s38, 0
      %p280 = por %p278, %p279
      %s282 = sadd.s32 %s281, 1
      %p285 = scmp.eq.s32.totalorder %s32, 1
      %p286 = scmp.ne.s32.totalorder %s281, %s283
      %p287 = scmp.eq.s32.totalorder %s32, 0
      %p288 = por %p286, %p287
      %p289 = scmp.ne.s32.totalorder %s281, %s283
      %p290 = scmp.eq.s32.totalorder %s37, 1
      %p291 = por %p289, %p290
      %p292 = scmp.ne.s32.totalorder %s283, %s284
      %p293 = scmp.eq.s32.totalorder %s37, 0
      %p294 = por %p292, %p293
      %p295 = scmp.ne.s32.totalorder %s283, %s284
      %p296 = scmp.eq.s32.totalorder %s38, 1
      %p297 = por %p295, %p296
      %p299 = scmp.ne.s32.totalorder %s284, %s298
      %p300 = scmp.eq.s32.totalorder %s38, 0
      %p301 = por %p299, %p300
      %s303 = sadd.s32 %s302, 1
      %p306 = scmp.eq.s32.totalorder %s32, 1
      %p307 = scmp.ne.s32.totalorder %s302, %s304
      %p308 = scmp.eq.s32.totalorder %s32, 0
      %p309 = por %p307, %p308
      %p310 = scmp.ne.s32.totalorder %s302, %s304
      %p311 = scmp.eq.s32.totalorder %s37, 1
      %p312 = por %p310, %p311
      %p313 = scmp.ne.s32.totalorder %s304, %s305
      %p314 = scmp.eq.s32.totalorder %s37, 0
      %p315 = por %p313, %p314
      %p316 = scmp.ne.s32.totalorder %s304, %s305
      %p317 = scmp.eq.s32.totalorder %s38, 1
      %p318 = por %p316, %p317
      %p320 = scmp.ne.s32.totalorder %s305, %s319
      %p321 = scmp.eq.s32.totalorder %s38, 0
      %p322 = por %p320, %p321
      %s324 = sadd.s32 %s323, 1
      %p327 = scmp.eq.s32.totalorder %s32, 1
      %p328 = scmp.ne.s32.totalorder %s323, %s325
      %p329 = scmp.eq.s32.totalorder %s32, 0
      %p330 = por %p328, %p329
      %p331 = scmp.ne.s32.totalorder %s323, %s325
      %p332 = scmp.eq.s32.totalorder %s37, 1
      %p333 = por %p331, %p332
      %p334 = scmp.ne.s32.totalorder %s325, %s326
      %p335 = scmp.eq.s32.totalorder %s37, 0
      %p336 = por %p334, %p335
      %p337 = scmp.ne.s32.totalorder %s325, %s326
      %p338 = scmp.eq.s32.totalorder %s38, 1
      %p339 = por %p337, %p338
      %p341 = scmp.ne.s32.totalorder %s326, %s340
      %p342 = scmp.eq.s32.totalorder %s38, 0
      %p343 = por %p341, %p342
      %s345 = sadd.s32 %s344, 1
      %p348 = scmp.eq.s32.totalorder %s32, 1
      %p349 = scmp.ne.s32.totalorder %s344, %s346
      %p350 = scmp.eq.s32.totalorder %s32, 0
      %p351 = por %p349, %p350
      %p352 = scmp.ne.s32.totalorder %s344, %s346
      %p353 = scmp.eq.s32.totalorder %s37, 1
      %p354 = por %p352, %p353
      %p355 = scmp.ne.s32.totalorder %s346, %s347
      %p356 = scmp.eq.s32.totalorder %s37, 0
      %p357 = por %p355, %p356
      %p358 = scmp.ne.s32.totalorder %s346, %s347
      %p359 = scmp.eq.s32.totalorder %s38, 1
      %p360 = por %p358, %p359
      %p362 = scmp.ne.s32.totalorder %s347, %s361
      %p363 = scmp.eq.s32.totalorder %s38, 0
      %p364 = por %p362, %p363
      %s366 = sadd.s32 %s365, 1
      %p369 = scmp.eq.s32.totalorder %s32, 1
      %p370 = scmp.ne.s32.totalorder %s365, %s367
      %p371 = scmp.eq.s32.totalorder %s32, 0
      %p372 = por %p370, %p371
      %p373 = scmp.ne.s32.totalorder %s365, %s367
      %p374 = scmp.eq.s32.totalorder %s37, 1
      %p375 = por %p373, %p374
      %p376 = scmp.ne.s32.totalorder %s367, %s368
      %p377 = scmp.eq.s32.totalorder %s37, 0
      %p378 = por %p376, %p377
      %p379 = scmp.ne.s32.totalorder %s367, %s368
      %p380 = scmp.eq.s32.totalorder %s38, 1
      %p381 = por %p379, %p380
      %p383 = scmp.ne.s32.totalorder %s368, %s382
      %p384 = scmp.eq.s32.totalorder %s38, 0
      %p385 = por %p383, %p384
      %s386 = ssub.s32 %s32, %s39
      %p387 = scmp.eq.s32.totalorder %s386, 0
      %s389 = sadd.s32 %s388, 1
      %s390 = scalar_select %p387, %s388, %s389
      %p393 = pneg %p387
      %p394 = scmp.eq.s32.totalorder %s32, 1
      %p395 = por %p393, %p394
      %p396 = scmp.ne.s32.totalorder %s388, %s391
      %p397 = scmp.eq.s32.totalorder %s32, 0
      %p398 = por %p396, %p397
      %p399 = scmp.ne.s32.totalorder %s388, %s391
      %p400 = scmp.eq.s32.totalorder %s37, 1
      %p401 = por %p399, %p400
      %p402 = scmp.ne.s32.totalorder %s391, %s392
      %p403 = scmp.eq.s32.totalorder %s37, 0
      %p404 = por %p402, %p403
      %p405 = scmp.ne.s32.totalorder %s391, %s392
      %p406 = scmp.eq.s32.totalorder %s38, 1
      %p407 = por %p405, %p406
      %p409 = scmp.ne.s32.totalorder %s392, %s408
      %p410 = scmp.eq.s32.totalorder %s38, 0
      %p411 = por %p409, %p410
      %p412 = scmp.le.s32.totalorder 1, %s32
      %p413 = scmp.lt.s32.totalorder %s32, 3
      %p414 = pnand %p412, %p413
      %p415 = pneg %p414
      // Predicated region
      $region9: #{snippet_topic_gcn.5} parent=5 // pred_check
        _
      $region10: #{snippet_topic_gcn.5} parent=5 // pred_check_branch
        %417 = sbr.rel (%p414) target = $region12
      $region11: #{snippet_topic_gcn.5} parent=5 // pred_region
        %s418 = ssub.s32 %s32, 1
        // Predicated region
        $region13: #{snippet_topic_gcn.5} parent=11 // pred_check
          %p419 = pneg %p105
        $region14: #{snippet_topic_gcn.5} parent=11 // pred_check_branch
          %421 = sbr.rel (%p419) target = $region16
        $region15: #{snippet_topic_gcn.5} parent=11 // pred_region
          _
        $region16: #{snippet_topic_gcn.5} parent=11 // pred_fallthru
          _
        // Predicated region
        $region17: #{snippet_topic_gcn.5} parent=11 // pred_check
          %p422 = pneg %p126
        $region18: #{snippet_topic_gcn.5} parent=11 // pred_check_branch
          %424 = sbr.rel (%p422) target = $region20
        $region19: #{snippet_topic_gcn.5} parent=11 // pred_region
          _
        $region20: #{snippet_topic_gcn.5} parent=11 // pred_fallthru
          _
        // Predicated region
        $region21: #{snippet_topic_gcn.5} parent=11 // pred_check
          %p425 = pneg %p147
        $region22: #{snippet_topic_gcn.5} parent=11 // pred_check_branch
          %427 = sbr.rel (%p425) target = $region24
        $region23: #{snippet_topic_gcn.5} parent=11 // pred_region
          _
        $region24: #{snippet_topic_gcn.5} parent=11 // pred_fallthru
          _
        // Predicated region
        $region25: #{snippet_topic_gcn.5} parent=11 // pred_check
          %p428 = pneg %p168
        $region26: #{snippet_topic_gcn.5} parent=11 // pred_check_branch
          %430 = sbr.rel (%p428) target = $region28
        $region27: #{snippet_topic_gcn.5} parent=11 // pred_region
          _
        $region28: #{snippet_topic_gcn.5} parent=11 // pred_fallthru
          _
        // Predicated region
        $region29: #{snippet_topic_gcn.5} parent=11 // pred_check
          %p431 = pneg %p189
        $region30: #{snippet_topic_gcn.5} parent=11 // pred_check_branch
          %433 = sbr.rel (%p431) target = $region32
        $region31: #{snippet_topic_gcn.5} parent=11 // pred_region
          _
        $region32: #{snippet_topic_gcn.5} parent=11 // pred_fallthru
          _
        // Predicated region
        $region33: #{snippet_topic_gcn.5} parent=11 // pred_check
          %p434 = pneg %p210
        $region34: #{snippet_topic_gcn.5} parent=11 // pred_check_branch
          %436 = sbr.rel (%p434) target = $region36
        $region35: #{snippet_topic_gcn.5} parent=11 // pred_region
          _
        $region36: #{snippet_topic_gcn.5} parent=11 // pred_fallthru
          _
        // Predicated region
        $region37: #{snippet_topic_gcn.5} parent=11 // pred_check
          %p437 = pneg %p231
        $region38: #{snippet_topic_gcn.5} parent=11 // pred_check_branch
          %439 = sbr.rel (%p437) target = $region40
        $region39: #{snippet_topic_gcn.5} parent=11 // pred_region
          _
        $region40: #{snippet_topic_gcn.5} parent=11 // pred_fallthru
          _
        // Predicated region
        $region41: #{snippet_topic_gcn.5} parent=11 // pred_check
          %p440 = pneg %p252
        $region42: #{snippet_topic_gcn.5} parent=11 // pred_check_branch
          %442 = sbr.rel (%p440) target = $region44
        $region43: #{snippet_topic_gcn.5} parent=11 // pred_region
          _
        $region44: #{snippet_topic_gcn.5} parent=11 // pred_fallthru
          _
        // Predicated region
        $region45: #{snippet_topic_gcn.5} parent=11 // pred_check
          %p443 = pneg %p273
        $region46: #{snippet_topic_gcn.5} parent=11 // pred_check_branch
          %445 = sbr.rel (%p443) target = $region48
        $region47: #{snippet_topic_gcn.5} parent=11 // pred_region
          _
        $region48: #{snippet_topic_gcn.5} parent=11 // pred_fallthru
          _
        // Predicated region
        $region49: #{snippet_topic_gcn.5} parent=11 // pred_check
          %p446 = pneg %p294
        $region50: #{snippet_topic_gcn.5} parent=11 // pred_check_branch
          %448 = sbr.rel (%p446) target = $region52
        $region51: #{snippet_topic_gcn.5} parent=11 // pred_region
          _
        $region52: #{snippet_topic_gcn.5} parent=11 // pred_fallthru
          _
        // Predicated region
        $region53: #{snippet_topic_gcn.5} parent=11 // pred_check
          %p449 = pneg %p315
        $region54: #{snippet_topic_gcn.5} parent=11 // pred_check_branch
          %451 = sbr.rel (%p449) target = $region56
        $region55: #{snippet_topic_gcn.5} parent=11 // pred_region
          _
        $region56: #{snippet_topic_gcn.5} parent=11 // pred_fallthru
          _
        // Predicated region
        $region57: #{snippet_topic_gcn.5} parent=11 // pred_check
          %p452 = pneg %p336
        $region58: #{snippet_topic_gcn.5} parent=11 // pred_check_branch
          %454 = sbr.rel (%p452) target = $region60
        $region59: #{snippet_topic_gcn.5} parent=11 // pred_region
          _
        $region60: #{snippet_topic_gcn.5} parent=11 // pred_fallthru
          _
        // Predicated region
        $region61: #{snippet_topic_gcn.5} parent=11 // pred_check
          %p455 = pneg %p357
        $region62: #{snippet_topic_gcn.5} parent=11 // pred_check_branch
          %457 = sbr.rel (%p455) target = $region64
        $region63: #{snippet_topic_gcn.5} parent=11 // pred_region
          _
        $region64: #{snippet_topic_gcn.5} parent=11 // pred_fallthru
          _
        // Predicated region
        $region65: #{snippet_topic_gcn.5} parent=11 // pred_check
          %p458 = pneg %p378
        $region66: #{snippet_topic_gcn.5} parent=11 // pred_check_branch
          %460 = sbr.rel (%p458) target = $region68
        $region67: #{snippet_topic_gcn.5} parent=11 // pred_region
          _
        $region68: #{snippet_topic_gcn.5} parent=11 // pred_fallthru
          _
      $region12: #{snippet_topic_gcn.5} parent=5 // pred_fallthru
        _
      %p461 = scmp.lt.s32.totalorder %s32, 2
      // Predicated region
      $region69: #{snippet_topic_gcn.5} parent=5 // pred_check
        %p462 = pneg %p461
      $region70: #{snippet_topic_gcn.5} parent=5 // pred_check_branch
        %464 = sbr.rel (%p462) target = $region72
      $region71: #{snippet_topic_gcn.5} parent=5 // pred_region
        // Predicated region
        $region73: #{snippet_topic_gcn.5} parent=71 // pred_check
          %p465 = pneg %p52
        $region74: #{snippet_topic_gcn.5} parent=71 // pred_check_branch
          %467 = sbr.rel (%p465) target = $region76
        $region75: #{snippet_topic_gcn.5} parent=71 // pred_region
          %p468 = scmp.lt.s32.totalorder %s32, 1
          %s469 = scalar_select %p468, %s32, 1
          %s470 = smul.addr %s469, 4
          %s471 = smul.addr %s470, 8
          %s472 = scalar_lea.vmem %s1, %s471
        $region76: #{snippet_topic_gcn.5} parent=71 // pred_fallthru
          _
        // Predicated region
        $region77: #{snippet_topic_gcn.5} parent=71 // pred_check
          %p473 = pneg %p78
        $region78: #{snippet_topic_gcn.5} parent=71 // pred_check_branch
          %475 = sbr.rel (%p473) target = $region80
        $region79: #{snippet_topic_gcn.5} parent=71 // pred_region
          %p476 = scmp.lt.s32.totalorder %s32, 1
          %s477 = scalar_select %p476, %s32, 1
          %s478 = smul.addr %s477, 2
          %s479 = scalar_lea.vmem %s2, %s478
        $region80: #{snippet_topic_gcn.5} parent=71 // pred_fallthru
          _
      $region72: #{snippet_topic_gcn.5} parent=5 // pred_fallthru
        _
      %p480 = scmp.le.s32.totalorder 1, %s32
      %p481 = scmp.lt.s32.totalorder %s32, 3
      %p482 = pnand %p480, %p481
      %p483 = pneg %p482
      // Predicated region
      $region81: #{snippet_topic_gcn.5} parent=5 // pred_check
        _
      $region82: #{snippet_topic_gcn.5} parent=5 // pred_check_branch
        %485 = sbr.rel (%p482) target = $region84
      $region83: #{snippet_topic_gcn.5} parent=5 // pred_region
        %s486 = ssub.s32 %s32, 1
        %p487 = scmp.lt.s32.totalorder %s37, 1
        %s488 = scalar_select %p487, %s37, 1
        %s489 = smul.addr %s488, 4
        %s490 = smul.addr %s489, 8
        %s491 = scalar_lea.vmem %s1, %s490
        %p492 = pneg %p58
        %p493 = pneg %p55
        %p494 = scmp.lt.s32.totalorder %s37, 1
        %s495 = scalar_select %p494, %s37, 1
        %s496 = smul.addr %s495, 2
        %s497 = scalar_lea.vmem %s2, %s496
        %p498 = pneg %p84
        %p499 = pneg %p81
        %p500 = pneg %p105
        %p501 = pneg %p102
        %p502 = pneg %p126
        %p503 = pneg %p123
        %p504 = pneg %p147
        %p505 = pneg %p144
        %p506 = pneg %p168
        %p507 = pneg %p165
        %p508 = pneg %p189
        %p509 = pneg %p186
        %p510 = pneg %p210
        %p511 = pneg %p207
        %p512 = pneg %p231
        %p513 = pneg %p228
        %p514 = pneg %p252
        %p515 = pneg %p249
        %p516 = pneg %p273
        %p517 = pneg %p270
        %p518 = pneg %p294
        %p519 = pneg %p291
        %p520 = pneg %p315
        %p521 = pneg %p312
        %p522 = pneg %p336
        %p523 = pneg %p333
        %p524 = pneg %p357
        %p525 = pneg %p354
        %p526 = pneg %p378
        %p527 = pneg %p375
        %p528 = pneg %p404
        %p529 = pneg %p401
        %s530 = sand.u32 %s391, 1
        %s531 = scalar_lea.sflag [#allocation5], %s530
        %s532 = sand.u32 %s391, 1
        %s533 = smul.addr %s532, 32
        %s534 = scalar_lea.vmem [#allocation4], %s533
        %p535 = scmp.lt.s32.totalorder %s37, 1
        %s536 = scalar_select %p535, %s37, 1
        %s537 = smul.addr %s536, 4
        %s538 = smul.addr %s537, 8
        %s539 = scalar_lea.vmem %s1, %s538
        %p540 = scmp.lt.s32.totalorder %s37, 1
        %s541 = scalar_select %p540, %s37, 1
        %s542 = smul.addr %s541, 2
        %s543 = scalar_lea.vmem %s2, %s542
        %v545 = vld [vmem:[%s539] sm:$0xff]
        %v546 = vld [vmem:[%s539 + $0x8] sm:$0xff]
        %v547 = vld [vmem:[%s539 + $0x10] sm:$0xff]
        %v548 = vld [vmem:[%s539 + $0x18] sm:$0xff]
        %549 = vmatprep.subr.mxu0 %v546
        %550 = vmatpush1.xpose.msra.mxu0 %v545
        %551 = vmatprep.subr.mxu0 %v548
        %552 = vmatpush1.xpose.msra.mxu0 %v547
        %553 = vmatprep.subr.mxu0 0.0
        %554 = vmatpush1.xpose.msra.mxu0 0.0
        %555 = vmatprep.subr.mxu0 0.0
        %556 = vmatpush1.xpose.msra.mxu0 0.0
        %557 = vmatprep.subr.mxu0 0.0
        %558 = vmatpush1.xpose.msra.mxu0 0.0
        %559 = vmatprep.subr.mxu0 0.0
        %560 = vmatpush1.xpose.msra.mxu0 0.0
        %561 = vmatprep.subr.mxu0 0.0
        %562 = vmatpush1.xpose.msra.mxu0 0.0
        %563 = vmatprep.subr.mxu0 0.0
        %564 = vmatpush1.xpose.msra.mxu0 0.0
        %565 = vmatprep.subr.mxu0 0.0
        %566 = vmatpush1.xpose.msra.mxu0 0.0
        %567 = vmatprep.subr.mxu0 0.0
        %568 = vmatpush1.xpose.msra.mxu0 0.0
        %569 = vmatprep.subr.mxu0 0.0
        %570 = vmatpush1.xpose.msra.mxu0 0.0
        %571 = vmatprep.subr.mxu0 0.0
        %572 = vmatpush1.xpose.msra.mxu0 0.0
        %573 = vmatprep.subr.mxu0 0.0
        %574 = vmatpush1.xpose.msra.mxu0 0.0
        %575 = vmatprep.subr.mxu0 0.0
        %576 = vmatpush1.xpose.msra.mxu0 0.0
        %577 = vmatprep.subr.mxu0 0.0
        %578 = vmatpush1.xpose.msra.mxu0 0.0
        %579 = vmatprep.subr.mxu0 0.0
        %580 = vmatpush1.xpose.msra.mxu0 0.0
        %581 = vmatprep.subr.mxu0 0.0
        %582 = vmatpush1.xpose.msra.mxu0 0.0
        %583 = vmatprep.subr.mxu0 0.0
        %584 = vmatpush1.xpose.msra.mxu0 0.0
        %585 = vmatprep.subr.mxu0 0.0
        %586 = vmatpush1.xpose.msra.mxu0 0.0
        %587 = vmatprep.subr.mxu0 0.0
        %588 = vmatpush1.xpose.msra.mxu0 0.0
        %589 = vmatprep.subr.mxu0 0.0
        %590 = vmatpush1.xpose.msra.mxu0 0.0
        %591 = vmatprep.subr.mxu0 0.0
        %592 = vmatpush1.xpose.msra.mxu0 0.0
        %593 = vmatprep.subr.mxu0 0.0
        %594 = vmatpush1.xpose.msra.mxu0 0.0
        %595 = vmatprep.subr.mxu0 0.0
        %596 = vmatpush1.xpose.msra.mxu0 0.0
        %597 = vmatprep.subr.mxu0 0.0
        %598 = vmatpush1.xpose.msra.mxu0 0.0
        %599 = vmatprep.subr.mxu0 0.0
        %600 = vmatpush1.xpose.msra.mxu0 0.0
        %601 = vmatprep.subr.mxu0 0.0
        %602 = vmatpush1.xpose.msra.mxu0 0.0
        %603 = vmatprep.subr.mxu0 0.0
        %604 = vmatpush1.xpose.msra.mxu0 0.0
        %605 = vmatprep.subr.mxu0 0.0
        %606 = vmatpush1.xpose.msra.mxu0 0.0
        %607 = vmatprep.subr.mxu0 0.0
        %608 = vmatpush1.xpose.msra.mxu0 0.0
        %609 = vmatprep.subr.mxu0 0.0
        %610 = vmatpush1.xpose.msra.mxu0 0.0
        %611 = vmatprep.subr.mxu0 0.0
        %612 = vmatpush1.xpose.msra.mxu0 0.0
        %613 = vmatprep.mubr.f32.mxu0 %v546
        %614 = vmatmul.mubr.f32.gmra.mrb[0].mxu0 %v545
        %v615 = vpop.f32.mrb[0].mxu0
        %v616 = vadd.f32 0.0, %v615
        %v617 = vpop.f32.mrb[0].mxu0
        %618 = vmatprep.mubr.f32.mxu0 %v548
        %619 = vmatmul.mubr.f32.gmra.mrb[0].mxu0 %v547
        %v620 = vpop.f32.mrb[0].mxu0
        %v621 = vadd.f32 0.0, %v620
        %v622 = vpop.f32.mrb[0].mxu0
        %623 = vdwg.mxu0
        %v624 = vlaneseq
        %v625 = vshrl.u32 %v624, 7
        %v626 = vadd.s32 %v625, 8
        %v627 = vlaneseq
        %v628 = vand.u32 %v627, 127
        %vm629 = vcmp.eq.s32.totalorder %v625, %v628
        %vm630 = vcmp.eq.s32.totalorder %v626, %v628
        %v631 = vsel %vm629, %v616, 0.0
        %v632 = vsel %vm630, %v621, 0.0
        %vm633 = vcmask 130048
        %v634 = vsel %vm633, %v631, 0.0
        %v635 = vsel %vm633, %v632, 0.0
        %v636 = vadd.f32 %v634, %v635
        %v637 = vrot.slane %v636, 4
        %v638 = vadd.f32 %v636, %v637
        %v639 = vrot.slane %v638, 2
        %v640 = vadd.f32 %v638, %v639
        %v641 = vrot.slane %v640, 1
        %v642 = vadd.f32 %v640, %v641
        %v643 = vmul.f32 %v616, 2.0
        %v644 = vmul.f32 %v621, 2.0
        %v645 = vsub.f32 %v643, %v642
        %v646 = vsub.f32 %v644, %v642
        %s647 = sld [smem:[#allocation3 + %s37]]
        %v648 = vstv %s647
        %vm649 = vcmp.lt.s32.totalorder %v628, %v648
        %v650 = vsel %vm649, %v645, -inf
        %v651 = vsel %vm649, %v646, -inf
        %v652 = vld [vmem:[%s3] sm:$0xf]
        %v653 = vld [vmem:[%s3 + $0x4] sm:$0xf]
        %v654 = vld [vmem:[%s3 + $0x8] sm:$0xf]
        %v655 = vld [vmem:[%s3 + $0xc] sm:$0xf]
        %v656 = vld [vmem:[%s3 + $0x10] sm:$0xf]
        %v657 = vld [vmem:[%s3 + $0x14] sm:$0xf]
        %v658 = vld [vmem:[%s3 + $0x18] sm:$0xf]
        %v659 = vld [vmem:[%s3 + $0x1c] sm:$0xf]
        %v660 = vld [vmem:[%s3 + $0x20] sm:$0xf]
        %v661 = vld [vmem:[%s3 + $0x24] sm:$0xf]
        %v662 = vld [vmem:[%s3 + $0x28] sm:$0xf]
        %v663 = vld [vmem:[%s3 + $0x2c] sm:$0xf]
        %v664 = vld [vmem:[%s3 + $0x30] sm:$0xf]
        %v665 = vld [vmem:[%s3 + $0x34] sm:$0xf]
        %v666 = vld [vmem:[%s3 + $0x38] sm:$0xf]
        %v667 = vld [vmem:[%s3 + $0x3c] sm:$0xf]
        %v668 = vld [vmem:[%s3 + $0x40] sm:$0xf]
        %v669 = vld [vmem:[%s3 + $0x44] sm:$0xf]
        %v670 = vld [vmem:[%s3 + $0x48] sm:$0xf]
        %v671 = vld [vmem:[%s3 + $0x4c] sm:$0xf]
        %v672 = vld [vmem:[%s3 + $0x50] sm:$0xf]
        %v673 = vld [vmem:[%s3 + $0x54] sm:$0xf]
        %v674 = vld [vmem:[%s3 + $0x58] sm:$0xf]
        %v675 = vld [vmem:[%s3 + $0x5c] sm:$0xf]
        %v676 = vld [vmem:[%s3 + $0x60] sm:$0xf]
        %v677 = vld [vmem:[%s3 + $0x64] sm:$0xf]
        %v678 = vld [vmem:[%s3 + $0x68] sm:$0xf]
        %v679 = vld [vmem:[%s3 + $0x6c] sm:$0xf]
        %v680 = vld [vmem:[%s3 + $0x70] sm:$0xf]
        %v681 = vld [vmem:[%s3 + $0x74] sm:$0xf]
        %v682 = vld [vmem:[%s3 + $0x78] sm:$0xf]
        %v683 = vld [vmem:[%s3 + $0x7c] sm:$0xf]
        %v684 = vpack.c.bf16 %v547, %v545
        %v685 = vpack.c.bf16 %v548, %v546
        %v686 = vld [vmem:[%s4] sm:$0x1]
        %v688 = vlaneseq
        %v689 = vshrl.u32 %v688, 7
        %v690 = vsub.s32 0, %v689
        %v691 = vrot.slane %v686, %v690
        %v725 = vunpack.c.l.b16 %v652
        %v726 = vunpack.c.l.b16 %v653
        %v727 = vunpack.c.l.b16 %v654
        %v728 = vunpack.c.l.b16 %v655
        %v729 = vunpack.c.l.b16 %v656
        %v730 = vunpack.c.l.b16 %v657
        %v731 = vunpack.c.l.b16 %v658
        %v732 = vunpack.c.l.b16 %v659
        %v733 = vunpack.c.l.b16 %v660
        %v734 = vunpack.c.l.b16 %v661
        %v735 = vunpack.c.l.b16 %v662
        %v736 = vunpack.c.l.b16 %v663
        %v737 = vunpack.c.l.b16 %v664
        %v738 = vunpack.c.l.b16 %v665
        %v739 = vunpack.c.l.b16 %v666
        %v740 = vunpack.c.l.b16 %v667
        %v741 = vunpack.c.l.b16 %v668
        %v742 = vunpack.c.l.b16 %v669
        %v743 = vunpack.c.l.b16 %v670
        %v744 = vunpack.c.l.b16 %v671
        %v745 = vunpack.c.l.b16 %v672
        %v746 = vunpack.c.l.b16 %v673
        %v747 = vunpack.c.l.b16 %v674
        %v748 = vunpack.c.l.b16 %v675
        %v749 = vunpack.c.l.b16 %v676
        %v750 = vunpack.c.l.b16 %v677
        %v751 = vunpack.c.l.b16 %v678
        %v752 = vunpack.c.l.b16 %v679
        %v753 = vunpack.c.l.b16 %v680
        %v754 = vunpack.c.l.b16 %v681
        %v755 = vunpack.c.l.b16 %v682
        %v756 = vunpack.c.l.b16 %v683
        %v757 = vpack.c.b16 %v726, %v725
        %v758 = vpack.c.b16 %v728, %v727
        %v759 = vpack.c.b16 %v730, %v729
        %v760 = vpack.c.b16 %v732, %v731
        %v761 = vpack.c.b16 %v734, %v733
        %v762 = vpack.c.b16 %v736, %v735
        %v763 = vpack.c.b16 %v738, %v737
        %v764 = vpack.c.b16 %v740, %v739
        %v765 = vpack.c.b16 %v742, %v741
        %v766 = vpack.c.b16 %v744, %v743
        %v767 = vpack.c.b16 %v746, %v745
        %v768 = vpack.c.b16 %v748, %v747
        %v769 = vpack.c.b16 %v750, %v749
        %v770 = vpack.c.b16 %v752, %v751
        %v771 = vpack.c.b16 %v754, %v753
        %v772 = vpack.c.b16 %v756, %v755
        %789 = vmatprep.subr.bf16.mxu0 0
        %790 = vmatpush1.bf16.msra.mxu0 %v757
        %791 = vmatprep.subr.bf16.mxu0 0
        %792 = vmatpush1.bf16.msra.mxu0 %v758
        %793 = vmatprep.subr.bf16.mxu0 0
        %794 = vmatpush1.bf16.msra.mxu0 %v759
        %795 = vmatprep.subr.bf16.mxu0 0
        %796 = vmatpush1.bf16.msra.mxu0 %v760
        %797 = vmatprep.subr.bf16.mxu0 0
        %798 = vmatpush1.bf16.msra.mxu0 %v761
        %799 = vmatprep.subr.bf16.mxu0 0
        %800 = vmatpush1.bf16.msra.mxu0 %v762
        %801 = vmatprep.subr.bf16.mxu0 0
        %802 = vmatpush1.bf16.msra.mxu0 %v763
        %803 = vmatprep.subr.bf16.mxu0 0
        %804 = vmatpush1.bf16.msra.mxu0 %v764
        %805 = vmatprep.subr.bf16.mxu0 0
        %806 = vmatpush1.bf16.msra.mxu0 %v765
        %807 = vmatprep.subr.bf16.mxu0 0
        %808 = vmatpush1.bf16.msra.mxu0 %v766
        %809 = vmatprep.subr.bf16.mxu0 0
        %810 = vmatpush1.bf16.msra.mxu0 %v767
        %811 = vmatprep.subr.bf16.mxu0 0
        %812 = vmatpush1.bf16.msra.mxu0 %v768
        %813 = vmatprep.subr.bf16.mxu0 0
        %814 = vmatpush1.bf16.msra.mxu0 %v769
        %815 = vmatprep.subr.bf16.mxu0 0
        %816 = vmatpush1.bf16.msra.mxu0 %v770
        %817 = vmatprep.subr.bf16.mxu0 0
        %818 = vmatpush1.bf16.msra.mxu0 %v771
        %819 = vmatprep.subr.bf16.mxu0 0
        %820 = vmatpush1.bf16.msra.mxu0 %v772
        %821 = vmatprep.mubr.bf16.mxu0 %v685
        %822 = vmatmul.mubr.bf16.gmra.mrb[0].mxu0 %v684
        %v823 = vpop.f32.mrb[0].mxu0
        %v824 = vadd.f32 %v691, %v823
        %v825 = vpop.f32.mrb[0].mxu0
        %v826 = vpop.f32.mrb[0].mxu0
        %v827 = vadd.f32 %v691, %v826
        %v828 = vpop.f32.mrb[0].mxu0
        %829 = vdwg.mxu0
        %v830 = vmax.f32 %v824, 0.0
        %v831 = vmax.f32 %v827, 0.0
        %v832 = vsub.s32 %v625, 1
        %v833 = vsub.s32 %v626, 1
        %vm834 = vcmp.eq.s32.totalorder %v628, %v832
        %vm835 = vcmp.eq.s32.totalorder %v628, %v833
        %v836 = vsel %vm834, 1, 0
        %v837 = vsel %vm835, 1, 0
        %v838 = vcvt.s32.f32 %v836
        %v839 = vcvt.s32.f32 %v837
        %v840 = vpack.c.bf16 %v839, %v838
        %v841 = vpack.c.bf16 %v831, %v830
        %v843 = vsel %vm633, %v840, 0
        %845 = vmatprep.subr.bf16.mxu0 0
        %846 = vmatpush1.bf16.msra.mxu0 %v841
        %847 = vmatprep.subr.bf16.mxu0 0
        %848 = vmatpush1.bf16.msra.mxu0 0
        %849 = vmatprep.subr.bf16.mxu0 0
        %850 = vmatpush1.bf16.msra.mxu0 0
        %851 = vmatprep.subr.bf16.mxu0 0
        %852 = vmatpush1.bf16.msra.mxu0 0
        %853 = vmatprep.subr.bf16.mxu0 0
        %854 = vmatpush1.bf16.msra.mxu0 0
        %855 = vmatprep.subr.bf16.mxu0 0
        %856 = vmatpush1.bf16.msra.mxu0 0
        %857 = vmatprep.subr.bf16.mxu0 0
        %858 = vmatpush1.bf16.msra.mxu0 0
        %859 = vmatprep.subr.bf16.mxu0 0
        %860 = vmatpush1.bf16.msra.mxu0 0
        %861 = vmatprep.subr.bf16.mxu0 0
        %862 = vmatpush1.bf16.msra.mxu0 0
        %863 = vmatprep.subr.bf16.mxu0 0
        %864 = vmatpush1.bf16.msra.mxu0 0
        %865 = vmatprep.subr.bf16.mxu0 0
        %866 = vmatpush1.bf16.msra.mxu0 0
        %867 = vmatprep.subr.bf16.mxu0 0
        %868 = vmatpush1.bf16.msra.mxu0 0
        %869 = vmatprep.subr.bf16.mxu0 0
        %870 = vmatpush1.bf16.msra.mxu0 0
        %871 = vmatprep.subr.bf16.mxu0 0
        %872 = vmatpush1.bf16.msra.mxu0 0
        %873 = vmatprep.subr.bf16.mxu0 0
        %874 = vmatpush1.bf16.msra.mxu0 0
        %875 = vmatprep.subr.bf16.mxu0 0
        %876 = vmatpush1.bf16.msra.mxu0 0
        %877 = vmatprep.mubr.bf16.mxu0 0
        %878 = vmatmul.mubr.bf16.gmra.mrb[0].mxu0 %v843
        %v879 = vpop.f32.mrb[0].mxu0
        %v880 = vadd.f32 0.0, %v879
        %v881 = vpop.f32.mrb[0].mxu0
        %v882 = vpop.f32.mrb[0].mxu0
        %v883 = vadd.f32 0.0, %v882
        %v884 = vpop.f32.mrb[0].mxu0
        %885 = vdwg.mxu0
        %v886 = vsub.s32 %v625, 4294967295
        %v887 = vsub.s32 %v626, 4294967295
        %vm888 = vcmp.eq.s32.totalorder %v628, %v886
        %vm889 = vcmp.eq.s32.totalorder %v628, %v887
        %v890 = vsel %vm888, 1, 0
        %v891 = vsel %vm889, 1, 0
        %v892 = vcvt.s32.f32 %v890
        %v893 = vcvt.s32.f32 %v891
        %v894 = vpack.c.bf16 %v893, %v892
        %v896 = vsel %vm633, %v894, 0
        %898 = vmatprep.subr.bf16.mxu0 0
        %899 = vmatpush1.bf16.msra.mxu0 %v841
        %900 = vmatprep.subr.bf16.mxu0 0
        %901 = vmatpush1.bf16.msra.mxu0 0
        %902 = vmatprep.subr.bf16.mxu0 0
        %903 = vmatpush1.bf16.msra.mxu0 0
        %904 = vmatprep.subr.bf16.mxu0 0
        %905 = vmatpush1.bf16.msra.mxu0 0
        %906 = vmatprep.subr.bf16.mxu0 0
        %907 = vmatpush1.bf16.msra.mxu0 0
        %908 = vmatprep.subr.bf16.mxu0 0
        %909 = vmatpush1.bf16.msra.mxu0 0
        %910 = vmatprep.subr.bf16.mxu0 0
        %911 = vmatpush1.bf16.msra.mxu0 0
        %912 = vmatprep.subr.bf16.mxu0 0
        %913 = vmatpush1.bf16.msra.mxu0 0
        %914 = vmatprep.subr.bf16.mxu0 0
        %915 = vmatpush1.bf16.msra.mxu0 0
        %916 = vmatprep.subr.bf16.mxu0 0
        %917 = vmatpush1.bf16.msra.mxu0 0
        %918 = vmatprep.subr.bf16.mxu0 0
        %919 = vmatpush1.bf16.msra.mxu0 0
        %920 = vmatprep.subr.bf16.mxu0 0
        %921 = vmatpush1.bf16.msra.mxu0 0
        %922 = vmatprep.subr.bf16.mxu0 0
        %923 = vmatpush1.bf16.msra.mxu0 0
        %924 = vmatprep.subr.bf16.mxu0 0
        %925 = vmatpush1.bf16.msra.mxu0 0
        %926 = vmatprep.subr.bf16.mxu0 0
        %927 = vmatpush1.bf16.msra.mxu0 0
        %928 = vmatprep.subr.bf16.mxu0 0
        %929 = vmatpush1.bf16.msra.mxu0 0
        %930 = vmatprep.mubr.bf16.mxu0 0
        %931 = vmatmul.mubr.bf16.gmra.mrb[0].mxu0 %v896
        %v932 = vpop.f32.mrb[0].mxu0
        %v933 = vadd.f32 0.0, %v932
        %v934 = vpop.f32.mrb[0].mxu0
        %v935 = vpop.f32.mrb[0].mxu0
        %v936 = vadd.f32 0.0, %v935
        %v937 = vpop.f32.mrb[0].mxu0
        %938 = vdwg.mxu0
        %v939 = vld [vmem:[%s5] sm:$0xf]
        %v940 = vld [vmem:[%s5 + $0x4] sm:$0xf]
        %v941 = vld [vmem:[%s5 + $0x8] sm:$0xf]
        %v942 = vld [vmem:[%s5 + $0xc] sm:$0xf]
        %v943 = vld [vmem:[%s5 + $0x10] sm:$0xf]
        %v944 = vld [vmem:[%s5 + $0x14] sm:$0xf]
        %v945 = vld [vmem:[%s5 + $0x18] sm:$0xf]
        %v946 = vld [vmem:[%s5 + $0x1c] sm:$0xf]
        %v947 = vld [vmem:[%s5 + $0x20] sm:$0xf]
        %v948 = vld [vmem:[%s5 + $0x24] sm:$0xf]
        %v949 = vld [vmem:[%s5 + $0x28] sm:$0xf]
        %v950 = vld [vmem:[%s5 + $0x2c] sm:$0xf]
        %v951 = vld [vmem:[%s5 + $0x30] sm:$0xf]
        %v952 = vld [vmem:[%s5 + $0x34] sm:$0xf]
        %v953 = vld [vmem:[%s5 + $0x38] sm:$0xf]
        %v954 = vld [vmem:[%s5 + $0x3c] sm:$0xf]
        %v955 = vld [vmem:[%s5 + $0x40] sm:$0xf]
        %v956 = vld [vmem:[%s5 + $0x44] sm:$0xf]
        %v957 = vld [vmem:[%s5 + $0x48] sm:$0xf]
        %v958 = vld [vmem:[%s5 + $0x4c] sm:$0xf]
        %v959 = vld [vmem:[%s5 + $0x50] sm:$0xf]
        %v960 = vld [vmem:[%s5 + $0x54] sm:$0xf]
        %v961 = vld [vmem:[%s5 + $0x58] sm:$0xf]
        %v962 = vld [vmem:[%s5 + $0x5c] sm:$0xf]
        %v963 = vld [vmem:[%s5 + $0x60] sm:$0xf]
        %v964 = vld [vmem:[%s5 + $0x64] sm:$0xf]
        %v965 = vld [vmem:[%s5 + $0x68] sm:$0xf]
        %v966 = vld [vmem:[%s5 + $0x6c] sm:$0xf]
        %v967 = vld [vmem:[%s5 + $0x70] sm:$0xf]
        %v968 = vld [vmem:[%s5 + $0x74] sm:$0xf]
        %v969 = vld [vmem:[%s5 + $0x78] sm:$0xf]
        %v970 = vld [vmem:[%s5 + $0x7c] sm:$0xf]
        %v971 = vld [vmem:[%s5 + $0x80] sm:$0xf]
        %v972 = vld [vmem:[%s5 + $0x84] sm:$0xf]
        %v973 = vld [vmem:[%s5 + $0x88] sm:$0xf]
        %v974 = vld [vmem:[%s5 + $0x8c] sm:$0xf]
        %v975 = vld [vmem:[%s5 + $0x90] sm:$0xf]
        %v976 = vld [vmem:[%s5 + $0x94] sm:$0xf]
        %v977 = vld [vmem:[%s5 + $0x98] sm:$0xf]
        %v978 = vld [vmem:[%s5 + $0x9c] sm:$0xf]
        %v979 = vld [vmem:[%s5 + $0xa0] sm:$0xf]
        %v980 = vld [vmem:[%s5 + $0xa4] sm:$0xf]
        %v981 = vld [vmem:[%s5 + $0xa8] sm:$0xf]
        %v982 = vld [vmem:[%s5 + $0xac] sm:$0xf]
        %v983 = vld [vmem:[%s5 + $0xb0] sm:$0xf]
        %v984 = vld [vmem:[%s5 + $0xb4] sm:$0xf]
        %v985 = vld [vmem:[%s5 + $0xb8] sm:$0xf]
        %v986 = vld [vmem:[%s5 + $0xbc] sm:$0xf]
        %v987 = vpack.c.bf16 %v883, %v880
        %v988 = vpack.c.bf16 %v936, %v933
        %v989 = vld [vmem:[%s6] sm:$0x1]
        %v991 = vlaneseq
        %v992 = vshrl.u32 %v991, 7
        %v993 = vsub.s32 0, %v992
        %v994 = vrot.slane %v989, %v993
        %v1044 = vunpack.c.l.b16 %v939
        %v1045 = vunpack.c.l.b16 %v940
        %v1046 = vunpack.c.l.b16 %v941
        %v1047 = vunpack.c.l.b16 %v942
        %v1048 = vunpack.c.l.b16 %v943
        %v1049 = vunpack.c.l.b16 %v944
        %v1050 = vunpack.c.l.b16 %v945
        %v1051 = vunpack.c.l.b16 %v946
        %v1052 = vunpack.c.l.b16 %v947
        %v1053 = vunpack.c.l.b16 %v948
        %v1054 = vunpack.c.l.b16 %v949
        %v1055 = vunpack.c.l.b16 %v950
        %v1056 = vunpack.c.l.b16 %v951
        %v1057 = vunpack.c.l.b16 %v952
        %v1058 = vunpack.c.l.b16 %v953
        %v1059 = vunpack.c.l.b16 %v954
        %v1060 = vunpack.c.l.b16 %v955
        %v1061 = vunpack.c.l.b16 %v956
        %v1062 = vunpack.c.l.b16 %v957
        %v1063 = vunpack.c.l.b16 %v958
        %v1064 = vunpack.c.l.b16 %v959
        %v1065 = vunpack.c.l.b16 %v960
        %v1066 = vunpack.c.l.b16 %v961
        %v1067 = vunpack.c.l.b16 %v962
        %v1068 = vunpack.c.l.b16 %v963
        %v1069 = vunpack.c.l.b16 %v964
        %v1070 = vunpack.c.l.b16 %v965
        %v1071 = vunpack.c.l.b16 %v966
        %v1072 = vunpack.c.l.b16 %v967
        %v1073 = vunpack.c.l.b16 %v968
        %v1074 = vunpack.c.l.b16 %v969
        %v1075 = vunpack.c.l.b16 %v970
        %v1076 = vunpack.c.l.b16 %v971
        %v1077 = vunpack.c.l.b16 %v972
        %v1078 = vunpack.c.l.b16 %v973
        %v1079 = vunpack.c.l.b16 %v974
        %v1080 = vunpack.c.l.b16 %v975
        %v1081 = vunpack.c.l.b16 %v976
        %v1082 = vunpack.c.l.b16 %v977
        %v1083 = vunpack.c.l.b16 %v978
        %v1084 = vunpack.c.l.b16 %v979
        %v1085 = vunpack.c.l.b16 %v980
        %v1086 = vunpack.c.l.b16 %v981
        %v1087 = vunpack.c.l.b16 %v982
        %v1088 = vunpack.c.l.b16 %v983
        %v1089 = vunpack.c.l.b16 %v984
        %v1090 = vunpack.c.l.b16 %v985
        %v1091 = vunpack.c.l.b16 %v986
        %v1092 = vpack.c.b16 %v1045, %v1044
        %v1093 = vpack.c.b16 %v1047, %v1046
        %v1094 = vpack.c.b16 %v1049, %v1048
        %v1095 = vpack.c.b16 %v1051, %v1050
        %v1096 = vpack.c.b16 %v1053, %v1052
        %v1097 = vpack.c.b16 %v1055, %v1054
        %v1098 = vpack.c.b16 %v1057, %v1056
        %v1099 = vpack.c.b16 %v1059, %v1058
        %v1100 = vpack.c.b16 %v1061, %v1060
        %v1101 = vpack.c.b16 %v1063, %v1062
        %v1102 = vpack.c.b16 %v1065, %v1064
        %v1103 = vpack.c.b16 %v1067, %v1066
        %v1104 = vpack.c.b16 %v1069, %v1068
        %v1105 = vpack.c.b16 %v1071, %v1070
        %v1106 = vpack.c.b16 %v1073, %v1072
        %v1107 = vpack.c.b16 %v1075, %v1074
        %v1108 = vpack.c.b16 %v1077, %v1076
        %v1109 = vpack.c.b16 %v1079, %v1078
        %v1110 = vpack.c.b16 %v1081, %v1080
        %v1111 = vpack.c.b16 %v1083, %v1082
        %v1112 = vpack.c.b16 %v1085, %v1084
        %v1113 = vpack.c.b16 %v1087, %v1086
        %v1114 = vpack.c.b16 %v1089, %v1088
        %v1115 = vpack.c.b16 %v1091, %v1090
        %1140 = vmatprep.subr.bf16.mxu0 0
        %1141 = vmatpush1.bf16.msra.mxu0 %v1092
        %1142 = vmatprep.subr.bf16.mxu0 0
        %1143 = vmatpush1.bf16.msra.mxu0 %v1093
        %1144 = vmatprep.subr.bf16.mxu0 0
        %1145 = vmatpush1.bf16.msra.mxu0 %v1094
        %1146 = vmatprep.subr.bf16.mxu0 0
        %1147 = vmatpush1.bf16.msra.mxu0 %v1095
        %1148 = vmatprep.subr.bf16.mxu0 0
        %1149 = vmatpush1.bf16.msra.mxu0 %v1096
        %1150 = vmatprep.subr.bf16.mxu0 0
        %1151 = vmatpush1.bf16.msra.mxu0 %v1097
        %1152 = vmatprep.subr.bf16.mxu0 0
        %1153 = vmatpush1.bf16.msra.mxu0 %v1098
        %1154 = vmatprep.subr.bf16.mxu0 0
        %1155 = vmatpush1.bf16.msra.mxu0 %v1099
        %1156 = vmatprep.subr.bf16.mxu0 0
        %1157 = vmatpush1.bf16.msra.mxu0 %v1100
        %1158 = vmatprep.subr.bf16.mxu0 0
        %1159 = vmatpush1.bf16.msra.mxu0 %v1101
        %1160 = vmatprep.subr.bf16.mxu0 0
        %1161 = vmatpush1.bf16.msra.mxu0 %v1102
        %1162 = vmatprep.subr.bf16.mxu0 0
        %1163 = vmatpush1.bf16.msra.mxu0 %v1103
        %1164 = vmatprep.subr.bf16.mxu0 0
        %1165 = vmatpush1.bf16.msra.mxu0 %v1104
        %1166 = vmatprep.subr.bf16.mxu0 0
        %1167 = vmatpush1.bf16.msra.mxu0 %v1105
        %1168 = vmatprep.subr.bf16.mxu0 0
        %1169 = vmatpush1.bf16.msra.mxu0 %v1106
        %1170 = vmatprep.subr.bf16.mxu0 0
        %1171 = vmatpush1.bf16.msra.mxu0 %v1107
        %1172 = vmatprep.mubr.bf16.mxu0 %v841
        %1173 = vmatmul.mubr.bf16.gmra.mrb[0].mxu0 %v987
        %v1174 = vpop.f32.mrb[0].mxu0
        %v1175 = vadd.f32 %v994, %v1174
        %v1176 = vpop.f32.mrb[0].mxu0
        %v1177 = vpop.f32.mrb[0].mxu0
        %v1178 = vadd.f32 %v994, %v1177
        %v1179 = vpop.f32.mrb[0].mxu0
        %1180 = vdwg.mxu0
        %1181 = vmatprep.subr.bf16.mxu0 0
        %1182 = vmatpush1.bf16.msra.mxu0 %v1108
        %1183 = vmatprep.subr.bf16.mxu0 0
        %1184 = vmatpush1.bf16.msra.mxu0 %v1109
        %1185 = vmatprep.subr.bf16.mxu0 0
        %1186 = vmatpush1.bf16.msra.mxu0 %v1110
        %1187 = vmatprep.subr.bf16.mxu0 0
        %1188 = vmatpush1.bf16.msra.mxu0 %v1111
        %1189 = vmatprep.subr.bf16.mxu0 0
        %1190 = vmatpush1.bf16.msra.mxu0 %v1112
        %1191 = vmatprep.subr.bf16.mxu0 0
        %1192 = vmatpush1.bf16.msra.mxu0 %v1113
        %1193 = vmatprep.subr.bf16.mxu0 0
        %1194 = vmatpush1.bf16.msra.mxu0 %v1114
        %1195 = vmatprep.subr.bf16.mxu0 0
        %1196 = vmatpush1.bf16.msra.mxu0 %v1115
        %1197 = vmatprep.subr.bf16.mxu0 0
        %1198 = vmatpush1.bf16.msra.mxu0 0
        %1199 = vmatprep.subr.bf16.mxu0 0
        %1200 = vmatpush1.bf16.msra.mxu0 0
        %1201 = vmatprep.subr.bf16.mxu0 0
        %1202 = vmatpush1.bf16.msra.mxu0 0
        %1203 = vmatprep.subr.bf16.mxu0 0
        %1204 = vmatpush1.bf16.msra.mxu0 0
        %1205 = vmatprep.subr.bf16.mxu0 0
        %1206 = vmatpush1.bf16.msra.mxu0 0
        %1207 = vmatprep.subr.bf16.mxu0 0
        %1208 = vmatpush1.bf16.msra.mxu0 0
        %1209 = vmatprep.subr.bf16.mxu0 0
        %1210 = vmatpush1.bf16.msra.mxu0 0
        %1211 = vmatprep.subr.bf16.mxu0 0
        %1212 = vmatpush1.bf16.msra.mxu0 0
        %1213 = vmatprep.mubr.bf16.mxu0 0
        %1214 = vmatmul.mubr.bf16.gmra.mrb[0].mxu0 %v988
        %v1215 = vpop.f32.mrb[0].mxu0
        %v1216 = vadd.f32 %v1175, %v1215
        %v1217 = vpop.f32.mrb[0].mxu0
        %v1218 = vpop.f32.mrb[0].mxu0
        %v1219 = vadd.f32 %v1178, %v1218
        %v1220 = vpop.f32.mrb[0].mxu0
        %1221 = vdwg.mxu0
        %v1222 = vmax.f32 %v1216, 0.0
        %v1223 = vmax.f32 %v1219, 0.0
        %v1224 = vld [vmem:[%s7] sm:$0xff]
        %v1225 = vld [vmem:[%s7 + $0x8] sm:$0xff]
        %v1226 = vld [vmem:[%s7 + $0x10] sm:$0xff]
        %v1227 = vld [vmem:[%s7 + $0x18] sm:$0xff]
        %v1228 = vld [vmem:[%s7 + $0x20] sm:$0xff]
        %v1229 = vld [vmem:[%s7 + $0x28] sm:$0xff]
        %v1230 = vld [vmem:[%s7 + $0x30] sm:$0xff]
        %v1231 = vld [vmem:[%s7 + $0x38] sm:$0xff]
        %v1232 = vld [vmem:[%s7 + $0x40] sm:$0xff]
        %v1233 = vld [vmem:[%s7 + $0x48] sm:$0xff]
        %v1234 = vld [vmem:[%s7 + $0x50] sm:$0xff]
        %v1235 = vld [vmem:[%s7 + $0x58] sm:$0xff]
        %v1236 = vld [vmem:[%s7 + $0x60] sm:$0xff]
        %v1237 = vld [vmem:[%s7 + $0x68] sm:$0xff]
        %v1238 = vld [vmem:[%s7 + $0x70] sm:$0xff]
        %v1239 = vld [vmem:[%s7 + $0x78] sm:$0xff]
        %v1240 = vpack.c.bf16 %v1223, %v1222
        %v1241 = vld [vmem:[%s8] sm:$0x3]
        %v1243 = vlaneseq
        %v1244 = vshrl.u32 %v1243, 7
        %v1245 = vsub.s32 0, %v1244
        %v1246 = vrot.slane %v1241, %v1245
        %v1247 = vlaneseq
        %v1248 = vshrl.u32 %v1247, 7
        %v1249 = vsub.s32 1, %v1248
        %v1250 = vrot.slane %v1241, %v1249
        %v1269 = vunpack.c.l.b16 %v1224
        %v1270 = vunpack.c.h.b16 %v1224
        %v1271 = vunpack.c.l.b16 %v1225
        %v1272 = vunpack.c.h.b16 %v1225
        %v1273 = vunpack.c.l.b16 %v1226
        %v1274 = vunpack.c.h.b16 %v1226
        %v1275 = vunpack.c.l.b16 %v1227
        %v1276 = vunpack.c.h.b16 %v1227
        %v1277 = vunpack.c.l.b16 %v1228
        %v1278 = vunpack.c.h.b16 %v1228
        %v1279 = vunpack.c.l.b16 %v1229
        %v1280 = vunpack.c.h.b16 %v1229
        %v1281 = vunpack.c.l.b16 %v1230
        %v1282 = vunpack.c.h.b16 %v1230
        %v1283 = vunpack.c.l.b16 %v1231
        %v1284 = vunpack.c.h.b16 %v1231
        %v1285 = vunpack.c.l.b16 %v1232
        %v1286 = vunpack.c.h.b16 %v1232
        %v1287 = vunpack.c.l.b16 %v1233
        %v1288 = vunpack.c.h.b16 %v1233
        %v1289 = vunpack.c.l.b16 %v1234
        %v1290 = vunpack.c.h.b16 %v1234
        %v1291 = vunpack.c.l.b16 %v1235
        %v1292 = vunpack.c.h.b16 %v1235
        %v1293 = vunpack.c.l.b16 %v1236
        %v1294 = vunpack.c.h.b16 %v1236
        %v1295 = vunpack.c.l.b16 %v1237
        %v1296 = vunpack.c.h.b16 %v1237
        %v1297 = vunpack.c.l.b16 %v1238
        %v1298 = vunpack.c.h.b16 %v1238
        %v1299 = vunpack.c.l.b16 %v1239
        %v1300 = vunpack.c.h.b16 %v1239
        %v1301 = vpack.c.b16 %v1271, %v1269
        %v1302 = vpack.c.b16 %v1272, %v1270
        %v1303 = vpack.c.b16 %v1275, %v1273
        %v1304 = vpack.c.b16 %v1276, %v1274
        %v1305 = vpack.c.b16 %v1279, %v1277
        %v1306 = vpack.c.b16 %v1280, %v1278
        %v1307 = vpack.c.b16 %v1283, %v1281
        %v1308 = vpack.c.b16 %v1284, %v1282
        %v1309 = vpack.c.b16 %v1287, %v1285
        %v1310 = vpack.c.b16 %v1288, %v1286
        %v1311 = vpack.c.b16 %v1291, %v1289
        %v1312 = vpack.c.b16 %v1292, %v1290
        %v1313 = vpack.c.b16 %v1295, %v1293
        %v1314 = vpack.c.b16 %v1296, %v1294
        %v1315 = vpack.c.b16 %v1299, %v1297
        %v1316 = vpack.c.b16 %v1300, %v1298
        %1333 = vmatprep.subr.bf16.mxu0 %v1302
        %1334 = vmatpush1.bf16.msra.mxu0 %v1301
        %1335 = vmatprep.subr.bf16.mxu0 %v1304
        %1336 = vmatpush1.bf16.msra.mxu0 %v1303
        %1337 = vmatprep.subr.bf16.mxu0 %v1306
        %1338 = vmatpush1.bf16.msra.mxu0 %v1305
        %1339 = vmatprep.subr.bf16.mxu0 %v1308
        %1340 = vmatpush1.bf16.msra.mxu0 %v1307
        %1341 = vmatprep.subr.bf16.mxu0 %v1310
        %1342 = vmatpush1.bf16.msra.mxu0 %v1309
        %1343 = vmatprep.subr.bf16.mxu0 %v1312
        %1344 = vmatpush1.bf16.msra.mxu0 %v1311
        %1345 = vmatprep.subr.bf16.mxu0 %v1314
        %1346 = vmatpush1.bf16.msra.mxu0 %v1313
        %1347 = vmatprep.subr.bf16.mxu0 %v1316
        %1348 = vmatpush1.bf16.msra.mxu0 %v1315
        %1349 = vmatprep.subr.bf16.mxu0 0
        %1350 = vmatpush1.bf16.msra.mxu0 0
        %1351 = vmatprep.subr.bf16.mxu0 0
        %1352 = vmatpush1.bf16.msra.mxu0 0
        %1353 = vmatprep.subr.bf16.mxu0 0
        %1354 = vmatpush1.bf16.msra.mxu0 0
        %1355 = vmatprep.subr.bf16.mxu0 0
        %1356 = vmatpush1.bf16.msra.mxu0 0
        %1357 = vmatprep.subr.bf16.mxu0 0
        %1358 = vmatpush1.bf16.msra.mxu0 0
        %1359 = vmatprep.subr.bf16.mxu0 0
        %1360 = vmatpush1.bf16.msra.mxu0 0
        %1361 = vmatprep.subr.bf16.mxu0 0
        %1362 = vmatpush1.bf16.msra.mxu0 0
        %1363 = vmatprep.subr.bf16.mxu0 0
        %1364 = vmatpush1.bf16.msra.mxu0 0
        %1365 = vmatprep.mubr.bf16.mxu0 0
        %1366 = vmatmul.mubr.bf16.gmra.mrb[0].mxu0 %v1240
        %v1367 = vpop.f32.mrb[0].mxu0
        %v1368 = vadd.f32 %v1246, %v1367
        %v1369 = vpop.f32.mrb[0].mxu0
        %v1370 = vadd.f32 %v1250, %v1369
        %v1371 = vpop.f32.mrb[0].mxu0
        %v1372 = vadd.f32 %v1246, %v1371
        %v1373 = vpop.f32.mrb[0].mxu0
        %v1374 = vadd.f32 %v1250, %v1373
        %1375 = vdwg.mxu0
        %v1376 = vld [vmem:[%s9] sm:$0xf]
        %v1377 = vld [vmem:[%s9 + $0x4] sm:$0xf]
        %v1378 = vld [vmem:[%s9 + $0x8] sm:$0xf]
        %v1379 = vld [vmem:[%s9 + $0xc] sm:$0xf]
        %v1380 = vld [vmem:[%s9 + $0x10] sm:$0xf]
        %v1381 = vld [vmem:[%s9 + $0x14] sm:$0xf]
        %v1382 = vld [vmem:[%s9 + $0x18] sm:$0xf]
        %v1383 = vld [vmem:[%s9 + $0x1c] sm:$0xf]
        %v1384 = vld [vmem:[%s9 + $0x20] sm:$0xf]
        %v1385 = vld [vmem:[%s9 + $0x24] sm:$0xf]
        %v1386 = vld [vmem:[%s9 + $0x28] sm:$0xf]
        %v1387 = vld [vmem:[%s9 + $0x2c] sm:$0xf]
        %v1388 = vld [vmem:[%s9 + $0x30] sm:$0xf]
        %v1389 = vld [vmem:[%s9 + $0x34] sm:$0xf]
        %v1390 = vld [vmem:[%s9 + $0x38] sm:$0xf]
        %v1391 = vld [vmem:[%s9 + $0x3c] sm:$0xf]
        %v1392 = vld [vmem:[%s9 + $0x40] sm:$0xf]
        %v1393 = vld [vmem:[%s9 + $0x44] sm:$0xf]
        %v1394 = vld [vmem:[%s9 + $0x48] sm:$0xf]
        %v1395 = vld [vmem:[%s9 + $0x4c] sm:$0xf]
        %v1396 = vld [vmem:[%s9 + $0x50] sm:$0xf]
        %v1397 = vld [vmem:[%s9 + $0x54] sm:$0xf]
        %v1398 = vld [vmem:[%s9 + $0x58] sm:$0xf]
        %v1399 = vld [vmem:[%s9 + $0x5c] sm:$0xf]
        %v1400 = vld [vmem:[%s9 + $0x60] sm:$0xf]
        %v1401 = vld [vmem:[%s9 + $0x64] sm:$0xf]
        %v1402 = vld [vmem:[%s9 + $0x68] sm:$0xf]
        %v1403 = vld [vmem:[%s9 + $0x6c] sm:$0xf]
        %v1404 = vld [vmem:[%s9 + $0x70] sm:$0xf]
        %v1405 = vld [vmem:[%s9 + $0x74] sm:$0xf]
        %v1406 = vld [vmem:[%s9 + $0x78] sm:$0xf]
        %v1407 = vld [vmem:[%s9 + $0x7c] sm:$0xf]
        %v1440 = vunpack.c.l.b16 %v1376
        %v1441 = vunpack.c.l.b16 %v1377
        %v1442 = vunpack.c.l.b16 %v1378
        %v1443 = vunpack.c.l.b16 %v1379
        %v1444 = vunpack.c.l.b16 %v1380
        %v1445 = vunpack.c.l.b16 %v1381
        %v1446 = vunpack.c.l.b16 %v1382
        %v1447 = vunpack.c.l.b16 %v1383
        %v1448 = vunpack.c.l.b16 %v1384
        %v1449 = vunpack.c.l.b16 %v1385
        %v1450 = vunpack.c.l.b16 %v1386
        %v1451 = vunpack.c.l.b16 %v1387
        %v1452 = vunpack.c.l.b16 %v1388
        %v1453 = vunpack.c.l.b16 %v1389
        %v1454 = vunpack.c.l.b16 %v1390
        %v1455 = vunpack.c.l.b16 %v1391
        %v1456 = vunpack.c.l.b16 %v1392
        %v1457 = vunpack.c.l.b16 %v1393
        %v1458 = vunpack.c.l.b16 %v1394
        %v1459 = vunpack.c.l.b16 %v1395
        %v1460 = vunpack.c.l.b16 %v1396
        %v1461 = vunpack.c.l.b16 %v1397
        %v1462 = vunpack.c.l.b16 %v1398
        %v1463 = vunpack.c.l.b16 %v1399
        %v1464 = vunpack.c.l.b16 %v1400
        %v1465 = vunpack.c.l.b16 %v1401
        %v1466 = vunpack.c.l.b16 %v1402
        %v1467 = vunpack.c.l.b16 %v1403
        %v1468 = vunpack.c.l.b16 %v1404
        %v1469 = vunpack.c.l.b16 %v1405
        %v1470 = vunpack.c.l.b16 %v1406
        %v1471 = vunpack.c.l.b16 %v1407
        %v1472 = vpack.c.b16 %v1441, %v1440
        %v1473 = vpack.c.b16 %v1443, %v1442
        %v1474 = vpack.c.b16 %v1445, %v1444
        %v1475 = vpack.c.b16 %v1447, %v1446
        %v1476 = vpack.c.b16 %v1449, %v1448
        %v1477 = vpack.c.b16 %v1451, %v1450
        %v1478 = vpack.c.b16 %v1453, %v1452
        %v1479 = vpack.c.b16 %v1455, %v1454
        %v1480 = vpack.c.b16 %v1457, %v1456
        %v1481 = vpack.c.b16 %v1459, %v1458
        %v1482 = vpack.c.b16 %v1461, %v1460
        %v1483 = vpack.c.b16 %v1463, %v1462
        %v1484 = vpack.c.b16 %v1465, %v1464
        %v1485 = vpack.c.b16 %v1467, %v1466
        %v1486 = vpack.c.b16 %v1469, %v1468
        %v1487 = vpack.c.b16 %v1471, %v1470
        %1504 = vmatprep.subr.bf16.mxu0 0
        %1505 = vmatpush1.bf16.msra.mxu0 %v1472
        %1506 = vmatprep.subr.bf16.mxu0 0
        %1507 = vmatpush1.bf16.msra.mxu0 %v1473
        %1508 = vmatprep.subr.bf16.mxu0 0
        %1509 = vmatpush1.bf16.msra.mxu0 %v1474
        %1510 = vmatprep.subr.bf16.mxu0 0
        %1511 = vmatpush1.bf16.msra.mxu0 %v1475
        %1512 = vmatprep.subr.bf16.mxu0 0
        %1513 = vmatpush1.bf16.msra.mxu0 %v1476
        %1514 = vmatprep.subr.bf16.mxu0 0
        %1515 = vmatpush1.bf16.msra.mxu0 %v1477
        %1516 = vmatprep.subr.bf16.mxu0 0
        %1517 = vmatpush1.bf16.msra.mxu0 %v1478
        %1518 = vmatprep.subr.bf16.mxu0 0
        %1519 = vmatpush1.bf16.msra.mxu0 %v1479
        %1520 = vmatprep.subr.bf16.mxu0 0
        %1521 = vmatpush1.bf16.msra.mxu0 %v1480
        %1522 = vmatprep.subr.bf16.mxu0 0
        %1523 = vmatpush1.bf16.msra.mxu0 %v1481
        %1524 = vmatprep.subr.bf16.mxu0 0
        %1525 = vmatpush1.bf16.msra.mxu0 %v1482
        %1526 = vmatprep.subr.bf16.mxu0 0
        %1527 = vmatpush1.bf16.msra.mxu0 %v1483
        %1528 = vmatprep.subr.bf16.mxu0 0
        %1529 = vmatpush1.bf16.msra.mxu0 %v1484
        %1530 = vmatprep.subr.bf16.mxu0 0
        %1531 = vmatpush1.bf16.msra.mxu0 %v1485
        %1532 = vmatprep.subr.bf16.mxu0 0
        %1533 = vmatpush1.bf16.msra.mxu0 %v1486
        %1534 = vmatprep.subr.bf16.mxu0 0
        %1535 = vmatpush1.bf16.msra.mxu0 %v1487
        %1536 = vmatprep.mubr.bf16.mxu0 %v685
        %1537 = vmatmul.mubr.bf16.gmra.mrb[0].mxu0 %v684
        %v1538 = vpop.f32.mrb[0].mxu0
        %v1539 = vadd.f32 0.0, %v1538
        %v1540 = vpop.f32.mrb[0].mxu0
        %v1541 = vpop.f32.mrb[0].mxu0
        %v1542 = vadd.f32 0.0, %v1541
        %v1543 = vpop.f32.mrb[0].mxu0
        %1544 = vdwg.mxu0
        %v1545 = vld [vmem:[%s10] sm:$0xf]
        %v1546 = vld [vmem:[%s10 + $0x4] sm:$0xf]
        %v1547 = vld [vmem:[%s10 + $0x8] sm:$0xf]
        %v1548 = vld [vmem:[%s10 + $0xc] sm:$0xf]
        %v1549 = vld [vmem:[%s10 + $0x10] sm:$0xf]
        %v1550 = vld [vmem:[%s10 + $0x14] sm:$0xf]
        %v1551 = vld [vmem:[%s10 + $0x18] sm:$0xf]
        %v1552 = vld [vmem:[%s10 + $0x1c] sm:$0xf]
        %v1553 = vld [vmem:[%s10 + $0x20] sm:$0xf]
        %v1554 = vld [vmem:[%s10 + $0x24] sm:$0xf]
        %v1555 = vld [vmem:[%s10 + $0x28] sm:$0xf]
        %v1556 = vld [vmem:[%s10 + $0x2c] sm:$0xf]
        %v1557 = vld [vmem:[%s10 + $0x30] sm:$0xf]
        %v1558 = vld [vmem:[%s10 + $0x34] sm:$0xf]
        %v1559 = vld [vmem:[%s10 + $0x38] sm:$0xf]
        %v1560 = vld [vmem:[%s10 + $0x3c] sm:$0xf]
        %v1561 = vld [vmem:[%s10 + $0x40] sm:$0xf]
        %v1562 = vld [vmem:[%s10 + $0x44] sm:$0xf]
        %v1563 = vld [vmem:[%s10 + $0x48] sm:$0xf]
        %v1564 = vld [vmem:[%s10 + $0x4c] sm:$0xf]
        %v1565 = vld [vmem:[%s10 + $0x50] sm:$0xf]
        %v1566 = vld [vmem:[%s10 + $0x54] sm:$0xf]
        %v1567 = vld [vmem:[%s10 + $0x58] sm:$0xf]
        %v1568 = vld [vmem:[%s10 + $0x5c] sm:$0xf]
        %v1569 = vld [vmem:[%s10 + $0x60] sm:$0xf]
        %v1570 = vld [vmem:[%s10 + $0x64] sm:$0xf]
        %v1571 = vld [vmem:[%s10 + $0x68] sm:$0xf]
        %v1572 = vld [vmem:[%s10 + $0x6c] sm:$0xf]
        %v1573 = vld [vmem:[%s10 + $0x70] sm:$0xf]
        %v1574 = vld [vmem:[%s10 + $0x74] sm:$0xf]
        %v1575 = vld [vmem:[%s10 + $0x78] sm:$0xf]
        %v1576 = vld [vmem:[%s10 + $0x7c] sm:$0xf]
        %v1577 = vld [vmem:[%s543] sm:$0x3]
        %v1578 = vld [vmem:[%s11] sm:$0xf]
        %v1579 = vld [vmem:[%s11 + $0x4] sm:$0xf]
        %v1580 = vld [vmem:[%s11 + $0x8] sm:$0xf]
        %v1581 = vld [vmem:[%s11 + $0xc] sm:$0xf]
        %v1582 = vld [vmem:[%s11 + $0x10] sm:$0xf]
        %v1583 = vld [vmem:[%s11 + $0x14] sm:$0xf]
        %v1584 = vld [vmem:[%s11 + $0x18] sm:$0xf]
        %v1585 = vld [vmem:[%s11 + $0x1c] sm:$0xf]
        %v1586 = vld [vmem:[%s11 + $0x20] sm:$0xf]
        %v1587 = vld [vmem:[%s11 + $0x24] sm:$0xf]
        %v1588 = vld [vmem:[%s11 + $0x28] sm:$0xf]
        %v1589 = vld [vmem:[%s11 + $0x2c] sm:$0xf]
        %v1590 = vld [vmem:[%s11 + $0x30] sm:$0xf]
        %v1591 = vld [vmem:[%s11 + $0x34] sm:$0xf]
        %v1592 = vld [vmem:[%s11 + $0x38] sm:$0xf]
        %v1593 = vld [vmem:[%s11 + $0x3c] sm:$0xf]
        %v1594 = vld [vmem:[%s11 + $0x40] sm:$0xf]
        %v1595 = vld [vmem:[%s11 + $0x44] sm:$0xf]
        %v1596 = vld [vmem:[%s11 + $0x48] sm:$0xf]
        %v1597 = vld [vmem:[%s11 + $0x4c] sm:$0xf]
        %v1598 = vld [vmem:[%s11 + $0x50] sm:$0xf]
        %v1599 = vld [vmem:[%s11 + $0x54] sm:$0xf]
        %v1600 = vld [vmem:[%s11 + $0x58] sm:$0xf]
        %v1601 = vld [vmem:[%s11 + $0x5c] sm:$0xf]
        %v1602 = vld [vmem:[%s11 + $0x60] sm:$0xf]
        %v1603 = vld [vmem:[%s11 + $0x64] sm:$0xf]
        %v1604 = vld [vmem:[%s11 + $0x68] sm:$0xf]
        %v1605 = vld [vmem:[%s11 + $0x6c] sm:$0xf]
        %v1606 = vld [vmem:[%s11 + $0x70] sm:$0xf]
        %v1607 = vld [vmem:[%s11 + $0x74] sm:$0xf]
        %v1608 = vld [vmem:[%s11 + $0x78] sm:$0xf]
        %v1609 = vld [vmem:[%s11 + $0x7c] sm:$0xf]
        %v1611 = vlaneseq
        %v1612 = vshrl.u32 %v1611, 7
        %v1613 = vsub.s32 0, %v1612
        %v1614 = vrot.slane %v1577, %v1613
        %v1615 = vlaneseq
        %v1616 = vshrl.u32 %v1615, 7
        %v1617 = vsub.s32 1, %v1616
        %v1618 = vrot.slane %v1577, %v1617
        %v1621 = vpack.c.bf16 %v1614, %v1614
        %v1622 = vpack.c.bf16 %v1618, %v1618
        %v1655 = vunpack.c.l.b16 %v1578
        %v1656 = vunpack.c.l.b16 %v1579
        %v1657 = vunpack.c.l.b16 %v1580
        %v1658 = vunpack.c.l.b16 %v1581
        %v1659 = vunpack.c.l.b16 %v1582
        %v1660 = vunpack.c.l.b16 %v1583
        %v1661 = vunpack.c.l.b16 %v1584
        %v1662 = vunpack.c.l.b16 %v1585
        %v1663 = vunpack.c.l.b16 %v1586
        %v1664 = vunpack.c.l.b16 %v1587
        %v1665 = vunpack.c.l.b16 %v1588
        %v1666 = vunpack.c.l.b16 %v1589
        %v1667 = vunpack.c.l.b16 %v1590
        %v1668 = vunpack.c.l.b16 %v1591
        %v1669 = vunpack.c.l.b16 %v1592
        %v1670 = vunpack.c.l.b16 %v1593
        %v1671 = vunpack.c.l.b16 %v1594
        %v1672 = vunpack.c.l.b16 %v1595
        %v1673 = vunpack.c.l.b16 %v1596
        %v1674 = vunpack.c.l.b16 %v1597
        %v1675 = vunpack.c.l.b16 %v1598
        %v1676 = vunpack.c.l.b16 %v1599
        %v1677 = vunpack.c.l.b16 %v1600
        %v1678 = vunpack.c.l.b16 %v1601
        %v1679 = vunpack.c.l.b16 %v1602
        %v1680 = vunpack.c.l.b16 %v1603
        %v1681 = vunpack.c.l.b16 %v1604
        %v1682 = vunpack.c.l.b16 %v1605
        %v1683 = vunpack.c.l.b16 %v1606
        %v1684 = vunpack.c.l.b16 %v1607
        %v1685 = vunpack.c.l.b16 %v1608
        %v1686 = vunpack.c.l.b16 %v1609
        %v1687 = vpack.c.b16 %v1656, %v1655
        %v1688 = vpack.c.b16 %v1658, %v1657
        %v1689 = vpack.c.b16 %v1660, %v1659
        %v1690 = vpack.c.b16 %v1662, %v1661
        %v1691 = vpack.c.b16 %v1664, %v1663
        %v1692 = vpack.c.b16 %v1666, %v1665
        %v1693 = vpack.c.b16 %v1668, %v1667
        %v1694 = vpack.c.b16 %v1670, %v1669
        %v1695 = vpack.c.b16 %v1672, %v1671
        %v1696 = vpack.c.b16 %v1674, %v1673
        %v1697 = vpack.c.b16 %v1676, %v1675
        %v1698 = vpack.c.b16 %v1678, %v1677
        %v1699 = vpack.c.b16 %v1680, %v1679
        %v1700 = vpack.c.b16 %v1682, %v1681
        %v1701 = vpack.c.b16 %v1684, %v1683
        %v1702 = vpack.c.b16 %v1686, %v1685
        %1719 = vmatprep.subr.bf16.mxu0 0
        %1720 = vmatpush1.bf16.msra.mxu0 %v1687
        %1721 = vmatprep.subr.bf16.mxu0 0
        %1722 = vmatpush1.bf16.msra.mxu0 %v1688
        %1723 = vmatprep.subr.bf16.mxu0 0
        %1724 = vmatpush1.bf16.msra.mxu0 %v1689
        %1725 = vmatprep.subr.bf16.mxu0 0
        %1726 = vmatpush1.bf16.msra.mxu0 %v1690
        %1727 = vmatprep.subr.bf16.mxu0 0
        %1728 = vmatpush1.bf16.msra.mxu0 %v1691
        %1729 = vmatprep.subr.bf16.mxu0 0
        %1730 = vmatpush1.bf16.msra.mxu0 %v1692
        %1731 = vmatprep.subr.bf16.mxu0 0
        %1732 = vmatpush1.bf16.msra.mxu0 %v1693
        %1733 = vmatprep.subr.bf16.mxu0 0
        %1734 = vmatpush1.bf16.msra.mxu0 %v1694
        %1735 = vmatprep.subr.bf16.mxu0 0
        %1736 = vmatpush1.bf16.msra.mxu0 %v1695
        %1737 = vmatprep.subr.bf16.mxu0 0
        %1738 = vmatpush1.bf16.msra.mxu0 %v1696
        %1739 = vmatprep.subr.bf16.mxu0 0
        %1740 = vmatpush1.bf16.msra.mxu0 %v1697
        %1741 = vmatprep.subr.bf16.mxu0 0
        %1742 = vmatpush1.bf16.msra.mxu0 %v1698
        %1743 = vmatprep.subr.bf16.mxu0 0
        %1744 = vmatpush1.bf16.msra.mxu0 %v1699
        %1745 = vmatprep.subr.bf16.mxu0 0
        %1746 = vmatpush1.bf16.msra.mxu0 %v1700
        %1747 = vmatprep.subr.bf16.mxu0 0
        %1748 = vmatpush1.bf16.msra.mxu0 %v1701
        %1749 = vmatprep.subr.bf16.mxu0 0
        %1750 = vmatpush1.bf16.msra.mxu0 %v1702
        %1751 = vmatprep.mubr.bf16.mxu0 %v1622
        %1752 = vmatmul.mubr.bf16.gmra.mrb[0].mxu0 %v1621
        %v1753 = vpop.f32.mrb[0].mxu0
        %v1754 = vadd.f32 0.0, %v1753
        %v1755 = vpop.f32.mrb[0].mxu0
        %v1756 = vpop.f32.mrb[0].mxu0
        %v1757 = vpop.f32.mrb[0].mxu0
        %1758 = vdwg.mxu0
        %v1759 = vlaneseq
        %v1760 = vshrl.u32 %v1759, 7
        %v1761 = vsub.s32 0, %v1760
        %v1762 = vrot.slane %v1754, %v1761
        %v1795 = vunpack.c.l.b16 %v1545
        %v1796 = vunpack.c.l.b16 %v1546
        %v1797 = vunpack.c.l.b16 %v1547
        %v1798 = vunpack.c.l.b16 %v1548
        %v1799 = vunpack.c.l.b16 %v1549
        %v1800 = vunpack.c.l.b16 %v1550
        %v1801 = vunpack.c.l.b16 %v1551
        %v1802 = vunpack.c.l.b16 %v1552
        %v1803 = vunpack.c.l.b16 %v1553
        %v1804 = vunpack.c.l.b16 %v1554
        %v1805 = vunpack.c.l.b16 %v1555
        %v1806 = vunpack.c.l.b16 %v1556
        %v1807 = vunpack.c.l.b16 %v1557
        %v1808 = vunpack.c.l.b16 %v1558
        %v1809 = vunpack.c.l.b16 %v1559
        %v1810 = vunpack.c.l.b16 %v1560
        %v1811 = vunpack.c.l.b16 %v1561
        %v1812 = vunpack.c.l.b16 %v1562
        %v1813 = vunpack.c.l.b16 %v1563
        %v1814 = vunpack.c.l.b16 %v1564
        %v1815 = vunpack.c.l.b16 %v1565
        %v1816 = vunpack.c.l.b16 %v1566
        %v1817 = vunpack.c.l.b16 %v1567
        %v1818 = vunpack.c.l.b16 %v1568
        %v1819 = vunpack.c.l.b16 %v1569
        %v1820 = vunpack.c.l.b16 %v1570
        %v1821 = vunpack.c.l.b16 %v1571
        %v1822 = vunpack.c.l.b16 %v1572
        %v1823 = vunpack.c.l.b16 %v1573
        %v1824 = vunpack.c.l.b16 %v1574
        %v1825 = vunpack.c.l.b16 %v1575
        %v1826 = vunpack.c.l.b16 %v1576
        %v1827 = vpack.c.b16 %v1796, %v1795
        %v1828 = vpack.c.b16 %v1798, %v1797
        %v1829 = vpack.c.b16 %v1800, %v1799
        %v1830 = vpack.c.b16 %v1802, %v1801
        %v1831 = vpack.c.b16 %v1804, %v1803
        %v1832 = vpack.c.b16 %v1806, %v1805
        %v1833 = vpack.c.b16 %v1808, %v1807
        %v1834 = vpack.c.b16 %v1810, %v1809
        %v1835 = vpack.c.b16 %v1812, %v1811
        %v1836 = vpack.c.b16 %v1814, %v1813
        %v1837 = vpack.c.b16 %v1816, %v1815
        %v1838 = vpack.c.b16 %v1818, %v1817
        %v1839 = vpack.c.b16 %v1820, %v1819
        %v1840 = vpack.c.b16 %v1822, %v1821
        %v1841 = vpack.c.b16 %v1824, %v1823
        %v1842 = vpack.c.b16 %v1826, %v1825
        %1859 = vmatprep.subr.bf16.mxu0 0
        %1860 = vmatpush1.bf16.msra.mxu0 %v1827
        %1861 = vmatprep.subr.bf16.mxu0 0
        %1862 = vmatpush1.bf16.msra.mxu0 %v1828
        %1863 = vmatprep.subr.bf16.mxu0 0
        %1864 = vmatpush1.bf16.msra.mxu0 %v1829
        %1865 = vmatprep.subr.bf16.mxu0 0
        %1866 = vmatpush1.bf16.msra.mxu0 %v1830
        %1867 = vmatprep.subr.bf16.mxu0 0
        %1868 = vmatpush1.bf16.msra.mxu0 %v1831
        %1869 = vmatprep.subr.bf16.mxu0 0
        %1870 = vmatpush1.bf16.msra.mxu0 %v1832
        %1871 = vmatprep.subr.bf16.mxu0 0
        %1872 = vmatpush1.bf16.msra.mxu0 %v1833
        %1873 = vmatprep.subr.bf16.mxu0 0
        %1874 = vmatpush1.bf16.msra.mxu0 %v1834
        %1875 = vmatprep.subr.bf16.mxu0 0
        %1876 = vmatpush1.bf16.msra.mxu0 %v1835
        %1877 = vmatprep.subr.bf16.mxu0 0
        %1878 = vmatpush1.bf16.msra.mxu0 %v1836
        %1879 = vmatprep.subr.bf16.mxu0 0
        %1880 = vmatpush1.bf16.msra.mxu0 %v1837
        %1881 = vmatprep.subr.bf16.mxu0 0
        %1882 = vmatpush1.bf16.msra.mxu0 %v1838
        %1883 = vmatprep.subr.bf16.mxu0 0
        %1884 = vmatpush1.bf16.msra.mxu0 %v1839
        %1885 = vmatprep.subr.bf16.mxu0 0
        %1886 = vmatpush1.bf16.msra.mxu0 %v1840
        %1887 = vmatprep.subr.bf16.mxu0 0
        %1888 = vmatpush1.bf16.msra.mxu0 %v1841
        %1889 = vmatprep.subr.bf16.mxu0 0
        %1890 = vmatpush1.bf16.msra.mxu0 %v1842
        %1891 = vmatprep.mubr.bf16.mxu0 %v685
        %1892 = vmatmul.mubr.bf16.gmra.mrb[0].mxu0 %v684
        %v1893 = vpop.f32.mrb[0].mxu0
        %v1894 = vadd.f32 %v1762, %v1893
        %v1895 = vpop.f32.mrb[0].mxu0
        %v1896 = vpop.f32.mrb[0].mxu0
        %v1897 = vadd.f32 %v1762, %v1896
        %v1898 = vpop.f32.mrb[0].mxu0
        %1899 = vdwg.mxu0
        %v1900 = vld [vmem:[%s12] sm:$0x1]
        %v1902 = vlaneseq
        %v1903 = vshrl.u32 %v1902, 7
        %v1904 = vsub.s32 0, %v1903
        %v1905 = vrot.slane %v1900, %v1904
        %v1907 = vadd.f32 %v1894, %v1905
        %v1908 = vadd.f32 %v1897, %v1905
        %v1909 = vcvt.s32.f32 %v628
        %v1910 = vsel %vm633, %v650, -inf
        %1911 = vmax.xlane.f32.xlu0 %v1910
        %v1912 = vpop.xlane.xlu0 %1911
        %v1913 = vsel %vm633, %v651, -inf
        %1914 = vmax.xlane.f32.xlu0 %v1913
        %v1915 = vpop.xlane.xlu0 %1914
        %vm1916 = vcmp.eq.f32.partialorder %v650, %v1912
        %vm1917 = vcmp.eq.f32.partialorder %v651, %v1915
        %v1918 = vsel %vm1916, %v1909, 16.0
        %v1919 = vsel %vm1917, %v1909, 16.0
        %v1920 = vsel %vm633, %v1918, inf
        %1921 = vmin.xlane.f32.xlu0 %v1920
        %v1922 = vpop.xlane.xlu0 %1921
        %v1923 = vsel %vm633, %v1919, inf
        %1924 = vmin.xlane.f32.xlu0 %v1923
        %v1925 = vpop.xlane.xlu0 %1924
        %vm1926 = vcmp.eq.f32.partialorder %v1909, %v1922
        %vm1927 = vcmp.eq.f32.partialorder %v1909, %v1925
        %v1928 = vsel %vm1926, -inf, %v650
        %v1929 = vsel %vm1927, -inf, %v651
        %v1930 = vsel %vm1926, 1, 0
        %v1931 = vsel %vm1927, 1, 0
        %v1932 = vcvt.s32.f32 %v1930
        %v1933 = vcvt.s32.f32 %v1931
        %v1934 = vpack.c.bf16 %v1933, %v1932
        %v1935 = vpack.c.bf16 %v1542, %v1539
        %v1937 = vsel %vm633, %v1934, 0
        %1939 = vmatprep.subr.bf16.mxu0 0
        %1940 = vmatpush1.bf16.msra.mxu0 %v1935
        %1941 = vmatprep.subr.bf16.mxu0 0
        %1942 = vmatpush1.bf16.msra.mxu0 0
        %1943 = vmatprep.subr.bf16.mxu0 0
        %1944 = vmatpush1.bf16.msra.mxu0 0
        %1945 = vmatprep.subr.bf16.mxu0 0
        %1946 = vmatpush1.bf16.msra.mxu0 0
        %1947 = vmatprep.subr.bf16.mxu0 0
        %1948 = vmatpush1.bf16.msra.mxu0 0
        %1949 = vmatprep.subr.bf16.mxu0 0
        %1950 = vmatpush1.bf16.msra.mxu0 0
        %1951 = vmatprep.subr.bf16.mxu0 0
        %1952 = vmatpush1.bf16.msra.mxu0 0
        %1953 = vmatprep.subr.bf16.mxu0 0
        %1954 = vmatpush1.bf16.msra.mxu0 0
        %1955 = vmatprep.subr.bf16.mxu0 0
        %1956 = vmatpush1.bf16.msra.mxu0 0
        %1957 = vmatprep.subr.bf16.mxu0 0
        %1958 = vmatpush1.bf16.msra.mxu0 0
        %1959 = vmatprep.subr.bf16.mxu0 0
        %1960 = vmatpush1.bf16.msra.mxu0 0
        %1961 = vmatprep.subr.bf16.mxu0 0
        %1962 = vmatpush1.bf16.msra.mxu0 0
        %1963 = vmatprep.subr.bf16.mxu0 0
        %1964 = vmatpush1.bf16.msra.mxu0 0
        %1965 = vmatprep.subr.bf16.mxu0 0
        %1966 = vmatpush1.bf16.msra.mxu0 0
        %1967 = vmatprep.subr.bf16.mxu0 0
        %1968 = vmatpush1.bf16.msra.mxu0 0
        %1969 = vmatprep.subr.bf16.mxu0 0
        %1970 = vmatpush1.bf16.msra.mxu0 0
        %1971 = vmatprep.mubr.bf16.mxu0 0
        %1972 = vmatmul.mubr.bf16.gmra.mrb[0].mxu0 %v1937
        %v1973 = vpop.f32.mrb[0].mxu0
        %v1974 = vadd.f32 %v1907, %v1973
        %v1975 = vpop.f32.mrb[0].mxu0
        %v1976 = vpop.f32.mrb[0].mxu0
        %v1977 = vadd.f32 %v1908, %v1976
        %v1978 = vpop.f32.mrb[0].mxu0
        %1979 = vdwg.mxu0
        %v1980 = vmax.f32 %v1974, 0.0
        %v1981 = vmax.f32 %v1977, 0.0
        %v1982 = vsel %vm633, %v1928, -inf
        %1983 = vmax.xlane.f32.xlu0 %v1982
        %v1984 = vpop.xlane.xlu0 %1983
        %v1985 = vsel %vm633, %v1929, -inf
        %1986 = vmax.xlane.f32.xlu0 %v1985
        %v1987 = vpop.xlane.xlu0 %1986
        %vm1988 = vcmp.eq.f32.partialorder %v1928, %v1984
        %vm1989 = vcmp.eq.f32.partialorder %v1929, %v1987
        %v1990 = vsel %vm1988, %v1909, 16.0
        %v1991 = vsel %vm1989, %v1909, 16.0
        %v1992 = vsel %vm633, %v1990, inf
        %1993 = vmin.xlane.f32.xlu0 %v1992
        %v1994 = vpop.xlane.xlu0 %1993
        %v1995 = vsel %vm633, %v1991, inf
        %1996 = vmin.xlane.f32.xlu0 %v1995
        %v1997 = vpop.xlane.xlu0 %1996
        %vm1998 = vcmp.eq.f32.partialorder %v1909, %v1994
        %vm1999 = vcmp.eq.f32.partialorder %v1909, %v1997
        %v2000 = vsel %vm1998, -inf, %v1928
        %v2001 = vsel %vm1999, -inf, %v1929
        %v2002 = vsel %vm1998, 1, 0
        %v2003 = vsel %vm1999, 1, 0
        %v2004 = vcvt.s32.f32 %v2002
        %v2005 = vcvt.s32.f32 %v2003
        %v2006 = vpack.c.bf16 %v2005, %v2004
        %v2008 = vsel %vm633, %v2006, 0
        %2010 = vmatprep.subr.bf16.mxu0 0
        %2011 = vmatpush1.bf16.msra.mxu0 %v1935
        %2012 = vmatprep.subr.bf16.mxu0 0
        %2013 = vmatpush1.bf16.msra.mxu0 0
        %2014 = vmatprep.subr.bf16.mxu0 0
        %2015 = vmatpush1.bf16.msra.mxu0 0
        %2016 = vmatprep.subr.bf16.mxu0 0
        %2017 = vmatpush1.bf16.msra.mxu0 0
        %2018 = vmatprep.subr.bf16.mxu0 0
        %2019 = vmatpush1.bf16.msra.mxu0 0
        %2020 = vmatprep.subr.bf16.mxu0 0
        %2021 = vmatpush1.bf16.msra.mxu0 0
        %2022 = vmatprep.subr.bf16.mxu0 0
        %2023 = vmatpush1.bf16.msra.mxu0 0
        %2024 = vmatprep.subr.bf16.mxu0 0
        %2025 = vmatpush1.bf16.msra.mxu0 0
        %2026 = vmatprep.subr.bf16.mxu0 0
        %2027 = vmatpush1.bf16.msra.mxu0 0
        %2028 = vmatprep.subr.bf16.mxu0 0
        %2029 = vmatpush1.bf16.msra.mxu0 0
        %2030 = vmatprep.subr.bf16.mxu0 0
        %2031 = vmatpush1.bf16.msra.mxu0 0
        %2032 = vmatprep.subr.bf16.mxu0 0
        %2033 = vmatpush1.bf16.msra.mxu0 0
        %2034 = vmatprep.subr.bf16.mxu0 0
        %2035 = vmatpush1.bf16.msra.mxu0 0
        %2036 = vmatprep.subr.bf16.mxu0 0
        %2037 = vmatpush1.bf16.msra.mxu0 0
        %2038 = vmatprep.subr.bf16.mxu0 0
        %2039 = vmatpush1.bf16.msra.mxu0 0
        %2040 = vmatprep.subr.bf16.mxu0 0
        %2041 = vmatpush1.bf16.msra.mxu0 0
        %2042 = vmatprep.mubr.bf16.mxu0 0
        %2043 = vmatmul.mubr.bf16.gmra.mrb[0].mxu0 %v2008
        %v2044 = vpop.f32.mrb[0].mxu0
        %v2045 = vadd.f32 %v1907, %v2044
        %v2046 = vpop.f32.mrb[0].mxu0
        %v2047 = vpop.f32.mrb[0].mxu0
        %v2048 = vadd.f32 %v1908, %v2047
        %v2049 = vpop.f32.mrb[0].mxu0
        %2050 = vdwg.mxu0
        %v2051 = vmax.f32 %v2045, 0.0
        %v2052 = vmax.f32 %v2048, 0.0
        %v2053 = vsel %vm633, %v2000, -inf
        %2054 = vmax.xlane.f32.xlu0 %v2053
        %v2055 = vpop.xlane.xlu0 %2054
        %v2056 = vsel %vm633, %v2001, -inf
        %2057 = vmax.xlane.f32.xlu0 %v2056
        %v2058 = vpop.xlane.xlu0 %2057
        %vm2059 = vcmp.eq.f32.partialorder %v2000, %v2055
        %vm2060 = vcmp.eq.f32.partialorder %v2001, %v2058
        %v2061 = vsel %vm2059, %v1909, 16.0
        %v2062 = vsel %vm2060, %v1909, 16.0
        %v2063 = vsel %vm633, %v2061, inf
        %2064 = vmin.xlane.f32.xlu0 %v2063
        %v2065 = vpop.xlane.xlu0 %2064
        %v2066 = vsel %vm633, %v2062, inf
        %2067 = vmin.xlane.f32.xlu0 %v2066
        %v2068 = vpop.xlane.xlu0 %2067
        %vm2069 = vcmp.eq.f32.partialorder %v1909, %v2065
        %vm2070 = vcmp.eq.f32.partialorder %v1909, %v2068
        %v2071 = vsel %vm2069, 1, 0
        %v2072 = vsel %vm2070, 1, 0
        %v2073 = vcvt.s32.f32 %v2071
        %v2074 = vcvt.s32.f32 %v2072
        %v2075 = vpack.c.bf16 %v2074, %v2073
        %v2077 = vsel %vm633, %v2075, 0
        %2079 = vmatprep.subr.bf16.mxu0 0
        %2080 = vmatpush1.bf16.msra.mxu0 %v1935
        %2081 = vmatprep.subr.bf16.mxu0 0
        %2082 = vmatpush1.bf16.msra.mxu0 0
        %2083 = vmatprep.subr.bf16.mxu0 0
        %2084 = vmatpush1.bf16.msra.mxu0 0
        %2085 = vmatprep.subr.bf16.mxu0 0
        %2086 = vmatpush1.bf16.msra.mxu0 0
        %2087 = vmatprep.subr.bf16.mxu0 0
        %2088 = vmatpush1.bf16.msra.mxu0 0
        %2089 = vmatprep.subr.bf16.mxu0 0
        %2090 = vmatpush1.bf16.msra.mxu0 0
        %2091 = vmatprep.subr.bf16.mxu0 0
        %2092 = vmatpush1.bf16.msra.mxu0 0
        %2093 = vmatprep.subr.bf16.mxu0 0
        %2094 = vmatpush1.bf16.msra.mxu0 0
        %2095 = vmatprep.subr.bf16.mxu0 0
        %2096 = vmatpush1.bf16.msra.mxu0 0
        %2097 = vmatprep.subr.bf16.mxu0 0
        %2098 = vmatpush1.bf16.msra.mxu0 0
        %2099 = vmatprep.subr.bf16.mxu0 0
        %2100 = vmatpush1.bf16.msra.mxu0 0
        %2101 = vmatprep.subr.bf16.mxu0 0
        %2102 = vmatpush1.bf16.msra.mxu0 0
        %2103 = vmatprep.subr.bf16.mxu0 0
        %2104 = vmatpush1.bf16.msra.mxu0 0
        %2105 = vmatprep.subr.bf16.mxu0 0
        %2106 = vmatpush1.bf16.msra.mxu0 0
        %2107 = vmatprep.subr.bf16.mxu0 0
        %2108 = vmatpush1.bf16.msra.mxu0 0
        %2109 = vmatprep.subr.bf16.mxu0 0
        %2110 = vmatpush1.bf16.msra.mxu0 0
        %2111 = vmatprep.mubr.bf16.mxu0 0
        %2112 = vmatmul.mubr.bf16.gmra.mrb[0].mxu0 %v2077
        %v2113 = vpop.f32.mrb[0].mxu0
        %v2114 = vadd.f32 %v1907, %v2113
        %v2115 = vpop.f32.mrb[0].mxu0
        %v2116 = vpop.f32.mrb[0].mxu0
        %v2117 = vadd.f32 %v1908, %v2116
        %v2118 = vpop.f32.mrb[0].mxu0
        %2119 = vdwg.mxu0
        %v2120 = vmax.f32 %v2114, 0.0
        %v2121 = vmax.f32 %v2117, 0.0
        %v2122 = vld [vmem:[%s13] sm:$0xf]
        %v2123 = vld [vmem:[%s13 + $0x4] sm:$0xf]
        %v2124 = vld [vmem:[%s13 + $0x8] sm:$0xf]
        %v2125 = vld [vmem:[%s13 + $0xc] sm:$0xf]
        %v2126 = vld [vmem:[%s13 + $0x10] sm:$0xf]
        %v2127 = vld [vmem:[%s13 + $0x14] sm:$0xf]
        %v2128 = vld [vmem:[%s13 + $0x18] sm:$0xf]
        %v2129 = vld [vmem:[%s13 + $0x1c] sm:$0xf]
        %v2130 = vld [vmem:[%s13 + $0x20] sm:$0xf]
        %v2131 = vld [vmem:[%s13 + $0x24] sm:$0xf]
        %v2132 = vld [vmem:[%s13 + $0x28] sm:$0xf]
        %v2133 = vld [vmem:[%s13 + $0x2c] sm:$0xf]
        %v2134 = vld [vmem:[%s13 + $0x30] sm:$0xf]
        %v2135 = vld [vmem:[%s13 + $0x34] sm:$0xf]
        %v2136 = vld [vmem:[%s13 + $0x38] sm:$0xf]
        %v2137 = vld [vmem:[%s13 + $0x3c] sm:$0xf]
        %v2138 = vld [vmem:[%s13 + $0x40] sm:$0xf]
        %v2139 = vld [vmem:[%s13 + $0x44] sm:$0xf]
        %v2140 = vld [vmem:[%s13 + $0x48] sm:$0xf]
        %v2141 = vld [vmem:[%s13 + $0x4c] sm:$0xf]
        %v2142 = vld [vmem:[%s13 + $0x50] sm:$0xf]
        %v2143 = vld [vmem:[%s13 + $0x54] sm:$0xf]
        %v2144 = vld [vmem:[%s13 + $0x58] sm:$0xf]
        %v2145 = vld [vmem:[%s13 + $0x5c] sm:$0xf]
        %v2146 = vld [vmem:[%s13 + $0x60] sm:$0xf]
        %v2147 = vld [vmem:[%s13 + $0x64] sm:$0xf]
        %v2148 = vld [vmem:[%s13 + $0x68] sm:$0xf]
        %v2149 = vld [vmem:[%s13 + $0x6c] sm:$0xf]
        %v2150 = vld [vmem:[%s13 + $0x70] sm:$0xf]
        %v2151 = vld [vmem:[%s13 + $0x74] sm:$0xf]
        %v2152 = vld [vmem:[%s13 + $0x78] sm:$0xf]
        %v2153 = vld [vmem:[%s13 + $0x7c] sm:$0xf]
        %v2154 = vld [vmem:[%s13 + $0x80] sm:$0xf]
        %v2155 = vld [vmem:[%s13 + $0x84] sm:$0xf]
        %v2156 = vld [vmem:[%s13 + $0x88] sm:$0xf]
        %v2157 = vld [vmem:[%s13 + $0x8c] sm:$0xf]
        %v2158 = vld [vmem:[%s13 + $0x90] sm:$0xf]
        %v2159 = vld [vmem:[%s13 + $0x94] sm:$0xf]
        %v2160 = vld [vmem:[%s13 + $0x98] sm:$0xf]
        %v2161 = vld [vmem:[%s13 + $0x9c] sm:$0xf]
        %v2162 = vld [vmem:[%s13 + $0xa0] sm:$0xf]
        %v2163 = vld [vmem:[%s13 + $0xa4] sm:$0xf]
        %v2164 = vld [vmem:[%s13 + $0xa8] sm:$0xf]
        %v2165 = vld [vmem:[%s13 + $0xac] sm:$0xf]
        %v2166 = vld [vmem:[%s13 + $0xb0] sm:$0xf]
        %v2167 = vld [vmem:[%s13 + $0xb4] sm:$0xf]
        %v2168 = vld [vmem:[%s13 + $0xb8] sm:$0xf]
        %v2169 = vld [vmem:[%s13 + $0xbc] sm:$0xf]
        %v2170 = vpack.c.bf16 %v1981, %v1980
        %v2171 = vpack.c.bf16 %v2052, %v2051
        %v2172 = vpack.c.bf16 %v2121, %v2120
        %v2173 = vld [vmem:[%s14] sm:$0x1]
        %v2175 = vlaneseq
        %v2176 = vshrl.u32 %v2175, 7
        %v2177 = vsub.s32 0, %v2176
        %v2178 = vrot.slane %v2173, %v2177
        %v2228 = vunpack.c.l.b16 %v2122
        %v2229 = vunpack.c.l.b16 %v2123
        %v2230 = vunpack.c.l.b16 %v2124
        %v2231 = vunpack.c.l.b16 %v2125
        %v2232 = vunpack.c.l.b16 %v2126
        %v2233 = vunpack.c.l.b16 %v2127
        %v2234 = vunpack.c.l.b16 %v2128
        %v2235 = vunpack.c.l.b16 %v2129
        %v2236 = vunpack.c.l.b16 %v2130
        %v2237 = vunpack.c.l.b16 %v2131
        %v2238 = vunpack.c.l.b16 %v2132
        %v2239 = vunpack.c.l.b16 %v2133
        %v2240 = vunpack.c.l.b16 %v2134
        %v2241 = vunpack.c.l.b16 %v2135
        %v2242 = vunpack.c.l.b16 %v2136
        %v2243 = vunpack.c.l.b16 %v2137
        %v2244 = vunpack.c.l.b16 %v2138
        %v2245 = vunpack.c.l.b16 %v2139
        %v2246 = vunpack.c.l.b16 %v2140
        %v2247 = vunpack.c.l.b16 %v2141
        %v2248 = vunpack.c.l.b16 %v2142
        %v2249 = vunpack.c.l.b16 %v2143
        %v2250 = vunpack.c.l.b16 %v2144
        %v2251 = vunpack.c.l.b16 %v2145
        %v2252 = vunpack.c.l.b16 %v2146
        %v2253 = vunpack.c.l.b16 %v2147
        %v2254 = vunpack.c.l.b16 %v2148
        %v2255 = vunpack.c.l.b16 %v2149
        %v2256 = vunpack.c.l.b16 %v2150
        %v2257 = vunpack.c.l.b16 %v2151
        %v2258 = vunpack.c.l.b16 %v2152
        %v2259 = vunpack.c.l.b16 %v2153
        %v2260 = vunpack.c.l.b16 %v2154
        %v2261 = vunpack.c.l.b16 %v2155
        %v2262 = vunpack.c.l.b16 %v2156
        %v2263 = vunpack.c.l.b16 %v2157
        %v2264 = vunpack.c.l.b16 %v2158
        %v2265 = vunpack.c.l.b16 %v2159
        %v2266 = vunpack.c.l.b16 %v2160
        %v2267 = vunpack.c.l.b16 %v2161
        %v2268 = vunpack.c.l.b16 %v2162
        %v2269 = vunpack.c.l.b16 %v2163
        %v2270 = vunpack.c.l.b16 %v2164
        %v2271 = vunpack.c.l.b16 %v2165
        %v2272 = vunpack.c.l.b16 %v2166
        %v2273 = vunpack.c.l.b16 %v2167
        %v2274 = vunpack.c.l.b16 %v2168
        %v2275 = vunpack.c.l.b16 %v2169
        %v2276 = vpack.c.b16 %v2229, %v2228
        %v2277 = vpack.c.b16 %v2231, %v2230
        %v2278 = vpack.c.b16 %v2233, %v2232
        %v2279 = vpack.c.b16 %v2235, %v2234
        %v2280 = vpack.c.b16 %v2237, %v2236
        %v2281 = vpack.c.b16 %v2239, %v2238
        %v2282 = vpack.c.b16 %v2241, %v2240
        %v2283 = vpack.c.b16 %v2243, %v2242
        %v2284 = vpack.c.b16 %v2245, %v2244
        %v2285 = vpack.c.b16 %v2247, %v2246
        %v2286 = vpack.c.b16 %v2249, %v2248
        %v2287 = vpack.c.b16 %v2251, %v2250
        %v2288 = vpack.c.b16 %v2253, %v2252
        %v2289 = vpack.c.b16 %v2255, %v2254
        %v2290 = vpack.c.b16 %v2257, %v2256
        %v2291 = vpack.c.b16 %v2259, %v2258
        %v2292 = vpack.c.b16 %v2261, %v2260
        %v2293 = vpack.c.b16 %v2263, %v2262
        %v2294 = vpack.c.b16 %v2265, %v2264
        %v2295 = vpack.c.b16 %v2267, %v2266
        %v2296 = vpack.c.b16 %v2269, %v2268
        %v2297 = vpack.c.b16 %v2271, %v2270
        %v2298 = vpack.c.b16 %v2273, %v2272
        %v2299 = vpack.c.b16 %v2275, %v2274
        %2324 = vmatprep.subr.bf16.mxu0 0
        %2325 = vmatpush1.bf16.msra.mxu0 %v2276
        %2326 = vmatprep.subr.bf16.mxu0 0
        %2327 = vmatpush1.bf16.msra.mxu0 %v2277
        %2328 = vmatprep.subr.bf16.mxu0 0
        %2329 = vmatpush1.bf16.msra.mxu0 %v2278
        %2330 = vmatprep.subr.bf16.mxu0 0
        %2331 = vmatpush1.bf16.msra.mxu0 %v2279
        %2332 = vmatprep.subr.bf16.mxu0 0
        %2333 = vmatpush1.bf16.msra.mxu0 %v2280
        %2334 = vmatprep.subr.bf16.mxu0 0
        %2335 = vmatpush1.bf16.msra.mxu0 %v2281
        %2336 = vmatprep.subr.bf16.mxu0 0
        %2337 = vmatpush1.bf16.msra.mxu0 %v2282
        %2338 = vmatprep.subr.bf16.mxu0 0
        %2339 = vmatpush1.bf16.msra.mxu0 %v2283
        %2340 = vmatprep.subr.bf16.mxu0 0
        %2341 = vmatpush1.bf16.msra.mxu0 %v2284
        %2342 = vmatprep.subr.bf16.mxu0 0
        %2343 = vmatpush1.bf16.msra.mxu0 %v2285
        %2344 = vmatprep.subr.bf16.mxu0 0
        %2345 = vmatpush1.bf16.msra.mxu0 %v2286
        %2346 = vmatprep.subr.bf16.mxu0 0
        %2347 = vmatpush1.bf16.msra.mxu0 %v2287
        %2348 = vmatprep.subr.bf16.mxu0 0
        %2349 = vmatpush1.bf16.msra.mxu0 %v2288
        %2350 = vmatprep.subr.bf16.mxu0 0
        %2351 = vmatpush1.bf16.msra.mxu0 %v2289
        %2352 = vmatprep.subr.bf16.mxu0 0
        %2353 = vmatpush1.bf16.msra.mxu0 %v2290
        %2354 = vmatprep.subr.bf16.mxu0 0
        %2355 = vmatpush1.bf16.msra.mxu0 %v2291
        %2356 = vmatprep.mubr.bf16.mxu0 %v2171
        %2357 = vmatmul.mubr.bf16.gmra.mrb[0].mxu0 %v2170
        %v2358 = vpop.f32.mrb[0].mxu0
        %v2359 = vadd.f32 %v2178, %v2358
        %v2360 = vpop.f32.mrb[0].mxu0
        %v2361 = vpop.f32.mrb[0].mxu0
        %v2362 = vadd.f32 %v2178, %v2361
        %v2363 = vpop.f32.mrb[0].mxu0
        %2364 = vdwg.mxu0
        %2365 = vmatprep.subr.bf16.mxu0 0
        %2366 = vmatpush1.bf16.msra.mxu0 %v2292
        %2367 = vmatprep.subr.bf16.mxu0 0
        %2368 = vmatpush1.bf16.msra.mxu0 %v2293
        %2369 = vmatprep.subr.bf16.mxu0 0
        %2370 = vmatpush1.bf16.msra.mxu0 %v2294
        %2371 = vmatprep.subr.bf16.mxu0 0
        %2372 = vmatpush1.bf16.msra.mxu0 %v2295
        %2373 = vmatprep.subr.bf16.mxu0 0
        %2374 = vmatpush1.bf16.msra.mxu0 %v2296
        %2375 = vmatprep.subr.bf16.mxu0 0
        %2376 = vmatpush1.bf16.msra.mxu0 %v2297
        %2377 = vmatprep.subr.bf16.mxu0 0
        %2378 = vmatpush1.bf16.msra.mxu0 %v2298
        %2379 = vmatprep.subr.bf16.mxu0 0
        %2380 = vmatpush1.bf16.msra.mxu0 %v2299
        %2381 = vmatprep.subr.bf16.mxu0 0
        %2382 = vmatpush1.bf16.msra.mxu0 0
        %2383 = vmatprep.subr.bf16.mxu0 0
        %2384 = vmatpush1.bf16.msra.mxu0 0
        %2385 = vmatprep.subr.bf16.mxu0 0
        %2386 = vmatpush1.bf16.msra.mxu0 0
        %2387 = vmatprep.subr.bf16.mxu0 0
        %2388 = vmatpush1.bf16.msra.mxu0 0
        %2389 = vmatprep.subr.bf16.mxu0 0
        %2390 = vmatpush1.bf16.msra.mxu0 0
        %2391 = vmatprep.subr.bf16.mxu0 0
        %2392 = vmatpush1.bf16.msra.mxu0 0
        %2393 = vmatprep.subr.bf16.mxu0 0
        %2394 = vmatpush1.bf16.msra.mxu0 0
        %2395 = vmatprep.subr.bf16.mxu0 0
        %2396 = vmatpush1.bf16.msra.mxu0 0
        %2397 = vmatprep.mubr.bf16.mxu0 0
        %2398 = vmatmul.mubr.bf16.gmra.mrb[0].mxu0 %v2172
        %v2399 = vpop.f32.mrb[0].mxu0
        %v2400 = vadd.f32 %v2359, %v2399
        %v2401 = vpop.f32.mrb[0].mxu0
        %v2402 = vpop.f32.mrb[0].mxu0
        %v2403 = vadd.f32 %v2362, %v2402
        %v2404 = vpop.f32.mrb[0].mxu0
        %2405 = vdwg.mxu0
        %v2406 = vmax.f32 %v2400, 0.0
        %v2407 = vmax.f32 %v2403, 0.0
        %v2408 = vld [vmem:[%s15] sm:$0xff]
        %v2409 = vld [vmem:[%s15 + $0x8] sm:$0xff]
        %v2410 = vld [vmem:[%s15 + $0x10] sm:$0xff]
        %v2411 = vld [vmem:[%s15 + $0x18] sm:$0xff]
        %v2412 = vld [vmem:[%s15 + $0x20] sm:$0xff]
        %v2413 = vld [vmem:[%s15 + $0x28] sm:$0xff]
        %v2414 = vld [vmem:[%s15 + $0x30] sm:$0xff]
        %v2415 = vld [vmem:[%s15 + $0x38] sm:$0xff]
        %v2416 = vld [vmem:[%s15 + $0x40] sm:$0xff]
        %v2417 = vld [vmem:[%s15 + $0x48] sm:$0xff]
        %v2418 = vld [vmem:[%s15 + $0x50] sm:$0xff]
        %v2419 = vld [vmem:[%s15 + $0x58] sm:$0xff]
        %v2420 = vld [vmem:[%s15 + $0x60] sm:$0xff]
        %v2421 = vld [vmem:[%s15 + $0x68] sm:$0xff]
        %v2422 = vld [vmem:[%s15 + $0x70] sm:$0xff]
        %v2423 = vld [vmem:[%s15 + $0x78] sm:$0xff]
        %v2424 = vpack.c.bf16 %v2407, %v2406
        %v2425 = vld [vmem:[%s16] sm:$0x3]
        %v2427 = vlaneseq
        %v2428 = vshrl.u32 %v2427, 7
        %v2429 = vsub.s32 0, %v2428
        %v2430 = vrot.slane %v2425, %v2429
        %v2431 = vlaneseq
        %v2432 = vshrl.u32 %v2431, 7
        %v2433 = vsub.s32 1, %v2432
        %v2434 = vrot.slane %v2425, %v2433
        %v2453 = vunpack.c.l.b16 %v2408
        %v2454 = vunpack.c.h.b16 %v2408
        %v2455 = vunpack.c.l.b16 %v2409
        %v2456 = vunpack.c.h.b16 %v2409
        %v2457 = vunpack.c.l.b16 %v2410
        %v2458 = vunpack.c.h.b16 %v2410
        %v2459 = vunpack.c.l.b16 %v2411
        %v2460 = vunpack.c.h.b16 %v2411
        %v2461 = vunpack.c.l.b16 %v2412
        %v2462 = vunpack.c.h.b16 %v2412
        %v2463 = vunpack.c.l.b16 %v2413
        %v2464 = vunpack.c.h.b16 %v2413
        %v2465 = vunpack.c.l.b16 %v2414
        %v2466 = vunpack.c.h.b16 %v2414
        %v2467 = vunpack.c.l.b16 %v2415
        %v2468 = vunpack.c.h.b16 %v2415
        %v2469 = vunpack.c.l.b16 %v2416
        %v2470 = vunpack.c.h.b16 %v2416
        %v2471 = vunpack.c.l.b16 %v2417
        %v2472 = vunpack.c.h.b16 %v2417
        %v2473 = vunpack.c.l.b16 %v2418
        %v2474 = vunpack.c.h.b16 %v2418
        %v2475 = vunpack.c.l.b16 %v2419
        %v2476 = vunpack.c.h.b16 %v2419
        %v2477 = vunpack.c.l.b16 %v2420
        %v2478 = vunpack.c.h.b16 %v2420
        %v2479 = vunpack.c.l.b16 %v2421
        %v2480 = vunpack.c.h.b16 %v2421
        %v2481 = vunpack.c.l.b16 %v2422
        %v2482 = vunpack.c.h.b16 %v2422
        %v2483 = vunpack.c.l.b16 %v2423
        %v2484 = vunpack.c.h.b16 %v2423
        %v2485 = vpack.c.b16 %v2455, %v2453
        %v2486 = vpack.c.b16 %v2456, %v2454
        %v2487 = vpack.c.b16 %v2459, %v2457
        %v2488 = vpack.c.b16 %v2460, %v2458
        %v2489 = vpack.c.b16 %v2463, %v2461
        %v2490 = vpack.c.b16 %v2464, %v2462
        %v2491 = vpack.c.b16 %v2467, %v2465
        %v2492 = vpack.c.b16 %v2468, %v2466
        %v2493 = vpack.c.b16 %v2471, %v2469
        %v2494 = vpack.c.b16 %v2472, %v2470
        %v2495 = vpack.c.b16 %v2475, %v2473
        %v2496 = vpack.c.b16 %v2476, %v2474
        %v2497 = vpack.c.b16 %v2479, %v2477
        %v2498 = vpack.c.b16 %v2480, %v2478
        %v2499 = vpack.c.b16 %v2483, %v2481
        %v2500 = vpack.c.b16 %v2484, %v2482
        %2517 = vmatprep.subr.bf16.mxu0 %v2486
        %2518 = vmatpush1.bf16.msra.mxu0 %v2485
        %2519 = vmatprep.subr.bf16.mxu0 %v2488
        %2520 = vmatpush1.bf16.msra.mxu0 %v2487
        %2521 = vmatprep.subr.bf16.mxu0 %v2490
        %2522 = vmatpush1.bf16.msra.mxu0 %v2489
        %2523 = vmatprep.subr.bf16.mxu0 %v2492
        %2524 = vmatpush1.bf16.msra.mxu0 %v2491
        %2525 = vmatprep.subr.bf16.mxu0 %v2494
        %2526 = vmatpush1.bf16.msra.mxu0 %v2493
        %2527 = vmatprep.subr.bf16.mxu0 %v2496
        %2528 = vmatpush1.bf16.msra.mxu0 %v2495
        %2529 = vmatprep.subr.bf16.mxu0 %v2498
        %2530 = vmatpush1.bf16.msra.mxu0 %v2497
        %2531 = vmatprep.subr.bf16.mxu0 %v2500
        %2532 = vmatpush1.bf16.msra.mxu0 %v2499
        %2533 = vmatprep.subr.bf16.mxu0 0
        %2534 = vmatpush1.bf16.msra.mxu0 0
        %2535 = vmatprep.subr.bf16.mxu0 0
        %2536 = vmatpush1.bf16.msra.mxu0 0
        %2537 = vmatprep.subr.bf16.mxu0 0
        %2538 = vmatpush1.bf16.msra.mxu0 0
        %2539 = vmatprep.subr.bf16.mxu0 0
        %2540 = vmatpush1.bf16.msra.mxu0 0
        %2541 = vmatprep.subr.bf16.mxu0 0
        %2542 = vmatpush1.bf16.msra.mxu0 0
        %2543 = vmatprep.subr.bf16.mxu0 0
        %2544 = vmatpush1.bf16.msra.mxu0 0
        %2545 = vmatprep.subr.bf16.mxu0 0
        %2546 = vmatpush1.bf16.msra.mxu0 0
        %2547 = vmatprep.subr.bf16.mxu0 0
        %2548 = vmatpush1.bf16.msra.mxu0 0
        %2549 = vmatprep.mubr.bf16.mxu0 0
        %2550 = vmatmul.mubr.bf16.gmra.mrb[0].mxu0 %v2424
        %v2551 = vpop.f32.mrb[0].mxu0
        %v2552 = vadd.f32 %v2430, %v2551
        %v2553 = vpop.f32.mrb[0].mxu0
        %v2554 = vadd.f32 %v2434, %v2553
        %v2555 = vpop.f32.mrb[0].mxu0
        %v2556 = vadd.f32 %v2430, %v2555
        %v2557 = vpop.f32.mrb[0].mxu0
        %v2558 = vadd.f32 %v2434, %v2557
        %2559 = vdwg.mxu0
        %v2560 = vadd.f32 %v1368, %v545
        %v2561 = vadd.f32 %v1370, %v546
        %v2562 = vadd.f32 %v1372, %v547
        %v2563 = vadd.f32 %v1374, %v548
        %v2564 = vadd.f32 %v2560, %v2552
        %v2565 = vadd.f32 %v2561, %v2554
        %v2566 = vadd.f32 %v2562, %v2556
        %v2567 = vadd.f32 %v2563, %v2558
        %v2568 = vmax.f32 %v2564, 0.0
        %v2569 = vmax.f32 %v2565, 0.0
        %v2570 = vmax.f32 %v2566, 0.0
        %v2571 = vmax.f32 %v2567, 0.0
        %2572 = vst [vmem:[%s534] sm:$0xff] %v2568
        %2573 = vst [vmem:[%s534 + $0x8] sm:$0xff] %v2569
        %2574 = vst [vmem:[%s534 + $0x10] sm:$0xff] %v2570
        %2575 = vst [vmem:[%s534 + $0x18] sm:$0xff] %v2571
        %s2576 = sand.u32 %s391, 1
        %s2577 = scalar_lea.sflag [#allocation5], %s2576
        %s2578 = sand.u32 %s391, 1
        %s2579 = smul.addr %s2578, 32
        %s2580 = scalar_lea.vmem [#allocation4], %s2579
        // Predicated region
        $region85: #{snippet_topic_gcn.5} parent=83 // pred_check
          %p2581 = pneg %p401
        $region86: #{snippet_topic_gcn.5} parent=83 // pred_check_branch
          %2583 = sbr.rel (%p2581) target = $region88
        $region87: #{snippet_topic_gcn.5} parent=83 // pred_region
          %s2585 = ssub.s32 512, 512
          %2586 = vsyncadd %s2577, %s2585
          %s2587 = smul.addr %s37, 4
          %s2588 = smul.addr %s2587, 128
          %s2589 = scalar_lea.hbm %s17, %s2588
          %s2590 = sshll.u32 %s2580, 4
          %s2591 = int_to_ptr.vmem [resolvable:$true] %s2590
          %2596 = dma.vmem_to_hbm [thread:$0]  %s2591, 512, %s2589, %s2577, 256, 256, 16
        $region88: #{snippet_topic_gcn.5} parent=83 // pred_fallthru
          _
      $region84: #{snippet_topic_gcn.5} parent=5 // pred_fallthru
        _
      %p2597 = scmp.le.s32.totalorder 2, %s32
      // Predicated region
      $region89: #{snippet_topic_gcn.5} parent=5 // pred_check
        %p2598 = pneg %p2597
      $region90: #{snippet_topic_gcn.5} parent=5 // pred_check_branch
        %2600 = sbr.rel (%p2598) target = $region92
      $region91: #{snippet_topic_gcn.5} parent=5 // pred_region
        %s2601 = ssub.s32 %s32, 2
        // Predicated region
        $region93: #{snippet_topic_gcn.5} parent=91 // pred_check
          %p2602 = pneg %p407
        $region94: #{snippet_topic_gcn.5} parent=91 // pred_check_branch
          %2604 = sbr.rel (%p2602) target = $region96
        $region95: #{snippet_topic_gcn.5} parent=91 // pred_region
          %s2605 = sand.u32 %s392, 1
          %s2606 = scalar_lea.sflag [#allocation5], %s2605
          %s2607 = sand.u32 %s392, 1
          %s2608 = smul.addr %s2607, 32
          %s2609 = scalar_lea.vmem [#allocation4], %s2608
          %2610 = dma.done %s2606, 512
        $region96: #{snippet_topic_gcn.5} parent=91 // pred_fallthru
          _
      $region92: #{snippet_topic_gcn.5} parent=5 // pred_fallthru
        _
    $region6: #{snippet_topic_gcn.5} parent=1 // loop_footer
      %s36 = sadd.s32 1, %s32
    $region7: #{snippet_topic_gcn.5} parent=1 // loop_footer_branch
      %31 = sbr.rel target = $region3
    $region8: #{snippet_topic_gcn.5} parent=1 // loop_exit
      _
    %2611 = vsyncpa [#allocation5], 1
    %s2612 = scalar_lea.sflag [#allocation5], 1
    %2613 = vsyncpa %s2612, 1

// kernel: snippet_topic_gcn.4
$region0: #{snippet_topic_gcn.4}
  #allocation0 [shape = 'u32[]', space=smem, size = 0x4, offset = 0x4, fixed_abs, tag = 'smem constant byte address 0x4 - core index']
  #allocation1 [shape = 'u32[144,128]{1,0:T(1,128)}', space=vmem, size = 0x12000, scoped, tag = 'internal scratch']
  #allocation2 [shape = 's32[1]{0}', space=sflag, size = 0x4, scoped, tag = 'scoped memory for snippet_topic_gcn.4']
  #allocation3 [shape = 'u8[512]{0}', space=smem, size = 0x200, scoped, tag = 'prefetched SMEM operand 0']
  %s0 = inlined_call_operand.vmem [shape: s32[2], index: 0, kind: input, shape index: {}]
  %s1 = inlined_call_operand.vmem [shape: f32[2,16,256], index: 1, kind: input, shape index: {}]
  %s2 = inlined_call_operand.vmem [shape: f32[2,1,256], index: 2, kind: input, shape index: {}]
  %s3 = inlined_call_operand.hbm [shape: bf16[256,128], index: 3, kind: input, shape index: {}]
  %s4 = inlined_call_operand.hbm [shape: f32[1,128], index: 4, kind: input, shape index: {}]
  %s5 = inlined_call_operand.vmem [shape: bf16[384,128], index: 5, kind: input, shape index: {}]
  %s6 = inlined_call_operand.hbm [shape: f32[1,128], index: 6, kind: input, shape index: {}]
  %s7 = inlined_call_operand.vmem [shape: bf16[128,256], index: 7, kind: input, shape index: {}]
  %s8 = inlined_call_operand.hbm [shape: f32[1,256], index: 8, kind: input, shape index: {}]
  %s9 = inlined_call_operand.hbm [shape: bf16[256,128], index: 9, kind: input, shape index: {}]
  %s10 = inlined_call_operand.hbm [shape: bf16[256,128], index: 10, kind: input, shape index: {}]
  %s11 = inlined_call_operand.hbm [shape: bf16[256,128], index: 11, kind: input, shape index: {}]
  %s12 = inlined_call_operand.hbm [shape: f32[1,128], index: 12, kind: input, shape index: {}]
  %s13 = inlined_call_operand.hbm [shape: bf16[384,128], index: 13, kind: input, shape index: {}]
  %s14 = inlined_call_operand.hbm [shape: f32[1,128], index: 14, kind: input, shape index: {}]
  %s15 = inlined_call_operand.hbm [shape: bf16[128,256], index: 15, kind: input, shape index: {}]
  %s16 = inlined_call_operand.hbm [shape: f32[1,256], index: 16, kind: input, shape index: {}]
  %s17 = inlined_call_operand.vmem [shape: f32[2,16,256], index: 17, kind: output, shape index: {}]
  %s18 = sld [smem:[#allocation0]]
  $region145: #{snippet_topic_gcn.4} parent=0
    _
  %s20 = ssub.s32 1, %s18
  %s21 = scalar_select 0, %s20, %s18
  %s22 = sshll.u32 %s0, 4
  %s23 = int_to_ptr.vmem [resolvable:$true] %s22
  %25 = dma.vmem_to_smem %s23, 16, [#allocation3], [#allocation2]
  %26 = dma.done [#allocation2], 16
  %27 = sfence
  $region1: #{snippet_topic_gcn.4} parent=0
    #allocation4 [shape = 'u8[65536]{0}', space=vmem, size = 0x10000, scoped, tag = 'input window, operand 3, single buffered']
    #allocation5 [shape = 's32[2]{0}', space=sflag, size = 0x8, scoped, tag = 'scoped memory for snippet_topic_gcn.4']
    #allocation6 [shape = 'u8[512]{0}', space=vmem, size = 0x400, scoped, tag = 'input window, operand 4, single buffered']
    #allocation7 [shape = 's32[1]{0}', space=sflag, size = 0x4, scoped, tag = 'scoped memory for snippet_topic_gcn.4']
    #allocation8 [shape = 'u8[512]{0}', space=vmem, size = 0x400, scoped, tag = 'input window, operand 6, single buffered']
    #allocation9 [shape = 'u8[1024]{0}', space=vmem, size = 0x400, scoped, tag = 'input window, operand 8, single buffered']
    #allocation10 [shape = 's32[1]{0}', space=sflag, size = 0x4, scoped, tag = 'scoped memory for snippet_topic_gcn.4']
    #allocation11 [shape = 'u8[65536]{0}', space=vmem, size = 0x10000, scoped, tag = 'input window, operand 9, single buffered']
    #allocation12 [shape = 'u8[65536]{0}', space=vmem, size = 0x10000, scoped, tag = 'input window, operand 10, single buffered']
    #allocation13 [shape = 's32[1]{0}', space=sflag, size = 0x4, scoped, tag = 'scoped memory for snippet_topic_gcn.4']
    #allocation14 [shape = 'u8[65536]{0}', space=vmem, size = 0x10000, scoped, tag = 'input window, operand 11, single buffered']
    #allocation15 [shape = 'u8[512]{0}', space=vmem, size = 0x400, scoped, tag = 'input window, operand 12, single buffered']
    #allocation16 [shape = 's32[1]{0}', space=sflag, size = 0x4, scoped, tag = 'scoped memory for snippet_topic_gcn.4']
    #allocation17 [shape = 'u8[98304]{0}', space=vmem, size = 0x18000, scoped, tag = 'input window, operand 13, single buffered']
    #allocation18 [shape = 'u8[512]{0}', space=vmem, size = 0x400, scoped, tag = 'input window, operand 14, single buffered']
    #allocation19 [shape = 's32[1]{0}', space=sflag, size = 0x4, scoped, tag = 'scoped memory for snippet_topic_gcn.4']
    #allocation20 [shape = 'u8[65536]{0}', space=vmem, size = 0x10000, scoped, tag = 'input window, operand 15, single buffered']
    #allocation21 [shape = 'u8[1024]{0}', space=vmem, size = 0x400, scoped, tag = 'input window, operand 16, single buffered']
    #allocation22 [shape = 's32[1]{0}', space=sflag, size = 0x4, scoped, tag = 'scoped memory for snippet_topic_gcn.4']
    %28 = vsyncpa [#allocation5], 0
    %29 = vsyncpa [#allocation7], 0
    %30 = vsyncpa [#allocation10], 0
    %31 = vsyncpa [#allocation13], 0
    %32 = vsyncpa [#allocation16], 0
    %33 = vsyncpa [#allocation19], 0
    %34 = vsyncpa [#allocation22], 0
    loop: start=0, step=1, limit=4
    $region2: #{snippet_topic_gcn.4} parent=1 // loop_pre_header
      _
    $region3: #{snippet_topic_gcn.4} parent=1 // loop_header
      %s36 = sphi 0, %s40
      %p37 = scmp.ge.s32.totalorder %s36, 4
      %s46 = sphi 0, %s48
      %s49 = sphi 0, %s46
      %s50 = sphi 0, %s49
      %s66 = sphi 0, %s50
      %s72 = sphi 0, %s74
      %s75 = sphi 0, %s72
      %s76 = sphi 0, %s75
      %s92 = sphi 0, %s76
      %s96 = sphi 0, %s96
      %s98 = sphi 0, %s96
      %s99 = sphi 0, %s98
      %s113 = sphi 0, %s99
      %s117 = sphi 0, %s117
      %s119 = sphi 0, %s117
      %s120 = sphi 0, %s119
      %s134 = sphi 0, %s120
      %s138 = sphi 0, %s138
      %s140 = sphi 0, %s138
      %s141 = sphi 0, %s140
      %s155 = sphi 0, %s141
      %s159 = sphi 0, %s159
      %s161 = sphi 0, %s159
      %s162 = sphi 0, %s161
      %s176 = sphi 0, %s162
      %s180 = sphi 0, %s180
      %s182 = sphi 0, %s180
      %s183 = sphi 0, %s182
      %s197 = sphi 0, %s183
      %s201 = sphi 0, %s201
      %s203 = sphi 0, %s201
      %s204 = sphi 0, %s203
      %s218 = sphi 0, %s204
      %s222 = sphi 0, %s222
      %s224 = sphi 0, %s222
      %s225 = sphi 0, %s224
      %s239 = sphi 0, %s225
      %s243 = sphi 0, %s243
      %s245 = sphi 0, %s243
      %s246 = sphi 0, %s245
      %s260 = sphi 0, %s246
      %s264 = sphi 0, %s264
      %s266 = sphi 0, %s264
      %s267 = sphi 0, %s266
      %s281 = sphi 0, %s267
      %s285 = sphi 0, %s285
      %s287 = sphi 0, %s285
      %s288 = sphi 0, %s287
      %s302 = sphi 0, %s288
      %s306 = sphi 0, %s306
      %s308 = sphi 0, %s306
      %s309 = sphi 0, %s308
      %s323 = sphi 0, %s309
      %s327 = sphi 0, %s327
      %s329 = sphi 0, %s327
      %s330 = sphi 0, %s329
      %s344 = sphi 0, %s330
      %s348 = sphi 0, %s348
      %s350 = sphi 0, %s348
      %s351 = sphi 0, %s350
      %s365 = sphi 0, %s351
      %s369 = sphi 0, %s369
      %s371 = sphi 0, %s369
      %s372 = sphi 0, %s371
      %s386 = sphi 0, %s372
      %s392 = sphi 0, %s394
      %s395 = sphi 0, %s392
      %s396 = sphi 0, %s395
      %s412 = sphi 0, %s396
    $region4: #{snippet_topic_gcn.4} parent=1 // loop_header_branch
      %39 = sbr.rel (%p37) target = $region8
    $region5: #{snippet_topic_gcn.4} parent=1 // loop_body
      %s41 = ssub.s32 %s36, 1
      %s42 = ssub.s32 %s36, 2
      %s43 = sadd.s32 %s36, 1
      %s44 = ssub.s32 %s36, %s43
      %p45 = scmp.eq.s32.totalorder %s44, 0
      %s47 = sadd.s32 %s46, 1
      %s48 = scalar_select %p45, %s46, %s47
      %p51 = pneg %p45
      %p52 = scmp.eq.s32.totalorder %s36, 1
      %p53 = por %p51, %p52
      %p54 = scmp.ne.s32.totalorder %s46, %s49
      %p55 = scmp.eq.s32.totalorder %s36, 0
      %p56 = por %p54, %p55
      %p57 = scmp.ne.s32.totalorder %s46, %s49
      %p58 = scmp.eq.s32.totalorder %s41, 1
      %p59 = por %p57, %p58
      %p60 = scmp.ne.s32.totalorder %s49, %s50
      %p61 = scmp.eq.s32.totalorder %s41, 0
      %p62 = por %p60, %p61
      %p63 = scmp.ne.s32.totalorder %s49, %s50
      %p64 = scmp.eq.s32.totalorder %s42, 1
      %p65 = por %p63, %p64
      %p67 = scmp.ne.s32.totalorder %s50, %s66
      %p68 = scmp.eq.s32.totalorder %s42, 0
      %p69 = por %p67, %p68
      %s70 = ssub.s32 %s36, %s43
      %p71 = scmp.eq.s32.totalorder %s70, 0
      %s73 = sadd.s32 %s72, 1
      %s74 = scalar_select %p71, %s72, %s73
      %p77 = pneg %p71
      %p78 = scmp.eq.s32.totalorder %s36, 1
      %p79 = por %p77, %p78
      %p80 = scmp.ne.s32.totalorder %s72, %s75
      %p81 = scmp.eq.s32.totalorder %s36, 0
      %p82 = por %p80, %p81
      %p83 = scmp.ne.s32.totalorder %s72, %s75
      %p84 = scmp.eq.s32.totalorder %s41, 1
      %p85 = por %p83, %p84
      %p86 = scmp.ne.s32.totalorder %s75, %s76
      %p87 = scmp.eq.s32.totalorder %s41, 0
      %p88 = por %p86, %p87
      %p89 = scmp.ne.s32.totalorder %s75, %s76
      %p90 = scmp.eq.s32.totalorder %s42, 1
      %p91 = por %p89, %p90
      %p93 = scmp.ne.s32.totalorder %s76, %s92
      %p94 = scmp.eq.s32.totalorder %s42, 0
      %p95 = por %p93, %p94
      %s97 = sadd.s32 %s96, 1
      %p100 = scmp.eq.s32.totalorder %s36, 1
      %p101 = scmp.ne.s32.totalorder %s96, %s98
      %p102 = scmp.eq.s32.totalorder %s36, 0
      %p103 = por %p101, %p102
      %p104 = scmp.ne.s32.totalorder %s96, %s98
      %p105 = scmp.eq.s32.totalorder %s41, 1
      %p106 = por %p104, %p105
      %p107 = scmp.ne.s32.totalorder %s98, %s99
      %p108 = scmp.eq.s32.totalorder %s41, 0
      %p109 = por %p107, %p108
      %p110 = scmp.ne.s32.totalorder %s98, %s99
      %p111 = scmp.eq.s32.totalorder %s42, 1
      %p112 = por %p110, %p111
      %p114 = scmp.ne.s32.totalorder %s99, %s113
      %p115 = scmp.eq.s32.totalorder %s42, 0
      %p116 = por %p114, %p115
      %s118 = sadd.s32 %s117, 1
      %p121 = scmp.eq.s32.totalorder %s36, 1
      %p122 = scmp.ne.s32.totalorder %s117, %s119
      %p123 = scmp.eq.s32.totalorder %s36, 0
      %p124 = por %p122, %p123
      %p125 = scmp.ne.s32.totalorder %s117, %s119
      %p126 = scmp.eq.s32.totalorder %s41, 1
      %p127 = por %p125, %p126
      %p128 = scmp.ne.s32.totalorder %s119, %s120
      %p129 = scmp.eq.s32.totalorder %s41, 0
      %p130 = por %p128, %p129
      %p131 = scmp.ne.s32.totalorder %s119, %s120
      %p132 = scmp.eq.s32.totalorder %s42, 1
      %p133 = por %p131, %p132
      %p135 = scmp.ne.s32.totalorder %s120, %s134
      %p136 = scmp.eq.s32.totalorder %s42, 0
      %p137 = por %p135, %p136
      %s139 = sadd.s32 %s138, 1
      %p142 = scmp.eq.s32.totalorder %s36, 1
      %p143 = scmp.ne.s32.totalorder %s138, %s140
      %p144 = scmp.eq.s32.totalorder %s36, 0
      %p145 = por %p143, %p144
      %p146 = scmp.ne.s32.totalorder %s138, %s140
      %p147 = scmp.eq.s32.totalorder %s41, 1
      %p148 = por %p146, %p147
      %p149 = scmp.ne.s32.totalorder %s140, %s141
      %p150 = scmp.eq.s32.totalorder %s41, 0
      %p151 = por %p149, %p150
      %p152 = scmp.ne.s32.totalorder %s140, %s141
      %p153 = scmp.eq.s32.totalorder %s42, 1
      %p154 = por %p152, %p153
      %p156 = scmp.ne.s32.totalorder %s141, %s155
      %p157 = scmp.eq.s32.totalorder %s42, 0
      %p158 = por %p156, %p157
      %s160 = sadd.s32 %s159, 1
      %p163 = scmp.eq.s32.totalorder %s36, 1
      %p164 = scmp.ne.s32.totalorder %s159, %s161
      %p165 = scmp.eq.s32.totalorder %s36, 0
      %p166 = por %p164, %p165
      %p167 = scmp.ne.s32.totalorder %s159, %s161
      %p168 = scmp.eq.s32.totalorder %s41, 1
      %p169 = por %p167, %p168
      %p170 = scmp.ne.s32.totalorder %s161, %s162
      %p171 = scmp.eq.s32.totalorder %s41, 0
      %p172 = por %p170, %p171
      %p173 = scmp.ne.s32.totalorder %s161, %s162
      %p174 = scmp.eq.s32.totalorder %s42, 1
      %p175 = por %p173, %p174
      %p177 = scmp.ne.s32.totalorder %s162, %s176
      %p178 = scmp.eq.s32.totalorder %s42, 0
      %p179 = por %p177, %p178
      %s181 = sadd.s32 %s180, 1
      %p184 = scmp.eq.s32.totalorder %s36, 1
      %p185 = scmp.ne.s32.totalorder %s180, %s182
      %p186 = scmp.eq.s32.totalorder %s36, 0
      %p187 = por %p185, %p186
      %p188 = scmp.ne.s32.totalorder %s180, %s182
      %p189 = scmp.eq.s32.totalorder %s41, 1
      %p190 = por %p188, %p189
      %p191 = scmp.ne.s32.totalorder %s182, %s183
      %p192 = scmp.eq.s32.totalorder %s41, 0
      %p193 = por %p191, %p192
      %p194 = scmp.ne.s32.totalorder %s182, %s183
      %p195 = scmp.eq.s32.totalorder %s42, 1
      %p196 = por %p194, %p195
      %p198 = scmp.ne.s32.totalorder %s183, %s197
      %p199 = scmp.eq.s32.totalorder %s42, 0
      %p200 = por %p198, %p199
      %s202 = sadd.s32 %s201, 1
      %p205 = scmp.eq.s32.totalorder %s36, 1
      %p206 = scmp.ne.s32.totalorder %s201, %s203
      %p207 = scmp.eq.s32.totalorder %s36, 0
      %p208 = por %p206, %p207
      %p209 = scmp.ne.s32.totalorder %s201, %s203
      %p210 = scmp.eq.s32.totalorder %s41, 1
      %p211 = por %p209, %p210
      %p212 = scmp.ne.s32.totalorder %s203, %s204
      %p213 = scmp.eq.s32.totalorder %s41, 0
      %p214 = por %p212, %p213
      %p215 = scmp.ne.s32.totalorder %s203, %s204
      %p216 = scmp.eq.s32.totalorder %s42, 1
      %p217 = por %p215, %p216
      %p219 = scmp.ne.s32.totalorder %s204, %s218
      %p220 = scmp.eq.s32.totalorder %s42, 0
      %p221 = por %p219, %p220
      %s223 = sadd.s32 %s222, 1
      %p226 = scmp.eq.s32.totalorder %s36, 1
      %p227 = scmp.ne.s32.totalorder %s222, %s224
      %p228 = scmp.eq.s32.totalorder %s36, 0
      %p229 = por %p227, %p228
      %p230 = scmp.ne.s32.totalorder %s222, %s224
      %p231 = scmp.eq.s32.totalorder %s41, 1
      %p232 = por %p230, %p231
      %p233 = scmp.ne.s32.totalorder %s224, %s225
      %p234 = scmp.eq.s32.totalorder %s41, 0
      %p235 = por %p233, %p234
      %p236 = scmp.ne.s32.totalorder %s224, %s225
      %p237 = scmp.eq.s32.totalorder %s42, 1
      %p238 = por %p236, %p237
      %p240 = scmp.ne.s32.totalorder %s225, %s239
      %p241 = scmp.eq.s32.totalorder %s42, 0
      %p242 = por %p240, %p241
      %s244 = sadd.s32 %s243, 1
      %p247 = scmp.eq.s32.totalorder %s36, 1
      %p248 = scmp.ne.s32.totalorder %s243, %s245
      %p249 = scmp.eq.s32.totalorder %s36, 0
      %p250 = por %p248, %p249
      %p251 = scmp.ne.s32.totalorder %s243, %s245
      %p252 = scmp.eq.s32.totalorder %s41, 1
      %p253 = por %p251, %p252
      %p254 = scmp.ne.s32.totalorder %s245, %s246
      %p255 = scmp.eq.s32.totalorder %s41, 0
      %p256 = por %p254, %p255
      %p257 = scmp.ne.s32.totalorder %s245, %s246
      %p258 = scmp.eq.s32.totalorder %s42, 1
      %p259 = por %p257, %p258
      %p261 = scmp.ne.s32.totalorder %s246, %s260
      %p262 = scmp.eq.s32.totalorder %s42, 0
      %p263 = por %p261, %p262
      %s265 = sadd.s32 %s264, 1
      %p268 = scmp.eq.s32.totalorder %s36, 1
      %p269 = scmp.ne.s32.totalorder %s264, %s266
      %p270 = scmp.eq.s32.totalorder %s36, 0
      %p271 = por %p269, %p270
      %p272 = scmp.ne.s32.totalorder %s264, %s266
      %p273 = scmp.eq.s32.totalorder %s41, 1
      %p274 = por %p272, %p273
      %p275 = scmp.ne.s32.totalorder %s266, %s267
      %p276 = scmp.eq.s32.totalorder %s41, 0
      %p277 = por %p275, %p276
      %p278 = scmp.ne.s32.totalorder %s266, %s267
      %p279 = scmp.eq.s32.totalorder %s42, 1
      %p280 = por %p278, %p279
      %p282 = scmp.ne.s32.totalorder %s267, %s281
      %p283 = scmp.eq.s32.totalorder %s42, 0
      %p284 = por %p282, %p283
      %s286 = sadd.s32 %s285, 1
      %p289 = scmp.eq.s32.totalorder %s36, 1
      %p290 = scmp.ne.s32.totalorder %s285, %s287
      %p291 = scmp.eq.s32.totalorder %s36, 0
      %p292 = por %p290, %p291
      %p293 = scmp.ne.s32.totalorder %s285, %s287
      %p294 = scmp.eq.s32.totalorder %s41, 1
      %p295 = por %p293, %p294
      %p296 = scmp.ne.s32.totalorder %s287, %s288
      %p297 = scmp.eq.s32.totalorder %s41, 0
      %p298 = por %p296, %p297
      %p299 = scmp.ne.s32.totalorder %s287, %s288
      %p300 = scmp.eq.s32.totalorder %s42, 1
      %p301 = por %p299, %p300
      %p303 = scmp.ne.s32.totalorder %s288, %s302
      %p304 = scmp.eq.s32.totalorder %s42, 0
      %p305 = por %p303, %p304
      %s307 = sadd.s32 %s306, 1
      %p310 = scmp.eq.s32.totalorder %s36, 1
      %p311 = scmp.ne.s32.totalorder %s306, %s308
      %p312 = scmp.eq.s32.totalorder %s36, 0
      %p313 = por %p311, %p312
      %p314 = scmp.ne.s32.totalorder %s306, %s308
      %p315 = scmp.eq.s32.totalorder %s41, 1
      %p316 = por %p314, %p315
      %p317 = scmp.ne.s32.totalorder %s308, %s309
      %p318 = scmp.eq.s32.totalorder %s41, 0
      %p319 = por %p317, %p318
      %p320 = scmp.ne.s32.totalorder %s308, %s309
      %p321 = scmp.eq.s32.totalorder %s42, 1
      %p322 = por %p320, %p321
      %p324 = scmp.ne.s32.totalorder %s309, %s323
      %p325 = scmp.eq.s32.totalorder %s42, 0
      %p326 = por %p324, %p325
      %s328 = sadd.s32 %s327, 1
      %p331 = scmp.eq.s32.totalorder %s36, 1
      %p332 = scmp.ne.s32.totalorder %s327, %s329
      %p333 = scmp.eq.s32.totalorder %s36, 0
      %p334 = por %p332, %p333
      %p335 = scmp.ne.s32.totalorder %s327, %s329
      %p336 = scmp.eq.s32.totalorder %s41, 1
      %p337 = por %p335, %p336
      %p338 = scmp.ne.s32.totalorder %s329, %s330
      %p339 = scmp.eq.s32.totalorder %s41, 0
      %p340 = por %p338, %p339
      %p341 = scmp.ne.s32.totalorder %s329, %s330
      %p342 = scmp.eq.s32.totalorder %s42, 1
      %p343 = por %p341, %p342
      %p345 = scmp.ne.s32.totalorder %s330, %s344
      %p346 = scmp.eq.s32.totalorder %s42, 0
      %p347 = por %p345, %p346
      %s349 = sadd.s32 %s348, 1
      %p352 = scmp.eq.s32.totalorder %s36, 1
      %p353 = scmp.ne.s32.totalorder %s348, %s350
      %p354 = scmp.eq.s32.totalorder %s36, 0
      %p355 = por %p353, %p354
      %p356 = scmp.ne.s32.totalorder %s348, %s350
      %p357 = scmp.eq.s32.totalorder %s41, 1
      %p358 = por %p356, %p357
      %p359 = scmp.ne.s32.totalorder %s350, %s351
      %p360 = scmp.eq.s32.totalorder %s41, 0
      %p361 = por %p359, %p360
      %p362 = scmp.ne.s32.totalorder %s350, %s351
      %p363 = scmp.eq.s32.totalorder %s42, 1
      %p364 = por %p362, %p363
      %p366 = scmp.ne.s32.totalorder %s351, %s365
      %p367 = scmp.eq.s32.totalorder %s42, 0
      %p368 = por %p366, %p367
      %s370 = sadd.s32 %s369, 1
      %p373 = scmp.eq.s32.totalorder %s36, 1
      %p374 = scmp.ne.s32.totalorder %s369, %s371
      %p375 = scmp.eq.s32.totalorder %s36, 0
      %p376 = por %p374, %p375
      %p377 = scmp.ne.s32.totalorder %s369, %s371
      %p378 = scmp.eq.s32.totalorder %s41, 1
      %p379 = por %p377, %p378
      %p380 = scmp.ne.s32.totalorder %s371, %s372
      %p381 = scmp.eq.s32.totalorder %s41, 0
      %p382 = por %p380, %p381
      %p383 = scmp.ne.s32.totalorder %s371, %s372
      %p384 = scmp.eq.s32.totalorder %s42, 1
      %p385 = por %p383, %p384
      %p387 = scmp.ne.s32.totalorder %s372, %s386
      %p388 = scmp.eq.s32.totalorder %s42, 0
      %p389 = por %p387, %p388
      %s390 = ssub.s32 %s36, %s43
      %p391 = scmp.eq.s32.totalorder %s390, 0
      %s393 = sadd.s32 %s392, 1
      %s394 = scalar_select %p391, %s392, %s393
      %p397 = pneg %p391
      %p398 = scmp.eq.s32.totalorder %s36, 1
      %p399 = por %p397, %p398
      %p400 = scmp.ne.s32.totalorder %s392, %s395
      %p401 = scmp.eq.s32.totalorder %s36, 0
      %p402 = por %p400, %p401
      %p403 = scmp.ne.s32.totalorder %s392, %s395
      %p404 = scmp.eq.s32.totalorder %s41, 1
      %p405 = por %p403, %p404
      %p406 = scmp.ne.s32.totalorder %s395, %s396
      %p407 = scmp.eq.s32.totalorder %s41, 0
      %p408 = por %p406, %p407
      %p409 = scmp.ne.s32.totalorder %s395, %s396
      %p410 = scmp.eq.s32.totalorder %s42, 1
      %p411 = por %p409, %p410
      %p413 = scmp.ne.s32.totalorder %s396, %s412
      %p414 = scmp.eq.s32.totalorder %s42, 0
      %p415 = por %p413, %p414
      %p416 = scmp.le.s32.totalorder 1, %s36
      %p417 = scmp.lt.s32.totalorder %s36, 3
      %p418 = pnand %p416, %p417
      %p419 = pneg %p418
      // Predicated region
      $region9: #{snippet_topic_gcn.4} parent=5 // pred_check
        _
      $region10: #{snippet_topic_gcn.4} parent=5 // pred_check_branch
        %421 = sbr.rel (%p418) target = $region12
      $region11: #{snippet_topic_gcn.4} parent=5 // pred_region
        %s422 = ssub.s32 %s36, 1
        // Predicated region
        $region13: #{snippet_topic_gcn.4} parent=11 // pred_check
          %p423 = pneg %p109
        $region14: #{snippet_topic_gcn.4} parent=11 // pred_check_branch
          %425 = sbr.rel (%p423) target = $region16
        $region15: #{snippet_topic_gcn.4} parent=11 // pred_region
          %s427 = ssub.s32 2048, 2048
          %428 = vsyncadd [#allocation5], %s427
          %s429 = sshll.u32 [#allocation4], 4
          %s430 = int_to_ptr.vmem [resolvable:$true] %s429
          %435 = dma.hbm_to_vmem [thread:$0]  %s3, 2048, %s430, [#allocation5], 64, 64, 4
        $region16: #{snippet_topic_gcn.4} parent=11 // pred_fallthru
          _
        // Predicated region
        $region17: #{snippet_topic_gcn.4} parent=11 // pred_check
          %p436 = pneg %p130
        $region18: #{snippet_topic_gcn.4} parent=11 // pred_check_branch
          %438 = sbr.rel (%p436) target = $region20
        $region19: #{snippet_topic_gcn.4} parent=11 // pred_region
          %s440 = ssub.s32 16, 16
          %441 = vsyncadd [#allocation7], %s440
          %s443 = sshll.u32 [#allocation6], 4
          %s444 = int_to_ptr.vmem [resolvable:$true] %s443
          %446 = dma.hbm_to_vmem [thread:$0]  %s4, 16, %s444, [#allocation7]
        $region20: #{snippet_topic_gcn.4} parent=11 // pred_fallthru
          _
        // Predicated region
        $region21: #{snippet_topic_gcn.4} parent=11 // pred_check
          %p447 = pneg %p151
        $region22: #{snippet_topic_gcn.4} parent=11 // pred_check_branch
          %449 = sbr.rel (%p447) target = $region24
        $region23: #{snippet_topic_gcn.4} parent=11 // pred_region
          _
        $region24: #{snippet_topic_gcn.4} parent=11 // pred_fallthru
          _
        // Predicated region
        $region25: #{snippet_topic_gcn.4} parent=11 // pred_check
          %p450 = pneg %p172
        $region26: #{snippet_topic_gcn.4} parent=11 // pred_check_branch
          %452 = sbr.rel (%p450) target = $region28
        $region27: #{snippet_topic_gcn.4} parent=11 // pred_region
          %s454 = ssub.s32 16, 16
          %455 = vsyncadd [#allocation7], %s454
          %s457 = sshll.u32 [#allocation8], 4
          %s458 = int_to_ptr.vmem [resolvable:$true] %s457
          %460 = dma.hbm_to_vmem [thread:$0]  %s6, 16, %s458, [#allocation7]
        $region28: #{snippet_topic_gcn.4} parent=11 // pred_fallthru
          _
        // Predicated region
        $region29: #{snippet_topic_gcn.4} parent=11 // pred_check
          %p461 = pneg %p193
        $region30: #{snippet_topic_gcn.4} parent=11 // pred_check_branch
          %463 = sbr.rel (%p461) target = $region32
        $region31: #{snippet_topic_gcn.4} parent=11 // pred_region
          _
        $region32: #{snippet_topic_gcn.4} parent=11 // pred_fallthru
          _
        // Predicated region
        $region33: #{snippet_topic_gcn.4} parent=11 // pred_check
          %p464 = pneg %p214
        $region34: #{snippet_topic_gcn.4} parent=11 // pred_check_branch
          %466 = sbr.rel (%p464) target = $region36
        $region35: #{snippet_topic_gcn.4} parent=11 // pred_region
          %s468 = ssub.s32 32, 32
          %469 = vsyncadd [#allocation10], %s468
          %s471 = sshll.u32 [#allocation9], 4
          %s472 = int_to_ptr.vmem [resolvable:$true] %s471
          %474 = dma.hbm_to_vmem [thread:$0]  %s8, 32, %s472, [#allocation10]
        $region36: #{snippet_topic_gcn.4} parent=11 // pred_fallthru
          _
        // Predicated region
        $region37: #{snippet_topic_gcn.4} parent=11 // pred_check
          %p475 = pneg %p235
        $region38: #{snippet_topic_gcn.4} parent=11 // pred_check_branch
          %477 = sbr.rel (%p475) target = $region40
        $region39: #{snippet_topic_gcn.4} parent=11 // pred_region
          %s479 = ssub.s32 2048, 2048
          %480 = vsyncadd [#allocation10], %s479
          %s481 = sshll.u32 [#allocation11], 4
          %s482 = int_to_ptr.vmem [resolvable:$true] %s481
          %487 = dma.hbm_to_vmem [thread:$0]  %s9, 2048, %s482, [#allocation10], 64, 64, 4
        $region40: #{snippet_topic_gcn.4} parent=11 // pred_fallthru
          _
        // Predicated region
        $region41: #{snippet_topic_gcn.4} parent=11 // pred_check
          %p488 = pneg %p256
        $region42: #{snippet_topic_gcn.4} parent=11 // pred_check_branch
          %490 = sbr.rel (%p488) target = $region44
        $region43: #{snippet_topic_gcn.4} parent=11 // pred_region
          %s492 = ssub.s32 2048, 2048
          %493 = vsyncadd [#allocation13], %s492
          %s494 = sshll.u32 [#allocation12], 4
          %s495 = int_to_ptr.vmem [resolvable:$true] %s494
          %500 = dma.hbm_to_vmem [thread:$0]  %s10, 2048, %s495, [#allocation13], 64, 64, 4
        $region44: #{snippet_topic_gcn.4} parent=11 // pred_fallthru
          _
        // Predicated region
        $region45: #{snippet_topic_gcn.4} parent=11 // pred_check
          %p501 = pneg %p277
        $region46: #{snippet_topic_gcn.4} parent=11 // pred_check_branch
          %503 = sbr.rel (%p501) target = $region48
        $region47: #{snippet_topic_gcn.4} parent=11 // pred_region
          %s505 = ssub.s32 2048, 2048
          %506 = vsyncadd [#allocation13], %s505
          %s507 = sshll.u32 [#allocation14], 4
          %s508 = int_to_ptr.vmem [resolvable:$true] %s507
          %513 = dma.hbm_to_vmem [thread:$0]  %s11, 2048, %s508, [#allocation13], 64, 64, 4
        $region48: #{snippet_topic_gcn.4} parent=11 // pred_fallthru
          _
        // Predicated region
        $region49: #{snippet_topic_gcn.4} parent=11 // pred_check
          %p514 = pneg %p298
        $region50: #{snippet_topic_gcn.4} parent=11 // pred_check_branch
          %516 = sbr.rel (%p514) target = $region52
        $region51: #{snippet_topic_gcn.4} parent=11 // pred_region
          %s518 = ssub.s32 16, 16
          %519 = vsyncadd [#allocation16], %s518
          %s521 = sshll.u32 [#allocation15], 4
          %s522 = int_to_ptr.vmem [resolvable:$true] %s521
          %524 = dma.hbm_to_vmem [thread:$0]  %s12, 16, %s522, [#allocation16]
        $region52: #{snippet_topic_gcn.4} parent=11 // pred_fallthru
          _
        // Predicated region
        $region53: #{snippet_topic_gcn.4} parent=11 // pred_check
          %p525 = pneg %p319
        $region54: #{snippet_topic_gcn.4} parent=11 // pred_check_branch
          %527 = sbr.rel (%p525) target = $region56
        $region55: #{snippet_topic_gcn.4} parent=11 // pred_region
          %s529 = ssub.s32 3072, 3072
          %530 = vsyncadd [#allocation16], %s529
          %s531 = sshll.u32 [#allocation17], 4
          %s532 = int_to_ptr.vmem [resolvable:$true] %s531
          %537 = dma.hbm_to_vmem [thread:$0]  %s13, 3072, %s532, [#allocation16], 64, 64, 4
        $region56: #{snippet_topic_gcn.4} parent=11 // pred_fallthru
          _
        // Predicated region
        $region57: #{snippet_topic_gcn.4} parent=11 // pred_check
          %p538 = pneg %p340
        $region58: #{snippet_topic_gcn.4} parent=11 // pred_check_branch
          %540 = sbr.rel (%p538) target = $region60
        $region59: #{snippet_topic_gcn.4} parent=11 // pred_region
          %s542 = ssub.s32 16, 16
          %543 = vsyncadd [#allocation19], %s542
          %s545 = sshll.u32 [#allocation18], 4
          %s546 = int_to_ptr.vmem [resolvable:$true] %s545
          %548 = dma.hbm_to_vmem [thread:$0]  %s14, 16, %s546, [#allocation19]
        $region60: #{snippet_topic_gcn.4} parent=11 // pred_fallthru
          _
        // Predicated region
        $region61: #{snippet_topic_gcn.4} parent=11 // pred_check
          %p549 = pneg %p361
        $region62: #{snippet_topic_gcn.4} parent=11 // pred_check_branch
          %551 = sbr.rel (%p549) target = $region64
        $region63: #{snippet_topic_gcn.4} parent=11 // pred_region
          %s553 = ssub.s32 2048, 2048
          %554 = vsyncadd [#allocation19], %s553
          %s555 = sshll.u32 [#allocation20], 4
          %s556 = int_to_ptr.vmem [resolvable:$true] %s555
          %561 = dma.hbm_to_vmem [thread:$0]  %s15, 2048, %s556, [#allocation19], 128, 128, 8
        $region64: #{snippet_topic_gcn.4} parent=11 // pred_fallthru
          _
        // Predicated region
        $region65: #{snippet_topic_gcn.4} parent=11 // pred_check
          %p562 = pneg %p382
        $region66: #{snippet_topic_gcn.4} parent=11 // pred_check_branch
          %564 = sbr.rel (%p562) target = $region68
        $region67: #{snippet_topic_gcn.4} parent=11 // pred_region
          %s566 = ssub.s32 32, 32
          %567 = vsyncadd [#allocation22], %s566
          %s569 = sshll.u32 [#allocation21], 4
          %s570 = int_to_ptr.vmem [resolvable:$true] %s569
          %572 = dma.hbm_to_vmem [thread:$0]  %s16, 32, %s570, [#allocation22]
        $region68: #{snippet_topic_gcn.4} parent=11 // pred_fallthru
          _
      $region12: #{snippet_topic_gcn.4} parent=5 // pred_fallthru
        _
      %p573 = scmp.lt.s32.totalorder %s36, 2
      // Predicated region
      $region69: #{snippet_topic_gcn.4} parent=5 // pred_check
        %p574 = pneg %p573
      $region70: #{snippet_topic_gcn.4} parent=5 // pred_check_branch
        %576 = sbr.rel (%p574) target = $region72
      $region71: #{snippet_topic_gcn.4} parent=5 // pred_region
        // Predicated region
        $region73: #{snippet_topic_gcn.4} parent=71 // pred_check
          %p577 = pneg %p56
        $region74: #{snippet_topic_gcn.4} parent=71 // pred_check_branch
          %579 = sbr.rel (%p577) target = $region76
        $region75: #{snippet_topic_gcn.4} parent=71 // pred_region
          %p580 = scmp.lt.s32.totalorder %s36, 1
          %s581 = scalar_select %p580, %s36, 1
          %s582 = smul.addr %s581, 4
          %s583 = smul.addr %s582, 8
          %s584 = scalar_lea.vmem %s1, %s583
        $region76: #{snippet_topic_gcn.4} parent=71 // pred_fallthru
          _
        // Predicated region
        $region77: #{snippet_topic_gcn.4} parent=71 // pred_check
          %p585 = pneg %p82
        $region78: #{snippet_topic_gcn.4} parent=71 // pred_check_branch
          %587 = sbr.rel (%p585) target = $region80
        $region79: #{snippet_topic_gcn.4} parent=71 // pred_region
          %p588 = scmp.lt.s32.totalorder %s36, 1
          %s589 = scalar_select %p588, %s36, 1
          %s590 = smul.addr %s589, 2
          %s591 = scalar_lea.vmem %s2, %s590
        $region80: #{snippet_topic_gcn.4} parent=71 // pred_fallthru
          _
      $region72: #{snippet_topic_gcn.4} parent=5 // pred_fallthru
        _
      %p592 = scmp.le.s32.totalorder 1, %s36
      %p593 = scmp.lt.s32.totalorder %s36, 3
      %p594 = pnand %p592, %p593
      %p595 = pneg %p594
      // Predicated region
      $region81: #{snippet_topic_gcn.4} parent=5 // pred_check
        _
      $region82: #{snippet_topic_gcn.4} parent=5 // pred_check_branch
        %597 = sbr.rel (%p594) target = $region84
      $region83: #{snippet_topic_gcn.4} parent=5 // pred_region
        %s598 = ssub.s32 %s36, 1
        // Predicated region
        $region85: #{snippet_topic_gcn.4} parent=83 // pred_check
          %p599 = pneg %p109
        $region86: #{snippet_topic_gcn.4} parent=83 // pred_check_branch
          %601 = sbr.rel (%p599) target = $region88
        $region87: #{snippet_topic_gcn.4} parent=83 // pred_region
          %602 = dma.done [#allocation5], 2048
        $region88: #{snippet_topic_gcn.4} parent=83 // pred_fallthru
          _
        // Predicated region
        $region89: #{snippet_topic_gcn.4} parent=83 // pred_check
          %p603 = pneg %p130
        $region90: #{snippet_topic_gcn.4} parent=83 // pred_check_branch
          %605 = sbr.rel (%p603) target = $region92
        $region91: #{snippet_topic_gcn.4} parent=83 // pred_region
          %606 = dma.done [#allocation7], 16
        $region92: #{snippet_topic_gcn.4} parent=83 // pred_fallthru
          _
        // Predicated region
        $region93: #{snippet_topic_gcn.4} parent=83 // pred_check
          %p607 = pneg %p172
        $region94: #{snippet_topic_gcn.4} parent=83 // pred_check_branch
          %609 = sbr.rel (%p607) target = $region96
        $region95: #{snippet_topic_gcn.4} parent=83 // pred_region
          %610 = dma.done [#allocation7], 16
        $region96: #{snippet_topic_gcn.4} parent=83 // pred_fallthru
          _
        // Predicated region
        $region97: #{snippet_topic_gcn.4} parent=83 // pred_check
          %p611 = pneg %p214
        $region98: #{snippet_topic_gcn.4} parent=83 // pred_check_branch
          %613 = sbr.rel (%p611) target = $region100
        $region99: #{snippet_topic_gcn.4} parent=83 // pred_region
          %614 = dma.done [#allocation10], 32
        $region100: #{snippet_topic_gcn.4} parent=83 // pred_fallthru
          _
        // Predicated region
        $region101: #{snippet_topic_gcn.4} parent=83 // pred_check
          %p615 = pneg %p235
        $region102: #{snippet_topic_gcn.4} parent=83 // pred_check_branch
          %617 = sbr.rel (%p615) target = $region104
        $region103: #{snippet_topic_gcn.4} parent=83 // pred_region
          %618 = dma.done [#allocation10], 2048
        $region104: #{snippet_topic_gcn.4} parent=83 // pred_fallthru
          _
        // Predicated region
        $region105: #{snippet_topic_gcn.4} parent=83 // pred_check
          %p619 = pneg %p256
        $region106: #{snippet_topic_gcn.4} parent=83 // pred_check_branch
          %621 = sbr.rel (%p619) target = $region108
        $region107: #{snippet_topic_gcn.4} parent=83 // pred_region
          %622 = dma.done [#allocation13], 2048
        $region108: #{snippet_topic_gcn.4} parent=83 // pred_fallthru
          _
        // Predicated region
        $region109: #{snippet_topic_gcn.4} parent=83 // pred_check
          %p623 = pneg %p277
        $region110: #{snippet_topic_gcn.4} parent=83 // pred_check_branch
          %625 = sbr.rel (%p623) target = $region112
        $region111: #{snippet_topic_gcn.4} parent=83 // pred_region
          %626 = dma.done [#allocation13], 2048
        $region112: #{snippet_topic_gcn.4} parent=83 // pred_fallthru
          _
        // Predicated region
        $region113: #{snippet_topic_gcn.4} parent=83 // pred_check
          %p627 = pneg %p298
        $region114: #{snippet_topic_gcn.4} parent=83 // pred_check_branch
          %629 = sbr.rel (%p627) target = $region116
        $region115: #{snippet_topic_gcn.4} parent=83 // pred_region
          %630 = dma.done [#allocation16], 16
        $region116: #{snippet_topic_gcn.4} parent=83 // pred_fallthru
          _
        // Predicated region
        $region117: #{snippet_topic_gcn.4} parent=83 // pred_check
          %p631 = pneg %p319
        $region118: #{snippet_topic_gcn.4} parent=83 // pred_check_branch
          %633 = sbr.rel (%p631) target = $region120
        $region119: #{snippet_topic_gcn.4} parent=83 // pred_region
          %634 = dma.done [#allocation16], 3072
        $region120: #{snippet_topic_gcn.4} parent=83 // pred_fallthru
          _
        // Predicated region
        $region121: #{snippet_topic_gcn.4} parent=83 // pred_check
          %p635 = pneg %p340
        $region122: #{snippet_topic_gcn.4} parent=83 // pred_check_branch
          %637 = sbr.rel (%p635) target = $region124
        $region123: #{snippet_topic_gcn.4} parent=83 // pred_region
          %638 = dma.done [#allocation19], 16
        $region124: #{snippet_topic_gcn.4} parent=83 // pred_fallthru
          _
        // Predicated region
        $region125: #{snippet_topic_gcn.4} parent=83 // pred_check
          %p639 = pneg %p361
        $region126: #{snippet_topic_gcn.4} parent=83 // pred_check_branch
          %641 = sbr.rel (%p639) target = $region128
        $region127: #{snippet_topic_gcn.4} parent=83 // pred_region
          %642 = dma.done [#allocation19], 2048
        $region128: #{snippet_topic_gcn.4} parent=83 // pred_fallthru
          _
        // Predicated region
        $region129: #{snippet_topic_gcn.4} parent=83 // pred_check
          %p643 = pneg %p382
        $region130: #{snippet_topic_gcn.4} parent=83 // pred_check_branch
          %645 = sbr.rel (%p643) target = $region132
        $region131: #{snippet_topic_gcn.4} parent=83 // pred_region
          %646 = dma.done [#allocation22], 32
        $region132: #{snippet_topic_gcn.4} parent=83 // pred_fallthru
          _
        %p647 = scmp.lt.s32.totalorder %s41, 1
        %s648 = scalar_select %p647, %s41, 1
        %s649 = smul.addr %s648, 4
        %s650 = smul.addr %s649, 8
        %s651 = scalar_lea.vmem %s1, %s650
        %p652 = pneg %p62
        %p653 = pneg %p59
        %p654 = scmp.lt.s32.totalorder %s41, 1
        %s655 = scalar_select %p654, %s41, 1
        %s656 = smul.addr %s655, 2
        %s657 = scalar_lea.vmem %s2, %s656
        %p658 = pneg %p88
        %p659 = pneg %p85
        %p660 = pneg %p109
        %p661 = pneg %p106
        %p662 = pneg %p130
        %p663 = pneg %p127
        %p664 = pneg %p151
        %p665 = pneg %p148
        %p666 = pneg %p172
        %p667 = pneg %p169
        %p668 = pneg %p193
        %p669 = pneg %p190
        %p670 = pneg %p214
        %p671 = pneg %p211
        %p672 = pneg %p235
        %p673 = pneg %p232
        %p674 = pneg %p256
        %p675 = pneg %p253
        %p676 = pneg %p277
        %p677 = pneg %p274
        %p678 = pneg %p298
        %p679 = pneg %p295
        %p680 = pneg %p319
        %p681 = pneg %p316
        %p682 = pneg %p340
        %p683 = pneg %p337
        %p684 = pneg %p361
        %p685 = pneg %p358
        %p686 = pneg %p382
        %p687 = pneg %p379
        %p688 = pneg %p408
        %p689 = pneg %p405
        %p690 = scmp.lt.s32.totalorder %s41, 1
        %s691 = scalar_select %p690, %s41, 1
        %s692 = smul.addr %s691, 4
        %s693 = smul.addr %s692, 8
        %s694 = scalar_lea.vmem %s17, %s693
        %p695 = scmp.lt.s32.totalorder %s41, 1
        %s696 = scalar_select %p695, %s41, 1
        %s697 = smul.addr %s696, 4
        %s698 = smul.addr %s697, 8
        %s699 = scalar_lea.vmem %s1, %s698
        %p700 = scmp.lt.s32.totalorder %s41, 1
        %s701 = scalar_select %p700, %s41, 1
        %s702 = smul.addr %s701, 2
        %s703 = scalar_lea.vmem %s2, %s702
        %p704 = scmp.lt.s32.totalorder %s41, 1
        %s705 = scalar_select %p704, %s41, 1
        %s706 = smul.addr %s705, 4
        %s707 = smul.addr %s706, 8
        %s708 = scalar_lea.vmem %s17, %s707
        %v710 = vld [vmem:[%s699] sm:$0xff]
        %v711 = vld [vmem:[%s699 + $0x8] sm:$0xff]
        %v712 = vld [vmem:[%s699 + $0x10] sm:$0xff]
        %v713 = vld [vmem:[%s699 + $0x18] sm:$0xff]
        %714 = vmatprep.subr.mxu0 %v711
        %715 = vmatpush1.xpose.msra.mxu0 %v710
        %716 = vmatprep.subr.mxu0 %v713
        %717 = vmatpush1.xpose.msra.mxu0 %v712
        %718 = vmatprep.subr.mxu0 0.0
        %719 = vmatpush1.xpose.msra.mxu0 0.0
        %720 = vmatprep.subr.mxu0 0.0
        %721 = vmatpush1.xpose.msra.mxu0 0.0
        %722 = vmatprep.subr.mxu0 0.0
        %723 = vmatpush1.xpose.msra.mxu0 0.0
        %724 = vmatprep.subr.mxu0 0.0
        %725 = vmatpush1.xpose.msra.mxu0 0.0
        %726 = vmatprep.subr.mxu0 0.0
        %727 = vmatpush1.xpose.msra.mxu0 0.0
        %728 = vmatprep.subr.mxu0 0.0
        %729 = vmatpush1.xpose.msra.mxu0 0.0
        %730 = vmatprep.subr.mxu0 0.0
        %731 = vmatpush1.xpose.msra.mxu0 0.0
        %732 = vmatprep.subr.mxu0 0.0
        %733 = vmatpush1.xpose.msra.mxu0 0.0
        %734 = vmatprep.subr.mxu0 0.0
        %735 = vmatpush1.xpose.msra.mxu0 0.0
        %736 = vmatprep.subr.mxu0 0.0
        %737 = vmatpush1.xpose.msra.mxu0 0.0
        %738 = vmatprep.subr.mxu0 0.0
        %739 = vmatpush1.xpose.msra.mxu0 0.0
        %740 = vmatprep.subr.mxu0 0.0
        %741 = vmatpush1.xpose.msra.mxu0 0.0
        %742 = vmatprep.subr.mxu0 0.0
        %743 = vmatpush1.xpose.msra.mxu0 0.0
        %744 = vmatprep.subr.mxu0 0.0
        %745 = vmatpush1.xpose.msra.mxu0 0.0
        %746 = vmatprep.subr.mxu0 0.0
        %747 = vmatpush1.xpose.msra.mxu0 0.0
        %748 = vmatprep.subr.mxu0 0.0
        %749 = vmatpush1.xpose.msra.mxu0 0.0
        %750 = vmatprep.subr.mxu0 0.0
        %751 = vmatpush1.xpose.msra.mxu0 0.0
        %752 = vmatprep.subr.mxu0 0.0
        %753 = vmatpush1.xpose.msra.mxu0 0.0
        %754 = vmatprep.subr.mxu0 0.0
        %755 = vmatpush1.xpose.msra.mxu0 0.0
        %756 = vmatprep.subr.mxu0 0.0
        %757 = vmatpush1.xpose.msra.mxu0 0.0
        %758 = vmatprep.subr.mxu0 0.0
        %759 = vmatpush1.xpose.msra.mxu0 0.0
        %760 = vmatprep.subr.mxu0 0.0
        %761 = vmatpush1.xpose.msra.mxu0 0.0
        %762 = vmatprep.subr.mxu0 0.0
        %763 = vmatpush1.xpose.msra.mxu0 0.0
        %764 = vmatprep.subr.mxu0 0.0
        %765 = vmatpush1.xpose.msra.mxu0 0.0
        %766 = vmatprep.subr.mxu0 0.0
        %767 = vmatpush1.xpose.msra.mxu0 0.0
        %768 = vmatprep.subr.mxu0 0.0
        %769 = vmatpush1.xpose.msra.mxu0 0.0
        %770 = vmatprep.subr.mxu0 0.0
        %771 = vmatpush1.xpose.msra.mxu0 0.0
        %772 = vmatprep.subr.mxu0 0.0
        %773 = vmatpush1.xpose.msra.mxu0 0.0
        %774 = vmatprep.subr.mxu0 0.0
        %775 = vmatpush1.xpose.msra.mxu0 0.0
        %776 = vmatprep.subr.mxu0 0.0
        %777 = vmatpush1.xpose.msra.mxu0 0.0
        %778 = vmatprep.mubr.f32.mxu0 %v711
        %779 = vmatmul.mubr.f32.gmra.mrb[0].mxu0 %v710
        %v780 = vpop.f32.mrb[0].mxu0
        %v781 = vadd.f32 0.0, %v780
        %v782 = vpop.f32.mrb[0].mxu0
        %783 = vmatprep.mubr.f32.mxu0 %v713
        %784 = vmatmul.mubr.f32.gmra.mrb[0].mxu0 %v712
        %v785 = vpop.f32.mrb[0].mxu0
        %v786 = vadd.f32 0.0, %v785
        %v787 = vpop.f32.mrb[0].mxu0
        %788 = vdwg.mxu0
        %v789 = vlaneseq
        %v790 = vshrl.u32 %v789, 7
        %v791 = vadd.s32 %v790, 8
        %v792 = vlaneseq
        %v793 = vand.u32 %v792, 127
        %vm794 = vcmp.eq.s32.totalorder %v790, %v793
        %vm795 = vcmp.eq.s32.totalorder %v791, %v793
        %v796 = vsel %vm794, %v781, 0.0
        %v797 = vsel %vm795, %v786, 0.0
        %vm798 = vcmask 130048
        %v799 = vsel %vm798, %v796, 0.0
        %v800 = vsel %vm798, %v797, 0.0
        %v801 = vadd.f32 %v799, %v800
        %v802 = vrot.slane %v801, 4
        %v803 = vadd.f32 %v801, %v802
        %v804 = vrot.slane %v803, 2
        %v805 = vadd.f32 %v803, %v804
        %v806 = vrot.slane %v805, 1
        %v807 = vadd.f32 %v805, %v806
        %v808 = vmul.f32 %v781, 2.0
        %v809 = vmul.f32 %v786, 2.0
        %v810 = vsub.f32 %v808, %v807
        %v811 = vsub.f32 %v809, %v807
        %s812 = sld [smem:[#allocation3 + %s41]]
        %v813 = vstv %s812
        %vm814 = vcmp.lt.s32.totalorder %v793, %v813
        %v815 = vsel %vm814, %v810, -inf
        %v816 = vsel %vm814, %v811, -inf
        %v817 = vld [vmem:[#allocation4] sm:$0xf]
        %v818 = vld [vmem:[#allocation4 + $0x4] sm:$0xf]
        %v819 = vld [vmem:[#allocation4 + $0x8] sm:$0xf]
        %v820 = vld [vmem:[#allocation4 + $0xc] sm:$0xf]
        %v821 = vld [vmem:[#allocation4 + $0x10] sm:$0xf]
        %v822 = vld [vmem:[#allocation4 + $0x14] sm:$0xf]
        %v823 = vld [vmem:[#allocation4 + $0x18] sm:$0xf]
        %v824 = vld [vmem:[#allocation4 + $0x1c] sm:$0xf]
        %v825 = vld [vmem:[#allocation4 + $0x20] sm:$0xf]
        %v826 = vld [vmem:[#allocation4 + $0x24] sm:$0xf]
        %v827 = vld [vmem:[#allocation4 + $0x28] sm:$0xf]
        %v828 = vld [vmem:[#allocation4 + $0x2c] sm:$0xf]
        %v829 = vld [vmem:[#allocation4 + $0x30] sm:$0xf]
        %v830 = vld [vmem:[#allocation4 + $0x34] sm:$0xf]
        %v831 = vld [vmem:[#allocation4 + $0x38] sm:$0xf]
        %v832 = vld [vmem:[#allocation4 + $0x3c] sm:$0xf]
        %v833 = vld [vmem:[#allocation4 + $0x40] sm:$0xf]
        %v834 = vld [vmem:[#allocation4 + $0x44] sm:$0xf]
        %v835 = vld [vmem:[#allocation4 + $0x48] sm:$0xf]
        %v836 = vld [vmem:[#allocation4 + $0x4c] sm:$0xf]
        %v837 = vld [vmem:[#allocation4 + $0x50] sm:$0xf]
        %v838 = vld [vmem:[#allocation4 + $0x54] sm:$0xf]
        %v839 = vld [vmem:[#allocation4 + $0x58] sm:$0xf]
        %v840 = vld [vmem:[#allocation4 + $0x5c] sm:$0xf]
        %v841 = vld [vmem:[#allocation4 + $0x60] sm:$0xf]
        %v842 = vld [vmem:[#allocation4 + $0x64] sm:$0xf]
        %v843 = vld [vmem:[#allocation4 + $0x68] sm:$0xf]
        %v844 = vld [vmem:[#allocation4 + $0x6c] sm:$0xf]
        %v845 = vld [vmem:[#allocation4 + $0x70] sm:$0xf]
        %v846 = vld [vmem:[#allocation4 + $0x74] sm:$0xf]
        %v847 = vld [vmem:[#allocation4 + $0x78] sm:$0xf]
        %v848 = vld [vmem:[#allocation4 + $0x7c] sm:$0xf]
        %v849 = vpack.c.bf16 %v712, %v710
        %v850 = vpack.c.bf16 %v713, %v711
        %v851 = vld [vmem:[#allocation6] sm:$0x1]
        %v853 = vlaneseq
        %v854 = vshrl.u32 %v853, 7
        %v855 = vsub.s32 0, %v854
        %v856 = vrot.slane %v851, %v855
        %v890 = vunpack.c.l.b16 %v817
        %v891 = vunpack.c.l.b16 %v818
        %v892 = vunpack.c.l.b16 %v819
        %v893 = vunpack.c.l.b16 %v820
        %v894 = vunpack.c.l.b16 %v821
        %v895 = vunpack.c.l.b16 %v822
        %v896 = vunpack.c.l.b16 %v823
        %v897 = vunpack.c.l.b16 %v824
        %v898 = vunpack.c.l.b16 %v825
        %v899 = vunpack.c.l.b16 %v826
        %v900 = vunpack.c.l.b16 %v827
        %v901 = vunpack.c.l.b16 %v828
        %v902 = vunpack.c.l.b16 %v829
        %v903 = vunpack.c.l.b16 %v830
        %v904 = vunpack.c.l.b16 %v831
        %v905 = vunpack.c.l.b16 %v832
        %v906 = vunpack.c.l.b16 %v833
        %v907 = vunpack.c.l.b16 %v834
        %v908 = vunpack.c.l.b16 %v835
        %v909 = vunpack.c.l.b16 %v836
        %v910 = vunpack.c.l.b16 %v837
        %v911 = vunpack.c.l.b16 %v838
        %v912 = vunpack.c.l.b16 %v839
        %v913 = vunpack.c.l.b16 %v840
        %v914 = vunpack.c.l.b16 %v841
        %v915 = vunpack.c.l.b16 %v842
        %v916 = vunpack.c.l.b16 %v843
        %v917 = vunpack.c.l.b16 %v844
        %v918 = vunpack.c.l.b16 %v845
        %v919 = vunpack.c.l.b16 %v846
        %v920 = vunpack.c.l.b16 %v847
        %v921 = vunpack.c.l.b16 %v848
        %v922 = vpack.c.b16 %v891, %v890
        %v923 = vpack.c.b16 %v893, %v892
        %v924 = vpack.c.b16 %v895, %v894
        %v925 = vpack.c.b16 %v897, %v896
        %v926 = vpack.c.b16 %v899, %v898
        %v927 = vpack.c.b16 %v901, %v900
        %v928 = vpack.c.b16 %v903, %v902
        %v929 = vpack.c.b16 %v905, %v904
        %v930 = vpack.c.b16 %v907, %v906
        %v931 = vpack.c.b16 %v909, %v908
        %v932 = vpack.c.b16 %v911, %v910
        %v933 = vpack.c.b16 %v913, %v912
        %v934 = vpack.c.b16 %v915, %v914
        %v935 = vpack.c.b16 %v917, %v916
        %v936 = vpack.c.b16 %v919, %v918
        %v937 = vpack.c.b16 %v921, %v920
        %954 = vmatprep.subr.bf16.mxu0 0
        %955 = vmatpush1.bf16.msra.mxu0 %v922
        %956 = vmatprep.subr.bf16.mxu0 0
        %957 = vmatpush1.bf16.msra.mxu0 %v923
        %958 = vmatprep.subr.bf16.mxu0 0
        %959 = vmatpush1.bf16.msra.mxu0 %v924
        %960 = vmatprep.subr.bf16.mxu0 0
        %961 = vmatpush1.bf16.msra.mxu0 %v925
        %962 = vmatprep.subr.bf16.mxu0 0
        %963 = vmatpush1.bf16.msra.mxu0 %v926
        %964 = vmatprep.subr.bf16.mxu0 0
        %965 = vmatpush1.bf16.msra.mxu0 %v927
        %966 = vmatprep.subr.bf16.mxu0 0
        %967 = vmatpush1.bf16.msra.mxu0 %v928
        %968 = vmatprep.subr.bf16.mxu0 0
        %969 = vmatpush1.bf16.msra.mxu0 %v929
        %970 = vmatprep.subr.bf16.mxu0 0
        %971 = vmatpush1.bf16.msra.mxu0 %v930
        %972 = vmatprep.subr.bf16.mxu0 0
        %973 = vmatpush1.bf16.msra.mxu0 %v931
        %974 = vmatprep.subr.bf16.mxu0 0
        %975 = vmatpush1.bf16.msra.mxu0 %v932
        %976 = vmatprep.subr.bf16.mxu0 0
        %977 = vmatpush1.bf16.msra.mxu0 %v933
        %978 = vmatprep.subr.bf16.mxu0 0
        %979 = vmatpush1.bf16.msra.mxu0 %v934
        %980 = vmatprep.subr.bf16.mxu0 0
        %981 = vmatpush1.bf16.msra.mxu0 %v935
        %982 = vmatprep.subr.bf16.mxu0 0
        %983 = vmatpush1.bf16.msra.mxu0 %v936
        %984 = vmatprep.subr.bf16.mxu0 0
        %985 = vmatpush1.bf16.msra.mxu0 %v937
        %986 = vmatprep.mubr.bf16.mxu0 %v850
        %987 = vmatmul.mubr.bf16.gmra.mrb[0].mxu0 %v849
        %v988 = vpop.f32.mrb[0].mxu0
        %v989 = vadd.f32 %v856, %v988
        %v990 = vpop.f32.mrb[0].mxu0
        %v991 = vpop.f32.mrb[0].mxu0
        %v992 = vadd.f32 %v856, %v991
        %v993 = vpop.f32.mrb[0].mxu0
        %994 = vdwg.mxu0
        %v995 = vmax.f32 %v989, 0.0
        %v996 = vmax.f32 %v992, 0.0
        %v997 = vsub.s32 %v790, 1
        %v998 = vsub.s32 %v791, 1
        %vm999 = vcmp.eq.s32.totalorder %v793, %v997
        %vm1000 = vcmp.eq.s32.totalorder %v793, %v998
        %v1001 = vsel %vm999, 1, 0
        %v1002 = vsel %vm1000, 1, 0
        %v1003 = vcvt.s32.f32 %v1001
        %v1004 = vcvt.s32.f32 %v1002
        %v1005 = vpack.c.bf16 %v1004, %v1003
        %v1006 = vpack.c.bf16 %v996, %v995
        %v1008 = vsel %vm798, %v1005, 0
        %1010 = vmatprep.subr.bf16.mxu0 0
        %1011 = vmatpush1.bf16.msra.mxu0 %v1006
        %1012 = vmatprep.subr.bf16.mxu0 0
        %1013 = vmatpush1.bf16.msra.mxu0 0
        %1014 = vmatprep.subr.bf16.mxu0 0
        %1015 = vmatpush1.bf16.msra.mxu0 0
        %1016 = vmatprep.subr.bf16.mxu0 0
        %1017 = vmatpush1.bf16.msra.mxu0 0
        %1018 = vmatprep.subr.bf16.mxu0 0
        %1019 = vmatpush1.bf16.msra.mxu0 0
        %1020 = vmatprep.subr.bf16.mxu0 0
        %1021 = vmatpush1.bf16.msra.mxu0 0
        %1022 = vmatprep.subr.bf16.mxu0 0
        %1023 = vmatpush1.bf16.msra.mxu0 0
        %1024 = vmatprep.subr.bf16.mxu0 0
        %1025 = vmatpush1.bf16.msra.mxu0 0
        %1026 = vmatprep.subr.bf16.mxu0 0
        %1027 = vmatpush1.bf16.msra.mxu0 0
        %1028 = vmatprep.subr.bf16.mxu0 0
        %1029 = vmatpush1.bf16.msra.mxu0 0
        %1030 = vmatprep.subr.bf16.mxu0 0
        %1031 = vmatpush1.bf16.msra.mxu0 0
        %1032 = vmatprep.subr.bf16.mxu0 0
        %1033 = vmatpush1.bf16.msra.mxu0 0
        %1034 = vmatprep.subr.bf16.mxu0 0
        %1035 = vmatpush1.bf16.msra.mxu0 0
        %1036 = vmatprep.subr.bf16.mxu0 0
        %1037 = vmatpush1.bf16.msra.mxu0 0
        %1038 = vmatprep.subr.bf16.mxu0 0
        %1039 = vmatpush1.bf16.msra.mxu0 0
        %1040 = vmatprep.subr.bf16.mxu0 0
        %1041 = vmatpush1.bf16.msra.mxu0 0
        %1042 = vmatprep.mubr.bf16.mxu0 0
        %1043 = vmatmul.mubr.bf16.gmra.mrb[0].mxu0 %v1008
        %v1044 = vpop.f32.mrb[0].mxu0
        %v1045 = vadd.f32 0.0, %v1044
        %v1046 = vpop.f32.mrb[0].mxu0
        %v1047 = vpop.f32.mrb[0].mxu0
        %v1048 = vadd.f32 0.0, %v1047
        %v1049 = vpop.f32.mrb[0].mxu0
        %1050 = vdwg.mxu0
        %v1051 = vsub.s32 %v790, 4294967295
        %v1052 = vsub.s32 %v791, 4294967295
        %vm1053 = vcmp.eq.s32.totalorder %v793, %v1051
        %vm1054 = vcmp.eq.s32.totalorder %v793, %v1052
        %v1055 = vsel %vm1053, 1, 0
        %v1056 = vsel %vm1054, 1, 0
        %v1057 = vcvt.s32.f32 %v1055
        %v1058 = vcvt.s32.f32 %v1056
        %v1059 = vpack.c.bf16 %v1058, %v1057
        %v1061 = vsel %vm798, %v1059, 0
        %1063 = vmatprep.subr.bf16.mxu0 0
        %1064 = vmatpush1.bf16.msra.mxu0 %v1006
        %1065 = vmatprep.subr.bf16.mxu0 0
        %1066 = vmatpush1.bf16.msra.mxu0 0
        %1067 = vmatprep.subr.bf16.mxu0 0
        %1068 = vmatpush1.bf16.msra.mxu0 0
        %1069 = vmatprep.subr.bf16.mxu0 0
        %1070 = vmatpush1.bf16.msra.mxu0 0
        %1071 = vmatprep.subr.bf16.mxu0 0
        %1072 = vmatpush1.bf16.msra.mxu0 0
        %1073 = vmatprep.subr.bf16.mxu0 0
        %1074 = vmatpush1.bf16.msra.mxu0 0
        %1075 = vmatprep.subr.bf16.mxu0 0
        %1076 = vmatpush1.bf16.msra.mxu0 0
        %1077 = vmatprep.subr.bf16.mxu0 0
        %1078 = vmatpush1.bf16.msra.mxu0 0
        %1079 = vmatprep.subr.bf16.mxu0 0
        %1080 = vmatpush1.bf16.msra.mxu0 0
        %1081 = vmatprep.subr.bf16.mxu0 0
        %1082 = vmatpush1.bf16.msra.mxu0 0
        %1083 = vmatprep.subr.bf16.mxu0 0
        %1084 = vmatpush1.bf16.msra.mxu0 0
        %1085 = vmatprep.subr.bf16.mxu0 0
        %1086 = vmatpush1.bf16.msra.mxu0 0
        %1087 = vmatprep.subr.bf16.mxu0 0
        %1088 = vmatpush1.bf16.msra.mxu0 0
        %1089 = vmatprep.subr.bf16.mxu0 0
        %1090 = vmatpush1.bf16.msra.mxu0 0
        %1091 = vmatprep.subr.bf16.mxu0 0
        %1092 = vmatpush1.bf16.msra.mxu0 0
        %1093 = vmatprep.subr.bf16.mxu0 0
        %1094 = vmatpush1.bf16.msra.mxu0 0
        %1095 = vmatprep.mubr.bf16.mxu0 0
        %1096 = vmatmul.mubr.bf16.gmra.mrb[0].mxu0 %v1061
        %v1097 = vpop.f32.mrb[0].mxu0
        %v1098 = vadd.f32 0.0, %v1097
        %v1099 = vpop.f32.mrb[0].mxu0
        %v1100 = vpop.f32.mrb[0].mxu0
        %v1101 = vadd.f32 0.0, %v1100
        %v1102 = vpop.f32.mrb[0].mxu0
        %1103 = vdwg.mxu0
        %v1104 = vld [vmem:[%s5] sm:$0xf]
        %v1105 = vld [vmem:[%s5 + $0x4] sm:$0xf]
        %v1106 = vld [vmem:[%s5 + $0x8] sm:$0xf]
        %v1107 = vld [vmem:[%s5 + $0xc] sm:$0xf]
        %v1108 = vld [vmem:[%s5 + $0x10] sm:$0xf]
        %v1109 = vld [vmem:[%s5 + $0x14] sm:$0xf]
        %v1110 = vld [vmem:[%s5 + $0x18] sm:$0xf]
        %v1111 = vld [vmem:[%s5 + $0x1c] sm:$0xf]
        %v1112 = vld [vmem:[%s5 + $0x20] sm:$0xf]
        %v1113 = vld [vmem:[%s5 + $0x24] sm:$0xf]
        %v1114 = vld [vmem:[%s5 + $0x28] sm:$0xf]
        %v1115 = vld [vmem:[%s5 + $0x2c] sm:$0xf]
        %v1116 = vld [vmem:[%s5 + $0x30] sm:$0xf]
        %v1117 = vld [vmem:[%s5 + $0x34] sm:$0xf]
        %v1118 = vld [vmem:[%s5 + $0x38] sm:$0xf]
        %v1119 = vld [vmem:[%s5 + $0x3c] sm:$0xf]
        %v1120 = vld [vmem:[%s5 + $0x40] sm:$0xf]
        %v1121 = vld [vmem:[%s5 + $0x44] sm:$0xf]
        %v1122 = vld [vmem:[%s5 + $0x48] sm:$0xf]
        %v1123 = vld [vmem:[%s5 + $0x4c] sm:$0xf]
        %v1124 = vld [vmem:[%s5 + $0x50] sm:$0xf]
        %v1125 = vld [vmem:[%s5 + $0x54] sm:$0xf]
        %v1126 = vld [vmem:[%s5 + $0x58] sm:$0xf]
        %v1127 = vld [vmem:[%s5 + $0x5c] sm:$0xf]
        %v1128 = vld [vmem:[%s5 + $0x60] sm:$0xf]
        %v1129 = vld [vmem:[%s5 + $0x64] sm:$0xf]
        %v1130 = vld [vmem:[%s5 + $0x68] sm:$0xf]
        %v1131 = vld [vmem:[%s5 + $0x6c] sm:$0xf]
        %v1132 = vld [vmem:[%s5 + $0x70] sm:$0xf]
        %v1133 = vld [vmem:[%s5 + $0x74] sm:$0xf]
        %v1134 = vld [vmem:[%s5 + $0x78] sm:$0xf]
        %v1135 = vld [vmem:[%s5 + $0x7c] sm:$0xf]
        %v1136 = vld [vmem:[%s5 + $0x80] sm:$0xf]
        %v1137 = vld [vmem:[%s5 + $0x84] sm:$0xf]
        %v1138 = vld [vmem:[%s5 + $0x88] sm:$0xf]
        %v1139 = vld [vmem:[%s5 + $0x8c] sm:$0xf]
        %v1140 = vld [vmem:[%s5 + $0x90] sm:$0xf]
        %v1141 = vld [vmem:[%s5 + $0x94] sm:$0xf]
        %v1142 = vld [vmem:[%s5 + $0x98] sm:$0xf]
        %v1143 = vld [vmem:[%s5 + $0x9c] sm:$0xf]
        %v1144 = vld [vmem:[%s5 + $0xa0] sm:$0xf]
        %v1145 = vld [vmem:[%s5 + $0xa4] sm:$0xf]
        %v1146 = vld [vmem:[%s5 + $0xa8] sm:$0xf]
        %v1147 = vld [vmem:[%s5 + $0xac] sm:$0xf]
        %v1148 = vld [vmem:[%s5 + $0xb0] sm:$0xf]
        %v1149 = vld [vmem:[%s5 + $0xb4] sm:$0xf]
        %v1150 = vld [vmem:[%s5 + $0xb8] sm:$0xf]
        %v1151 = vld [vmem:[%s5 + $0xbc] sm:$0xf]
        %v1152 = vpack.c.bf16 %v1048, %v1045
        %v1153 = vpack.c.bf16 %v1101, %v1098
        %v1154 = vld [vmem:[#allocation8] sm:$0x1]
        %v1156 = vlaneseq
        %v1157 = vshrl.u32 %v1156, 7
        %v1158 = vsub.s32 0, %v1157
        %v1159 = vrot.slane %v1154, %v1158
        %v1209 = vunpack.c.l.b16 %v1104
        %v1210 = vunpack.c.l.b16 %v1105
        %v1211 = vunpack.c.l.b16 %v1106
        %v1212 = vunpack.c.l.b16 %v1107
        %v1213 = vunpack.c.l.b16 %v1108
        %v1214 = vunpack.c.l.b16 %v1109
        %v1215 = vunpack.c.l.b16 %v1110
        %v1216 = vunpack.c.l.b16 %v1111
        %v1217 = vunpack.c.l.b16 %v1112
        %v1218 = vunpack.c.l.b16 %v1113
        %v1219 = vunpack.c.l.b16 %v1114
        %v1220 = vunpack.c.l.b16 %v1115
        %v1221 = vunpack.c.l.b16 %v1116
        %v1222 = vunpack.c.l.b16 %v1117
        %v1223 = vunpack.c.l.b16 %v1118
        %v1224 = vunpack.c.l.b16 %v1119
        %v1225 = vunpack.c.l.b16 %v1120
        %v1226 = vunpack.c.l.b16 %v1121
        %v1227 = vunpack.c.l.b16 %v1122
        %v1228 = vunpack.c.l.b16 %v1123
        %v1229 = vunpack.c.l.b16 %v1124
        %v1230 = vunpack.c.l.b16 %v1125
        %v1231 = vunpack.c.l.b16 %v1126
        %v1232 = vunpack.c.l.b16 %v1127
        %v1233 = vunpack.c.l.b16 %v1128
        %v1234 = vunpack.c.l.b16 %v1129
        %v1235 = vunpack.c.l.b16 %v1130
        %v1236 = vunpack.c.l.b16 %v1131
        %v1237 = vunpack.c.l.b16 %v1132
        %v1238 = vunpack.c.l.b16 %v1133
        %v1239 = vunpack.c.l.b16 %v1134
        %v1240 = vunpack.c.l.b16 %v1135
        %v1241 = vunpack.c.l.b16 %v1136
        %v1242 = vunpack.c.l.b16 %v1137
        %v1243 = vunpack.c.l.b16 %v1138
        %v1244 = vunpack.c.l.b16 %v1139
        %v1245 = vunpack.c.l.b16 %v1140
        %v1246 = vunpack.c.l.b16 %v1141
        %v1247 = vunpack.c.l.b16 %v1142
        %v1248 = vunpack.c.l.b16 %v1143
        %v1249 = vunpack.c.l.b16 %v1144
        %v1250 = vunpack.c.l.b16 %v1145
        %v1251 = vunpack.c.l.b16 %v1146
        %v1252 = vunpack.c.l.b16 %v1147
        %v1253 = vunpack.c.l.b16 %v1148
        %v1254 = vunpack.c.l.b16 %v1149
        %v1255 = vunpack.c.l.b16 %v1150
        %v1256 = vunpack.c.l.b16 %v1151
        %v1257 = vpack.c.b16 %v1210, %v1209
        %v1258 = vpack.c.b16 %v1212, %v1211
        %v1259 = vpack.c.b16 %v1214, %v1213
        %v1260 = vpack.c.b16 %v1216, %v1215
        %v1261 = vpack.c.b16 %v1218, %v1217
        %v1262 = vpack.c.b16 %v1220, %v1219
        %v1263 = vpack.c.b16 %v1222, %v1221
        %v1264 = vpack.c.b16 %v1224, %v1223
        %v1265 = vpack.c.b16 %v1226, %v1225
        %v1266 = vpack.c.b16 %v1228, %v1227
        %v1267 = vpack.c.b16 %v1230, %v1229
        %v1268 = vpack.c.b16 %v1232, %v1231
        %v1269 = vpack.c.b16 %v1234, %v1233
        %v1270 = vpack.c.b16 %v1236, %v1235
        %v1271 = vpack.c.b16 %v1238, %v1237
        %v1272 = vpack.c.b16 %v1240, %v1239
        %v1273 = vpack.c.b16 %v1242, %v1241
        %v1274 = vpack.c.b16 %v1244, %v1243
        %v1275 = vpack.c.b16 %v1246, %v1245
        %v1276 = vpack.c.b16 %v1248, %v1247
        %v1277 = vpack.c.b16 %v1250, %v1249
        %v1278 = vpack.c.b16 %v1252, %v1251
        %v1279 = vpack.c.b16 %v1254, %v1253
        %v1280 = vpack.c.b16 %v1256, %v1255
        %1305 = vmatprep.subr.bf16.mxu0 0
        %1306 = vmatpush1.bf16.msra.mxu0 %v1257
        %1307 = vmatprep.subr.bf16.mxu0 0
        %1308 = vmatpush1.bf16.msra.mxu0 %v1258
        %1309 = vmatprep.subr.bf16.mxu0 0
        %1310 = vmatpush1.bf16.msra.mxu0 %v1259
        %1311 = vmatprep.subr.bf16.mxu0 0
        %1312 = vmatpush1.bf16.msra.mxu0 %v1260
        %1313 = vmatprep.subr.bf16.mxu0 0
        %1314 = vmatpush1.bf16.msra.mxu0 %v1261
        %1315 = vmatprep.subr.bf16.mxu0 0
        %1316 = vmatpush1.bf16.msra.mxu0 %v1262
        %1317 = vmatprep.subr.bf16.mxu0 0
        %1318 = vmatpush1.bf16.msra.mxu0 %v1263
        %1319 = vmatprep.subr.bf16.mxu0 0
        %1320 = vmatpush1.bf16.msra.mxu0 %v1264
        %1321 = vmatprep.subr.bf16.mxu0 0
        %1322 = vmatpush1.bf16.msra.mxu0 %v1265
        %1323 = vmatprep.subr.bf16.mxu0 0
        %1324 = vmatpush1.bf16.msra.mxu0 %v1266
        %1325 = vmatprep.subr.bf16.mxu0 0
        %1326 = vmatpush1.bf16.msra.mxu0 %v1267
        %1327 = vmatprep.subr.bf16.mxu0 0
        %1328 = vmatpush1.bf16.msra.mxu0 %v1268
        %1329 = vmatprep.subr.bf16.mxu0 0
        %1330 = vmatpush1.bf16.msra.mxu0 %v1269
        %1331 = vmatprep.subr.bf16.mxu0 0
        %1332 = vmatpush1.bf16.msra.mxu0 %v1270
        %1333 = vmatprep.subr.bf16.mxu0 0
        %1334 = vmatpush1.bf16.msra.mxu0 %v1271
        %1335 = vmatprep.subr.bf16.mxu0 0
        %1336 = vmatpush1.bf16.msra.mxu0 %v1272
        %1337 = vmatprep.mubr.bf16.mxu0 %v1006
        %1338 = vmatmul.mubr.bf16.gmra.mrb[0].mxu0 %v1152
        %v1339 = vpop.f32.mrb[0].mxu0
        %v1340 = vadd.f32 %v1159, %v1339
        %v1341 = vpop.f32.mrb[0].mxu0
        %v1342 = vpop.f32.mrb[0].mxu0
        %v1343 = vadd.f32 %v1159, %v1342
        %v1344 = vpop.f32.mrb[0].mxu0
        %1345 = vdwg.mxu0
        %1346 = vmatprep.subr.bf16.mxu0 0
        %1347 = vmatpush1.bf16.msra.mxu0 %v1273
        %1348 = vmatprep.subr.bf16.mxu0 0
        %1349 = vmatpush1.bf16.msra.mxu0 %v1274
        %1350 = vmatprep.subr.bf16.mxu0 0
        %1351 = vmatpush1.bf16.msra.mxu0 %v1275
        %1352 = vmatprep.subr.bf16.mxu0 0
        %1353 = vmatpush1.bf16.msra.mxu0 %v1276
        %1354 = vmatprep.subr.bf16.mxu0 0
        %1355 = vmatpush1.bf16.msra.mxu0 %v1277
        %1356 = vmatprep.subr.bf16.mxu0 0
        %1357 = vmatpush1.bf16.msra.mxu0 %v1278
        %1358 = vmatprep.subr.bf16.mxu0 0
        %1359 = vmatpush1.bf16.msra.mxu0 %v1279
        %1360 = vmatprep.subr.bf16.mxu0 0
        %1361 = vmatpush1.bf16.msra.mxu0 %v1280
        %1362 = vmatprep.subr.bf16.mxu0 0
        %1363 = vmatpush1.bf16.msra.mxu0 0
        %1364 = vmatprep.subr.bf16.mxu0 0
        %1365 = vmatpush1.bf16.msra.mxu0 0
        %1366 = vmatprep.subr.bf16.mxu0 0
        %1367 = vmatpush1.bf16.msra.mxu0 0
        %1368 = vmatprep.subr.bf16.mxu0 0
        %1369 = vmatpush1.bf16.msra.mxu0 0
        %1370 = vmatprep.subr.bf16.mxu0 0
        %1371 = vmatpush1.bf16.msra.mxu0 0
        %1372 = vmatprep.subr.bf16.mxu0 0
        %1373 = vmatpush1.bf16.msra.mxu0 0
        %1374 = vmatprep.subr.bf16.mxu0 0
        %1375 = vmatpush1.bf16.msra.mxu0 0
        %1376 = vmatprep.subr.bf16.mxu0 0
        %1377 = vmatpush1.bf16.msra.mxu0 0
        %1378 = vmatprep.mubr.bf16.mxu0 0
        %1379 = vmatmul.mubr.bf16.gmra.mrb[0].mxu0 %v1153
        %v1380 = vpop.f32.mrb[0].mxu0
        %v1381 = vadd.f32 %v1340, %v1380
        %v1382 = vpop.f32.mrb[0].mxu0
        %v1383 = vpop.f32.mrb[0].mxu0
        %v1384 = vadd.f32 %v1343, %v1383
        %v1385 = vpop.f32.mrb[0].mxu0
        %1386 = vdwg.mxu0
        %v1387 = vmax.f32 %v1381, 0.0
        %v1388 = vmax.f32 %v1384, 0.0
        %v1389 = vld [vmem:[%s7] sm:$0xff]
        %v1390 = vld [vmem:[%s7 + $0x8] sm:$0xff]
        %v1391 = vld [vmem:[%s7 + $0x10] sm:$0xff]
        %v1392 = vld [vmem:[%s7 + $0x18] sm:$0xff]
        %v1393 = vld [vmem:[%s7 + $0x20] sm:$0xff]
        %v1394 = vld [vmem:[%s7 + $0x28] sm:$0xff]
        %v1395 = vld [vmem:[%s7 + $0x30] sm:$0xff]
        %v1396 = vld [vmem:[%s7 + $0x38] sm:$0xff]
        %v1397 = vld [vmem:[%s7 + $0x40] sm:$0xff]
        %v1398 = vld [vmem:[%s7 + $0x48] sm:$0xff]
        %v1399 = vld [vmem:[%s7 + $0x50] sm:$0xff]
        %v1400 = vld [vmem:[%s7 + $0x58] sm:$0xff]
        %v1401 = vld [vmem:[%s7 + $0x60] sm:$0xff]
        %v1402 = vld [vmem:[%s7 + $0x68] sm:$0xff]
        %v1403 = vld [vmem:[%s7 + $0x70] sm:$0xff]
        %v1404 = vld [vmem:[%s7 + $0x78] sm:$0xff]
        %v1405 = vpack.c.bf16 %v1388, %v1387
        %v1406 = vld [vmem:[#allocation9] sm:$0x3]
        %v1408 = vlaneseq
        %v1409 = vshrl.u32 %v1408, 7
        %v1410 = vsub.s32 0, %v1409
        %v1411 = vrot.slane %v1406, %v1410
        %v1412 = vlaneseq
        %v1413 = vshrl.u32 %v1412, 7
        %v1414 = vsub.s32 1, %v1413
        %v1415 = vrot.slane %v1406, %v1414
        %v1434 = vunpack.c.l.b16 %v1389
        %v1435 = vunpack.c.h.b16 %v1389
        %v1436 = vunpack.c.l.b16 %v1390
        %v1437 = vunpack.c.h.b16 %v1390
        %v1438 = vunpack.c.l.b16 %v1391
        %v1439 = vunpack.c.h.b16 %v1391
        %v1440 = vunpack.c.l.b16 %v1392
        %v1441 = vunpack.c.h.b16 %v1392
        %v1442 = vunpack.c.l.b16 %v1393
        %v1443 = vunpack.c.h.b16 %v1393
        %v1444 = vunpack.c.l.b16 %v1394
        %v1445 = vunpack.c.h.b16 %v1394
        %v1446 = vunpack.c.l.b16 %v1395
        %v1447 = vunpack.c.h.b16 %v1395
        %v1448 = vunpack.c.l.b16 %v1396
        %v1449 = vunpack.c.h.b16 %v1396
        %v1450 = vunpack.c.l.b16 %v1397
        %v1451 = vunpack.c.h.b16 %v1397
        %v1452 = vunpack.c.l.b16 %v1398
        %v1453 = vunpack.c.h.b16 %v1398
        %v1454 = vunpack.c.l.b16 %v1399
        %v1455 = vunpack.c.h.b16 %v1399
        %v1456 = vunpack.c.l.b16 %v1400
        %v1457 = vunpack.c.h.b16 %v1400
        %v1458 = vunpack.c.l.b16 %v1401
        %v1459 = vunpack.c.h.b16 %v1401
        %v1460 = vunpack.c.l.b16 %v1402
        %v1461 = vunpack.c.h.b16 %v1402
        %v1462 = vunpack.c.l.b16 %v1403
        %v1463 = vunpack.c.h.b16 %v1403
        %v1464 = vunpack.c.l.b16 %v1404
        %v1465 = vunpack.c.h.b16 %v1404
        %v1466 = vpack.c.b16 %v1436, %v1434
        %v1467 = vpack.c.b16 %v1437, %v1435
        %v1468 = vpack.c.b16 %v1440, %v1438
        %v1469 = vpack.c.b16 %v1441, %v1439
        %v1470 = vpack.c.b16 %v1444, %v1442
        %v1471 = vpack.c.b16 %v1445, %v1443
        %v1472 = vpack.c.b16 %v1448, %v1446
        %v1473 = vpack.c.b16 %v1449, %v1447
        %v1474 = vpack.c.b16 %v1452, %v1450
        %v1475 = vpack.c.b16 %v1453, %v1451
        %v1476 = vpack.c.b16 %v1456, %v1454
        %v1477 = vpack.c.b16 %v1457, %v1455
        %v1478 = vpack.c.b16 %v1460, %v1458
        %v1479 = vpack.c.b16 %v1461, %v1459
        %v1480 = vpack.c.b16 %v1464, %v1462
        %v1481 = vpack.c.b16 %v1465, %v1463
        %1498 = vmatprep.subr.bf16.mxu0 %v1467
        %1499 = vmatpush1.bf16.msra.mxu0 %v1466
        %1500 = vmatprep.subr.bf16.mxu0 %v1469
        %1501 = vmatpush1.bf16.msra.mxu0 %v1468
        %1502 = vmatprep.subr.bf16.mxu0 %v1471
        %1503 = vmatpush1.bf16.msra.mxu0 %v1470
        %1504 = vmatprep.subr.bf16.mxu0 %v1473
        %1505 = vmatpush1.bf16.msra.mxu0 %v1472
        %1506 = vmatprep.subr.bf16.mxu0 %v1475
        %1507 = vmatpush1.bf16.msra.mxu0 %v1474
        %1508 = vmatprep.subr.bf16.mxu0 %v1477
        %1509 = vmatpush1.bf16.msra.mxu0 %v1476
        %1510 = vmatprep.subr.bf16.mxu0 %v1479
        %1511 = vmatpush1.bf16.msra.mxu0 %v1478
        %1512 = vmatprep.subr.bf16.mxu0 %v1481
        %1513 = vmatpush1.bf16.msra.mxu0 %v1480
        %1514 = vmatprep.subr.bf16.mxu0 0
        %1515 = vmatpush1.bf16.msra.mxu0 0
        %1516 = vmatprep.subr.bf16.mxu0 0
        %1517 = vmatpush1.bf16.msra.mxu0 0
        %1518 = vmatprep.subr.bf16.mxu0 0
        %1519 = vmatpush1.bf16.msra.mxu0 0
        %1520 = vmatprep.subr.bf16.mxu0 0
        %1521 = vmatpush1.bf16.msra.mxu0 0
        %1522 = vmatprep.subr.bf16.mxu0 0
        %1523 = vmatpush1.bf16.msra.mxu0 0
        %1524 = vmatprep.subr.bf16.mxu0 0
        %1525 = vmatpush1.bf16.msra.mxu0 0
        %1526 = vmatprep.subr.bf16.mxu0 0
        %1527 = vmatpush1.bf16.msra.mxu0 0
        %1528 = vmatprep.subr.bf16.mxu0 0
        %1529 = vmatpush1.bf16.msra.mxu0 0
        %1530 = vmatprep.mubr.bf16.mxu0 0
        %1531 = vmatmul.mubr.bf16.gmra.mrb[0].mxu0 %v1405
        %v1532 = vpop.f32.mrb[0].mxu0
        %v1533 = vadd.f32 %v1411, %v1532
        %v1534 = vpop.f32.mrb[0].mxu0
        %v1535 = vadd.f32 %v1415, %v1534
        %v1536 = vpop.f32.mrb[0].mxu0
        %v1537 = vadd.f32 %v1411, %v1536
        %v1538 = vpop.f32.mrb[0].mxu0
        %v1539 = vadd.f32 %v1415, %v1538
        %1540 = vdwg.mxu0
        %v1541 = vld [vmem:[#allocation11] sm:$0xf]
        %v1542 = vld [vmem:[#allocation11 + $0x4] sm:$0xf]
        %v1543 = vld [vmem:[#allocation11 + $0x8] sm:$0xf]
        %v1544 = vld [vmem:[#allocation11 + $0xc] sm:$0xf]
        %v1545 = vld [vmem:[#allocation11 + $0x10] sm:$0xf]
        %v1546 = vld [vmem:[#allocation11 + $0x14] sm:$0xf]
        %v1547 = vld [vmem:[#allocation11 + $0x18] sm:$0xf]
        %v1548 = vld [vmem:[#allocation11 + $0x1c] sm:$0xf]
        %v1549 = vld [vmem:[#allocation11 + $0x20] sm:$0xf]
        %v1550 = vld [vmem:[#allocation11 + $0x24] sm:$0xf]
        %v1551 = vld [vmem:[#allocation11 + $0x28] sm:$0xf]
        %v1552 = vld [vmem:[#allocation11 + $0x2c] sm:$0xf]
        %v1553 = vld [vmem:[#allocation11 + $0x30] sm:$0xf]
        %v1554 = vld [vmem:[#allocation11 + $0x34] sm:$0xf]
        %v1555 = vld [vmem:[#allocation11 + $0x38] sm:$0xf]
        %v1556 = vld [vmem:[#allocation11 + $0x3c] sm:$0xf]
        %v1557 = vld [vmem:[#allocation11 + $0x40] sm:$0xf]
        %v1558 = vld [vmem:[#allocation11 + $0x44] sm:$0xf]
        %v1559 = vld [vmem:[#allocation11 + $0x48] sm:$0xf]
        %v1560 = vld [vmem:[#allocation11 + $0x4c] sm:$0xf]
        %v1561 = vld [vmem:[#allocation11 + $0x50] sm:$0xf]
        %v1562 = vld [vmem:[#allocation11 + $0x54] sm:$0xf]
        %v1563 = vld [vmem:[#allocation11 + $0x58] sm:$0xf]
        %v1564 = vld [vmem:[#allocation11 + $0x5c] sm:$0xf]
        %v1565 = vld [vmem:[#allocation11 + $0x60] sm:$0xf]
        %v1566 = vld [vmem:[#allocation11 + $0x64] sm:$0xf]
        %v1567 = vld [vmem:[#allocation11 + $0x68] sm:$0xf]
        %v1568 = vld [vmem:[#allocation11 + $0x6c] sm:$0xf]
        %v1569 = vld [vmem:[#allocation11 + $0x70] sm:$0xf]
        %v1570 = vld [vmem:[#allocation11 + $0x74] sm:$0xf]
        %v1571 = vld [vmem:[#allocation11 + $0x78] sm:$0xf]
        %v1572 = vld [vmem:[#allocation11 + $0x7c] sm:$0xf]
        %v1605 = vunpack.c.l.b16 %v1541
        %v1606 = vunpack.c.l.b16 %v1542
        %v1607 = vunpack.c.l.b16 %v1543
        %v1608 = vunpack.c.l.b16 %v1544
        %v1609 = vunpack.c.l.b16 %v1545
        %v1610 = vunpack.c.l.b16 %v1546
        %v1611 = vunpack.c.l.b16 %v1547
        %v1612 = vunpack.c.l.b16 %v1548
        %v1613 = vunpack.c.l.b16 %v1549
        %v1614 = vunpack.c.l.b16 %v1550
        %v1615 = vunpack.c.l.b16 %v1551
        %v1616 = vunpack.c.l.b16 %v1552
        %v1617 = vunpack.c.l.b16 %v1553
        %v1618 = vunpack.c.l.b16 %v1554
        %v1619 = vunpack.c.l.b16 %v1555
        %v1620 = vunpack.c.l.b16 %v1556
        %v1621 = vunpack.c.l.b16 %v1557
        %v1622 = vunpack.c.l.b16 %v1558
        %v1623 = vunpack.c.l.b16 %v1559
        %v1624 = vunpack.c.l.b16 %v1560
        %v1625 = vunpack.c.l.b16 %v1561
        %v1626 = vunpack.c.l.b16 %v1562
        %v1627 = vunpack.c.l.b16 %v1563
        %v1628 = vunpack.c.l.b16 %v1564
        %v1629 = vunpack.c.l.b16 %v1565
        %v1630 = vunpack.c.l.b16 %v1566
        %v1631 = vunpack.c.l.b16 %v1567
        %v1632 = vunpack.c.l.b16 %v1568
        %v1633 = vunpack.c.l.b16 %v1569
        %v1634 = vunpack.c.l.b16 %v1570
        %v1635 = vunpack.c.l.b16 %v1571
        %v1636 = vunpack.c.l.b16 %v1572
        %v1637 = vpack.c.b16 %v1606, %v1605
        %v1638 = vpack.c.b16 %v1608, %v1607
        %v1639 = vpack.c.b16 %v1610, %v1609
        %v1640 = vpack.c.b16 %v1612, %v1611
        %v1641 = vpack.c.b16 %v1614, %v1613
        %v1642 = vpack.c.b16 %v1616, %v1615
        %v1643 = vpack.c.b16 %v1618, %v1617
        %v1644 = vpack.c.b16 %v1620, %v1619
        %v1645 = vpack.c.b16 %v1622, %v1621
        %v1646 = vpack.c.b16 %v1624, %v1623
        %v1647 = vpack.c.b16 %v1626, %v1625
        %v1648 = vpack.c.b16 %v1628, %v1627
        %v1649 = vpack.c.b16 %v1630, %v1629
        %v1650 = vpack.c.b16 %v1632, %v1631
        %v1651 = vpack.c.b16 %v1634, %v1633
        %v1652 = vpack.c.b16 %v1636, %v1635
        %1669 = vmatprep.subr.bf16.mxu0 0
        %1670 = vmatpush1.bf16.msra.mxu0 %v1637
        %1671 = vmatprep.subr.bf16.mxu0 0
        %1672 = vmatpush1.bf16.msra.mxu0 %v1638
        %1673 = vmatprep.subr.bf16.mxu0 0
        %1674 = vmatpush1.bf16.msra.mxu0 %v1639
        %1675 = vmatprep.subr.bf16.mxu0 0
        %1676 = vmatpush1.bf16.msra.mxu0 %v1640
        %1677 = vmatprep.subr.bf16.mxu0 0
        %1678 = vmatpush1.bf16.msra.mxu0 %v1641
        %1679 = vmatprep.subr.bf16.mxu0 0
        %1680 = vmatpush1.bf16.msra.mxu0 %v1642
        %1681 = vmatprep.subr.bf16.mxu0 0
        %1682 = vmatpush1.bf16.msra.mxu0 %v1643
        %1683 = vmatprep.subr.bf16.mxu0 0
        %1684 = vmatpush1.bf16.msra.mxu0 %v1644
        %1685 = vmatprep.subr.bf16.mxu0 0
        %1686 = vmatpush1.bf16.msra.mxu0 %v1645
        %1687 = vmatprep.subr.bf16.mxu0 0
        %1688 = vmatpush1.bf16.msra.mxu0 %v1646
        %1689 = vmatprep.subr.bf16.mxu0 0
        %1690 = vmatpush1.bf16.msra.mxu0 %v1647
        %1691 = vmatprep.subr.bf16.mxu0 0
        %1692 = vmatpush1.bf16.msra.mxu0 %v1648
        %1693 = vmatprep.subr.bf16.mxu0 0
        %1694 = vmatpush1.bf16.msra.mxu0 %v1649
        %1695 = vmatprep.subr.bf16.mxu0 0
        %1696 = vmatpush1.bf16.msra.mxu0 %v1650
        %1697 = vmatprep.subr.bf16.mxu0 0
        %1698 = vmatpush1.bf16.msra.mxu0 %v1651
        %1699 = vmatprep.subr.bf16.mxu0 0
        %1700 = vmatpush1.bf16.msra.mxu0 %v1652
        %1701 = vmatprep.mubr.bf16.mxu0 %v850
        %1702 = vmatmul.mubr.bf16.gmra.mrb[0].mxu0 %v849
        %v1703 = vpop.f32.mrb[0].mxu0
        %v1704 = vadd.f32 0.0, %v1703
        %v1705 = vpop.f32.mrb[0].mxu0
        %v1706 = vpop.f32.mrb[0].mxu0
        %v1707 = vadd.f32 0.0, %v1706
        %v1708 = vpop.f32.mrb[0].mxu0
        %1709 = vdwg.mxu0
        %v1710 = vld [vmem:[#allocation12] sm:$0xf]
        %v1711 = vld [vmem:[#allocation12 + $0x4] sm:$0xf]
        %v1712 = vld [vmem:[#allocation12 + $0x8] sm:$0xf]
        %v1713 = vld [vmem:[#allocation12 + $0xc] sm:$0xf]
        %v1714 = vld [vmem:[#allocation12 + $0x10] sm:$0xf]
        %v1715 = vld [vmem:[#allocation12 + $0x14] sm:$0xf]
        %v1716 = vld [vmem:[#allocation12 + $0x18] sm:$0xf]
        %v1717 = vld [vmem:[#allocation12 + $0x1c] sm:$0xf]
        %v1718 = vld [vmem:[#allocation12 + $0x20] sm:$0xf]
        %v1719 = vld [vmem:[#allocation12 + $0x24] sm:$0xf]
        %v1720 = vld [vmem:[#allocation12 + $0x28] sm:$0xf]
        %v1721 = vld [vmem:[#allocation12 + $0x2c] sm:$0xf]
        %v1722 = vld [vmem:[#allocation12 + $0x30] sm:$0xf]
        %v1723 = vld [vmem:[#allocation12 + $0x34] sm:$0xf]
        %v1724 = vld [vmem:[#allocation12 + $0x38] sm:$0xf]
        %v1725 = vld [vmem:[#allocation12 + $0x3c] sm:$0xf]
        %v1726 = vld [vmem:[#allocation12 + $0x40] sm:$0xf]
        %v1727 = vld [vmem:[#allocation12 + $0x44] sm:$0xf]
        %v1728 = vld [vmem:[#allocation12 + $0x48] sm:$0xf]
        %v1729 = vld [vmem:[#allocation12 + $0x4c] sm:$0xf]
        %v1730 = vld [vmem:[#allocation12 + $0x50] sm:$0xf]
        %v1731 = vld [vmem:[#allocation12 + $0x54] sm:$0xf]
        %v1732 = vld [vmem:[#allocation12 + $0x58] sm:$0xf]
        %v1733 = vld [vmem:[#allocation12 + $0x5c] sm:$0xf]
        %v1734 = vld [vmem:[#allocation12 + $0x60] sm:$0xf]
        %v1735 = vld [vmem:[#allocation12 + $0x64] sm:$0xf]
        %v1736 = vld [vmem:[#allocation12 + $0x68] sm:$0xf]
        %v1737 = vld [vmem:[#allocation12 + $0x6c] sm:$0xf]
        %v1738 = vld [vmem:[#allocation12 + $0x70] sm:$0xf]
        %v1739 = vld [vmem:[#allocation12 + $0x74] sm:$0xf]
        %v1740 = vld [vmem:[#allocation12 + $0x78] sm:$0xf]
        %v1741 = vld [vmem:[#allocation12 + $0x7c] sm:$0xf]
        %v1742 = vld [vmem:[%s703] sm:$0x3]
        %v1743 = vld [vmem:[#allocation14] sm:$0xf]
        %v1744 = vld [vmem:[#allocation14 + $0x4] sm:$0xf]
        %v1745 = vld [vmem:[#allocation14 + $0x8] sm:$0xf]
        %v1746 = vld [vmem:[#allocation14 + $0xc] sm:$0xf]
        %v1747 = vld [vmem:[#allocation14 + $0x10] sm:$0xf]
        %v1748 = vld [vmem:[#allocation14 + $0x14] sm:$0xf]
        %v1749 = vld [vmem:[#allocation14 + $0x18] sm:$0xf]
        %v1750 = vld [vmem:[#allocation14 + $0x1c] sm:$0xf]
        %v1751 = vld [vmem:[#allocation14 + $0x20] sm:$0xf]
        %v1752 = vld [vmem:[#allocation14 + $0x24] sm:$0xf]
        %v1753 = vld [vmem:[#allocation14 + $0x28] sm:$0xf]
        %v1754 = vld [vmem:[#allocation14 + $0x2c] sm:$0xf]
        %v1755 = vld [vmem:[#allocation14 + $0x30] sm:$0xf]
        %v1756 = vld [vmem:[#allocation14 + $0x34] sm:$0xf]
        %v1757 = vld [vmem:[#allocation14 + $0x38] sm:$0xf]
        %v1758 = vld [vmem:[#allocation14 + $0x3c] sm:$0xf]
        %v1759 = vld [vmem:[#allocation14 + $0x40] sm:$0xf]
        %v1760 = vld [vmem:[#allocation14 + $0x44] sm:$0xf]
        %v1761 = vld [vmem:[#allocation14 + $0x48] sm:$0xf]
        %v1762 = vld [vmem:[#allocation14 + $0x4c] sm:$0xf]
        %v1763 = vld [vmem:[#allocation14 + $0x50] sm:$0xf]
        %v1764 = vld [vmem:[#allocation14 + $0x54] sm:$0xf]
        %v1765 = vld [vmem:[#allocation14 + $0x58] sm:$0xf]
        %v1766 = vld [vmem:[#allocation14 + $0x5c] sm:$0xf]
        %v1767 = vld [vmem:[#allocation14 + $0x60] sm:$0xf]
        %v1768 = vld [vmem:[#allocation14 + $0x64] sm:$0xf]
        %v1769 = vld [vmem:[#allocation14 + $0x68] sm:$0xf]
        %v1770 = vld [vmem:[#allocation14 + $0x6c] sm:$0xf]
        %v1771 = vld [vmem:[#allocation14 + $0x70] sm:$0xf]
        %v1772 = vld [vmem:[#allocation14 + $0x74] sm:$0xf]
        %v1773 = vld [vmem:[#allocation14 + $0x78] sm:$0xf]
        %v1774 = vld [vmem:[#allocation14 + $0x7c] sm:$0xf]
        %v1776 = vlaneseq
        %v1777 = vshrl.u32 %v1776, 7
        %v1778 = vsub.s32 0, %v1777
        %v1779 = vrot.slane %v1742, %v1778
        %v1780 = vlaneseq
        %v1781 = vshrl.u32 %v1780, 7
        %v1782 = vsub.s32 1, %v1781
        %v1783 = vrot.slane %v1742, %v1782
        %v1786 = vpack.c.bf16 %v1779, %v1779
        %v1787 = vpack.c.bf16 %v1783, %v1783
        %v1820 = vunpack.c.l.b16 %v1743
        %v1821 = vunpack.c.l.b16 %v1744
        %v1822 = vunpack.c.l.b16 %v1745
        %v1823 = vunpack.c.l.b16 %v1746
        %v1824 = vunpack.c.l.b16 %v1747
        %v1825 = vunpack.c.l.b16 %v1748
        %v1826 = vunpack.c.l.b16 %v1749
        %v1827 = vunpack.c.l.b16 %v1750
        %v1828 = vunpack.c.l.b16 %v1751
        %v1829 = vunpack.c.l.b16 %v1752
        %v1830 = vunpack.c.l.b16 %v1753
        %v1831 = vunpack.c.l.b16 %v1754
        %v1832 = vunpack.c.l.b16 %v1755
        %v1833 = vunpack.c.l.b16 %v1756
        %v1834 = vunpack.c.l.b16 %v1757
        %v1835 = vunpack.c.l.b16 %v1758
        %v1836 = vunpack.c.l.b16 %v1759
        %v1837 = vunpack.c.l.b16 %v1760
        %v1838 = vunpack.c.l.b16 %v1761
        %v1839 = vunpack.c.l.b16 %v1762
        %v1840 = vunpack.c.l.b16 %v1763
        %v1841 = vunpack.c.l.b16 %v1764
        %v1842 = vunpack.c.l.b16 %v1765
        %v1843 = vunpack.c.l.b16 %v1766
        %v1844 = vunpack.c.l.b16 %v1767
        %v1845 = vunpack.c.l.b16 %v1768
        %v1846 = vunpack.c.l.b16 %v1769
        %v1847 = vunpack.c.l.b16 %v1770
        %v1848 = vunpack.c.l.b16 %v1771
        %v1849 = vunpack.c.l.b16 %v1772
        %v1850 = vunpack.c.l.b16 %v1773
        %v1851 = vunpack.c.l.b16 %v1774
        %v1852 = vpack.c.b16 %v1821, %v1820
        %v1853 = vpack.c.b16 %v1823, %v1822
        %v1854 = vpack.c.b16 %v1825, %v1824
        %v1855 = vpack.c.b16 %v1827, %v1826
        %v1856 = vpack.c.b16 %v1829, %v1828
        %v1857 = vpack.c.b16 %v1831, %v1830
        %v1858 = vpack.c.b16 %v1833, %v1832
        %v1859 = vpack.c.b16 %v1835, %v1834
        %v1860 = vpack.c.b16 %v1837, %v1836
        %v1861 = vpack.c.b16 %v1839, %v1838
        %v1862 = vpack.c.b16 %v1841, %v1840
        %v1863 = vpack.c.b16 %v1843, %v1842
        %v1864 = vpack.c.b16 %v1845, %v1844
        %v1865 = vpack.c.b16 %v1847, %v1846
        %v1866 = vpack.c.b16 %v1849, %v1848
        %v1867 = vpack.c.b16 %v1851, %v1850
        %1884 = vmatprep.subr.bf16.mxu0 0
        %1885 = vmatpush1.bf16.msra.mxu0 %v1852
        %1886 = vmatprep.subr.bf16.mxu0 0
        %1887 = vmatpush1.bf16.msra.mxu0 %v1853
        %1888 = vmatprep.subr.bf16.mxu0 0
        %1889 = vmatpush1.bf16.msra.mxu0 %v1854
        %1890 = vmatprep.subr.bf16.mxu0 0
        %1891 = vmatpush1.bf16.msra.mxu0 %v1855
        %1892 = vmatprep.subr.bf16.mxu0 0
        %1893 = vmatpush1.bf16.msra.mxu0 %v1856
        %1894 = vmatprep.subr.bf16.mxu0 0
        %1895 = vmatpush1.bf16.msra.mxu0 %v1857
        %1896 = vmatprep.subr.bf16.mxu0 0
        %1897 = vmatpush1.bf16.msra.mxu0 %v1858
        %1898 = vmatprep.subr.bf16.mxu0 0
        %1899 = vmatpush1.bf16.msra.mxu0 %v1859
        %1900 = vmatprep.subr.bf16.mxu0 0
        %1901 = vmatpush1.bf16.msra.mxu0 %v1860
        %1902 = vmatprep.subr.bf16.mxu0 0
        %1903 = vmatpush1.bf16.msra.mxu0 %v1861
        %1904 = vmatprep.subr.bf16.mxu0 0
        %1905 = vmatpush1.bf16.msra.mxu0 %v1862
        %1906 = vmatprep.subr.bf16.mxu0 0
        %1907 = vmatpush1.bf16.msra.mxu0 %v1863
        %1908 = vmatprep.subr.bf16.mxu0 0
        %1909 = vmatpush1.bf16.msra.mxu0 %v1864
        %1910 = vmatprep.subr.bf16.mxu0 0
        %1911 = vmatpush1.bf16.msra.mxu0 %v1865
        %1912 = vmatprep.subr.bf16.mxu0 0
        %1913 = vmatpush1.bf16.msra.mxu0 %v1866
        %1914 = vmatprep.subr.bf16.mxu0 0
        %1915 = vmatpush1.bf16.msra.mxu0 %v1867
        %1916 = vmatprep.mubr.bf16.mxu0 %v1787
        %1917 = vmatmul.mubr.bf16.gmra.mrb[0].mxu0 %v1786
        %v1918 = vpop.f32.mrb[0].mxu0
        %v1919 = vadd.f32 0.0, %v1918
        %v1920 = vpop.f32.mrb[0].mxu0
        %v1921 = vpop.f32.mrb[0].mxu0
        %v1922 = vpop.f32.mrb[0].mxu0
        %1923 = vdwg.mxu0
        %v1924 = vlaneseq
        %v1925 = vshrl.u32 %v1924, 7
        %v1926 = vsub.s32 0, %v1925
        %v1927 = vrot.slane %v1919, %v1926
        %v1960 = vunpack.c.l.b16 %v1710
        %v1961 = vunpack.c.l.b16 %v1711
        %v1962 = vunpack.c.l.b16 %v1712
        %v1963 = vunpack.c.l.b16 %v1713
        %v1964 = vunpack.c.l.b16 %v1714
        %v1965 = vunpack.c.l.b16 %v1715
        %v1966 = vunpack.c.l.b16 %v1716
        %v1967 = vunpack.c.l.b16 %v1717
        %v1968 = vunpack.c.l.b16 %v1718
        %v1969 = vunpack.c.l.b16 %v1719
        %v1970 = vunpack.c.l.b16 %v1720
        %v1971 = vunpack.c.l.b16 %v1721
        %v1972 = vunpack.c.l.b16 %v1722
        %v1973 = vunpack.c.l.b16 %v1723
        %v1974 = vunpack.c.l.b16 %v1724
        %v1975 = vunpack.c.l.b16 %v1725
        %v1976 = vunpack.c.l.b16 %v1726
        %v1977 = vunpack.c.l.b16 %v1727
        %v1978 = vunpack.c.l.b16 %v1728
        %v1979 = vunpack.c.l.b16 %v1729
        %v1980 = vunpack.c.l.b16 %v1730
        %v1981 = vunpack.c.l.b16 %v1731
        %v1982 = vunpack.c.l.b16 %v1732
        %v1983 = vunpack.c.l.b16 %v1733
        %v1984 = vunpack.c.l.b16 %v1734
        %v1985 = vunpack.c.l.b16 %v1735
        %v1986 = vunpack.c.l.b16 %v1736
        %v1987 = vunpack.c.l.b16 %v1737
        %v1988 = vunpack.c.l.b16 %v1738
        %v1989 = vunpack.c.l.b16 %v1739
        %v1990 = vunpack.c.l.b16 %v1740
        %v1991 = vunpack.c.l.b16 %v1741
        %v1992 = vpack.c.b16 %v1961, %v1960
        %v1993 = vpack.c.b16 %v1963, %v1962
        %v1994 = vpack.c.b16 %v1965, %v1964
        %v1995 = vpack.c.b16 %v1967, %v1966
        %v1996 = vpack.c.b16 %v1969, %v1968
        %v1997 = vpack.c.b16 %v1971, %v1970
        %v1998 = vpack.c.b16 %v1973, %v1972
        %v1999 = vpack.c.b16 %v1975, %v1974
        %v2000 = vpack.c.b16 %v1977, %v1976
        %v2001 = vpack.c.b16 %v1979, %v1978
        %v2002 = vpack.c.b16 %v1981, %v1980
        %v2003 = vpack.c.b16 %v1983, %v1982
        %v2004 = vpack.c.b16 %v1985, %v1984
        %v2005 = vpack.c.b16 %v1987, %v1986
        %v2006 = vpack.c.b16 %v1989, %v1988
        %v2007 = vpack.c.b16 %v1991, %v1990
        %2024 = vmatprep.subr.bf16.mxu0 0
        %2025 = vmatpush1.bf16.msra.mxu0 %v1992
        %2026 = vmatprep.subr.bf16.mxu0 0
        %2027 = vmatpush1.bf16.msra.mxu0 %v1993
        %2028 = vmatprep.subr.bf16.mxu0 0
        %2029 = vmatpush1.bf16.msra.mxu0 %v1994
        %2030 = vmatprep.subr.bf16.mxu0 0
        %2031 = vmatpush1.bf16.msra.mxu0 %v1995
        %2032 = vmatprep.subr.bf16.mxu0 0
        %2033 = vmatpush1.bf16.msra.mxu0 %v1996
        %2034 = vmatprep.subr.bf16.mxu0 0
        %2035 = vmatpush1.bf16.msra.mxu0 %v1997
        %2036 = vmatprep.subr.bf16.mxu0 0
        %2037 = vmatpush1.bf16.msra.mxu0 %v1998
        %2038 = vmatprep.subr.bf16.mxu0 0
        %2039 = vmatpush1.bf16.msra.mxu0 %v1999
        %2040 = vmatprep.subr.bf16.mxu0 0
        %2041 = vmatpush1.bf16.msra.mxu0 %v2000
        %2042 = vmatprep.subr.bf16.mxu0 0
        %2043 = vmatpush1.bf16.msra.mxu0 %v2001
        %2044 = vmatprep.subr.bf16.mxu0 0
        %2045 = vmatpush1.bf16.msra.mxu0 %v2002
        %2046 = vmatprep.subr.bf16.mxu0 0
        %2047 = vmatpush1.bf16.msra.mxu0 %v2003
        %2048 = vmatprep.subr.bf16.mxu0 0
        %2049 = vmatpush1.bf16.msra.mxu0 %v2004
        %2050 = vmatprep.subr.bf16.mxu0 0
        %2051 = vmatpush1.bf16.msra.mxu0 %v2005
        %2052 = vmatprep.subr.bf16.mxu0 0
        %2053 = vmatpush1.bf16.msra.mxu0 %v2006
        %2054 = vmatprep.subr.bf16.mxu0 0
        %2055 = vmatpush1.bf16.msra.mxu0 %v2007
        %2056 = vmatprep.mubr.bf16.mxu0 %v850
        %2057 = vmatmul.mubr.bf16.gmra.mrb[0].mxu0 %v849
        %v2058 = vpop.f32.mrb[0].mxu0
        %v2059 = vadd.f32 %v1927, %v2058
        %v2060 = vpop.f32.mrb[0].mxu0
        %v2061 = vpop.f32.mrb[0].mxu0
        %v2062 = vadd.f32 %v1927, %v2061
        %v2063 = vpop.f32.mrb[0].mxu0
        %2064 = vdwg.mxu0
        %v2065 = vld [vmem:[#allocation15] sm:$0x1]
        %v2067 = vlaneseq
        %v2068 = vshrl.u32 %v2067, 7
        %v2069 = vsub.s32 0, %v2068
        %v2070 = vrot.slane %v2065, %v2069
        %v2072 = vadd.f32 %v2059, %v2070
        %v2073 = vadd.f32 %v2062, %v2070
        %v2074 = vcvt.s32.f32 %v793
        %v2075 = vsel %vm798, %v815, -inf
        %2076 = vmax.xlane.f32.xlu0 %v2075
        %v2077 = vpop.xlane.xlu0 %2076
        %v2078 = vsel %vm798, %v816, -inf
        %2079 = vmax.xlane.f32.xlu0 %v2078
        %v2080 = vpop.xlane.xlu0 %2079
        %vm2081 = vcmp.eq.f32.partialorder %v815, %v2077
        %vm2082 = vcmp.eq.f32.partialorder %v816, %v2080
        %v2083 = vsel %vm2081, %v2074, 16.0
        %v2084 = vsel %vm2082, %v2074, 16.0
        %v2085 = vsel %vm798, %v2083, inf
        %2086 = vmin.xlane.f32.xlu0 %v2085
        %v2087 = vpop.xlane.xlu0 %2086
        %v2088 = vsel %vm798, %v2084, inf
        %2089 = vmin.xlane.f32.xlu0 %v2088
        %v2090 = vpop.xlane.xlu0 %2089
        %vm2091 = vcmp.eq.f32.partialorder %v2074, %v2087
        %vm2092 = vcmp.eq.f32.partialorder %v2074, %v2090
        %v2093 = vsel %vm2091, -inf, %v815
        %v2094 = vsel %vm2092, -inf, %v816
        %v2095 = vsel %vm2091, 1, 0
        %v2096 = vsel %vm2092, 1, 0
        %v2097 = vcvt.s32.f32 %v2095
        %v2098 = vcvt.s32.f32 %v2096
        %v2099 = vpack.c.bf16 %v2098, %v2097
        %v2100 = vpack.c.bf16 %v1707, %v1704
        %v2102 = vsel %vm798, %v2099, 0
        %2104 = vmatprep.subr.bf16.mxu0 0
        %2105 = vmatpush1.bf16.msra.mxu0 %v2100
        %2106 = vmatprep.subr.bf16.mxu0 0
        %2107 = vmatpush1.bf16.msra.mxu0 0
        %2108 = vmatprep.subr.bf16.mxu0 0
        %2109 = vmatpush1.bf16.msra.mxu0 0
        %2110 = vmatprep.subr.bf16.mxu0 0
        %2111 = vmatpush1.bf16.msra.mxu0 0
        %2112 = vmatprep.subr.bf16.mxu0 0
        %2113 = vmatpush1.bf16.msra.mxu0 0
        %2114 = vmatprep.subr.bf16.mxu0 0
        %2115 = vmatpush1.bf16.msra.mxu0 0
        %2116 = vmatprep.subr.bf16.mxu0 0
        %2117 = vmatpush1.bf16.msra.mxu0 0
        %2118 = vmatprep.subr.bf16.mxu0 0
        %2119 = vmatpush1.bf16.msra.mxu0 0
        %2120 = vmatprep.subr.bf16.mxu0 0
        %2121 = vmatpush1.bf16.msra.mxu0 0
        %2122 = vmatprep.subr.bf16.mxu0 0
        %2123 = vmatpush1.bf16.msra.mxu0 0
        %2124 = vmatprep.subr.bf16.mxu0 0
        %2125 = vmatpush1.bf16.msra.mxu0 0
        %2126 = vmatprep.subr.bf16.mxu0 0
        %2127 = vmatpush1.bf16.msra.mxu0 0
        %2128 = vmatprep.subr.bf16.mxu0 0
        %2129 = vmatpush1.bf16.msra.mxu0 0
        %2130 = vmatprep.subr.bf16.mxu0 0
        %2131 = vmatpush1.bf16.msra.mxu0 0
        %2132 = vmatprep.subr.bf16.mxu0 0
        %2133 = vmatpush1.bf16.msra.mxu0 0
        %2134 = vmatprep.subr.bf16.mxu0 0
        %2135 = vmatpush1.bf16.msra.mxu0 0
        %2136 = vmatprep.mubr.bf16.mxu0 0
        %2137 = vmatmul.mubr.bf16.gmra.mrb[0].mxu0 %v2102
        %v2138 = vpop.f32.mrb[0].mxu0
        %v2139 = vadd.f32 %v2072, %v2138
        %v2140 = vpop.f32.mrb[0].mxu0
        %v2141 = vpop.f32.mrb[0].mxu0
        %v2142 = vadd.f32 %v2073, %v2141
        %v2143 = vpop.f32.mrb[0].mxu0
        %2144 = vdwg.mxu0
        %v2145 = vmax.f32 %v2139, 0.0
        %v2146 = vmax.f32 %v2142, 0.0
        %v2147 = vsel %vm798, %v2093, -inf
        %2148 = vmax.xlane.f32.xlu0 %v2147
        %v2149 = vpop.xlane.xlu0 %2148
        %v2150 = vsel %vm798, %v2094, -inf
        %2151 = vmax.xlane.f32.xlu0 %v2150
        %v2152 = vpop.xlane.xlu0 %2151
        %vm2153 = vcmp.eq.f32.partialorder %v2093, %v2149
        %vm2154 = vcmp.eq.f32.partialorder %v2094, %v2152
        %v2155 = vsel %vm2153, %v2074, 16.0
        %v2156 = vsel %vm2154, %v2074, 16.0
        %v2157 = vsel %vm798, %v2155, inf
        %2158 = vmin.xlane.f32.xlu0 %v2157
        %v2159 = vpop.xlane.xlu0 %2158
        %v2160 = vsel %vm798, %v2156, inf
        %2161 = vmin.xlane.f32.xlu0 %v2160
        %v2162 = vpop.xlane.xlu0 %2161
        %vm2163 = vcmp.eq.f32.partialorder %v2074, %v2159
        %vm2164 = vcmp.eq.f32.partialorder %v2074, %v2162
        %v2165 = vsel %vm2163, -inf, %v2093
        %v2166 = vsel %vm2164, -inf, %v2094
        %v2167 = vsel %vm2163, 1, 0
        %v2168 = vsel %vm2164, 1, 0
        %v2169 = vcvt.s32.f32 %v2167
        %v2170 = vcvt.s32.f32 %v2168
        %v2171 = vpack.c.bf16 %v2170, %v2169
        %v2173 = vsel %vm798, %v2171, 0
        %2175 = vmatprep.subr.bf16.mxu0 0
        %2176 = vmatpush1.bf16.msra.mxu0 %v2100
        %2177 = vmatprep.subr.bf16.mxu0 0
        %2178 = vmatpush1.bf16.msra.mxu0 0
        %2179 = vmatprep.subr.bf16.mxu0 0
        %2180 = vmatpush1.bf16.msra.mxu0 0
        %2181 = vmatprep.subr.bf16.mxu0 0
        %2182 = vmatpush1.bf16.msra.mxu0 0
        %2183 = vmatprep.subr.bf16.mxu0 0
        %2184 = vmatpush1.bf16.msra.mxu0 0
        %2185 = vmatprep.subr.bf16.mxu0 0
        %2186 = vmatpush1.bf16.msra.mxu0 0
        %2187 = vmatprep.subr.bf16.mxu0 0
        %2188 = vmatpush1.bf16.msra.mxu0 0
        %2189 = vmatprep.subr.bf16.mxu0 0
        %2190 = vmatpush1.bf16.msra.mxu0 0
        %2191 = vmatprep.subr.bf16.mxu0 0
        %2192 = vmatpush1.bf16.msra.mxu0 0
        %2193 = vmatprep.subr.bf16.mxu0 0
        %2194 = vmatpush1.bf16.msra.mxu0 0
        %2195 = vmatprep.subr.bf16.mxu0 0
        %2196 = vmatpush1.bf16.msra.mxu0 0
        %2197 = vmatprep.subr.bf16.mxu0 0
        %2198 = vmatpush1.bf16.msra.mxu0 0
        %2199 = vmatprep.subr.bf16.mxu0 0
        %2200 = vmatpush1.bf16.msra.mxu0 0
        %2201 = vmatprep.subr.bf16.mxu0 0
        %2202 = vmatpush1.bf16.msra.mxu0 0
        %2203 = vmatprep.subr.bf16.mxu0 0
        %2204 = vmatpush1.bf16.msra.mxu0 0
        %2205 = vmatprep.subr.bf16.mxu0 0
        %2206 = vmatpush1.bf16.msra.mxu0 0
        %2207 = vmatprep.mubr.bf16.mxu0 0
        %2208 = vmatmul.mubr.bf16.gmra.mrb[0].mxu0 %v2173
        %v2209 = vpop.f32.mrb[0].mxu0
        %v2210 = vadd.f32 %v2072, %v2209
        %v2211 = vpop.f32.mrb[0].mxu0
        %v2212 = vpop.f32.mrb[0].mxu0
        %v2213 = vadd.f32 %v2073, %v2212
        %v2214 = vpop.f32.mrb[0].mxu0
        %2215 = vdwg.mxu0
        %v2216 = vmax.f32 %v2210, 0.0
        %v2217 = vmax.f32 %v2213, 0.0
        %v2218 = vsel %vm798, %v2165, -inf
        %2219 = vmax.xlane.f32.xlu0 %v2218
        %v2220 = vpop.xlane.xlu0 %2219
        %v2221 = vsel %vm798, %v2166, -inf
        %2222 = vmax.xlane.f32.xlu0 %v2221
        %v2223 = vpop.xlane.xlu0 %2222
        %vm2224 = vcmp.eq.f32.partialorder %v2165, %v2220
        %vm2225 = vcmp.eq.f32.partialorder %v2166, %v2223
        %v2226 = vsel %vm2224, %v2074, 16.0
        %v2227 = vsel %vm2225, %v2074, 16.0
        %v2228 = vsel %vm798, %v2226, inf
        %2229 = vmin.xlane.f32.xlu0 %v2228
        %v2230 = vpop.xlane.xlu0 %2229
        %v2231 = vsel %vm798, %v2227, inf
        %2232 = vmin.xlane.f32.xlu0 %v2231
        %v2233 = vpop.xlane.xlu0 %2232
        %vm2234 = vcmp.eq.f32.partialorder %v2074, %v2230
        %vm2235 = vcmp.eq.f32.partialorder %v2074, %v2233
        %v2236 = vsel %vm2234, 1, 0
        %v2237 = vsel %vm2235, 1, 0
        %v2238 = vcvt.s32.f32 %v2236
        %v2239 = vcvt.s32.f32 %v2237
        %v2240 = vpack.c.bf16 %v2239, %v2238
        %v2242 = vsel %vm798, %v2240, 0
        %2244 = vmatprep.subr.bf16.mxu0 0
        %2245 = vmatpush1.bf16.msra.mxu0 %v2100
        %2246 = vmatprep.subr.bf16.mxu0 0
        %2247 = vmatpush1.bf16.msra.mxu0 0
        %2248 = vmatprep.subr.bf16.mxu0 0
        %2249 = vmatpush1.bf16.msra.mxu0 0
        %2250 = vmatprep.subr.bf16.mxu0 0
        %2251 = vmatpush1.bf16.msra.mxu0 0
        %2252 = vmatprep.subr.bf16.mxu0 0
        %2253 = vmatpush1.bf16.msra.mxu0 0
        %2254 = vmatprep.subr.bf16.mxu0 0
        %2255 = vmatpush1.bf16.msra.mxu0 0
        %2256 = vmatprep.subr.bf16.mxu0 0
        %2257 = vmatpush1.bf16.msra.mxu0 0
        %2258 = vmatprep.subr.bf16.mxu0 0
        %2259 = vmatpush1.bf16.msra.mxu0 0
        %2260 = vmatprep.subr.bf16.mxu0 0
        %2261 = vmatpush1.bf16.msra.mxu0 0
        %2262 = vmatprep.subr.bf16.mxu0 0
        %2263 = vmatpush1.bf16.msra.mxu0 0
        %2264 = vmatprep.subr.bf16.mxu0 0
        %2265 = vmatpush1.bf16.msra.mxu0 0
        %2266 = vmatprep.subr.bf16.mxu0 0
        %2267 = vmatpush1.bf16.msra.mxu0 0
        %2268 = vmatprep.subr.bf16.mxu0 0
        %2269 = vmatpush1.bf16.msra.mxu0 0
        %2270 = vmatprep.subr.bf16.mxu0 0
        %2271 = vmatpush1.bf16.msra.mxu0 0
        %2272 = vmatprep.subr.bf16.mxu0 0
        %2273 = vmatpush1.bf16.msra.mxu0 0
        %2274 = vmatprep.subr.bf16.mxu0 0
        %2275 = vmatpush1.bf16.msra.mxu0 0
        %2276 = vmatprep.mubr.bf16.mxu0 0
        %2277 = vmatmul.mubr.bf16.gmra.mrb[0].mxu0 %v2242
        %v2278 = vpop.f32.mrb[0].mxu0
        %v2279 = vadd.f32 %v2072, %v2278
        %v2280 = vpop.f32.mrb[0].mxu0
        %v2281 = vpop.f32.mrb[0].mxu0
        %v2282 = vadd.f32 %v2073, %v2281
        %v2283 = vpop.f32.mrb[0].mxu0
        %2284 = vdwg.mxu0
        %v2285 = vmax.f32 %v2279, 0.0
        %v2286 = vmax.f32 %v2282, 0.0
        %v2287 = vld [vmem:[#allocation17] sm:$0xf]
        %v2288 = vld [vmem:[#allocation17 + $0x4] sm:$0xf]
        %v2289 = vld [vmem:[#allocation17 + $0x8] sm:$0xf]
        %v2290 = vld [vmem:[#allocation17 + $0xc] sm:$0xf]
        %v2291 = vld [vmem:[#allocation17 + $0x10] sm:$0xf]
        %v2292 = vld [vmem:[#allocation17 + $0x14] sm:$0xf]
        %v2293 = vld [vmem:[#allocation17 + $0x18] sm:$0xf]
        %v2294 = vld [vmem:[#allocation17 + $0x1c] sm:$0xf]
        %v2295 = vld [vmem:[#allocation17 + $0x20] sm:$0xf]
        %v2296 = vld [vmem:[#allocation17 + $0x24] sm:$0xf]
        %v2297 = vld [vmem:[#allocation17 + $0x28] sm:$0xf]
        %v2298 = vld [vmem:[#allocation17 + $0x2c] sm:$0xf]
        %v2299 = vld [vmem:[#allocation17 + $0x30] sm:$0xf]
        %v2300 = vld [vmem:[#allocation17 + $0x34] sm:$0xf]
        %v2301 = vld [vmem:[#allocation17 + $0x38] sm:$0xf]
        %v2302 = vld [vmem:[#allocation17 + $0x3c] sm:$0xf]
        %v2303 = vld [vmem:[#allocation17 + $0x40] sm:$0xf]
        %v2304 = vld [vmem:[#allocation17 + $0x44] sm:$0xf]
        %v2305 = vld [vmem:[#allocation17 + $0x48] sm:$0xf]
        %v2306 = vld [vmem:[#allocation17 + $0x4c] sm:$0xf]
        %v2307 = vld [vmem:[#allocation17 + $0x50] sm:$0xf]
        %v2308 = vld [vmem:[#allocation17 + $0x54] sm:$0xf]
        %v2309 = vld [vmem:[#allocation17 + $0x58] sm:$0xf]
        %v2310 = vld [vmem:[#allocation17 + $0x5c] sm:$0xf]
        %v2311 = vld [vmem:[#allocation17 + $0x60] sm:$0xf]
        %v2312 = vld [vmem:[#allocation17 + $0x64] sm:$0xf]
        %v2313 = vld [vmem:[#allocation17 + $0x68] sm:$0xf]
        %v2314 = vld [vmem:[#allocation17 + $0x6c] sm:$0xf]
        %v2315 = vld [vmem:[#allocation17 + $0x70] sm:$0xf]
        %v2316 = vld [vmem:[#allocation17 + $0x74] sm:$0xf]
        %v2317 = vld [vmem:[#allocation17 + $0x78] sm:$0xf]
        %v2318 = vld [vmem:[#allocation17 + $0x7c] sm:$0xf]
        %v2319 = vld [vmem:[#allocation17 + $0x80] sm:$0xf]
        %v2320 = vld [vmem:[#allocation17 + $0x84] sm:$0xf]
        %v2321 = vld [vmem:[#allocation17 + $0x88] sm:$0xf]
        %v2322 = vld [vmem:[#allocation17 + $0x8c] sm:$0xf]
        %v2323 = vld [vmem:[#allocation17 + $0x90] sm:$0xf]
        %v2324 = vld [vmem:[#allocation17 + $0x94] sm:$0xf]
        %v2325 = vld [vmem:[#allocation17 + $0x98] sm:$0xf]
        %v2326 = vld [vmem:[#allocation17 + $0x9c] sm:$0xf]
        %v2327 = vld [vmem:[#allocation17 + $0xa0] sm:$0xf]
        %v2328 = vld [vmem:[#allocation17 + $0xa4] sm:$0xf]
        %v2329 = vld [vmem:[#allocation17 + $0xa8] sm:$0xf]
        %v2330 = vld [vmem:[#allocation17 + $0xac] sm:$0xf]
        %v2331 = vld [vmem:[#allocation17 + $0xb0] sm:$0xf]
        %v2332 = vld [vmem:[#allocation17 + $0xb4] sm:$0xf]
        %v2333 = vld [vmem:[#allocation17 + $0xb8] sm:$0xf]
        %v2334 = vld [vmem:[#allocation17 + $0xbc] sm:$0xf]
        %v2335 = vpack.c.bf16 %v2146, %v2145
        %v2336 = vpack.c.bf16 %v2217, %v2216
        %v2337 = vpack.c.bf16 %v2286, %v2285
        %v2338 = vld [vmem:[#allocation18] sm:$0x1]
        %v2340 = vlaneseq
        %v2341 = vshrl.u32 %v2340, 7
        %v2342 = vsub.s32 0, %v2341
        %v2343 = vrot.slane %v2338, %v2342
        %v2393 = vunpack.c.l.b16 %v2287
        %v2394 = vunpack.c.l.b16 %v2288
        %v2395 = vunpack.c.l.b16 %v2289
        %v2396 = vunpack.c.l.b16 %v2290
        %v2397 = vunpack.c.l.b16 %v2291
        %v2398 = vunpack.c.l.b16 %v2292
        %v2399 = vunpack.c.l.b16 %v2293
        %v2400 = vunpack.c.l.b16 %v2294
        %v2401 = vunpack.c.l.b16 %v2295
        %v2402 = vunpack.c.l.b16 %v2296
        %v2403 = vunpack.c.l.b16 %v2297
        %v2404 = vunpack.c.l.b16 %v2298
        %v2405 = vunpack.c.l.b16 %v2299
        %v2406 = vunpack.c.l.b16 %v2300
        %v2407 = vunpack.c.l.b16 %v2301
        %v2408 = vunpack.c.l.b16 %v2302
        %v2409 = vunpack.c.l.b16 %v2303
        %v2410 = vunpack.c.l.b16 %v2304
        %v2411 = vunpack.c.l.b16 %v2305
        %v2412 = vunpack.c.l.b16 %v2306
        %v2413 = vunpack.c.l.b16 %v2307
        %v2414 = vunpack.c.l.b16 %v2308
        %v2415 = vunpack.c.l.b16 %v2309
        %v2416 = vunpack.c.l.b16 %v2310
        %v2417 = vunpack.c.l.b16 %v2311
        %v2418 = vunpack.c.l.b16 %v2312
        %v2419 = vunpack.c.l.b16 %v2313
        %v2420 = vunpack.c.l.b16 %v2314
        %v2421 = vunpack.c.l.b16 %v2315
        %v2422 = vunpack.c.l.b16 %v2316
        %v2423 = vunpack.c.l.b16 %v2317
        %v2424 = vunpack.c.l.b16 %v2318
        %v2425 = vunpack.c.l.b16 %v2319
        %v2426 = vunpack.c.l.b16 %v2320
        %v2427 = vunpack.c.l.b16 %v2321
        %v2428 = vunpack.c.l.b16 %v2322
        %v2429 = vunpack.c.l.b16 %v2323
        %v2430 = vunpack.c.l.b16 %v2324
        %v2431 = vunpack.c.l.b16 %v2325
        %v2432 = vunpack.c.l.b16 %v2326
        %v2433 = vunpack.c.l.b16 %v2327
        %v2434 = vunpack.c.l.b16 %v2328
        %v2435 = vunpack.c.l.b16 %v2329
        %v2436 = vunpack.c.l.b16 %v2330
        %v2437 = vunpack.c.l.b16 %v2331
        %v2438 = vunpack.c.l.b16 %v2332
        %v2439 = vunpack.c.l.b16 %v2333
        %v2440 = vunpack.c.l.b16 %v2334
        %v2441 = vpack.c.b16 %v2394, %v2393
        %v2442 = vpack.c.b16 %v2396, %v2395
        %v2443 = vpack.c.b16 %v2398, %v2397
        %v2444 = vpack.c.b16 %v2400, %v2399
        %v2445 = vpack.c.b16 %v2402, %v2401
        %v2446 = vpack.c.b16 %v2404, %v2403
        %v2447 = vpack.c.b16 %v2406, %v2405
        %v2448 = vpack.c.b16 %v2408, %v2407
        %v2449 = vpack.c.b16 %v2410, %v2409
        %v2450 = vpack.c.b16 %v2412, %v2411
        %v2451 = vpack.c.b16 %v2414, %v2413
        %v2452 = vpack.c.b16 %v2416, %v2415
        %v2453 = vpack.c.b16 %v2418, %v2417
        %v2454 = vpack.c.b16 %v2420, %v2419
        %v2455 = vpack.c.b16 %v2422, %v2421
        %v2456 = vpack.c.b16 %v2424, %v2423
        %v2457 = vpack.c.b16 %v2426, %v2425
        %v2458 = vpack.c.b16 %v2428, %v2427
        %v2459 = vpack.c.b16 %v2430, %v2429
        %v2460 = vpack.c.b16 %v2432, %v2431
        %v2461 = vpack.c.b16 %v2434, %v2433
        %v2462 = vpack.c.b16 %v2436, %v2435
        %v2463 = vpack.c.b16 %v2438, %v2437
        %v2464 = vpack.c.b16 %v2440, %v2439
        %2489 = vmatprep.subr.bf16.mxu0 0
        %2490 = vmatpush1.bf16.msra.mxu0 %v2441
        %2491 = vmatprep.subr.bf16.mxu0 0
        %2492 = vmatpush1.bf16.msra.mxu0 %v2442
        %2493 = vmatprep.subr.bf16.mxu0 0
        %2494 = vmatpush1.bf16.msra.mxu0 %v2443
        %2495 = vmatprep.subr.bf16.mxu0 0
        %2496 = vmatpush1.bf16.msra.mxu0 %v2444
        %2497 = vmatprep.subr.bf16.mxu0 0
        %2498 = vmatpush1.bf16.msra.mxu0 %v2445
        %2499 = vmatprep.subr.bf16.mxu0 0
        %2500 = vmatpush1.bf16.msra.mxu0 %v2446
        %2501 = vmatprep.subr.bf16.mxu0 0
        %2502 = vmatpush1.bf16.msra.mxu0 %v2447
        %2503 = vmatprep.subr.bf16.mxu0 0
        %2504 = vmatpush1.bf16.msra.mxu0 %v2448
        %2505 = vmatprep.subr.bf16.mxu0 0
        %2506 = vmatpush1.bf16.msra.mxu0 %v2449
        %2507 = vmatprep.subr.bf16.mxu0 0
        %2508 = vmatpush1.bf16.msra.mxu0 %v2450
        %2509 = vmatprep.subr.bf16.mxu0 0
        %2510 = vmatpush1.bf16.msra.mxu0 %v2451
        %2511 = vmatprep.subr.bf16.mxu0 0
        %2512 = vmatpush1.bf16.msra.mxu0 %v2452
        %2513 = vmatprep.subr.bf16.mxu0 0
        %2514 = vmatpush1.bf16.msra.mxu0 %v2453
        %2515 = vmatprep.subr.bf16.mxu0 0
        %2516 = vmatpush1.bf16.msra.mxu0 %v2454
        %2517 = vmatprep.subr.bf16.mxu0 0
        %2518 = vmatpush1.bf16.msra.mxu0 %v2455
        %2519 = vmatprep.subr.bf16.mxu0 0
        %2520 = vmatpush1.bf16.msra.mxu0 %v2456
        %2521 = vmatprep.mubr.bf16.mxu0 %v2336
        %2522 = vmatmul.mubr.bf16.gmra.mrb[0].mxu0 %v2335
        %v2523 = vpop.f32.mrb[0].mxu0
        %v2524 = vadd.f32 %v2343, %v2523
        %v2525 = vpop.f32.mrb[0].mxu0
        %v2526 = vpop.f32.mrb[0].mxu0
        %v2527 = vadd.f32 %v2343, %v2526
        %v2528 = vpop.f32.mrb[0].mxu0
        %2529 = vdwg.mxu0
        %2530 = vmatprep.subr.bf16.mxu0 0
        %2531 = vmatpush1.bf16.msra.mxu0 %v2457
        %2532 = vmatprep.subr.bf16.mxu0 0
        %2533 = vmatpush1.bf16.msra.mxu0 %v2458
        %2534 = vmatprep.subr.bf16.mxu0 0
        %2535 = vmatpush1.bf16.msra.mxu0 %v2459
        %2536 = vmatprep.subr.bf16.mxu0 0
        %2537 = vmatpush1.bf16.msra.mxu0 %v2460
        %2538 = vmatprep.subr.bf16.mxu0 0
        %2539 = vmatpush1.bf16.msra.mxu0 %v2461
        %2540 = vmatprep.subr.bf16.mxu0 0
        %2541 = vmatpush1.bf16.msra.mxu0 %v2462
        %2542 = vmatprep.subr.bf16.mxu0 0
        %2543 = vmatpush1.bf16.msra.mxu0 %v2463
        %2544 = vmatprep.subr.bf16.mxu0 0
        %2545 = vmatpush1.bf16.msra.mxu0 %v2464
        %2546 = vmatprep.subr.bf16.mxu0 0
        %2547 = vmatpush1.bf16.msra.mxu0 0
        %2548 = vmatprep.subr.bf16.mxu0 0
        %2549 = vmatpush1.bf16.msra.mxu0 0
        %2550 = vmatprep.subr.bf16.mxu0 0
        %2551 = vmatpush1.bf16.msra.mxu0 0
        %2552 = vmatprep.subr.bf16.mxu0 0
        %2553 = vmatpush1.bf16.msra.mxu0 0
        %2554 = vmatprep.subr.bf16.mxu0 0
        %2555 = vmatpush1.bf16.msra.mxu0 0
        %2556 = vmatprep.subr.bf16.mxu0 0
        %2557 = vmatpush1.bf16.msra.mxu0 0
        %2558 = vmatprep.subr.bf16.mxu0 0
        %2559 = vmatpush1.bf16.msra.mxu0 0
        %2560 = vmatprep.subr.bf16.mxu0 0
        %2561 = vmatpush1.bf16.msra.mxu0 0
        %2562 = vmatprep.mubr.bf16.mxu0 0
        %2563 = vmatmul.mubr.bf16.gmra.mrb[0].mxu0 %v2337
        %v2564 = vpop.f32.mrb[0].mxu0
        %v2565 = vadd.f32 %v2524, %v2564
        %v2566 = vpop.f32.mrb[0].mxu0
        %v2567 = vpop.f32.mrb[0].mxu0
        %v2568 = vadd.f32 %v2527, %v2567
        %v2569 = vpop.f32.mrb[0].mxu0
        %2570 = vdwg.mxu0
        %v2571 = vmax.f32 %v2565, 0.0
        %v2572 = vmax.f32 %v2568, 0.0
        %v2573 = vld [vmem:[#allocation20] sm:$0xff]
        %v2574 = vld [vmem:[#allocation20 + $0x8] sm:$0xff]
        %v2575 = vld [vmem:[#allocation20 + $0x10] sm:$0xff]
        %v2576 = vld [vmem:[#allocation20 + $0x18] sm:$0xff]
        %v2577 = vld [vmem:[#allocation20 + $0x20] sm:$0xff]
        %v2578 = vld [vmem:[#allocation20 + $0x28] sm:$0xff]
        %v2579 = vld [vmem:[#allocation20 + $0x30] sm:$0xff]
        %v2580 = vld [vmem:[#allocation20 + $0x38] sm:$0xff]
        %v2581 = vld [vmem:[#allocation20 + $0x40] sm:$0xff]
        %v2582 = vld [vmem:[#allocation20 + $0x48] sm:$0xff]
        %v2583 = vld [vmem:[#allocation20 + $0x50] sm:$0xff]
        %v2584 = vld [vmem:[#allocation20 + $0x58] sm:$0xff]
        %v2585 = vld [vmem:[#allocation20 + $0x60] sm:$0xff]
        %v2586 = vld [vmem:[#allocation20 + $0x68] sm:$0xff]
        %v2587 = vld [vmem:[#allocation20 + $0x70] sm:$0xff]
        %v2588 = vld [vmem:[#allocation20 + $0x78] sm:$0xff]
        %v2589 = vpack.c.bf16 %v2572, %v2571
        %v2590 = vld [vmem:[#allocation21] sm:$0x3]
        %v2592 = vlaneseq
        %v2593 = vshrl.u32 %v2592, 7
        %v2594 = vsub.s32 0, %v2593
        %v2595 = vrot.slane %v2590, %v2594
        %v2596 = vlaneseq
        %v2597 = vshrl.u32 %v2596, 7
        %v2598 = vsub.s32 1, %v2597
        %v2599 = vrot.slane %v2590, %v2598
        %v2618 = vunpack.c.l.b16 %v2573
        %v2619 = vunpack.c.h.b16 %v2573
        %v2620 = vunpack.c.l.b16 %v2574
        %v2621 = vunpack.c.h.b16 %v2574
        %v2622 = vunpack.c.l.b16 %v2575
        %v2623 = vunpack.c.h.b16 %v2575
        %v2624 = vunpack.c.l.b16 %v2576
        %v2625 = vunpack.c.h.b16 %v2576
        %v2626 = vunpack.c.l.b16 %v2577
        %v2627 = vunpack.c.h.b16 %v2577
        %v2628 = vunpack.c.l.b16 %v2578
        %v2629 = vunpack.c.h.b16 %v2578
        %v2630 = vunpack.c.l.b16 %v2579
        %v2631 = vunpack.c.h.b16 %v2579
        %v2632 = vunpack.c.l.b16 %v2580
        %v2633 = vunpack.c.h.b16 %v2580
        %v2634 = vunpack.c.l.b16 %v2581
        %v2635 = vunpack.c.h.b16 %v2581
        %v2636 = vunpack.c.l.b16 %v2582
        %v2637 = vunpack.c.h.b16 %v2582
        %v2638 = vunpack.c.l.b16 %v2583
        %v2639 = vunpack.c.h.b16 %v2583
        %v2640 = vunpack.c.l.b16 %v2584
        %v2641 = vunpack.c.h.b16 %v2584
        %v2642 = vunpack.c.l.b16 %v2585
        %v2643 = vunpack.c.h.b16 %v2585
        %v2644 = vunpack.c.l.b16 %v2586
        %v2645 = vunpack.c.h.b16 %v2586
        %v2646 = vunpack.c.l.b16 %v2587
        %v2647 = vunpack.c.h.b16 %v2587
        %v2648 = vunpack.c.l.b16 %v2588
        %v2649 = vunpack.c.h.b16 %v2588
        %v2650 = vpack.c.b16 %v2620, %v2618
        %v2651 = vpack.c.b16 %v2621, %v2619
        %v2652 = vpack.c.b16 %v2624, %v2622
        %v2653 = vpack.c.b16 %v2625, %v2623
        %v2654 = vpack.c.b16 %v2628, %v2626
        %v2655 = vpack.c.b16 %v2629, %v2627
        %v2656 = vpack.c.b16 %v2632, %v2630
        %v2657 = vpack.c.b16 %v2633, %v2631
        %v2658 = vpack.c.b16 %v2636, %v2634
        %v2659 = vpack.c.b16 %v2637, %v2635
        %v2660 = vpack.c.b16 %v2640, %v2638
        %v2661 = vpack.c.b16 %v2641, %v2639
        %v2662 = vpack.c.b16 %v2644, %v2642
        %v2663 = vpack.c.b16 %v2645, %v2643
        %v2664 = vpack.c.b16 %v2648, %v2646
        %v2665 = vpack.c.b16 %v2649, %v2647
        %2682 = vmatprep.subr.bf16.mxu0 %v2651
        %2683 = vmatpush1.bf16.msra.mxu0 %v2650
        %2684 = vmatprep.subr.bf16.mxu0 %v2653
        %2685 = vmatpush1.bf16.msra.mxu0 %v2652
        %2686 = vmatprep.subr.bf16.mxu0 %v2655
        %2687 = vmatpush1.bf16.msra.mxu0 %v2654
        %2688 = vmatprep.subr.bf16.mxu0 %v2657
        %2689 = vmatpush1.bf16.msra.mxu0 %v2656
        %2690 = vmatprep.subr.bf16.mxu0 %v2659
        %2691 = vmatpush1.bf16.msra.mxu0 %v2658
        %2692 = vmatprep.subr.bf16.mxu0 %v2661
        %2693 = vmatpush1.bf16.msra.mxu0 %v2660
        %2694 = vmatprep.subr.bf16.mxu0 %v2663
        %2695 = vmatpush1.bf16.msra.mxu0 %v2662
        %2696 = vmatprep.subr.bf16.mxu0 %v2665
        %2697 = vmatpush1.bf16.msra.mxu0 %v2664
        %2698 = vmatprep.subr.bf16.mxu0 0
        %2699 = vmatpush1.bf16.msra.mxu0 0
        %2700 = vmatprep.subr.bf16.mxu0 0
        %2701 = vmatpush1.bf16.msra.mxu0 0
        %2702 = vmatprep.subr.bf16.mxu0 0
        %2703 = vmatpush1.bf16.msra.mxu0 0
        %2704 = vmatprep.subr.bf16.mxu0 0
        %2705 = vmatpush1.bf16.msra.mxu0 0
        %2706 = vmatprep.subr.bf16.mxu0 0
        %2707 = vmatpush1.bf16.msra.mxu0 0
        %2708 = vmatprep.subr.bf16.mxu0 0
        %2709 = vmatpush1.bf16.msra.mxu0 0
        %2710 = vmatprep.subr.bf16.mxu0 0
        %2711 = vmatpush1.bf16.msra.mxu0 0
        %2712 = vmatprep.subr.bf16.mxu0 0
        %2713 = vmatpush1.bf16.msra.mxu0 0
        %2714 = vmatprep.mubr.bf16.mxu0 0
        %2715 = vmatmul.mubr.bf16.gmra.mrb[0].mxu0 %v2589
        %v2716 = vpop.f32.mrb[0].mxu0
        %v2717 = vadd.f32 %v2595, %v2716
        %v2718 = vpop.f32.mrb[0].mxu0
        %v2719 = vadd.f32 %v2599, %v2718
        %v2720 = vpop.f32.mrb[0].mxu0
        %v2721 = vadd.f32 %v2595, %v2720
        %v2722 = vpop.f32.mrb[0].mxu0
        %v2723 = vadd.f32 %v2599, %v2722
        %2724 = vdwg.mxu0
        %v2725 = vadd.f32 %v1533, %v710
        %v2726 = vadd.f32 %v1535, %v711
        %v2727 = vadd.f32 %v1537, %v712
        %v2728 = vadd.f32 %v1539, %v713
        %v2729 = vadd.f32 %v2725, %v2717
        %v2730 = vadd.f32 %v2726, %v2719
        %v2731 = vadd.f32 %v2727, %v2721
        %v2732 = vadd.f32 %v2728, %v2723
        %v2733 = vmax.f32 %v2729, 0.0
        %v2734 = vmax.f32 %v2730, 0.0
        %v2735 = vmax.f32 %v2731, 0.0
        %v2736 = vmax.f32 %v2732, 0.0
        %2737 = vst [vmem:[%s708] sm:$0xff] %v2733
        %2738 = vst [vmem:[%s708 + $0x8] sm:$0xff] %v2734
        %2739 = vst [vmem:[%s708 + $0x10] sm:$0xff] %v2735
        %2740 = vst [vmem:[%s708 + $0x18] sm:$0xff] %v2736
        %p2741 = scmp.lt.s32.totalorder %s41, 1
        %s2742 = scalar_select %p2741, %s41, 1
        %s2743 = smul.addr %s2742, 4
        %s2744 = smul.addr %s2743, 8
        %s2745 = scalar_lea.vmem %s17, %s2744
        // Predicated region
        $region133: #{snippet_topic_gcn.4} parent=83 // pred_check
          %p2746 = pneg %p405
        $region134: #{snippet_topic_gcn.4} parent=83 // pred_check_branch
          %2748 = sbr.rel (%p2746) target = $region136
        $region135: #{snippet_topic_gcn.4} parent=83 // pred_region
          _
        $region136: #{snippet_topic_gcn.4} parent=83 // pred_fallthru
          _
      $region84: #{snippet_topic_gcn.4} parent=5 // pred_fallthru
        _
      %p2749 = scmp.le.s32.totalorder 2, %s36
      // Predicated region
      $region137: #{snippet_topic_gcn.4} parent=5 // pred_check
        %p2750 = pneg %p2749
      $region138: #{snippet_topic_gcn.4} parent=5 // pred_check_branch
        %2752 = sbr.rel (%p2750) target = $region140
      $region139: #{snippet_topic_gcn.4} parent=5 // pred_region
        %s2753 = ssub.s32 %s36, 2
        // Predicated region
        $region141: #{snippet_topic_gcn.4} parent=139 // pred_check
          %p2754 = pneg %p411
        $region142: #{snippet_topic_gcn.4} parent=139 // pred_check_branch
          %2756 = sbr.rel (%p2754) target = $region144
        $region143: #{snippet_topic_gcn.4} parent=139 // pred_region
          %p2757 = scmp.lt.s32.totalorder %s42, 1
          %s2758 = scalar_select %p2757, %s42, 1
          %s2759 = smul.addr %s2758, 4
          %s2760 = smul.addr %s2759, 8
          %s2761 = scalar_lea.vmem %s17, %s2760
        $region144: #{snippet_topic_gcn.4} parent=139 // pred_fallthru
          _
      $region140: #{snippet_topic_gcn.4} parent=5 // pred_fallthru
        _
    $region6: #{snippet_topic_gcn.4} parent=1 // loop_footer
      %s40 = sadd.s32 1, %s36
    $region7: #{snippet_topic_gcn.4} parent=1 // loop_footer_branch
      %35 = sbr.rel target = $region3
    $region8: #{snippet_topic_gcn.4} parent=1 // loop_exit
      _
    %2762 = vsyncpa [#allocation5], 1
    %s2763 = scalar_lea.sflag [#allocation5], 1
    %2764 = vsyncpa %s2763, 1
    %2765 = vsyncpa [#allocation7], 1
    %2766 = vsyncpa [#allocation10], 1
    %2767 = vsyncpa [#allocation13], 1
    %2768 = vsyncpa [#allocation16], 1
    %2769 = vsyncpa [#allocation19], 1
    %2770 = vsyncpa [#allocation22], 1

</llo_original>
